<compile_context>
chip_gen: v7x
topology: tpu7x:2x2x1
jax: 0.10.0
libtpu: 0.0.40
codegen_flags: <defaults>
</compile_context>

<pallas_src>
import functools

import jax
import jax.numpy as jnp
from jax import lax
from jax.experimental import pallas as pl
from jax.experimental.pallas import tpu as pltpu

# Model hyper-parameters (small, consistent with the module: nhead=4, ffn=4*H)
INPUT_SIZE = 12
HIDDEN = 32
NHEAD = 4
HEAD_DIM = HIDDEN // NHEAD
FFN = HIDDEN * 4
NUM_LAYERS = 2
LN_EPS = 1e-5


# ---------------------------------------------------------------------------
# Fused Pallas kernel
# ---------------------------------------------------------------------------

def _sigmoid(z):
    # 1 / (1 + exp(-z)); the divide goes to the EUP slot (approx reciprocal).
    return pl.reciprocal(1.0 + jnp.exp(-z), approx=True)


def _layernorm(y, w, b):
    mu = jnp.mean(y, axis=-1, keepdims=True)
    var = jnp.mean((y - mu) ** 2, axis=-1, keepdims=True)
    return (y - mu) * lax.rsqrt(var + LN_EPS) * w + b


def _softmax_rows(s):
    m = jnp.max(s, axis=-1, keepdims=True)
    p = jnp.exp(s - m)
    return p * pl.reciprocal(jnp.sum(p, axis=-1, keepdims=True), approx=True)


def _fused_forward_kernel(
    # inputs
    x_ref,                                   # (B*S, F)
    in_w_ref, in_b_ref,                      # (F, H), (1, H)
    qkv_w_ref, qkv_b_ref,                    # (L, H, 3H), (L, 1, 3H)
    ao_w_ref, ao_b_ref,                      # (L, H, H),  (L, 1, H)
    ln1_w_ref, ln1_b_ref,                    # (L, 1, H)
    ff1_w_ref, ff1_b_ref,                    # (L, H, FFN), (L, 1, FFN)
    ff2_w_ref, ff2_b_ref,                    # (L, FFN, H), (L, 1, H)
    ln2_w_ref, ln2_b_ref,                    # (L, 1, H)
    wih_ref, whh_ref, lstm_b_ref,            # (H, 4H), (H, 4H), (1, 4H)
    fc_w_ref, fc_b_ref,                      # (1, H), (1, 1)
    # outputs
    out_ref,                                 # (B, 1)
    *, batch, seq):
    B, S, H, D = batch, seq, HIDDEN, HEAD_DIM
    scale = 1.0 / float(D) ** 0.5

    # ---- input projection: Linear + ReLU (Dropout == identity in eval) ----
    h = jnp.dot(x_ref[...], in_w_ref[...], preferred_element_type=jnp.float32)
    h = jnp.maximum(h + in_b_ref[...], 0.0)                    # (B*S, H)

    # ---- 2 x TransformerEncoderLayer (post-norm, relu FFN, 4 heads) ----
    for l in range(NUM_LAYERS):
        # QKV projection; in_proj rows are [Wq; Wk; Wv] -> lanes [q | k | v]
        qkv = jnp.dot(h, qkv_w_ref[l],
                      preferred_element_type=jnp.float32) + qkv_b_ref[l]
        wo = ao_w_ref[l]                                       # (H, H)

        # per-(batch, head) scaled-dot-product attention, statically unrolled;
        # the output projection is folded per head so the head contexts never
        # get re-assembled along lanes.
        attn_rows = []
        for b in range(B):
            r0, r1 = b * S, (b + 1) * S
            acc = None
            for hd in range(NHEAD):
                q = qkv[r0:r1, hd * D:(hd + 1) * D]                      # (S, D)
                k = qkv[r0:r1, H + hd * D:H + (hd + 1) * D]              # (S, D)
                v = qkv[r0:r1, 2 * H + hd * D:2 * H + (hd + 1) * D]      # (S, D)
                s = lax.dot_general(q, k, (((1,), (1,)), ((), ())),
                                    preferred_element_type=jnp.float32)  # (S, S)
                p = _softmax_rows(s * scale)
                ctx = jnp.dot(p, v, preferred_element_type=jnp.float32)  # (S, D)
                part = jnp.dot(ctx, wo[hd * D:(hd + 1) * D, :],
                               preferred_element_type=jnp.float32)       # (S, H)
                acc = part if acc is None else acc + part
            attn_rows.append(acc)
        attn_out = jnp.concatenate(attn_rows, axis=0) + ao_b_ref[l]      # (B*S, H)
        h = _layernorm(h + attn_out, ln1_w_ref[l], ln1_b_ref[l])         # norm1

        ff = jnp.dot(h, ff1_w_ref[l], preferred_element_type=jnp.float32)
        ff = jnp.maximum(ff + ff1_b_ref[l], 0.0)
        ff = jnp.dot(ff, ff2_w_ref[l],
                     preferred_element_type=jnp.float32) + ff2_b_ref[l]
        h = _layernorm(h + ff, ln2_w_ref[l], ln2_b_ref[l])               # norm2

    # ---- LSTM: one matmul for x@W_ih^T + (b_ih+b_hh), then batched,
    #      fully-unrolled recurrence with vreg-carried h/c (gate order i,f,g,o)
    pre = jnp.dot(h, wih_ref[...],
                  preferred_element_type=jnp.float32) + lstm_b_ref[...]  # (B*S, 4H)
    w_hh = whh_ref[...]                                                  # (H, 4H)

    h_t = jnp.zeros((B, H), jnp.float32)
    c_t = jnp.zeros((B, H), jnp.float32)
    for t in range(S):                      # fully unrolled, static trip count
        pre_t = jnp.concatenate(
            [pre[b * S + t:b * S + t + 1, :] for b in range(B)], axis=0)  # (B, 4H)
        gates = pre_t + jnp.dot(h_t, w_hh,
                                preferred_element_type=jnp.float32)       # (B, 4H)
        i = _sigmoid(gates[:, 0 * H:1 * H])
        f = _sigmoid(gates[:, 1 * H:2 * H])
        g = jnp.tanh(gates[:, 2 * H:3 * H])
        o = _sigmoid(gates[:, 3 * H:4 * H])
        c_t = f * c_t + i * g
        h_t = o * jnp.tanh(c_t)

    # final fc (Linear(H, 1)) fused as a row reduction; dropout = identity
    out_ref[...] = (jnp.sum(h_t * fc_w_ref[...], axis=1, keepdims=True)
                    + fc_b_ref[...]).astype(out_ref.dtype)


# ---------------------------------------------------------------------------
# Wrapper: single pallas_call, whole model resident in VMEM (working set << 1 MiB)
# ---------------------------------------------------------------------------

def hybrid_forward(p, x):
    B, S, F = x.shape
    kernel = functools.partial(_fused_forward_kernel, batch=B, seq=S)
    return pl.pallas_call(
        kernel,
        out_shape=jax.ShapeDtypeStruct((B, 1), jnp.float32),
    )(
        x.reshape(B * S, F),
        p["in_w"], p["in_b"],
        p["qkv_w"], p["qkv_b"],
        p["ao_w"], p["ao_b"],
        p["ln1_w"], p["ln1_b"],
        p["ff1_w"], p["ff1_b"],
        p["ff2_w"], p["ff2_b"],
        p["ln2_w"], p["ln2_b"],
        p["lstm_w_ih"], p["lstm_w_hh"], p["lstm_b"],
        p["fc_w"], p["fc_b"],
    )


# ---------------------------------------------------------------------------
# Parameter creation (PyTorch layout) + one-time packing into kernel layout
# ---------------------------------------------------------------------------

def init_params(key):
    keys = iter(jax.random.split(key, 64))

    def rnd(shape, scale=0.1):
        return jax.random.normal(next(keys), shape, jnp.float32) * scale

    params = {
        "in_w": rnd((HIDDEN, INPUT_SIZE)),
        "in_b": rnd((HIDDEN,)),
        "layers": [],
        "lstm_w_ih": rnd((4 * HIDDEN, HIDDEN)),
        "lstm_w_hh": rnd((4 * HIDDEN, HIDDEN)),
        "lstm_b_ih": rnd((4 * HIDDEN,)),
        "lstm_b_hh": rnd((4 * HIDDEN,)),
        "fc_w": rnd((1, HIDDEN)),
        "fc_b": rnd((1,)),
    }
    for _ in range(NUM_LAYERS):
        params["layers"].append({
            "attn_in_w": rnd((3 * HIDDEN, HIDDEN)),
            "attn_in_b": rnd((3 * HIDDEN,)),
            "attn_out_w": rnd((HIDDEN, HIDDEN)),
            "attn_out_b": rnd((HIDDEN,)),
            "ln1_w": jnp.ones((HIDDEN,), jnp.float32),
            "ln1_b": jnp.zeros((HIDDEN,), jnp.float32),
            "lin1_w": rnd((FFN, HIDDEN)),
            "lin1_b": rnd((FFN,)),
            "lin2_w": rnd((HIDDEN, FFN)),
            "lin2_b": rnd((HIDDEN,)),
            "ln2_w": jnp.ones((HIDDEN,), jnp.float32),
            "ln2_b": jnp.zeros((HIDDEN,), jnp.float32),
        })
    return params


def pack_params(raw):
    """One-time conversion: PyTorch (out,in) weights -> (in,out); biases ->
    (1,N); per-layer tensors stacked along a leading layer axis."""
    L = NUM_LAYERS

    def stack_w(name):
        return jnp.stack([raw["layers"][l][name].T for l in range(L)])

    def stack_b(name, n):
        return jnp.stack([raw["layers"][l][name].reshape(1, n) for l in range(L)])

    return {
        "in_w": raw["in_w"].T,                                  # (F, H)
        "in_b": raw["in_b"].reshape(1, HIDDEN),
        "qkv_w": stack_w("attn_in_w"),                          # (L, H, 3H)
        "qkv_b": stack_b("attn_in_b", 3 * HIDDEN),
        "ao_w": stack_w("attn_out_w"),                          # (L, H, H)
        "ao_b": stack_b("attn_out_b", HIDDEN),
        "ln1_w": stack_b("ln1_w", HIDDEN),
        "ln1_b": stack_b("ln1_b", HIDDEN),
        "ff1_w": stack_w("lin1_w"),                             # (L, H, FFN)
        "ff1_b": stack_b("lin1_b", FFN),
        "ff2_w": stack_w("lin2_w"),                             # (L, FFN, H)
        "ff2_b": stack_b("lin2_b", HIDDEN),
        "ln2_w": stack_b("ln2_w", HIDDEN),
        "ln2_b": stack_b("ln2_b", HIDDEN),
        "lstm_w_ih": raw["lstm_w_ih"].T,                        # (H, 4H)
        "lstm_w_hh": raw["lstm_w_hh"].T,                        # (H, 4H)
        "lstm_b": (raw["lstm_b_ih"] + raw["lstm_b_hh"]).reshape(1, 4 * HIDDEN),
        "fc_w": raw["fc_w"].reshape(1, HIDDEN),                 # (1, H)
        "fc_b": raw["fc_b"].reshape(1, 1),
    }


if __name__ == "__main__":
    key = jax.random.PRNGKey(0)
    pkey, xkey = jax.random.split(key)
    params = pack_params(init_params(pkey))

    B, S = 2, 8
    x = jax.random.normal(xkey, (B, S, INPUT_SIZE), jnp.float32)

    out = jax.jit(hybrid_forward)(params, x)
    out = jax.block_until_ready(out)
    assert out.shape == (B, 1), out.shape
    assert bool(jnp.all(jnp.isfinite(out)))
    print("KERNEL_OK")
</pallas_src>

<mosaic_0001>
module attributes {stable_mosaic.version = 11 : i64} {
  func.func @_fused_forward_kernel(%arg0: memref<16x12xf32, #tpu.memory_space<vmem>>, %arg1: memref<12x32xf32, #tpu.memory_space<vmem>>, %arg2: memref<1x32xf32, #tpu.memory_space<vmem>>, %arg3: memref<2x32x96xf32, #tpu.memory_space<vmem>>, %arg4: memref<2x1x96xf32, #tpu.memory_space<vmem>>, %arg5: memref<2x32x32xf32, #tpu.memory_space<vmem>>, %arg6: memref<2x1x32xf32, #tpu.memory_space<vmem>>, %arg7: memref<2x1x32xf32, #tpu.memory_space<vmem>>, %arg8: memref<2x1x32xf32, #tpu.memory_space<vmem>>, %arg9: memref<2x32x128xf32, #tpu.memory_space<vmem>>, %arg10: memref<2x1x128xf32, #tpu.memory_space<vmem>>, %arg11: memref<2x128x32xf32, #tpu.memory_space<vmem>>, %arg12: memref<2x1x32xf32, #tpu.memory_space<vmem>>, %arg13: memref<2x1x32xf32, #tpu.memory_space<vmem>>, %arg14: memref<2x1x32xf32, #tpu.memory_space<vmem>>, %arg15: memref<32x128xf32, #tpu.memory_space<vmem>>, %arg16: memref<32x128xf32, #tpu.memory_space<vmem>>, %arg17: memref<1x128xf32, #tpu.memory_space<vmem>>, %arg18: memref<1x32xf32, #tpu.memory_space<vmem>>, %arg19: memref<1x1xf32, #tpu.memory_space<vmem>>, %arg20: memref<2x1xf32, #tpu.memory_space<vmem>>) attributes {dimension_semantics = [], scalar_prefetch = 0 : i64, scratch_operands = 0 : i64, tpu.core_type = #tpu.core_type<tc>} {
    %c0 = arith.constant 0 : index
    %c0_0 = arith.constant 0 : index
    %0 = vector.load %arg0[%c0, %c0_0] : memref<16x12xf32, #tpu.memory_space<vmem>>, vector<16x12xf32>
    %c0_1 = arith.constant 0 : index
    %c0_2 = arith.constant 0 : index
    %1 = vector.load %arg1[%c0_1, %c0_2] : memref<12x32xf32, #tpu.memory_space<vmem>>, vector<12x32xf32>
    %cst = arith.constant dense<0.000000e+00> : vector<16x32xf32>
    %2 = tpu.matmul %0, %1, %cst {dimension_numbers = #tpu.dot_dimension_numbers<[1], [0], [0], [1], [0, 0, 1, 1], [], []>} : vector<16x12xf32>, vector<12x32xf32>, vector<16x32xf32> -> vector<16x32xf32>
    %c0_3 = arith.constant 0 : index
    %c0_4 = arith.constant 0 : index
    %3 = vector.load %arg2[%c0_3, %c0_4] : memref<1x32xf32, #tpu.memory_space<vmem>>, vector<1x32xf32>
    %4 = vector.broadcast %3 : vector<1x32xf32> to vector<16x32xf32>
    %5 = arith.addf %2, %4 : vector<16x32xf32>
    %cst_5 = arith.constant 0.000000e+00 : f32
    %6 = vector.broadcast %cst_5 : f32 to vector<16x32xf32>
    %7 = arith.maximumf %5, %6 : vector<16x32xf32>
    %c0_6 = arith.constant 0 : index
    %c0_7 = arith.constant 0 : index
    %c0_8 = arith.constant 0 : index
    %8 = vector.load %arg3[%c0_6, %c0_7, %c0_8] : memref<2x32x96xf32, #tpu.memory_space<vmem>>, vector<1x32x96xf32>
    %9 = vector.shape_cast %8 : vector<1x32x96xf32> to vector<32x96xf32>
    %cst_9 = arith.constant dense<0.000000e+00> : vector<16x96xf32>
    %10 = tpu.matmul %7, %9, %cst_9 {dimension_numbers = #tpu.dot_dimension_numbers<[1], [0], [0], [1], [0, 0, 1, 1], [], []>} : vector<16x32xf32>, vector<32x96xf32>, vector<16x96xf32> -> vector<16x96xf32>
    %c0_10 = arith.constant 0 : index
    %c0_11 = arith.constant 0 : index
    %c0_12 = arith.constant 0 : index
    %11 = vector.load %arg4[%c0_10, %c0_11, %c0_12] : memref<2x1x96xf32, #tpu.memory_space<vmem>>, vector<1x1x96xf32>
    %12 = vector.shape_cast %11 : vector<1x1x96xf32> to vector<1x96xf32>
    %13 = vector.broadcast %12 : vector<1x96xf32> to vector<16x96xf32>
    %14 = arith.addf %10, %13 : vector<16x96xf32>
    %c0_13 = arith.constant 0 : index
    %c0_14 = arith.constant 0 : index
    %c0_15 = arith.constant 0 : index
    %15 = vector.load %arg5[%c0_13, %c0_14, %c0_15] : memref<2x32x32xf32, #tpu.memory_space<vmem>>, vector<1x32x32xf32>
    %16 = vector.shape_cast %15 : vector<1x32x32xf32> to vector<32x32xf32>
    %17 = vector.extract_strided_slice %14 {offsets = [0, 0], sizes = [8, 8], strides = [1, 1]} : vector<16x96xf32> to vector<8x8xf32>
    %18 = vector.extract_strided_slice %14 {offsets = [0, 32], sizes = [8, 8], strides = [1, 1]} : vector<16x96xf32> to vector<8x8xf32>
    %19 = vector.extract_strided_slice %14 {offsets = [0, 64], sizes = [8, 8], strides = [1, 1]} : vector<16x96xf32> to vector<8x8xf32>
    %cst_16 = arith.constant dense<0.000000e+00> : vector<8x8xf32>
    %20 = tpu.matmul %17, %18, %cst_16 {dimension_numbers = #tpu.dot_dimension_numbers<[1], [1], [0], [0], [0, 0, 1, 0], [], []>} : vector<8x8xf32>, vector<8x8xf32>, vector<8x8xf32> -> vector<8x8xf32>
    %cst_17 = arith.constant 0.353553385 : f32
    %21 = vector.broadcast %cst_17 : f32 to vector<8x8xf32>
    %22 = arith.mulf %20, %21 : vector<8x8xf32>
    %cst_18 = arith.constant dense<0xFF800000> : vector<8xf32>
    %23 = vector.multi_reduction <maximumf>, %22, %cst_18 [1] : vector<8x8xf32> to vector<8xf32>
    %24 = vector.shape_cast %23 : vector<8xf32> to vector<8x1xf32>
    %25 = vector.broadcast %24 : vector<8x1xf32> to vector<8x8xf32>
    %26 = arith.subf %22, %25 : vector<8x8xf32>
    %27 = math.exp %26 : vector<8x8xf32>
    %cst_19 = arith.constant dense<0.000000e+00> : vector<8xf32>
    %28 = vector.multi_reduction <add>, %27, %cst_19 [1] : vector<8x8xf32> to vector<8xf32>
    %29 = vector.shape_cast %28 : vector<8xf32> to vector<8x1xf32>
    %30 = tpu.reciprocal %29 {approx = true} : vector<8x1xf32> -> vector<8x1xf32>
    %31 = vector.broadcast %30 : vector<8x1xf32> to vector<8x8xf32>
    %32 = arith.mulf %27, %31 : vector<8x8xf32>
    %cst_20 = arith.constant dense<0.000000e+00> : vector<8x8xf32>
    %33 = tpu.matmul %32, %19, %cst_20 {dimension_numbers = #tpu.dot_dimension_numbers<[1], [0], [0], [1], [0, 0, 1, 1], [], []>} : vector<8x8xf32>, vector<8x8xf32>, vector<8x8xf32> -> vector<8x8xf32>
    %34 = vector.extract_strided_slice %16 {offsets = [0, 0], sizes = [8, 32], strides = [1, 1]} : vector<32x32xf32> to vector<8x32xf32>
    %cst_21 = arith.constant dense<0.000000e+00> : vector<8x32xf32>
    %35 = tpu.matmul %33, %34, %cst_21 {dimension_numbers = #tpu.dot_dimension_numbers<[1], [0], [0], [1], [0, 0, 1, 1], [], []>} : vector<8x8xf32>, vector<8x32xf32>, vector<8x32xf32> -> vector<8x32xf32>
    %36 = vector.extract_strided_slice %14 {offsets = [0, 8], sizes = [8, 8], strides = [1, 1]} : vector<16x96xf32> to vector<8x8xf32>
    %37 = vector.extract_strided_slice %14 {offsets = [0, 40], sizes = [8, 8], strides = [1, 1]} : vector<16x96xf32> to vector<8x8xf32>
    %38 = vector.extract_strided_slice %14 {offsets = [0, 72], sizes = [8, 8], strides = [1, 1]} : vector<16x96xf32> to vector<8x8xf32>
    %cst_22 = arith.constant dense<0.000000e+00> : vector<8x8xf32>
    %39 = tpu.matmul %36, %37, %cst_22 {dimension_numbers = #tpu.dot_dimension_numbers<[1], [1], [0], [0], [0, 0, 1, 0], [], []>} : vector<8x8xf32>, vector<8x8xf32>, vector<8x8xf32> -> vector<8x8xf32>
    %cst_23 = arith.constant 0.353553385 : f32
    %40 = vector.broadcast %cst_23 : f32 to vector<8x8xf32>
    %41 = arith.mulf %39, %40 : vector<8x8xf32>
    %cst_24 = arith.constant dense<0xFF800000> : vector<8xf32>
    %42 = vector.multi_reduction <maximumf>, %41, %cst_24 [1] : vector<8x8xf32> to vector<8xf32>
    %43 = vector.shape_cast %42 : vector<8xf32> to vector<8x1xf32>
    %44 = vector.broadcast %43 : vector<8x1xf32> to vector<8x8xf32>
    %45 = arith.subf %41, %44 : vector<8x8xf32>
    %46 = math.exp %45 : vector<8x8xf32>
    %cst_25 = arith.constant dense<0.000000e+00> : vector<8xf32>
    %47 = vector.multi_reduction <add>, %46, %cst_25 [1] : vector<8x8xf32> to vector<8xf32>
    %48 = vector.shape_cast %47 : vector<8xf32> to vector<8x1xf32>
    %49 = tpu.reciprocal %48 {approx = true} : vector<8x1xf32> -> vector<8x1xf32>
    %50 = vector.broadcast %49 : vector<8x1xf32> to vector<8x8xf32>
    %51 = arith.mulf %46, %50 : vector<8x8xf32>
    %cst_26 = arith.constant dense<0.000000e+00> : vector<8x8xf32>
    %52 = tpu.matmul %51, %38, %cst_26 {dimension_numbers = #tpu.dot_dimension_numbers<[1], [0], [0], [1], [0, 0, 1, 1], [], []>} : vector<8x8xf32>, vector<8x8xf32>, vector<8x8xf32> -> vector<8x8xf32>
    %53 = vector.extract_strided_slice %16 {offsets = [8, 0], sizes = [8, 32], strides = [1, 1]} : vector<32x32xf32> to vector<8x32xf32>
    %cst_27 = arith.constant dense<0.000000e+00> : vector<8x32xf32>
    %54 = tpu.matmul %52, %53, %cst_27 {dimension_numbers = #tpu.dot_dimension_numbers<[1], [0], [0], [1], [0, 0, 1, 1], [], []>} : vector<8x8xf32>, vector<8x32xf32>, vector<8x32xf32> -> vector<8x32xf32>
    %55 = arith.addf %35, %54 : vector<8x32xf32>
    %56 = vector.extract_strided_slice %14 {offsets = [0, 16], sizes = [8, 8], strides = [1, 1]} : vector<16x96xf32> to vector<8x8xf32>
    %57 = vector.extract_strided_slice %14 {offsets = [0, 48], sizes = [8, 8], strides = [1, 1]} : vector<16x96xf32> to vector<8x8xf32>
    %58 = vector.extract_strided_slice %14 {offsets = [0, 80], sizes = [8, 8], strides = [1, 1]} : vector<16x96xf32> to vector<8x8xf32>
    %cst_28 = arith.constant dense<0.000000e+00> : vector<8x8xf32>
    %59 = tpu.matmul %56, %57, %cst_28 {dimension_numbers = #tpu.dot_dimension_numbers<[1], [1], [0], [0], [0, 0, 1, 0], [], []>} : vector<8x8xf32>, vector<8x8xf32>, vector<8x8xf32> -> vector<8x8xf32>
    %cst_29 = arith.constant 0.353553385 : f32
    %60 = vector.broadcast %cst_29 : f32 to vector<8x8xf32>
    %61 = arith.mulf %59, %60 : vector<8x8xf32>
    %cst_30 = arith.constant dense<0xFF800000> : vector<8xf32>
    %62 = vector.multi_reduction <maximumf>, %61, %cst_30 [1] : vector<8x8xf32> to vector<8xf32>
    %63 = vector.shape_cast %62 : vector<8xf32> to vector<8x1xf32>
    %64 = vector.broadcast %63 : vector<8x1xf32> to vector<8x8xf32>
    %65 = arith.subf %61, %64 : vector<8x8xf32>
    %66 = math.exp %65 : vector<8x8xf32>
    %cst_31 = arith.constant dense<0.000000e+00> : vector<8xf32>
    %67 = vector.multi_reduction <add>, %66, %cst_31 [1] : vector<8x8xf32> to vector<8xf32>
    %68 = vector.shape_cast %67 : vector<8xf32> to vector<8x1xf32>
    %69 = tpu.reciprocal %68 {approx = true} : vector<8x1xf32> -> vector<8x1xf32>
    %70 = vector.broadcast %69 : vector<8x1xf32> to vector<8x8xf32>
    %71 = arith.mulf %66, %70 : vector<8x8xf32>
    %cst_32 = arith.constant dense<0.000000e+00> : vector<8x8xf32>
    %72 = tpu.matmul %71, %58, %cst_32 {dimension_numbers = #tpu.dot_dimension_numbers<[1], [0], [0], [1], [0, 0, 1, 1], [], []>} : vector<8x8xf32>, vector<8x8xf32>, vector<8x8xf32> -> vector<8x8xf32>
    %73 = vector.extract_strided_slice %16 {offsets = [16, 0], sizes = [8, 32], strides = [1, 1]} : vector<32x32xf32> to vector<8x32xf32>
    %cst_33 = arith.constant dense<0.000000e+00> : vector<8x32xf32>
    %74 = tpu.matmul %72, %73, %cst_33 {dimension_numbers = #tpu.dot_dimension_numbers<[1], [0], [0], [1], [0, 0, 1, 1], [], []>} : vector<8x8xf32>, vector<8x32xf32>, vector<8x32xf32> -> vector<8x32xf32>
    %75 = arith.addf %55, %74 : vector<8x32xf32>
    %76 = vector.extract_strided_slice %14 {offsets = [0, 24], sizes = [8, 8], strides = [1, 1]} : vector<16x96xf32> to vector<8x8xf32>
    %77 = vector.extract_strided_slice %14 {offsets = [0, 56], sizes = [8, 8], strides = [1, 1]} : vector<16x96xf32> to vector<8x8xf32>
    %78 = vector.extract_strided_slice %14 {offsets = [0, 88], sizes = [8, 8], strides = [1, 1]} : vector<16x96xf32> to vector<8x8xf32>
    %cst_34 = arith.constant dense<0.000000e+00> : vector<8x8xf32>
    %79 = tpu.matmul %76, %77, %cst_34 {dimension_numbers = #tpu.dot_dimension_numbers<[1], [1], [0], [0], [0, 0, 1, 0], [], []>} : vector<8x8xf32>, vector<8x8xf32>, vector<8x8xf32> -> vector<8x8xf32>
    %cst_35 = arith.constant 0.353553385 : f32
    %80 = vector.broadcast %cst_35 : f32 to vector<8x8xf32>
    %81 = arith.mulf %79, %80 : vector<8x8xf32>
    %cst_36 = arith.constant dense<0xFF800000> : vector<8xf32>
    %82 = vector.multi_reduction <maximumf>, %81, %cst_36 [1] : vector<8x8xf32> to vector<8xf32>
    %83 = vector.shape_cast %82 : vector<8xf32> to vector<8x1xf32>
    %84 = vector.broadcast %83 : vector<8x1xf32> to vector<8x8xf32>
    %85 = arith.subf %81, %84 : vector<8x8xf32>
    %86 = math.exp %85 : vector<8x8xf32>
    %cst_37 = arith.constant dense<0.000000e+00> : vector<8xf32>
    %87 = vector.multi_reduction <add>, %86, %cst_37 [1] : vector<8x8xf32> to vector<8xf32>
    %88 = vector.shape_cast %87 : vector<8xf32> to vector<8x1xf32>
    %89 = tpu.reciprocal %88 {approx = true} : vector<8x1xf32> -> vector<8x1xf32>
    %90 = vector.broadcast %89 : vector<8x1xf32> to vector<8x8xf32>
    %91 = arith.mulf %86, %90 : vector<8x8xf32>
    %cst_38 = arith.constant dense<0.000000e+00> : vector<8x8xf32>
    %92 = tpu.matmul %91, %78, %cst_38 {dimension_numbers = #tpu.dot_dimension_numbers<[1], [0], [0], [1], [0, 0, 1, 1], [], []>} : vector<8x8xf32>, vector<8x8xf32>, vector<8x8xf32> -> vector<8x8xf32>
    %93 = vector.extract_strided_slice %16 {offsets = [24, 0], sizes = [8, 32], strides = [1, 1]} : vector<32x32xf32> to vector<8x32xf32>
    %cst_39 = arith.constant dense<0.000000e+00> : vector<8x32xf32>
    %94 = tpu.matmul %92, %93, %cst_39 {dimension_numbers = #tpu.dot_dimension_numbers<[1], [0], [0], [1], [0, 0, 1, 1], [], []>} : vector<8x8xf32>, vector<8x32xf32>, vector<8x32xf32> -> vector<8x32xf32>
    %95 = arith.addf %75, %94 : vector<8x32xf32>
    %96 = vector.extract_strided_slice %14 {offsets = [8, 0], sizes = [8, 8], strides = [1, 1]} : vector<16x96xf32> to vector<8x8xf32>
    %97 = vector.extract_strided_slice %14 {offsets = [8, 32], sizes = [8, 8], strides = [1, 1]} : vector<16x96xf32> to vector<8x8xf32>
    %98 = vector.extract_strided_slice %14 {offsets = [8, 64], sizes = [8, 8], strides = [1, 1]} : vector<16x96xf32> to vector<8x8xf32>
    %cst_40 = arith.constant dense<0.000000e+00> : vector<8x8xf32>
    %99 = tpu.matmul %96, %97, %cst_40 {dimension_numbers = #tpu.dot_dimension_numbers<[1], [1], [0], [0], [0, 0, 1, 0], [], []>} : vector<8x8xf32>, vector<8x8xf32>, vector<8x8xf32> -> vector<8x8xf32>
    %cst_41 = arith.constant 0.353553385 : f32
    %100 = vector.broadcast %cst_41 : f32 to vector<8x8xf32>
    %101 = arith.mulf %99, %100 : vector<8x8xf32>
    %cst_42 = arith.constant dense<0xFF800000> : vector<8xf32>
    %102 = vector.multi_reduction <maximumf>, %101, %cst_42 [1] : vector<8x8xf32> to vector<8xf32>
    %103 = vector.shape_cast %102 : vector<8xf32> to vector<8x1xf32>
    %104 = vector.broadcast %103 : vector<8x1xf32> to vector<8x8xf32>
    %105 = arith.subf %101, %104 : vector<8x8xf32>
    %106 = math.exp %105 : vector<8x8xf32>
    %cst_43 = arith.constant dense<0.000000e+00> : vector<8xf32>
    %107 = vector.multi_reduction <add>, %106, %cst_43 [1] : vector<8x8xf32> to vector<8xf32>
    %108 = vector.shape_cast %107 : vector<8xf32> to vector<8x1xf32>
    %109 = tpu.reciprocal %108 {approx = true} : vector<8x1xf32> -> vector<8x1xf32>
    %110 = vector.broadcast %109 : vector<8x1xf32> to vector<8x8xf32>
    %111 = arith.mulf %106, %110 : vector<8x8xf32>
    %cst_44 = arith.constant dense<0.000000e+00> : vector<8x8xf32>
    %112 = tpu.matmul %111, %98, %cst_44 {dimension_numbers = #tpu.dot_dimension_numbers<[1], [0], [0], [1], [0, 0, 1, 1], [], []>} : vector<8x8xf32>, vector<8x8xf32>, vector<8x8xf32> -> vector<8x8xf32>
    %113 = vector.extract_strided_slice %16 {offsets = [0, 0], sizes = [8, 32], strides = [1, 1]} : vector<32x32xf32> to vector<8x32xf32>
    %cst_45 = arith.constant dense<0.000000e+00> : vector<8x32xf32>
    %114 = tpu.matmul %112, %113, %cst_45 {dimension_numbers = #tpu.dot_dimension_numbers<[1], [0], [0], [1], [0, 0, 1, 1], [], []>} : vector<8x8xf32>, vector<8x32xf32>, vector<8x32xf32> -> vector<8x32xf32>
    %115 = vector.extract_strided_slice %14 {offsets = [8, 8], sizes = [8, 8], strides = [1, 1]} : vector<16x96xf32> to vector<8x8xf32>
    %116 = vector.extract_strided_slice %14 {offsets = [8, 40], sizes = [8, 8], strides = [1, 1]} : vector<16x96xf32> to vector<8x8xf32>
    %117 = vector.extract_strided_slice %14 {offsets = [8, 72], sizes = [8, 8], strides = [1, 1]} : vector<16x96xf32> to vector<8x8xf32>
    %cst_46 = arith.constant dense<0.000000e+00> : vector<8x8xf32>
    %118 = tpu.matmul %115, %116, %cst_46 {dimension_numbers = #tpu.dot_dimension_numbers<[1], [1], [0], [0], [0, 0, 1, 0], [], []>} : vector<8x8xf32>, vector<8x8xf32>, vector<8x8xf32> -> vector<8x8xf32>
    %cst_47 = arith.constant 0.353553385 : f32
    %119 = vector.broadcast %cst_47 : f32 to vector<8x8xf32>
    %120 = arith.mulf %118, %119 : vector<8x8xf32>
    %cst_48 = arith.constant dense<0xFF800000> : vector<8xf32>
    %121 = vector.multi_reduction <maximumf>, %120, %cst_48 [1] : vector<8x8xf32> to vector<8xf32>
    %122 = vector.shape_cast %121 : vector<8xf32> to vector<8x1xf32>
    %123 = vector.broadcast %122 : vector<8x1xf32> to vector<8x8xf32>
    %124 = arith.subf %120, %123 : vector<8x8xf32>
    %125 = math.exp %124 : vector<8x8xf32>
    %cst_49 = arith.constant dense<0.000000e+00> : vector<8xf32>
    %126 = vector.multi_reduction <add>, %125, %cst_49 [1] : vector<8x8xf32> to vector<8xf32>
    %127 = vector.shape_cast %126 : vector<8xf32> to vector<8x1xf32>
    %128 = tpu.reciprocal %127 {approx = true} : vector<8x1xf32> -> vector<8x1xf32>
    %129 = vector.broadcast %128 : vector<8x1xf32> to vector<8x8xf32>
    %130 = arith.mulf %125, %129 : vector<8x8xf32>
    %cst_50 = arith.constant dense<0.000000e+00> : vector<8x8xf32>
    %131 = tpu.matmul %130, %117, %cst_50 {dimension_numbers = #tpu.dot_dimension_numbers<[1], [0], [0], [1], [0, 0, 1, 1], [], []>} : vector<8x8xf32>, vector<8x8xf32>, vector<8x8xf32> -> vector<8x8xf32>
    %132 = vector.extract_strided_slice %16 {offsets = [8, 0], sizes = [8, 32], strides = [1, 1]} : vector<32x32xf32> to vector<8x32xf32>
    %cst_51 = arith.constant dense<0.000000e+00> : vector<8x32xf32>
    %133 = tpu.matmul %131, %132, %cst_51 {dimension_numbers = #tpu.dot_dimension_numbers<[1], [0], [0], [1], [0, 0, 1, 1], [], []>} : vector<8x8xf32>, vector<8x32xf32>, vector<8x32xf32> -> vector<8x32xf32>
    %134 = arith.addf %114, %133 : vector<8x32xf32>
    %135 = vector.extract_strided_slice %14 {offsets = [8, 16], sizes = [8, 8], strides = [1, 1]} : vector<16x96xf32> to vector<8x8xf32>
    %136 = vector.extract_strided_slice %14 {offsets = [8, 48], sizes = [8, 8], strides = [1, 1]} : vector<16x96xf32> to vector<8x8xf32>
    %137 = vector.extract_strided_slice %14 {offsets = [8, 80], sizes = [8, 8], strides = [1, 1]} : vector<16x96xf32> to vector<8x8xf32>
    %cst_52 = arith.constant dense<0.000000e+00> : vector<8x8xf32>
    %138 = tpu.matmul %135, %136, %cst_52 {dimension_numbers = #tpu.dot_dimension_numbers<[1], [1], [0], [0], [0, 0, 1, 0], [], []>} : vector<8x8xf32>, vector<8x8xf32>, vector<8x8xf32> -> vector<8x8xf32>
    %cst_53 = arith.constant 0.353553385 : f32
    %139 = vector.broadcast %cst_53 : f32 to vector<8x8xf32>
    %140 = arith.mulf %138, %139 : vector<8x8xf32>
    %cst_54 = arith.constant dense<0xFF800000> : vector<8xf32>
    %141 = vector.multi_reduction <maximumf>, %140, %cst_54 [1] : vector<8x8xf32> to vector<8xf32>
    %142 = vector.shape_cast %141 : vector<8xf32> to vector<8x1xf32>
    %143 = vector.broadcast %142 : vector<8x1xf32> to vector<8x8xf32>
    %144 = arith.subf %140, %143 : vector<8x8xf32>
    %145 = math.exp %144 : vector<8x8xf32>
    %cst_55 = arith.constant dense<0.000000e+00> : vector<8xf32>
    %146 = vector.multi_reduction <add>, %145, %cst_55 [1] : vector<8x8xf32> to vector<8xf32>
    %147 = vector.shape_cast %146 : vector<8xf32> to vector<8x1xf32>
    %148 = tpu.reciprocal %147 {approx = true} : vector<8x1xf32> -> vector<8x1xf32>
    %149 = vector.broadcast %148 : vector<8x1xf32> to vector<8x8xf32>
    %150 = arith.mulf %145, %149 : vector<8x8xf32>
    %cst_56 = arith.constant dense<0.000000e+00> : vector<8x8xf32>
    %151 = tpu.matmul %150, %137, %cst_56 {dimension_numbers = #tpu.dot_dimension_numbers<[1], [0], [0], [1], [0, 0, 1, 1], [], []>} : vector<8x8xf32>, vector<8x8xf32>, vector<8x8xf32> -> vector<8x8xf32>
    %152 = vector.extract_strided_slice %16 {offsets = [16, 0], sizes = [8, 32], strides = [1, 1]} : vector<32x32xf32> to vector<8x32xf32>
    %cst_57 = arith.constant dense<0.000000e+00> : vector<8x32xf32>
    %153 = tpu.matmul %151, %152, %cst_57 {dimension_numbers = #tpu.dot_dimension_numbers<[1], [0], [0], [1], [0, 0, 1, 1], [], []>} : vector<8x8xf32>, vector<8x32xf32>, vector<8x32xf32> -> vector<8x32xf32>
    %154 = arith.addf %134, %153 : vector<8x32xf32>
    %155 = vector.extract_strided_slice %14 {offsets = [8, 24], sizes = [8, 8], strides = [1, 1]} : vector<16x96xf32> to vector<8x8xf32>
    %156 = vector.extract_strided_slice %14 {offsets = [8, 56], sizes = [8, 8], strides = [1, 1]} : vector<16x96xf32> to vector<8x8xf32>
    %157 = vector.extract_strided_slice %14 {offsets = [8, 88], sizes = [8, 8], strides = [1, 1]} : vector<16x96xf32> to vector<8x8xf32>
    %cst_58 = arith.constant dense<0.000000e+00> : vector<8x8xf32>
    %158 = tpu.matmul %155, %156, %cst_58 {dimension_numbers = #tpu.dot_dimension_numbers<[1], [1], [0], [0], [0, 0, 1, 0], [], []>} : vector<8x8xf32>, vector<8x8xf32>, vector<8x8xf32> -> vector<8x8xf32>
    %cst_59 = arith.constant 0.353553385 : f32
    %159 = vector.broadcast %cst_59 : f32 to vector<8x8xf32>
    %160 = arith.mulf %158, %159 : vector<8x8xf32>
    %cst_60 = arith.constant dense<0xFF800000> : vector<8xf32>
    %161 = vector.multi_reduction <maximumf>, %160, %cst_60 [1] : vector<8x8xf32> to vector<8xf32>
    %162 = vector.shape_cast %161 : vector<8xf32> to vector<8x1xf32>
    %163 = vector.broadcast %162 : vector<8x1xf32> to vector<8x8xf32>
    %164 = arith.subf %160, %163 : vector<8x8xf32>
    %165 = math.exp %164 : vector<8x8xf32>
    %cst_61 = arith.constant dense<0.000000e+00> : vector<8xf32>
    %166 = vector.multi_reduction <add>, %165, %cst_61 [1] : vector<8x8xf32> to vector<8xf32>
    %167 = vector.shape_cast %166 : vector<8xf32> to vector<8x1xf32>
    %168 = tpu.reciprocal %167 {approx = true} : vector<8x1xf32> -> vector<8x1xf32>
    %169 = vector.broadcast %168 : vector<8x1xf32> to vector<8x8xf32>
    %170 = arith.mulf %165, %169 : vector<8x8xf32>
    %cst_62 = arith.constant dense<0.000000e+00> : vector<8x8xf32>
    %171 = tpu.matmul %170, %157, %cst_62 {dimension_numbers = #tpu.dot_dimension_numbers<[1], [0], [0], [1], [0, 0, 1, 1], [], []>} : vector<8x8xf32>, vector<8x8xf32>, vector<8x8xf32> -> vector<8x8xf32>
    %172 = vector.extract_strided_slice %16 {offsets = [24, 0], sizes = [8, 32], strides = [1, 1]} : vector<32x32xf32> to vector<8x32xf32>
    %cst_63 = arith.constant dense<0.000000e+00> : vector<8x32xf32>
    %173 = tpu.matmul %171, %172, %cst_63 {dimension_numbers = #tpu.dot_dimension_numbers<[1], [0], [0], [1], [0, 0, 1, 1], [], []>} : vector<8x8xf32>, vector<8x32xf32>, vector<8x32xf32> -> vector<8x32xf32>
    %174 = arith.addf %154, %173 : vector<8x32xf32>
    %175 = tpu.concatenate %95, %174 in 0 : vector<8x32xf32>, vector<8x32xf32> -> vector<16x32xf32>
    %c0_64 = arith.constant 0 : index
    %c0_65 = arith.constant 0 : index
    %c0_66 = arith.constant 0 : index
    %176 = vector.load %arg6[%c0_64, %c0_65, %c0_66] : memref<2x1x32xf32, #tpu.memory_space<vmem>>, vector<1x1x32xf32>
    %177 = vector.shape_cast %176 : vector<1x1x32xf32> to vector<1x32xf32>
    %178 = vector.broadcast %177 : vector<1x32xf32> to vector<16x32xf32>
    %179 = arith.addf %175, %178 : vector<16x32xf32>
    %180 = arith.addf %7, %179 : vector<16x32xf32>
    %c0_67 = arith.constant 0 : index
    %c0_68 = arith.constant 0 : index
    %c0_69 = arith.constant 0 : index
    %181 = vector.load %arg7[%c0_67, %c0_68, %c0_69] : memref<2x1x32xf32, #tpu.memory_space<vmem>>, vector<1x1x32xf32>
    %182 = vector.shape_cast %181 : vector<1x1x32xf32> to vector<1x32xf32>
    %c0_70 = arith.constant 0 : index
    %c0_71 = arith.constant 0 : index
    %c0_72 = arith.constant 0 : index
    %183 = vector.load %arg8[%c0_70, %c0_71, %c0_72] : memref<2x1x32xf32, #tpu.memory_space<vmem>>, vector<1x1x32xf32>
    %184 = vector.shape_cast %183 : vector<1x1x32xf32> to vector<1x32xf32>
    %cst_73 = arith.constant dense<0.000000e+00> : vector<16xf32>
    %185 = vector.multi_reduction <add>, %180, %cst_73 [1] : vector<16x32xf32> to vector<16xf32>
    %186 = vector.shape_cast %185 : vector<16xf32> to vector<16x1xf32>
    %cst_74 = arith.constant 3.200000e+01 : f32
    %187 = vector.broadcast %cst_74 : f32 to vector<16x1xf32>
    %188 = arith.divf %186, %187 : vector<16x1xf32>
    %189 = vector.broadcast %188 : vector<16x1xf32> to vector<16x32xf32>
    %190 = arith.subf %180, %189 : vector<16x32xf32>
    %191 = arith.mulf %190, %190 : vector<16x32xf32>
    %cst_75 = arith.constant dense<0.000000e+00> : vector<16xf32>
    %192 = vector.multi_reduction <add>, %191, %cst_75 [1] : vector<16x32xf32> to vector<16xf32>
    %193 = vector.shape_cast %192 : vector<16xf32> to vector<16x1xf32>
    %cst_76 = arith.constant 3.200000e+01 : f32
    %194 = vector.broadcast %cst_76 : f32 to vector<16x1xf32>
    %195 = arith.divf %193, %194 : vector<16x1xf32>
    %196 = vector.broadcast %188 : vector<16x1xf32> to vector<16x32xf32>
    %197 = arith.subf %180, %196 : vector<16x32xf32>
    %cst_77 = arith.constant 9.99999974E-6 : f32
    %198 = vector.broadcast %cst_77 : f32 to vector<16x1xf32>
    %199 = arith.addf %195, %198 : vector<16x1xf32>
    %200 = math.rsqrt %199 : vector<16x1xf32>
    %201 = vector.broadcast %200 : vector<16x1xf32> to vector<16x32xf32>
    %202 = arith.mulf %197, %201 : vector<16x32xf32>
    %203 = vector.broadcast %182 : vector<1x32xf32> to vector<16x32xf32>
    %204 = arith.mulf %202, %203 : vector<16x32xf32>
    %205 = vector.broadcast %184 : vector<1x32xf32> to vector<16x32xf32>
    %206 = arith.addf %204, %205 : vector<16x32xf32>
    %c0_78 = arith.constant 0 : index
    %c0_79 = arith.constant 0 : index
    %c0_80 = arith.constant 0 : index
    %207 = vector.load %arg9[%c0_78, %c0_79, %c0_80] : memref<2x32x128xf32, #tpu.memory_space<vmem>>, vector<1x32x128xf32>
    %208 = vector.shape_cast %207 : vector<1x32x128xf32> to vector<32x128xf32>
    %cst_81 = arith.constant dense<0.000000e+00> : vector<16x128xf32>
    %209 = tpu.matmul %206, %208, %cst_81 {dimension_numbers = #tpu.dot_dimension_numbers<[1], [0], [0], [1], [0, 0, 1, 1], [], []>} : vector<16x32xf32>, vector<32x128xf32>, vector<16x128xf32> -> vector<16x128xf32>
    %c0_82 = arith.constant 0 : index
    %c0_83 = arith.constant 0 : index
    %c0_84 = arith.constant 0 : index
    %210 = vector.load %arg10[%c0_82, %c0_83, %c0_84] : memref<2x1x128xf32, #tpu.memory_space<vmem>>, vector<1x1x128xf32>
    %211 = vector.shape_cast %210 : vector<1x1x128xf32> to vector<1x128xf32>
    %212 = vector.broadcast %211 : vector<1x128xf32> to vector<16x128xf32>
    %213 = arith.addf %209, %212 : vector<16x128xf32>
    %cst_85 = arith.constant 0.000000e+00 : f32
    %214 = vector.broadcast %cst_85 : f32 to vector<16x128xf32>
    %215 = arith.maximumf %213, %214 : vector<16x128xf32>
    %c0_86 = arith.constant 0 : index
    %c0_87 = arith.constant 0 : index
    %c0_88 = arith.constant 0 : index
    %216 = vector.load %arg11[%c0_86, %c0_87, %c0_88] : memref<2x128x32xf32, #tpu.memory_space<vmem>>, vector<1x128x32xf32>
    %217 = vector.shape_cast %216 : vector<1x128x32xf32> to vector<128x32xf32>
    %cst_89 = arith.constant dense<0.000000e+00> : vector<16x32xf32>
    %218 = tpu.matmul %215, %217, %cst_89 {dimension_numbers = #tpu.dot_dimension_numbers<[1], [0], [0], [1], [0, 0, 1, 1], [], []>} : vector<16x128xf32>, vector<128x32xf32>, vector<16x32xf32> -> vector<16x32xf32>
    %c0_90 = arith.constant 0 : index
    %c0_91 = arith.constant 0 : index
    %c0_92 = arith.constant 0 : index
    %219 = vector.load %arg12[%c0_90, %c0_91, %c0_92] : memref<2x1x32xf32, #tpu.memory_space<vmem>>, vector<1x1x32xf32>
    %220 = vector.shape_cast %219 : vector<1x1x32xf32> to vector<1x32xf32>
    %221 = vector.broadcast %220 : vector<1x32xf32> to vector<16x32xf32>
    %222 = arith.addf %218, %221 : vector<16x32xf32>
    %223 = arith.addf %206, %222 : vector<16x32xf32>
    %c0_93 = arith.constant 0 : index
    %c0_94 = arith.constant 0 : index
    %c0_95 = arith.constant 0 : index
    %224 = vector.load %arg13[%c0_93, %c0_94, %c0_95] : memref<2x1x32xf32, #tpu.memory_space<vmem>>, vector<1x1x32xf32>
    %225 = vector.shape_cast %224 : vector<1x1x32xf32> to vector<1x32xf32>
    %c0_96 = arith.constant 0 : index
    %c0_97 = arith.constant 0 : index
    %c0_98 = arith.constant 0 : index
    %226 = vector.load %arg14[%c0_96, %c0_97, %c0_98] : memref<2x1x32xf32, #tpu.memory_space<vmem>>, vector<1x1x32xf32>
    %227 = vector.shape_cast %226 : vector<1x1x32xf32> to vector<1x32xf32>
    %cst_99 = arith.constant dense<0.000000e+00> : vector<16xf32>
    %228 = vector.multi_reduction <add>, %223, %cst_99 [1] : vector<16x32xf32> to vector<16xf32>
    %229 = vector.shape_cast %228 : vector<16xf32> to vector<16x1xf32>
    %cst_100 = arith.constant 3.200000e+01 : f32
    %230 = vector.broadcast %cst_100 : f32 to vector<16x1xf32>
    %231 = arith.divf %229, %230 : vector<16x1xf32>
    %232 = vector.broadcast %231 : vector<16x1xf32> to vector<16x32xf32>
    %233 = arith.subf %223, %232 : vector<16x32xf32>
    %234 = arith.mulf %233, %233 : vector<16x32xf32>
    %cst_101 = arith.constant dense<0.000000e+00> : vector<16xf32>
    %235 = vector.multi_reduction <add>, %234, %cst_101 [1] : vector<16x32xf32> to vector<16xf32>
    %236 = vector.shape_cast %235 : vector<16xf32> to vector<16x1xf32>
    %cst_102 = arith.constant 3.200000e+01 : f32
    %237 = vector.broadcast %cst_102 : f32 to vector<16x1xf32>
    %238 = arith.divf %236, %237 : vector<16x1xf32>
    %239 = vector.broadcast %231 : vector<16x1xf32> to vector<16x32xf32>
    %240 = arith.subf %223, %239 : vector<16x32xf32>
    %cst_103 = arith.constant 9.99999974E-6 : f32
    %241 = vector.broadcast %cst_103 : f32 to vector<16x1xf32>
    %242 = arith.addf %238, %241 : vector<16x1xf32>
    %243 = math.rsqrt %242 : vector<16x1xf32>
    %244 = vector.broadcast %243 : vector<16x1xf32> to vector<16x32xf32>
    %245 = arith.mulf %240, %244 : vector<16x32xf32>
    %246 = vector.broadcast %225 : vector<1x32xf32> to vector<16x32xf32>
    %247 = arith.mulf %245, %246 : vector<16x32xf32>
    %248 = vector.broadcast %227 : vector<1x32xf32> to vector<16x32xf32>
    %249 = arith.addf %247, %248 : vector<16x32xf32>
    %c1 = arith.constant 1 : index
    %c0_104 = arith.constant 0 : index
    %c0_105 = arith.constant 0 : index
    %250 = vector.load %arg3[%c1, %c0_104, %c0_105] : memref<2x32x96xf32, #tpu.memory_space<vmem>>, vector<1x32x96xf32>
    %251 = vector.shape_cast %250 : vector<1x32x96xf32> to vector<32x96xf32>
    %cst_106 = arith.constant dense<0.000000e+00> : vector<16x96xf32>
    %252 = tpu.matmul %249, %251, %cst_106 {dimension_numbers = #tpu.dot_dimension_numbers<[1], [0], [0], [1], [0, 0, 1, 1], [], []>} : vector<16x32xf32>, vector<32x96xf32>, vector<16x96xf32> -> vector<16x96xf32>
    %c1_107 = arith.constant 1 : index
    %c0_108 = arith.constant 0 : index
    %c0_109 = arith.constant 0 : index
    %253 = vector.load %arg4[%c1_107, %c0_108, %c0_109] : memref<2x1x96xf32, #tpu.memory_space<vmem>>, vector<1x1x96xf32>
    %254 = vector.shape_cast %253 : vector<1x1x96xf32> to vector<1x96xf32>
    %255 = vector.broadcast %254 : vector<1x96xf32> to vector<16x96xf32>
    %256 = arith.addf %252, %255 : vector<16x96xf32>
    %c1_110 = arith.constant 1 : index
    %c0_111 = arith.constant 0 : index
    %c0_112 = arith.constant 0 : index
    %257 = vector.load %arg5[%c1_110, %c0_111, %c0_112] : memref<2x32x32xf32, #tpu.memory_space<vmem>>, vector<1x32x32xf32>
    %258 = vector.shape_cast %257 : vector<1x32x32xf32> to vector<32x32xf32>
    %259 = vector.extract_strided_slice %256 {offsets = [0, 0], sizes = [8, 8], strides = [1, 1]} : vector<16x96xf32> to vector<8x8xf32>
    %260 = vector.extract_strided_slice %256 {offsets = [0, 32], sizes = [8, 8], strides = [1, 1]} : vector<16x96xf32> to vector<8x8xf32>
    %261 = vector.extract_strided_slice %256 {offsets = [0, 64], sizes = [8, 8], strides = [1, 1]} : vector<16x96xf32> to vector<8x8xf32>
    %cst_113 = arith.constant dense<0.000000e+00> : vector<8x8xf32>
    %262 = tpu.matmul %259, %260, %cst_113 {dimension_numbers = #tpu.dot_dimension_numbers<[1], [1], [0], [0], [0, 0, 1, 0], [], []>} : vector<8x8xf32>, vector<8x8xf32>, vector<8x8xf32> -> vector<8x8xf32>
    %cst_114 = arith.constant 0.353553385 : f32
    %263 = vector.broadcast %cst_114 : f32 to vector<8x8xf32>
    %264 = arith.mulf %262, %263 : vector<8x8xf32>
    %cst_115 = arith.constant dense<0xFF800000> : vector<8xf32>
    %265 = vector.multi_reduction <maximumf>, %264, %cst_115 [1] : vector<8x8xf32> to vector<8xf32>
    %266 = vector.shape_cast %265 : vector<8xf32> to vector<8x1xf32>
    %267 = vector.broadcast %266 : vector<8x1xf32> to vector<8x8xf32>
    %268 = arith.subf %264, %267 : vector<8x8xf32>
    %269 = math.exp %268 : vector<8x8xf32>
    %cst_116 = arith.constant dense<0.000000e+00> : vector<8xf32>
    %270 = vector.multi_reduction <add>, %269, %cst_116 [1] : vector<8x8xf32> to vector<8xf32>
    %271 = vector.shape_cast %270 : vector<8xf32> to vector<8x1xf32>
    %272 = tpu.reciprocal %271 {approx = true} : vector<8x1xf32> -> vector<8x1xf32>
    %273 = vector.broadcast %272 : vector<8x1xf32> to vector<8x8xf32>
    %274 = arith.mulf %269, %273 : vector<8x8xf32>
    %cst_117 = arith.constant dense<0.000000e+00> : vector<8x8xf32>
    %275 = tpu.matmul %274, %261, %cst_117 {dimension_numbers = #tpu.dot_dimension_numbers<[1], [0], [0], [1], [0, 0, 1, 1], [], []>} : vector<8x8xf32>, vector<8x8xf32>, vector<8x8xf32> -> vector<8x8xf32>
    %276 = vector.extract_strided_slice %258 {offsets = [0, 0], sizes = [8, 32], strides = [1, 1]} : vector<32x32xf32> to vector<8x32xf32>
    %cst_118 = arith.constant dense<0.000000e+00> : vector<8x32xf32>
    %277 = tpu.matmul %275, %276, %cst_118 {dimension_numbers = #tpu.dot_dimension_numbers<[1], [0], [0], [1], [0, 0, 1, 1], [], []>} : vector<8x8xf32>, vector<8x32xf32>, vector<8x32xf32> -> vector<8x32xf32>
    %278 = vector.extract_strided_slice %256 {offsets = [0, 8], sizes = [8, 8], strides = [1, 1]} : vector<16x96xf32> to vector<8x8xf32>
    %279 = vector.extract_strided_slice %256 {offsets = [0, 40], sizes = [8, 8], strides = [1, 1]} : vector<16x96xf32> to vector<8x8xf32>
    %280 = vector.extract_strided_slice %256 {offsets = [0, 72], sizes = [8, 8], strides = [1, 1]} : vector<16x96xf32> to vector<8x8xf32>
    %cst_119 = arith.constant dense<0.000000e+00> : vector<8x8xf32>
    %281 = tpu.matmul %278, %279, %cst_119 {dimension_numbers = #tpu.dot_dimension_numbers<[1], [1], [0], [0], [0, 0, 1, 0], [], []>} : vector<8x8xf32>, vector<8x8xf32>, vector<8x8xf32> -> vector<8x8xf32>
    %cst_120 = arith.constant 0.353553385 : f32
    %282 = vector.broadcast %cst_120 : f32 to vector<8x8xf32>
    %283 = arith.mulf %281, %282 : vector<8x8xf32>
    %cst_121 = arith.constant dense<0xFF800000> : vector<8xf32>
    %284 = vector.multi_reduction <maximumf>, %283, %cst_121 [1] : vector<8x8xf32> to vector<8xf32>
    %285 = vector.shape_cast %284 : vector<8xf32> to vector<8x1xf32>
    %286 = vector.broadcast %285 : vector<8x1xf32> to vector<8x8xf32>
    %287 = arith.subf %283, %286 : vector<8x8xf32>
    %288 = math.exp %287 : vector<8x8xf32>
    %cst_122 = arith.constant dense<0.000000e+00> : vector<8xf32>
    %289 = vector.multi_reduction <add>, %288, %cst_122 [1] : vector<8x8xf32> to vector<8xf32>
    %290 = vector.shape_cast %289 : vector<8xf32> to vector<8x1xf32>
    %291 = tpu.reciprocal %290 {approx = true} : vector<8x1xf32> -> vector<8x1xf32>
    %292 = vector.broadcast %291 : vector<8x1xf32> to vector<8x8xf32>
    %293 = arith.mulf %288, %292 : vector<8x8xf32>
    %cst_123 = arith.constant dense<0.000000e+00> : vector<8x8xf32>
    %294 = tpu.matmul %293, %280, %cst_123 {dimension_numbers = #tpu.dot_dimension_numbers<[1], [0], [0], [1], [0, 0, 1, 1], [], []>} : vector<8x8xf32>, vector<8x8xf32>, vector<8x8xf32> -> vector<8x8xf32>
    %295 = vector.extract_strided_slice %258 {offsets = [8, 0], sizes = [8, 32], strides = [1, 1]} : vector<32x32xf32> to vector<8x32xf32>
    %cst_124 = arith.constant dense<0.000000e+00> : vector<8x32xf32>
    %296 = tpu.matmul %294, %295, %cst_124 {dimension_numbers = #tpu.dot_dimension_numbers<[1], [0], [0], [1], [0, 0, 1, 1], [], []>} : vector<8x8xf32>, vector<8x32xf32>, vector<8x32xf32> -> vector<8x32xf32>
    %297 = arith.addf %277, %296 : vector<8x32xf32>
    %298 = vector.extract_strided_slice %256 {offsets = [0, 16], sizes = [8, 8], strides = [1, 1]} : vector<16x96xf32> to vector<8x8xf32>
    %299 = vector.extract_strided_slice %256 {offsets = [0, 48], sizes = [8, 8], strides = [1, 1]} : vector<16x96xf32> to vector<8x8xf32>
    %300 = vector.extract_strided_slice %256 {offsets = [0, 80], sizes = [8, 8], strides = [1, 1]} : vector<16x96xf32> to vector<8x8xf32>
    %cst_125 = arith.constant dense<0.000000e+00> : vector<8x8xf32>
    %301 = tpu.matmul %298, %299, %cst_125 {dimension_numbers = #tpu.dot_dimension_numbers<[1], [1], [0], [0], [0, 0, 1, 0], [], []>} : vector<8x8xf32>, vector<8x8xf32>, vector<8x8xf32> -> vector<8x8xf32>
    %cst_126 = arith.constant 0.353553385 : f32
    %302 = vector.broadcast %cst_126 : f32 to vector<8x8xf32>
    %303 = arith.mulf %301, %302 : vector<8x8xf32>
    %cst_127 = arith.constant dense<0xFF800000> : vector<8xf32>
    %304 = vector.multi_reduction <maximumf>, %303, %cst_127 [1] : vector<8x8xf32> to vector<8xf32>
    %305 = vector.shape_cast %304 : vector<8xf32> to vector<8x1xf32>
    %306 = vector.broadcast %305 : vector<8x1xf32> to vector<8x8xf32>
    %307 = arith.subf %303, %306 : vector<8x8xf32>
    %308 = math.exp %307 : vector<8x8xf32>
    %cst_128 = arith.constant dense<0.000000e+00> : vector<8xf32>
    %309 = vector.multi_reduction <add>, %308, %cst_128 [1] : vector<8x8xf32> to vector<8xf32>
    %310 = vector.shape_cast %309 : vector<8xf32> to vector<8x1xf32>
    %311 = tpu.reciprocal %310 {approx = true} : vector<8x1xf32> -> vector<8x1xf32>
    %312 = vector.broadcast %311 : vector<8x1xf32> to vector<8x8xf32>
    %313 = arith.mulf %308, %312 : vector<8x8xf32>
    %cst_129 = arith.constant dense<0.000000e+00> : vector<8x8xf32>
    %314 = tpu.matmul %313, %300, %cst_129 {dimension_numbers = #tpu.dot_dimension_numbers<[1], [0], [0], [1], [0, 0, 1, 1], [], []>} : vector<8x8xf32>, vector<8x8xf32>, vector<8x8xf32> -> vector<8x8xf32>
    %315 = vector.extract_strided_slice %258 {offsets = [16, 0], sizes = [8, 32], strides = [1, 1]} : vector<32x32xf32> to vector<8x32xf32>
    %cst_130 = arith.constant dense<0.000000e+00> : vector<8x32xf32>
    %316 = tpu.matmul %314, %315, %cst_130 {dimension_numbers = #tpu.dot_dimension_numbers<[1], [0], [0], [1], [0, 0, 1, 1], [], []>} : vector<8x8xf32>, vector<8x32xf32>, vector<8x32xf32> -> vector<8x32xf32>
    %317 = arith.addf %297, %316 : vector<8x32xf32>
    %318 = vector.extract_strided_slice %256 {offsets = [0, 24], sizes = [8, 8], strides = [1, 1]} : vector<16x96xf32> to vector<8x8xf32>
    %319 = vector.extract_strided_slice %256 {offsets = [0, 56], sizes = [8, 8], strides = [1, 1]} : vector<16x96xf32> to vector<8x8xf32>
    %320 = vector.extract_strided_slice %256 {offsets = [0, 88], sizes = [8, 8], strides = [1, 1]} : vector<16x96xf32> to vector<8x8xf32>
    %cst_131 = arith.constant dense<0.000000e+00> : vector<8x8xf32>
    %321 = tpu.matmul %318, %319, %cst_131 {dimension_numbers = #tpu.dot_dimension_numbers<[1], [1], [0], [0], [0, 0, 1, 0], [], []>} : vector<8x8xf32>, vector<8x8xf32>, vector<8x8xf32> -> vector<8x8xf32>
    %cst_132 = arith.constant 0.353553385 : f32
    %322 = vector.broadcast %cst_132 : f32 to vector<8x8xf32>
    %323 = arith.mulf %321, %322 : vector<8x8xf32>
    %cst_133 = arith.constant dense<0xFF800000> : vector<8xf32>
    %324 = vector.multi_reduction <maximumf>, %323, %cst_133 [1] : vector<8x8xf32> to vector<8xf32>
    %325 = vector.shape_cast %324 : vector<8xf32> to vector<8x1xf32>
    %326 = vector.broadcast %325 : vector<8x1xf32> to vector<8x8xf32>
    %327 = arith.subf %323, %326 : vector<8x8xf32>
    %328 = math.exp %327 : vector<8x8xf32>
    %cst_134 = arith.constant dense<0.000000e+00> : vector<8xf32>
    %329 = vector.multi_reduction <add>, %328, %cst_134 [1] : vector<8x8xf32> to vector<8xf32>
    %330 = vector.shape_cast %329 : vector<8xf32> to vector<8x1xf32>
    %331 = tpu.reciprocal %330 {approx = true} : vector<8x1xf32> -> vector<8x1xf32>
    %332 = vector.broadcast %331 : vector<8x1xf32> to vector<8x8xf32>
    %333 = arith.mulf %328, %332 : vector<8x8xf32>
    %cst_135 = arith.constant dense<0.000000e+00> : vector<8x8xf32>
    %334 = tpu.matmul %333, %320, %cst_135 {dimension_numbers = #tpu.dot_dimension_numbers<[1], [0], [0], [1], [0, 0, 1, 1], [], []>} : vector<8x8xf32>, vector<8x8xf32>, vector<8x8xf32> -> vector<8x8xf32>
    %335 = vector.extract_strided_slice %258 {offsets = [24, 0], sizes = [8, 32], strides = [1, 1]} : vector<32x32xf32> to vector<8x32xf32>
    %cst_136 = arith.constant dense<0.000000e+00> : vector<8x32xf32>
    %336 = tpu.matmul %334, %335, %cst_136 {dimension_numbers = #tpu.dot_dimension_numbers<[1], [0], [0], [1], [0, 0, 1, 1], [], []>} : vector<8x8xf32>, vector<8x32xf32>, vector<8x32xf32> -> vector<8x32xf32>
    %337 = arith.addf %317, %336 : vector<8x32xf32>
    %338 = vector.extract_strided_slice %256 {offsets = [8, 0], sizes = [8, 8], strides = [1, 1]} : vector<16x96xf32> to vector<8x8xf32>
    %339 = vector.extract_strided_slice %256 {offsets = [8, 32], sizes = [8, 8], strides = [1, 1]} : vector<16x96xf32> to vector<8x8xf32>
    %340 = vector.extract_strided_slice %256 {offsets = [8, 64], sizes = [8, 8], strides = [1, 1]} : vector<16x96xf32> to vector<8x8xf32>
    %cst_137 = arith.constant dense<0.000000e+00> : vector<8x8xf32>
    %341 = tpu.matmul %338, %339, %cst_137 {dimension_numbers = #tpu.dot_dimension_numbers<[1], [1], [0], [0], [0, 0, 1, 0], [], []>} : vector<8x8xf32>, vector<8x8xf32>, vector<8x8xf32> -> vector<8x8xf32>
    %cst_138 = arith.constant 0.353553385 : f32
    %342 = vector.broadcast %cst_138 : f32 to vector<8x8xf32>
    %343 = arith.mulf %341, %342 : vector<8x8xf32>
    %cst_139 = arith.constant dense<0xFF800000> : vector<8xf32>
    %344 = vector.multi_reduction <maximumf>, %343, %cst_139 [1] : vector<8x8xf32> to vector<8xf32>
    %345 = vector.shape_cast %344 : vector<8xf32> to vector<8x1xf32>
    %346 = vector.broadcast %345 : vector<8x1xf32> to vector<8x8xf32>
    %347 = arith.subf %343, %346 : vector<8x8xf32>
    %348 = math.exp %347 : vector<8x8xf32>
    %cst_140 = arith.constant dense<0.000000e+00> : vector<8xf32>
    %349 = vector.multi_reduction <add>, %348, %cst_140 [1] : vector<8x8xf32> to vector<8xf32>
    %350 = vector.shape_cast %349 : vector<8xf32> to vector<8x1xf32>
    %351 = tpu.reciprocal %350 {approx = true} : vector<8x1xf32> -> vector<8x1xf32>
    %352 = vector.broadcast %351 : vector<8x1xf32> to vector<8x8xf32>
    %353 = arith.mulf %348, %352 : vector<8x8xf32>
    %cst_141 = arith.constant dense<0.000000e+00> : vector<8x8xf32>
    %354 = tpu.matmul %353, %340, %cst_141 {dimension_numbers = #tpu.dot_dimension_numbers<[1], [0], [0], [1], [0, 0, 1, 1], [], []>} : vector<8x8xf32>, vector<8x8xf32>, vector<8x8xf32> -> vector<8x8xf32>
    %355 = vector.extract_strided_slice %258 {offsets = [0, 0], sizes = [8, 32], strides = [1, 1]} : vector<32x32xf32> to vector<8x32xf32>
    %cst_142 = arith.constant dense<0.000000e+00> : vector<8x32xf32>
    %356 = tpu.matmul %354, %355, %cst_142 {dimension_numbers = #tpu.dot_dimension_numbers<[1], [0], [0], [1], [0, 0, 1, 1], [], []>} : vector<8x8xf32>, vector<8x32xf32>, vector<8x32xf32> -> vector<8x32xf32>
    %357 = vector.extract_strided_slice %256 {offsets = [8, 8], sizes = [8, 8], strides = [1, 1]} : vector<16x96xf32> to vector<8x8xf32>
    %358 = vector.extract_strided_slice %256 {offsets = [8, 40], sizes = [8, 8], strides = [1, 1]} : vector<16x96xf32> to vector<8x8xf32>
    %359 = vector.extract_strided_slice %256 {offsets = [8, 72], sizes = [8, 8], strides = [1, 1]} : vector<16x96xf32> to vector<8x8xf32>
    %cst_143 = arith.constant dense<0.000000e+00> : vector<8x8xf32>
    %360 = tpu.matmul %357, %358, %cst_143 {dimension_numbers = #tpu.dot_dimension_numbers<[1], [1], [0], [0], [0, 0, 1, 0], [], []>} : vector<8x8xf32>, vector<8x8xf32>, vector<8x8xf32> -> vector<8x8xf32>
    %cst_144 = arith.constant 0.353553385 : f32
    %361 = vector.broadcast %cst_144 : f32 to vector<8x8xf32>
    %362 = arith.mulf %360, %361 : vector<8x8xf32>
    %cst_145 = arith.constant dense<0xFF800000> : vector<8xf32>
    %363 = vector.multi_reduction <maximumf>, %362, %cst_145 [1] : vector<8x8xf32> to vector<8xf32>
    %364 = vector.shape_cast %363 : vector<8xf32> to vector<8x1xf32>
    %365 = vector.broadcast %364 : vector<8x1xf32> to vector<8x8xf32>
    %366 = arith.subf %362, %365 : vector<8x8xf32>
    %367 = math.exp %366 : vector<8x8xf32>
    %cst_146 = arith.constant dense<0.000000e+00> : vector<8xf32>
    %368 = vector.multi_reduction <add>, %367, %cst_146 [1] : vector<8x8xf32> to vector<8xf32>
    %369 = vector.shape_cast %368 : vector<8xf32> to vector<8x1xf32>
    %370 = tpu.reciprocal %369 {approx = true} : vector<8x1xf32> -> vector<8x1xf32>
    %371 = vector.broadcast %370 : vector<8x1xf32> to vector<8x8xf32>
    %372 = arith.mulf %367, %371 : vector<8x8xf32>
    %cst_147 = arith.constant dense<0.000000e+00> : vector<8x8xf32>
    %373 = tpu.matmul %372, %359, %cst_147 {dimension_numbers = #tpu.dot_dimension_numbers<[1], [0], [0], [1], [0, 0, 1, 1], [], []>} : vector<8x8xf32>, vector<8x8xf32>, vector<8x8xf32> -> vector<8x8xf32>
    %374 = vector.extract_strided_slice %258 {offsets = [8, 0], sizes = [8, 32], strides = [1, 1]} : vector<32x32xf32> to vector<8x32xf32>
    %cst_148 = arith.constant dense<0.000000e+00> : vector<8x32xf32>
    %375 = tpu.matmul %373, %374, %cst_148 {dimension_numbers = #tpu.dot_dimension_numbers<[1], [0], [0], [1], [0, 0, 1, 1], [], []>} : vector<8x8xf32>, vector<8x32xf32>, vector<8x32xf32> -> vector<8x32xf32>
    %376 = arith.addf %356, %375 : vector<8x32xf32>
    %377 = vector.extract_strided_slice %256 {offsets = [8, 16], sizes = [8, 8], strides = [1, 1]} : vector<16x96xf32> to vector<8x8xf32>
    %378 = vector.extract_strided_slice %256 {offsets = [8, 48], sizes = [8, 8], strides = [1, 1]} : vector<16x96xf32> to vector<8x8xf32>
    %379 = vector.extract_strided_slice %256 {offsets = [8, 80], sizes = [8, 8], strides = [1, 1]} : vector<16x96xf32> to vector<8x8xf32>
    %cst_149 = arith.constant dense<0.000000e+00> : vector<8x8xf32>
    %380 = tpu.matmul %377, %378, %cst_149 {dimension_numbers = #tpu.dot_dimension_numbers<[1], [1], [0], [0], [0, 0, 1, 0], [], []>} : vector<8x8xf32>, vector<8x8xf32>, vector<8x8xf32> -> vector<8x8xf32>
    %cst_150 = arith.constant 0.353553385 : f32
    %381 = vector.broadcast %cst_150 : f32 to vector<8x8xf32>
    %382 = arith.mulf %380, %381 : vector<8x8xf32>
    %cst_151 = arith.constant dense<0xFF800000> : vector<8xf32>
    %383 = vector.multi_reduction <maximumf>, %382, %cst_151 [1] : vector<8x8xf32> to vector<8xf32>
    %384 = vector.shape_cast %383 : vector<8xf32> to vector<8x1xf32>
    %385 = vector.broadcast %384 : vector<8x1xf32> to vector<8x8xf32>
    %386 = arith.subf %382, %385 : vector<8x8xf32>
    %387 = math.exp %386 : vector<8x8xf32>
    %cst_152 = arith.constant dense<0.000000e+00> : vector<8xf32>
    %388 = vector.multi_reduction <add>, %387, %cst_152 [1] : vector<8x8xf32> to vector<8xf32>
    %389 = vector.shape_cast %388 : vector<8xf32> to vector<8x1xf32>
    %390 = tpu.reciprocal %389 {approx = true} : vector<8x1xf32> -> vector<8x1xf32>
    %391 = vector.broadcast %390 : vector<8x1xf32> to vector<8x8xf32>
    %392 = arith.mulf %387, %391 : vector<8x8xf32>
    %cst_153 = arith.constant dense<0.000000e+00> : vector<8x8xf32>
    %393 = tpu.matmul %392, %379, %cst_153 {dimension_numbers = #tpu.dot_dimension_numbers<[1], [0], [0], [1], [0, 0, 1, 1], [], []>} : vector<8x8xf32>, vector<8x8xf32>, vector<8x8xf32> -> vector<8x8xf32>
    %394 = vector.extract_strided_slice %258 {offsets = [16, 0], sizes = [8, 32], strides = [1, 1]} : vector<32x32xf32> to vector<8x32xf32>
    %cst_154 = arith.constant dense<0.000000e+00> : vector<8x32xf32>
    %395 = tpu.matmul %393, %394, %cst_154 {dimension_numbers = #tpu.dot_dimension_numbers<[1], [0], [0], [1], [0, 0, 1, 1], [], []>} : vector<8x8xf32>, vector<8x32xf32>, vector<8x32xf32> -> vector<8x32xf32>
    %396 = arith.addf %376, %395 : vector<8x32xf32>
    %397 = vector.extract_strided_slice %256 {offsets = [8, 24], sizes = [8, 8], strides = [1, 1]} : vector<16x96xf32> to vector<8x8xf32>
    %398 = vector.extract_strided_slice %256 {offsets = [8, 56], sizes = [8, 8], strides = [1, 1]} : vector<16x96xf32> to vector<8x8xf32>
    %399 = vector.extract_strided_slice %256 {offsets = [8, 88], sizes = [8, 8], strides = [1, 1]} : vector<16x96xf32> to vector<8x8xf32>
    %cst_155 = arith.constant dense<0.000000e+00> : vector<8x8xf32>
    %400 = tpu.matmul %397, %398, %cst_155 {dimension_numbers = #tpu.dot_dimension_numbers<[1], [1], [0], [0], [0, 0, 1, 0], [], []>} : vector<8x8xf32>, vector<8x8xf32>, vector<8x8xf32> -> vector<8x8xf32>
    %cst_156 = arith.constant 0.353553385 : f32
    %401 = vector.broadcast %cst_156 : f32 to vector<8x8xf32>
    %402 = arith.mulf %400, %401 : vector<8x8xf32>
    %cst_157 = arith.constant dense<0xFF800000> : vector<8xf32>
    %403 = vector.multi_reduction <maximumf>, %402, %cst_157 [1] : vector<8x8xf32> to vector<8xf32>
    %404 = vector.shape_cast %403 : vector<8xf32> to vector<8x1xf32>
    %405 = vector.broadcast %404 : vector<8x1xf32> to vector<8x8xf32>
    %406 = arith.subf %402, %405 : vector<8x8xf32>
    %407 = math.exp %406 : vector<8x8xf32>
    %cst_158 = arith.constant dense<0.000000e+00> : vector<8xf32>
    %408 = vector.multi_reduction <add>, %407, %cst_158 [1] : vector<8x8xf32> to vector<8xf32>
    %409 = vector.shape_cast %408 : vector<8xf32> to vector<8x1xf32>
    %410 = tpu.reciprocal %409 {approx = true} : vector<8x1xf32> -> vector<8x1xf32>
    %411 = vector.broadcast %410 : vector<8x1xf32> to vector<8x8xf32>
    %412 = arith.mulf %407, %411 : vector<8x8xf32>
    %cst_159 = arith.constant dense<0.000000e+00> : vector<8x8xf32>
    %413 = tpu.matmul %412, %399, %cst_159 {dimension_numbers = #tpu.dot_dimension_numbers<[1], [0], [0], [1], [0, 0, 1, 1], [], []>} : vector<8x8xf32>, vector<8x8xf32>, vector<8x8xf32> -> vector<8x8xf32>
    %414 = vector.extract_strided_slice %258 {offsets = [24, 0], sizes = [8, 32], strides = [1, 1]} : vector<32x32xf32> to vector<8x32xf32>
    %cst_160 = arith.constant dense<0.000000e+00> : vector<8x32xf32>
    %415 = tpu.matmul %413, %414, %cst_160 {dimension_numbers = #tpu.dot_dimension_numbers<[1], [0], [0], [1], [0, 0, 1, 1], [], []>} : vector<8x8xf32>, vector<8x32xf32>, vector<8x32xf32> -> vector<8x32xf32>
    %416 = arith.addf %396, %415 : vector<8x32xf32>
    %417 = tpu.concatenate %337, %416 in 0 : vector<8x32xf32>, vector<8x32xf32> -> vector<16x32xf32>
    %c1_161 = arith.constant 1 : index
    %c0_162 = arith.constant 0 : index
    %c0_163 = arith.constant 0 : index
    %418 = vector.load %arg6[%c1_161, %c0_162, %c0_163] : memref<2x1x32xf32, #tpu.memory_space<vmem>>, vector<1x1x32xf32>
    %419 = vector.shape_cast %418 : vector<1x1x32xf32> to vector<1x32xf32>
    %420 = vector.broadcast %419 : vector<1x32xf32> to vector<16x32xf32>
    %421 = arith.addf %417, %420 : vector<16x32xf32>
    %422 = arith.addf %249, %421 : vector<16x32xf32>
    %c1_164 = arith.constant 1 : index
    %c0_165 = arith.constant 0 : index
    %c0_166 = arith.constant 0 : index
    %423 = vector.load %arg7[%c1_164, %c0_165, %c0_166] : memref<2x1x32xf32, #tpu.memory_space<vmem>>, vector<1x1x32xf32>
    %424 = vector.shape_cast %423 : vector<1x1x32xf32> to vector<1x32xf32>
    %c1_167 = arith.constant 1 : index
    %c0_168 = arith.constant 0 : index
    %c0_169 = arith.constant 0 : index
    %425 = vector.load %arg8[%c1_167, %c0_168, %c0_169] : memref<2x1x32xf32, #tpu.memory_space<vmem>>, vector<1x1x32xf32>
    %426 = vector.shape_cast %425 : vector<1x1x32xf32> to vector<1x32xf32>
    %cst_170 = arith.constant dense<0.000000e+00> : vector<16xf32>
    %427 = vector.multi_reduction <add>, %422, %cst_170 [1] : vector<16x32xf32> to vector<16xf32>
    %428 = vector.shape_cast %427 : vector<16xf32> to vector<16x1xf32>
    %cst_171 = arith.constant 3.200000e+01 : f32
    %429 = vector.broadcast %cst_171 : f32 to vector<16x1xf32>
    %430 = arith.divf %428, %429 : vector<16x1xf32>
    %431 = vector.broadcast %430 : vector<16x1xf32> to vector<16x32xf32>
    %432 = arith.subf %422, %431 : vector<16x32xf32>
    %433 = arith.mulf %432, %432 : vector<16x32xf32>
    %cst_172 = arith.constant dense<0.000000e+00> : vector<16xf32>
    %434 = vector.multi_reduction <add>, %433, %cst_172 [1] : vector<16x32xf32> to vector<16xf32>
    %435 = vector.shape_cast %434 : vector<16xf32> to vector<16x1xf32>
    %cst_173 = arith.constant 3.200000e+01 : f32
    %436 = vector.broadcast %cst_173 : f32 to vector<16x1xf32>
    %437 = arith.divf %435, %436 : vector<16x1xf32>
    %438 = vector.broadcast %430 : vector<16x1xf32> to vector<16x32xf32>
    %439 = arith.subf %422, %438 : vector<16x32xf32>
    %cst_174 = arith.constant 9.99999974E-6 : f32
    %440 = vector.broadcast %cst_174 : f32 to vector<16x1xf32>
    %441 = arith.addf %437, %440 : vector<16x1xf32>
    %442 = math.rsqrt %441 : vector<16x1xf32>
    %443 = vector.broadcast %442 : vector<16x1xf32> to vector<16x32xf32>
    %444 = arith.mulf %439, %443 : vector<16x32xf32>
    %445 = vector.broadcast %424 : vector<1x32xf32> to vector<16x32xf32>
    %446 = arith.mulf %444, %445 : vector<16x32xf32>
    %447 = vector.broadcast %426 : vector<1x32xf32> to vector<16x32xf32>
    %448 = arith.addf %446, %447 : vector<16x32xf32>
    %c1_175 = arith.constant 1 : index
    %c0_176 = arith.constant 0 : index
    %c0_177 = arith.constant 0 : index
    %449 = vector.load %arg9[%c1_175, %c0_176, %c0_177] : memref<2x32x128xf32, #tpu.memory_space<vmem>>, vector<1x32x128xf32>
    %450 = vector.shape_cast %449 : vector<1x32x128xf32> to vector<32x128xf32>
    %cst_178 = arith.constant dense<0.000000e+00> : vector<16x128xf32>
    %451 = tpu.matmul %448, %450, %cst_178 {dimension_numbers = #tpu.dot_dimension_numbers<[1], [0], [0], [1], [0, 0, 1, 1], [], []>} : vector<16x32xf32>, vector<32x128xf32>, vector<16x128xf32> -> vector<16x128xf32>
    %c1_179 = arith.constant 1 : index
    %c0_180 = arith.constant 0 : index
    %c0_181 = arith.constant 0 : index
    %452 = vector.load %arg10[%c1_179, %c0_180, %c0_181] : memref<2x1x128xf32, #tpu.memory_space<vmem>>, vector<1x1x128xf32>
    %453 = vector.shape_cast %452 : vector<1x1x128xf32> to vector<1x128xf32>
    %454 = vector.broadcast %453 : vector<1x128xf32> to vector<16x128xf32>
    %455 = arith.addf %451, %454 : vector<16x128xf32>
    %cst_182 = arith.constant 0.000000e+00 : f32
    %456 = vector.broadcast %cst_182 : f32 to vector<16x128xf32>
    %457 = arith.maximumf %455, %456 : vector<16x128xf32>
    %c1_183 = arith.constant 1 : index
    %c0_184 = arith.constant 0 : index
    %c0_185 = arith.constant 0 : index
    %458 = vector.load %arg11[%c1_183, %c0_184, %c0_185] : memref<2x128x32xf32, #tpu.memory_space<vmem>>, vector<1x128x32xf32>
    %459 = vector.shape_cast %458 : vector<1x128x32xf32> to vector<128x32xf32>
    %cst_186 = arith.constant dense<0.000000e+00> : vector<16x32xf32>
    %460 = tpu.matmul %457, %459, %cst_186 {dimension_numbers = #tpu.dot_dimension_numbers<[1], [0], [0], [1], [0, 0, 1, 1], [], []>} : vector<16x128xf32>, vector<128x32xf32>, vector<16x32xf32> -> vector<16x32xf32>
    %c1_187 = arith.constant 1 : index
    %c0_188 = arith.constant 0 : index
    %c0_189 = arith.constant 0 : index
    %461 = vector.load %arg12[%c1_187, %c0_188, %c0_189] : memref<2x1x32xf32, #tpu.memory_space<vmem>>, vector<1x1x32xf32>
    %462 = vector.shape_cast %461 : vector<1x1x32xf32> to vector<1x32xf32>
    %463 = vector.broadcast %462 : vector<1x32xf32> to vector<16x32xf32>
    %464 = arith.addf %460, %463 : vector<16x32xf32>
    %465 = arith.addf %448, %464 : vector<16x32xf32>
    %c1_190 = arith.constant 1 : index
    %c0_191 = arith.constant 0 : index
    %c0_192 = arith.constant 0 : index
    %466 = vector.load %arg13[%c1_190, %c0_191, %c0_192] : memref<2x1x32xf32, #tpu.memory_space<vmem>>, vector<1x1x32xf32>
    %467 = vector.shape_cast %466 : vector<1x1x32xf32> to vector<1x32xf32>
    %c1_193 = arith.constant 1 : index
    %c0_194 = arith.constant 0 : index
    %c0_195 = arith.constant 0 : index
    %468 = vector.load %arg14[%c1_193, %c0_194, %c0_195] : memref<2x1x32xf32, #tpu.memory_space<vmem>>, vector<1x1x32xf32>
    %469 = vector.shape_cast %468 : vector<1x1x32xf32> to vector<1x32xf32>
    %cst_196 = arith.constant dense<0.000000e+00> : vector<16xf32>
    %470 = vector.multi_reduction <add>, %465, %cst_196 [1] : vector<16x32xf32> to vector<16xf32>
    %471 = vector.shape_cast %470 : vector<16xf32> to vector<16x1xf32>
    %cst_197 = arith.constant 3.200000e+01 : f32
    %472 = vector.broadcast %cst_197 : f32 to vector<16x1xf32>
    %473 = arith.divf %471, %472 : vector<16x1xf32>
    %474 = vector.broadcast %473 : vector<16x1xf32> to vector<16x32xf32>
    %475 = arith.subf %465, %474 : vector<16x32xf32>
    %476 = arith.mulf %475, %475 : vector<16x32xf32>
    %cst_198 = arith.constant dense<0.000000e+00> : vector<16xf32>
    %477 = vector.multi_reduction <add>, %476, %cst_198 [1] : vector<16x32xf32> to vector<16xf32>
    %478 = vector.shape_cast %477 : vector<16xf32> to vector<16x1xf32>
    %cst_199 = arith.constant 3.200000e+01 : f32
    %479 = vector.broadcast %cst_199 : f32 to vector<16x1xf32>
    %480 = arith.divf %478, %479 : vector<16x1xf32>
    %481 = vector.broadcast %473 : vector<16x1xf32> to vector<16x32xf32>
    %482 = arith.subf %465, %481 : vector<16x32xf32>
    %cst_200 = arith.constant 9.99999974E-6 : f32
    %483 = vector.broadcast %cst_200 : f32 to vector<16x1xf32>
    %484 = arith.addf %480, %483 : vector<16x1xf32>
    %485 = math.rsqrt %484 : vector<16x1xf32>
    %486 = vector.broadcast %485 : vector<16x1xf32> to vector<16x32xf32>
    %487 = arith.mulf %482, %486 : vector<16x32xf32>
    %488 = vector.broadcast %467 : vector<1x32xf32> to vector<16x32xf32>
    %489 = arith.mulf %487, %488 : vector<16x32xf32>
    %490 = vector.broadcast %469 : vector<1x32xf32> to vector<16x32xf32>
    %491 = arith.addf %489, %490 : vector<16x32xf32>
    %c0_201 = arith.constant 0 : index
    %c0_202 = arith.constant 0 : index
    %492 = vector.load %arg15[%c0_201, %c0_202] : memref<32x128xf32, #tpu.memory_space<vmem>>, vector<32x128xf32>
    %cst_203 = arith.constant dense<0.000000e+00> : vector<16x128xf32>
    %493 = tpu.matmul %491, %492, %cst_203 {dimension_numbers = #tpu.dot_dimension_numbers<[1], [0], [0], [1], [0, 0, 1, 1], [], []>} : vector<16x32xf32>, vector<32x128xf32>, vector<16x128xf32> -> vector<16x128xf32>
    %c0_204 = arith.constant 0 : index
    %c0_205 = arith.constant 0 : index
    %494 = vector.load %arg17[%c0_204, %c0_205] : memref<1x128xf32, #tpu.memory_space<vmem>>, vector<1x128xf32>
    %495 = vector.broadcast %494 : vector<1x128xf32> to vector<16x128xf32>
    %496 = arith.addf %493, %495 : vector<16x128xf32>
    %c0_206 = arith.constant 0 : index
    %c0_207 = arith.constant 0 : index
    %497 = vector.load %arg16[%c0_206, %c0_207] : memref<32x128xf32, #tpu.memory_space<vmem>>, vector<32x128xf32>
    %cst_208 = arith.constant 0.000000e+00 : f32
    %498 = vector.broadcast %cst_208 : f32 to vector<2x32xf32>
    %cst_209 = arith.constant 0.000000e+00 : f32
    %499 = vector.broadcast %cst_209 : f32 to vector<2x32xf32>
    %500 = vector.extract_strided_slice %496 {offsets = [0, 0], sizes = [1, 128], strides = [1, 1]} : vector<16x128xf32> to vector<1x128xf32>
    %501 = vector.extract_strided_slice %496 {offsets = [8, 0], sizes = [1, 128], strides = [1, 1]} : vector<16x128xf32> to vector<1x128xf32>
    %502 = tpu.concatenate %500, %501 in 0 : vector<1x128xf32>, vector<1x128xf32> -> vector<2x128xf32>
    %cst_210 = arith.constant dense<0.000000e+00> : vector<2x128xf32>
    %503 = tpu.matmul %498, %497, %cst_210 {dimension_numbers = #tpu.dot_dimension_numbers<[1], [0], [0], [1], [0, 0, 1, 1], [], []>} : vector<2x32xf32>, vector<32x128xf32>, vector<2x128xf32> -> vector<2x128xf32>
    %504 = arith.addf %502, %503 : vector<2x128xf32>
    %505 = vector.extract_strided_slice %504 {offsets = [0, 0], sizes = [2, 32], strides = [1, 1]} : vector<2x128xf32> to vector<2x32xf32>
    %cst_211 = arith.constant 0.000000e+00 : f32
    %506 = vector.broadcast %cst_211 : f32 to vector<2x32xf32>
    %507 = arith.subf %506, %505 : vector<2x32xf32>
    %508 = math.exp %507 : vector<2x32xf32>
    %cst_212 = arith.constant 1.000000e+00 : f32
    %509 = vector.broadcast %cst_212 : f32 to vector<2x32xf32>
    %510 = arith.addf %509, %508 : vector<2x32xf32>
    %511 = tpu.reciprocal %510 {approx = true} : vector<2x32xf32> -> vector<2x32xf32>
    %512 = vector.extract_strided_slice %504 {offsets = [0, 32], sizes = [2, 32], strides = [1, 1]} : vector<2x128xf32> to vector<2x32xf32>
    %cst_213 = arith.constant 0.000000e+00 : f32
    %513 = vector.broadcast %cst_213 : f32 to vector<2x32xf32>
    %514 = arith.subf %513, %512 : vector<2x32xf32>
    %515 = math.exp %514 : vector<2x32xf32>
    %cst_214 = arith.constant 1.000000e+00 : f32
    %516 = vector.broadcast %cst_214 : f32 to vector<2x32xf32>
    %517 = arith.addf %516, %515 : vector<2x32xf32>
    %518 = tpu.reciprocal %517 {approx = true} : vector<2x32xf32> -> vector<2x32xf32>
    %519 = vector.extract_strided_slice %504 {offsets = [0, 64], sizes = [2, 32], strides = [1, 1]} : vector<2x128xf32> to vector<2x32xf32>
    %520 = math.tanh %519 : vector<2x32xf32>
    %521 = vector.extract_strided_slice %504 {offsets = [0, 96], sizes = [2, 32], strides = [1, 1]} : vector<2x128xf32> to vector<2x32xf32>
    %cst_215 = arith.constant 0.000000e+00 : f32
    %522 = vector.broadcast %cst_215 : f32 to vector<2x32xf32>
    %523 = arith.subf %522, %521 : vector<2x32xf32>
    %524 = math.exp %523 : vector<2x32xf32>
    %cst_216 = arith.constant 1.000000e+00 : f32
    %525 = vector.broadcast %cst_216 : f32 to vector<2x32xf32>
    %526 = arith.addf %525, %524 : vector<2x32xf32>
    %527 = tpu.reciprocal %526 {approx = true} : vector<2x32xf32> -> vector<2x32xf32>
    %528 = arith.mulf %518, %499 : vector<2x32xf32>
    %529 = arith.mulf %511, %520 : vector<2x32xf32>
    %530 = arith.addf %528, %529 : vector<2x32xf32>
    %531 = math.tanh %530 : vector<2x32xf32>
    %532 = arith.mulf %527, %531 : vector<2x32xf32>
    %533 = vector.extract_strided_slice %496 {offsets = [1, 0], sizes = [1, 128], strides = [1, 1]} : vector<16x128xf32> to vector<1x128xf32>
    %534 = vector.extract_strided_slice %496 {offsets = [9, 0], sizes = [1, 128], strides = [1, 1]} : vector<16x128xf32> to vector<1x128xf32>
    %535 = tpu.concatenate %533, %534 in 0 : vector<1x128xf32>, vector<1x128xf32> -> vector<2x128xf32>
    %cst_217 = arith.constant dense<0.000000e+00> : vector<2x128xf32>
    %536 = tpu.matmul %532, %497, %cst_217 {dimension_numbers = #tpu.dot_dimension_numbers<[1], [0], [0], [1], [0, 0, 1, 1], [], []>} : vector<2x32xf32>, vector<32x128xf32>, vector<2x128xf32> -> vector<2x128xf32>
    %537 = arith.addf %535, %536 : vector<2x128xf32>
    %538 = vector.extract_strided_slice %537 {offsets = [0, 0], sizes = [2, 32], strides = [1, 1]} : vector<2x128xf32> to vector<2x32xf32>
    %cst_218 = arith.constant 0.000000e+00 : f32
    %539 = vector.broadcast %cst_218 : f32 to vector<2x32xf32>
    %540 = arith.subf %539, %538 : vector<2x32xf32>
    %541 = math.exp %540 : vector<2x32xf32>
    %cst_219 = arith.constant 1.000000e+00 : f32
    %542 = vector.broadcast %cst_219 : f32 to vector<2x32xf32>
    %543 = arith.addf %542, %541 : vector<2x32xf32>
    %544 = tpu.reciprocal %543 {approx = true} : vector<2x32xf32> -> vector<2x32xf32>
    %545 = vector.extract_strided_slice %537 {offsets = [0, 32], sizes = [2, 32], strides = [1, 1]} : vector<2x128xf32> to vector<2x32xf32>
    %cst_220 = arith.constant 0.000000e+00 : f32
    %546 = vector.broadcast %cst_220 : f32 to vector<2x32xf32>
    %547 = arith.subf %546, %545 : vector<2x32xf32>
    %548 = math.exp %547 : vector<2x32xf32>
    %cst_221 = arith.constant 1.000000e+00 : f32
    %549 = vector.broadcast %cst_221 : f32 to vector<2x32xf32>
    %550 = arith.addf %549, %548 : vector<2x32xf32>
    %551 = tpu.reciprocal %550 {approx = true} : vector<2x32xf32> -> vector<2x32xf32>
    %552 = vector.extract_strided_slice %537 {offsets = [0, 64], sizes = [2, 32], strides = [1, 1]} : vector<2x128xf32> to vector<2x32xf32>
    %553 = math.tanh %552 : vector<2x32xf32>
    %554 = vector.extract_strided_slice %537 {offsets = [0, 96], sizes = [2, 32], strides = [1, 1]} : vector<2x128xf32> to vector<2x32xf32>
    %cst_222 = arith.constant 0.000000e+00 : f32
    %555 = vector.broadcast %cst_222 : f32 to vector<2x32xf32>
    %556 = arith.subf %555, %554 : vector<2x32xf32>
    %557 = math.exp %556 : vector<2x32xf32>
    %cst_223 = arith.constant 1.000000e+00 : f32
    %558 = vector.broadcast %cst_223 : f32 to vector<2x32xf32>
    %559 = arith.addf %558, %557 : vector<2x32xf32>
    %560 = tpu.reciprocal %559 {approx = true} : vector<2x32xf32> -> vector<2x32xf32>
    %561 = arith.mulf %551, %530 : vector<2x32xf32>
    %562 = arith.mulf %544, %553 : vector<2x32xf32>
    %563 = arith.addf %561, %562 : vector<2x32xf32>
    %564 = math.tanh %563 : vector<2x32xf32>
    %565 = arith.mulf %560, %564 : vector<2x32xf32>
    %566 = vector.extract_strided_slice %496 {offsets = [2, 0], sizes = [1, 128], strides = [1, 1]} : vector<16x128xf32> to vector<1x128xf32>
    %567 = vector.extract_strided_slice %496 {offsets = [10, 0], sizes = [1, 128], strides = [1, 1]} : vector<16x128xf32> to vector<1x128xf32>
    %568 = tpu.concatenate %566, %567 in 0 : vector<1x128xf32>, vector<1x128xf32> -> vector<2x128xf32>
    %cst_224 = arith.constant dense<0.000000e+00> : vector<2x128xf32>
    %569 = tpu.matmul %565, %497, %cst_224 {dimension_numbers = #tpu.dot_dimension_numbers<[1], [0], [0], [1], [0, 0, 1, 1], [], []>} : vector<2x32xf32>, vector<32x128xf32>, vector<2x128xf32> -> vector<2x128xf32>
    %570 = arith.addf %568, %569 : vector<2x128xf32>
    %571 = vector.extract_strided_slice %570 {offsets = [0, 0], sizes = [2, 32], strides = [1, 1]} : vector<2x128xf32> to vector<2x32xf32>
    %cst_225 = arith.constant 0.000000e+00 : f32
    %572 = vector.broadcast %cst_225 : f32 to vector<2x32xf32>
    %573 = arith.subf %572, %571 : vector<2x32xf32>
    %574 = math.exp %573 : vector<2x32xf32>
    %cst_226 = arith.constant 1.000000e+00 : f32
    %575 = vector.broadcast %cst_226 : f32 to vector<2x32xf32>
    %576 = arith.addf %575, %574 : vector<2x32xf32>
    %577 = tpu.reciprocal %576 {approx = true} : vector<2x32xf32> -> vector<2x32xf32>
    %578 = vector.extract_strided_slice %570 {offsets = [0, 32], sizes = [2, 32], strides = [1, 1]} : vector<2x128xf32> to vector<2x32xf32>
    %cst_227 = arith.constant 0.000000e+00 : f32
    %579 = vector.broadcast %cst_227 : f32 to vector<2x32xf32>
    %580 = arith.subf %579, %578 : vector<2x32xf32>
    %581 = math.exp %580 : vector<2x32xf32>
    %cst_228 = arith.constant 1.000000e+00 : f32
    %582 = vector.broadcast %cst_228 : f32 to vector<2x32xf32>
    %583 = arith.addf %582, %581 : vector<2x32xf32>
    %584 = tpu.reciprocal %583 {approx = true} : vector<2x32xf32> -> vector<2x32xf32>
    %585 = vector.extract_strided_slice %570 {offsets = [0, 64], sizes = [2, 32], strides = [1, 1]} : vector<2x128xf32> to vector<2x32xf32>
    %586 = math.tanh %585 : vector<2x32xf32>
    %587 = vector.extract_strided_slice %570 {offsets = [0, 96], sizes = [2, 32], strides = [1, 1]} : vector<2x128xf32> to vector<2x32xf32>
    %cst_229 = arith.constant 0.000000e+00 : f32
    %588 = vector.broadcast %cst_229 : f32 to vector<2x32xf32>
    %589 = arith.subf %588, %587 : vector<2x32xf32>
    %590 = math.exp %589 : vector<2x32xf32>
    %cst_230 = arith.constant 1.000000e+00 : f32
    %591 = vector.broadcast %cst_230 : f32 to vector<2x32xf32>
    %592 = arith.addf %591, %590 : vector<2x32xf32>
    %593 = tpu.reciprocal %592 {approx = true} : vector<2x32xf32> -> vector<2x32xf32>
    %594 = arith.mulf %584, %563 : vector<2x32xf32>
    %595 = arith.mulf %577, %586 : vector<2x32xf32>
    %596 = arith.addf %594, %595 : vector<2x32xf32>
    %597 = math.tanh %596 : vector<2x32xf32>
    %598 = arith.mulf %593, %597 : vector<2x32xf32>
    %599 = vector.extract_strided_slice %496 {offsets = [3, 0], sizes = [1, 128], strides = [1, 1]} : vector<16x128xf32> to vector<1x128xf32>
    %600 = vector.extract_strided_slice %496 {offsets = [11, 0], sizes = [1, 128], strides = [1, 1]} : vector<16x128xf32> to vector<1x128xf32>
    %601 = tpu.concatenate %599, %600 in 0 : vector<1x128xf32>, vector<1x128xf32> -> vector<2x128xf32>
    %cst_231 = arith.constant dense<0.000000e+00> : vector<2x128xf32>
    %602 = tpu.matmul %598, %497, %cst_231 {dimension_numbers = #tpu.dot_dimension_numbers<[1], [0], [0], [1], [0, 0, 1, 1], [], []>} : vector<2x32xf32>, vector<32x128xf32>, vector<2x128xf32> -> vector<2x128xf32>
    %603 = arith.addf %601, %602 : vector<2x128xf32>
    %604 = vector.extract_strided_slice %603 {offsets = [0, 0], sizes = [2, 32], strides = [1, 1]} : vector<2x128xf32> to vector<2x32xf32>
    %cst_232 = arith.constant 0.000000e+00 : f32
    %605 = vector.broadcast %cst_232 : f32 to vector<2x32xf32>
    %606 = arith.subf %605, %604 : vector<2x32xf32>
    %607 = math.exp %606 : vector<2x32xf32>
    %cst_233 = arith.constant 1.000000e+00 : f32
    %608 = vector.broadcast %cst_233 : f32 to vector<2x32xf32>
    %609 = arith.addf %608, %607 : vector<2x32xf32>
    %610 = tpu.reciprocal %609 {approx = true} : vector<2x32xf32> -> vector<2x32xf32>
    %611 = vector.extract_strided_slice %603 {offsets = [0, 32], sizes = [2, 32], strides = [1, 1]} : vector<2x128xf32> to vector<2x32xf32>
    %cst_234 = arith.constant 0.000000e+00 : f32
    %612 = vector.broadcast %cst_234 : f32 to vector<2x32xf32>
    %613 = arith.subf %612, %611 : vector<2x32xf32>
    %614 = math.exp %613 : vector<2x32xf32>
    %cst_235 = arith.constant 1.000000e+00 : f32
    %615 = vector.broadcast %cst_235 : f32 to vector<2x32xf32>
    %616 = arith.addf %615, %614 : vector<2x32xf32>
    %617 = tpu.reciprocal %616 {approx = true} : vector<2x32xf32> -> vector<2x32xf32>
    %618 = vector.extract_strided_slice %603 {offsets = [0, 64], sizes = [2, 32], strides = [1, 1]} : vector<2x128xf32> to vector<2x32xf32>
    %619 = math.tanh %618 : vector<2x32xf32>
    %620 = vector.extract_strided_slice %603 {offsets = [0, 96], sizes = [2, 32], strides = [1, 1]} : vector<2x128xf32> to vector<2x32xf32>
    %cst_236 = arith.constant 0.000000e+00 : f32
    %621 = vector.broadcast %cst_236 : f32 to vector<2x32xf32>
    %622 = arith.subf %621, %620 : vector<2x32xf32>
    %623 = math.exp %622 : vector<2x32xf32>
    %cst_237 = arith.constant 1.000000e+00 : f32
    %624 = vector.broadcast %cst_237 : f32 to vector<2x32xf32>
    %625 = arith.addf %624, %623 : vector<2x32xf32>
    %626 = tpu.reciprocal %625 {approx = true} : vector<2x32xf32> -> vector<2x32xf32>
    %627 = arith.mulf %617, %596 : vector<2x32xf32>
    %628 = arith.mulf %610, %619 : vector<2x32xf32>
    %629 = arith.addf %627, %628 : vector<2x32xf32>
    %630 = math.tanh %629 : vector<2x32xf32>
    %631 = arith.mulf %626, %630 : vector<2x32xf32>
    %632 = vector.extract_strided_slice %496 {offsets = [4, 0], sizes = [1, 128], strides = [1, 1]} : vector<16x128xf32> to vector<1x128xf32>
    %633 = vector.extract_strided_slice %496 {offsets = [12, 0], sizes = [1, 128], strides = [1, 1]} : vector<16x128xf32> to vector<1x128xf32>
    %634 = tpu.concatenate %632, %633 in 0 : vector<1x128xf32>, vector<1x128xf32> -> vector<2x128xf32>
    %cst_238 = arith.constant dense<0.000000e+00> : vector<2x128xf32>
    %635 = tpu.matmul %631, %497, %cst_238 {dimension_numbers = #tpu.dot_dimension_numbers<[1], [0], [0], [1], [0, 0, 1, 1], [], []>} : vector<2x32xf32>, vector<32x128xf32>, vector<2x128xf32> -> vector<2x128xf32>
    %636 = arith.addf %634, %635 : vector<2x128xf32>
    %637 = vector.extract_strided_slice %636 {offsets = [0, 0], sizes = [2, 32], strides = [1, 1]} : vector<2x128xf32> to vector<2x32xf32>
    %cst_239 = arith.constant 0.000000e+00 : f32
    %638 = vector.broadcast %cst_239 : f32 to vector<2x32xf32>
    %639 = arith.subf %638, %637 : vector<2x32xf32>
    %640 = math.exp %639 : vector<2x32xf32>
    %cst_240 = arith.constant 1.000000e+00 : f32
    %641 = vector.broadcast %cst_240 : f32 to vector<2x32xf32>
    %642 = arith.addf %641, %640 : vector<2x32xf32>
    %643 = tpu.reciprocal %642 {approx = true} : vector<2x32xf32> -> vector<2x32xf32>
    %644 = vector.extract_strided_slice %636 {offsets = [0, 32], sizes = [2, 32], strides = [1, 1]} : vector<2x128xf32> to vector<2x32xf32>
    %cst_241 = arith.constant 0.000000e+00 : f32
    %645 = vector.broadcast %cst_241 : f32 to vector<2x32xf32>
    %646 = arith.subf %645, %644 : vector<2x32xf32>
    %647 = math.exp %646 : vector<2x32xf32>
    %cst_242 = arith.constant 1.000000e+00 : f32
    %648 = vector.broadcast %cst_242 : f32 to vector<2x32xf32>
    %649 = arith.addf %648, %647 : vector<2x32xf32>
    %650 = tpu.reciprocal %649 {approx = true} : vector<2x32xf32> -> vector<2x32xf32>
    %651 = vector.extract_strided_slice %636 {offsets = [0, 64], sizes = [2, 32], strides = [1, 1]} : vector<2x128xf32> to vector<2x32xf32>
    %652 = math.tanh %651 : vector<2x32xf32>
    %653 = vector.extract_strided_slice %636 {offsets = [0, 96], sizes = [2, 32], strides = [1, 1]} : vector<2x128xf32> to vector<2x32xf32>
    %cst_243 = arith.constant 0.000000e+00 : f32
    %654 = vector.broadcast %cst_243 : f32 to vector<2x32xf32>
    %655 = arith.subf %654, %653 : vector<2x32xf32>
    %656 = math.exp %655 : vector<2x32xf32>
    %cst_244 = arith.constant 1.000000e+00 : f32
    %657 = vector.broadcast %cst_244 : f32 to vector<2x32xf32>
    %658 = arith.addf %657, %656 : vector<2x32xf32>
    %659 = tpu.reciprocal %658 {approx = true} : vector<2x32xf32> -> vector<2x32xf32>
    %660 = arith.mulf %650, %629 : vector<2x32xf32>
    %661 = arith.mulf %643, %652 : vector<2x32xf32>
    %662 = arith.addf %660, %661 : vector<2x32xf32>
    %663 = math.tanh %662 : vector<2x32xf32>
    %664 = arith.mulf %659, %663 : vector<2x32xf32>
    %665 = vector.extract_strided_slice %496 {offsets = [5, 0], sizes = [1, 128], strides = [1, 1]} : vector<16x128xf32> to vector<1x128xf32>
    %666 = vector.extract_strided_slice %496 {offsets = [13, 0], sizes = [1, 128], strides = [1, 1]} : vector<16x128xf32> to vector<1x128xf32>
    %667 = tpu.concatenate %665, %666 in 0 : vector<1x128xf32>, vector<1x128xf32> -> vector<2x128xf32>
    %cst_245 = arith.constant dense<0.000000e+00> : vector<2x128xf32>
    %668 = tpu.matmul %664, %497, %cst_245 {dimension_numbers = #tpu.dot_dimension_numbers<[1], [0], [0], [1], [0, 0, 1, 1], [], []>} : vector<2x32xf32>, vector<32x128xf32>, vector<2x128xf32> -> vector<2x128xf32>
    %669 = arith.addf %667, %668 : vector<2x128xf32>
    %670 = vector.extract_strided_slice %669 {offsets = [0, 0], sizes = [2, 32], strides = [1, 1]} : vector<2x128xf32> to vector<2x32xf32>
    %cst_246 = arith.constant 0.000000e+00 : f32
    %671 = vector.broadcast %cst_246 : f32 to vector<2x32xf32>
    %672 = arith.subf %671, %670 : vector<2x32xf32>
    %673 = math.exp %672 : vector<2x32xf32>
    %cst_247 = arith.constant 1.000000e+00 : f32
    %674 = vector.broadcast %cst_247 : f32 to vector<2x32xf32>
    %675 = arith.addf %674, %673 : vector<2x32xf32>
    %676 = tpu.reciprocal %675 {approx = true} : vector<2x32xf32> -> vector<2x32xf32>
    %677 = vector.extract_strided_slice %669 {offsets = [0, 32], sizes = [2, 32], strides = [1, 1]} : vector<2x128xf32> to vector<2x32xf32>
    %cst_248 = arith.constant 0.000000e+00 : f32
    %678 = vector.broadcast %cst_248 : f32 to vector<2x32xf32>
    %679 = arith.subf %678, %677 : vector<2x32xf32>
    %680 = math.exp %679 : vector<2x32xf32>
    %cst_249 = arith.constant 1.000000e+00 : f32
    %681 = vector.broadcast %cst_249 : f32 to vector<2x32xf32>
    %682 = arith.addf %681, %680 : vector<2x32xf32>
    %683 = tpu.reciprocal %682 {approx = true} : vector<2x32xf32> -> vector<2x32xf32>
    %684 = vector.extract_strided_slice %669 {offsets = [0, 64], sizes = [2, 32], strides = [1, 1]} : vector<2x128xf32> to vector<2x32xf32>
    %685 = math.tanh %684 : vector<2x32xf32>
    %686 = vector.extract_strided_slice %669 {offsets = [0, 96], sizes = [2, 32], strides = [1, 1]} : vector<2x128xf32> to vector<2x32xf32>
    %cst_250 = arith.constant 0.000000e+00 : f32
    %687 = vector.broadcast %cst_250 : f32 to vector<2x32xf32>
    %688 = arith.subf %687, %686 : vector<2x32xf32>
    %689 = math.exp %688 : vector<2x32xf32>
    %cst_251 = arith.constant 1.000000e+00 : f32
    %690 = vector.broadcast %cst_251 : f32 to vector<2x32xf32>
    %691 = arith.addf %690, %689 : vector<2x32xf32>
    %692 = tpu.reciprocal %691 {approx = true} : vector<2x32xf32> -> vector<2x32xf32>
    %693 = arith.mulf %683, %662 : vector<2x32xf32>
    %694 = arith.mulf %676, %685 : vector<2x32xf32>
    %695 = arith.addf %693, %694 : vector<2x32xf32>
    %696 = math.tanh %695 : vector<2x32xf32>
    %697 = arith.mulf %692, %696 : vector<2x32xf32>
    %698 = vector.extract_strided_slice %496 {offsets = [6, 0], sizes = [1, 128], strides = [1, 1]} : vector<16x128xf32> to vector<1x128xf32>
    %699 = vector.extract_strided_slice %496 {offsets = [14, 0], sizes = [1, 128], strides = [1, 1]} : vector<16x128xf32> to vector<1x128xf32>
    %700 = tpu.concatenate %698, %699 in 0 : vector<1x128xf32>, vector<1x128xf32> -> vector<2x128xf32>
    %cst_252 = arith.constant dense<0.000000e+00> : vector<2x128xf32>
    %701 = tpu.matmul %697, %497, %cst_252 {dimension_numbers = #tpu.dot_dimension_numbers<[1], [0], [0], [1], [0, 0, 1, 1], [], []>} : vector<2x32xf32>, vector<32x128xf32>, vector<2x128xf32> -> vector<2x128xf32>
    %702 = arith.addf %700, %701 : vector<2x128xf32>
    %703 = vector.extract_strided_slice %702 {offsets = [0, 0], sizes = [2, 32], strides = [1, 1]} : vector<2x128xf32> to vector<2x32xf32>
    %cst_253 = arith.constant 0.000000e+00 : f32
    %704 = vector.broadcast %cst_253 : f32 to vector<2x32xf32>
    %705 = arith.subf %704, %703 : vector<2x32xf32>
    %706 = math.exp %705 : vector<2x32xf32>
    %cst_254 = arith.constant 1.000000e+00 : f32
    %707 = vector.broadcast %cst_254 : f32 to vector<2x32xf32>
    %708 = arith.addf %707, %706 : vector<2x32xf32>
    %709 = tpu.reciprocal %708 {approx = true} : vector<2x32xf32> -> vector<2x32xf32>
    %710 = vector.extract_strided_slice %702 {offsets = [0, 32], sizes = [2, 32], strides = [1, 1]} : vector<2x128xf32> to vector<2x32xf32>
    %cst_255 = arith.constant 0.000000e+00 : f32
    %711 = vector.broadcast %cst_255 : f32 to vector<2x32xf32>
    %712 = arith.subf %711, %710 : vector<2x32xf32>
    %713 = math.exp %712 : vector<2x32xf32>
    %cst_256 = arith.constant 1.000000e+00 : f32
    %714 = vector.broadcast %cst_256 : f32 to vector<2x32xf32>
    %715 = arith.addf %714, %713 : vector<2x32xf32>
    %716 = tpu.reciprocal %715 {approx = true} : vector<2x32xf32> -> vector<2x32xf32>
    %717 = vector.extract_strided_slice %702 {offsets = [0, 64], sizes = [2, 32], strides = [1, 1]} : vector<2x128xf32> to vector<2x32xf32>
    %718 = math.tanh %717 : vector<2x32xf32>
    %719 = vector.extract_strided_slice %702 {offsets = [0, 96], sizes = [2, 32], strides = [1, 1]} : vector<2x128xf32> to vector<2x32xf32>
    %cst_257 = arith.constant 0.000000e+00 : f32
    %720 = vector.broadcast %cst_257 : f32 to vector<2x32xf32>
    %721 = arith.subf %720, %719 : vector<2x32xf32>
    %722 = math.exp %721 : vector<2x32xf32>
    %cst_258 = arith.constant 1.000000e+00 : f32
    %723 = vector.broadcast %cst_258 : f32 to vector<2x32xf32>
    %724 = arith.addf %723, %722 : vector<2x32xf32>
    %725 = tpu.reciprocal %724 {approx = true} : vector<2x32xf32> -> vector<2x32xf32>
    %726 = arith.mulf %716, %695 : vector<2x32xf32>
    %727 = arith.mulf %709, %718 : vector<2x32xf32>
    %728 = arith.addf %726, %727 : vector<2x32xf32>
    %729 = math.tanh %728 : vector<2x32xf32>
    %730 = arith.mulf %725, %729 : vector<2x32xf32>
    %731 = vector.extract_strided_slice %496 {offsets = [7, 0], sizes = [1, 128], strides = [1, 1]} : vector<16x128xf32> to vector<1x128xf32>
    %732 = vector.extract_strided_slice %496 {offsets = [15, 0], sizes = [1, 128], strides = [1, 1]} : vector<16x128xf32> to vector<1x128xf32>
    %733 = tpu.concatenate %731, %732 in 0 : vector<1x128xf32>, vector<1x128xf32> -> vector<2x128xf32>
    %cst_259 = arith.constant dense<0.000000e+00> : vector<2x128xf32>
    %734 = tpu.matmul %730, %497, %cst_259 {dimension_numbers = #tpu.dot_dimension_numbers<[1], [0], [0], [1], [0, 0, 1, 1], [], []>} : vector<2x32xf32>, vector<32x128xf32>, vector<2x128xf32> -> vector<2x128xf32>
    %735 = arith.addf %733, %734 : vector<2x128xf32>
    %736 = vector.extract_strided_slice %735 {offsets = [0, 0], sizes = [2, 32], strides = [1, 1]} : vector<2x128xf32> to vector<2x32xf32>
    %cst_260 = arith.constant 0.000000e+00 : f32
    %737 = vector.broadcast %cst_260 : f32 to vector<2x32xf32>
    %738 = arith.subf %737, %736 : vector<2x32xf32>
    %739 = math.exp %738 : vector<2x32xf32>
    %cst_261 = arith.constant 1.000000e+00 : f32
    %740 = vector.broadcast %cst_261 : f32 to vector<2x32xf32>
    %741 = arith.addf %740, %739 : vector<2x32xf32>
    %742 = tpu.reciprocal %741 {approx = true} : vector<2x32xf32> -> vector<2x32xf32>
    %743 = vector.extract_strided_slice %735 {offsets = [0, 32], sizes = [2, 32], strides = [1, 1]} : vector<2x128xf32> to vector<2x32xf32>
    %cst_262 = arith.constant 0.000000e+00 : f32
    %744 = vector.broadcast %cst_262 : f32 to vector<2x32xf32>
    %745 = arith.subf %744, %743 : vector<2x32xf32>
    %746 = math.exp %745 : vector<2x32xf32>
    %cst_263 = arith.constant 1.000000e+00 : f32
    %747 = vector.broadcast %cst_263 : f32 to vector<2x32xf32>
    %748 = arith.addf %747, %746 : vector<2x32xf32>
    %749 = tpu.reciprocal %748 {approx = true} : vector<2x32xf32> -> vector<2x32xf32>
    %750 = vector.extract_strided_slice %735 {offsets = [0, 64], sizes = [2, 32], strides = [1, 1]} : vector<2x128xf32> to vector<2x32xf32>
    %751 = math.tanh %750 : vector<2x32xf32>
    %752 = vector.extract_strided_slice %735 {offsets = [0, 96], sizes = [2, 32], strides = [1, 1]} : vector<2x128xf32> to vector<2x32xf32>
    %cst_264 = arith.constant 0.000000e+00 : f32
    %753 = vector.broadcast %cst_264 : f32 to vector<2x32xf32>
    %754 = arith.subf %753, %752 : vector<2x32xf32>
    %755 = math.exp %754 : vector<2x32xf32>
    %cst_265 = arith.constant 1.000000e+00 : f32
    %756 = vector.broadcast %cst_265 : f32 to vector<2x32xf32>
    %757 = arith.addf %756, %755 : vector<2x32xf32>
    %758 = tpu.reciprocal %757 {approx = true} : vector<2x32xf32> -> vector<2x32xf32>
    %759 = arith.mulf %749, %728 : vector<2x32xf32>
    %760 = arith.mulf %742, %751 : vector<2x32xf32>
    %761 = arith.addf %759, %760 : vector<2x32xf32>
    %762 = math.tanh %761 : vector<2x32xf32>
    %763 = arith.mulf %758, %762 : vector<2x32xf32>
    %c0_266 = arith.constant 0 : index
    %c0_267 = arith.constant 0 : index
    %764 = vector.load %arg18[%c0_266, %c0_267] : memref<1x32xf32, #tpu.memory_space<vmem>>, vector<1x32xf32>
    %765 = vector.broadcast %764 : vector<1x32xf32> to vector<2x32xf32>
    %766 = arith.mulf %763, %765 : vector<2x32xf32>
    %cst_268 = arith.constant dense<0.000000e+00> : vector<2xf32>
    %767 = vector.multi_reduction <add>, %766, %cst_268 [1] : vector<2x32xf32> to vector<2xf32>
    %768 = vector.shape_cast %767 : vector<2xf32> to vector<2x1xf32>
    %c0_269 = arith.constant 0 : index
    %c0_270 = arith.constant 0 : index
    %769 = vector.load %arg19[%c0_269, %c0_270] : memref<1x1xf32, #tpu.memory_space<vmem>>, vector<1x1xf32>
    %770 = vector.broadcast %769 : vector<1x1xf32> to vector<2x1xf32>
    %771 = arith.addf %768, %770 : vector<2x1xf32>
    %c0_271 = arith.constant 0 : index
    %c0_272 = arith.constant 0 : index
    %772 = vector.load %arg20[%c0_271, %c0_272] : memref<2x1xf32, #tpu.memory_space<vmem>>, vector<2x1xf32>
    tpu.vector_store %arg20[%c0_271, %c0_272], %771 {strides = array<i32>} : memref<2x1xf32, #tpu.memory_space<vmem>>, vector<2x1xf32>,
    return
  }
}

</mosaic_0001>

<llo_original>
// kernel: hybrid_forward.1
$region0: #{hybrid_forward.1}
  #allocation0 [shape = 'u32[]', space=smem, size = 0x4, offset = 0x4, fixed_abs, tag = 'smem constant byte address 0x4 - core index']
  #allocation1 [shape = 'u32[144,128]{1,0:T(1,128)}', space=vmem, size = 0x12000, scoped, tag = 'internal scratch']
  #allocation2 [shape = 'f32[1,1]{1,0:T(1,128)S(1)}', space=vmem, size = 0x200, scoped, tag = 'scoped memory for hybrid_forward.1']
  %s0 = inlined_call_operand.vmem [shape: f32[16,12], index: 0, kind: input, shape index: {}]
  %s1 = inlined_call_operand.vmem [shape: f32[12,32], index: 1, kind: input, shape index: {}]
  %s2 = inlined_call_operand.vmem [shape: f32[1,32], index: 2, kind: input, shape index: {}]
  %s3 = inlined_call_operand.vmem [shape: f32[2,32,96], index: 3, kind: input, shape index: {}]
  %s4 = inlined_call_operand.vmem [shape: f32[2,1,96], index: 4, kind: input, shape index: {}]
  %s5 = inlined_call_operand.vmem [shape: f32[2,32,32], index: 5, kind: input, shape index: {}]
  %s6 = inlined_call_operand.vmem [shape: f32[2,1,32], index: 6, kind: input, shape index: {}]
  %s7 = inlined_call_operand.vmem [shape: f32[2,1,32], index: 7, kind: input, shape index: {}]
  %s8 = inlined_call_operand.vmem [shape: f32[2,1,32], index: 8, kind: input, shape index: {}]
  %s9 = inlined_call_operand.vmem [shape: f32[2,32,128], index: 9, kind: input, shape index: {}]
  %s10 = inlined_call_operand.vmem [shape: f32[2,1,128], index: 10, kind: input, shape index: {}]
  %s11 = inlined_call_operand.vmem [shape: f32[2,128,32], index: 11, kind: input, shape index: {}]
  %s12 = inlined_call_operand.vmem [shape: f32[2,1,32], index: 12, kind: input, shape index: {}]
  %s13 = inlined_call_operand.vmem [shape: f32[2,1,32], index: 13, kind: input, shape index: {}]
  %s14 = inlined_call_operand.vmem [shape: f32[2,1,32], index: 14, kind: input, shape index: {}]
  %s15 = inlined_call_operand.vmem [shape: f32[32,128], index: 15, kind: input, shape index: {}]
  %s16 = inlined_call_operand.vmem [shape: f32[32,128], index: 16, kind: input, shape index: {}]
  %s17 = inlined_call_operand.vmem [shape: f32[1,128], index: 17, kind: input, shape index: {}]
  %s18 = inlined_call_operand.vmem [shape: f32[1,32], index: 18, kind: input, shape index: {}]
  %s19 = inlined_call_operand.<no memory space> [shape: f32[1,1], index: 19, kind: input, shape index: {}]
  %s20 = inlined_call_operand.vmem [shape: f32[2,1], index: 20, kind: output, shape index: {}]
  %s21 = sld [smem:[#allocation0]]
  $region90: #{hybrid_forward.1} parent=0
    _
  %s23 = ssub.s32 1, %s21
  %s24 = scalar_select 0, %s23, %s21
  %v25 = vstv %s19
  %26 = vst [vmem:[#allocation2] sm:$0x1] %v25
  // Predicated region
  $region2: #{hybrid_forward.1} parent=0 // pred_check
    _
  $region3: #{hybrid_forward.1} parent=0 // pred_check_branch
    %28 = sbr.rel (0) target = $region5
  $region4: #{hybrid_forward.1} parent=0 // pred_region
    _
  $region5: #{hybrid_forward.1} parent=0 // pred_fallthru
    _
  // Predicated region
  $region6: #{hybrid_forward.1} parent=0 // pred_check
    _
  $region7: #{hybrid_forward.1} parent=0 // pred_check_branch
    %30 = sbr.rel (0) target = $region9
  $region8: #{hybrid_forward.1} parent=0 // pred_region
    _
  $region9: #{hybrid_forward.1} parent=0 // pred_fallthru
    _
  // Predicated region
  $region10: #{hybrid_forward.1} parent=0 // pred_check
    _
  $region11: #{hybrid_forward.1} parent=0 // pred_check_branch
    %32 = sbr.rel (0) target = $region13
  $region12: #{hybrid_forward.1} parent=0 // pred_region
    _
  $region13: #{hybrid_forward.1} parent=0 // pred_fallthru
    _
  // Predicated region
  $region14: #{hybrid_forward.1} parent=0 // pred_check
    _
  $region15: #{hybrid_forward.1} parent=0 // pred_check_branch
    %34 = sbr.rel (0) target = $region17
  $region16: #{hybrid_forward.1} parent=0 // pred_region
    _
  $region17: #{hybrid_forward.1} parent=0 // pred_fallthru
    _
  // Predicated region
  $region18: #{hybrid_forward.1} parent=0 // pred_check
    _
  $region19: #{hybrid_forward.1} parent=0 // pred_check_branch
    %36 = sbr.rel (0) target = $region21
  $region20: #{hybrid_forward.1} parent=0 // pred_region
    _
  $region21: #{hybrid_forward.1} parent=0 // pred_fallthru
    _
  // Predicated region
  $region22: #{hybrid_forward.1} parent=0 // pred_check
    _
  $region23: #{hybrid_forward.1} parent=0 // pred_check_branch
    %38 = sbr.rel (0) target = $region25
  $region24: #{hybrid_forward.1} parent=0 // pred_region
    _
  $region25: #{hybrid_forward.1} parent=0 // pred_fallthru
    _
  // Predicated region
  $region26: #{hybrid_forward.1} parent=0 // pred_check
    _
  $region27: #{hybrid_forward.1} parent=0 // pred_check_branch
    %40 = sbr.rel (0) target = $region29
  $region28: #{hybrid_forward.1} parent=0 // pred_region
    _
  $region29: #{hybrid_forward.1} parent=0 // pred_fallthru
    _
  // Predicated region
  $region30: #{hybrid_forward.1} parent=0 // pred_check
    _
  $region31: #{hybrid_forward.1} parent=0 // pred_check_branch
    %42 = sbr.rel (0) target = $region33
  $region32: #{hybrid_forward.1} parent=0 // pred_region
    _
  $region33: #{hybrid_forward.1} parent=0 // pred_fallthru
    _
  // Predicated region
  $region34: #{hybrid_forward.1} parent=0 // pred_check
    _
  $region35: #{hybrid_forward.1} parent=0 // pred_check_branch
    %44 = sbr.rel (0) target = $region37
  $region36: #{hybrid_forward.1} parent=0 // pred_region
    _
  $region37: #{hybrid_forward.1} parent=0 // pred_fallthru
    _
  // Predicated region
  $region38: #{hybrid_forward.1} parent=0 // pred_check
    _
  $region39: #{hybrid_forward.1} parent=0 // pred_check_branch
    %46 = sbr.rel (0) target = $region41
  $region40: #{hybrid_forward.1} parent=0 // pred_region
    _
  $region41: #{hybrid_forward.1} parent=0 // pred_fallthru
    _
  // Predicated region
  $region42: #{hybrid_forward.1} parent=0 // pred_check
    _
  $region43: #{hybrid_forward.1} parent=0 // pred_check_branch
    %48 = sbr.rel (0) target = $region45
  $region44: #{hybrid_forward.1} parent=0 // pred_region
    _
  $region45: #{hybrid_forward.1} parent=0 // pred_fallthru
    _
  // Predicated region
  $region46: #{hybrid_forward.1} parent=0 // pred_check
    _
  $region47: #{hybrid_forward.1} parent=0 // pred_check_branch
    %50 = sbr.rel (0) target = $region49
  $region48: #{hybrid_forward.1} parent=0 // pred_region
    _
  $region49: #{hybrid_forward.1} parent=0 // pred_fallthru
    _
  // Predicated region
  $region50: #{hybrid_forward.1} parent=0 // pred_check
    _
  $region51: #{hybrid_forward.1} parent=0 // pred_check_branch
    %52 = sbr.rel (0) target = $region53
  $region52: #{hybrid_forward.1} parent=0 // pred_region
    _
  $region53: #{hybrid_forward.1} parent=0 // pred_fallthru
    _
  // Predicated region
  $region54: #{hybrid_forward.1} parent=0 // pred_check
    _
  $region55: #{hybrid_forward.1} parent=0 // pred_check_branch
    %54 = sbr.rel (0) target = $region57
  $region56: #{hybrid_forward.1} parent=0 // pred_region
    _
  $region57: #{hybrid_forward.1} parent=0 // pred_fallthru
    _
  // Predicated region
  $region58: #{hybrid_forward.1} parent=0 // pred_check
    _
  $region59: #{hybrid_forward.1} parent=0 // pred_check_branch
    %56 = sbr.rel (0) target = $region61
  $region60: #{hybrid_forward.1} parent=0 // pred_region
    _
  $region61: #{hybrid_forward.1} parent=0 // pred_fallthru
    _
  // Predicated region
  $region62: #{hybrid_forward.1} parent=0 // pred_check
    _
  $region63: #{hybrid_forward.1} parent=0 // pred_check_branch
    %58 = sbr.rel (0) target = $region65
  $region64: #{hybrid_forward.1} parent=0 // pred_region
    _
  $region65: #{hybrid_forward.1} parent=0 // pred_fallthru
    _
  // Predicated region
  $region66: #{hybrid_forward.1} parent=0 // pred_check
    _
  $region67: #{hybrid_forward.1} parent=0 // pred_check_branch
    %60 = sbr.rel (0) target = $region69
  $region68: #{hybrid_forward.1} parent=0 // pred_region
    _
  $region69: #{hybrid_forward.1} parent=0 // pred_fallthru
    _
  // Predicated region
  $region70: #{hybrid_forward.1} parent=0 // pred_check
    _
  $region71: #{hybrid_forward.1} parent=0 // pred_check_branch
    %62 = sbr.rel (0) target = $region73
  $region72: #{hybrid_forward.1} parent=0 // pred_region
    _
  $region73: #{hybrid_forward.1} parent=0 // pred_fallthru
    _
  // Predicated region
  $region74: #{hybrid_forward.1} parent=0 // pred_check
    _
  $region75: #{hybrid_forward.1} parent=0 // pred_check_branch
    %64 = sbr.rel (0) target = $region77
  $region76: #{hybrid_forward.1} parent=0 // pred_region
    _
  $region77: #{hybrid_forward.1} parent=0 // pred_fallthru
    _
  // Predicated region
  $region78: #{hybrid_forward.1} parent=0 // pred_check
    _
  $region79: #{hybrid_forward.1} parent=0 // pred_check_branch
    %66 = sbr.rel (0) target = $region81
  $region80: #{hybrid_forward.1} parent=0 // pred_region
    _
  $region81: #{hybrid_forward.1} parent=0 // pred_fallthru
    _
  %v67 = vld [vmem:[%s0] sm:$0xff]
  %v68 = vld [vmem:[%s0 + $0x8] sm:$0xff]
  %v69 = vld [vmem:[%s1] sm:$0xff]
  %v70 = vld [vmem:[%s1 + $0x8] sm:$0xf]
  %v71 = vld [vmem:[%s2] sm:$0x1]
  %v73 = vlaneseq
  %v74 = vshrl.u32 %v73, 7
  %v75 = vsub.s32 0, %v74
  %v76 = vrot.slane %v71, %v75
  %vm78 = vcmask 97280
  %v80 = vsel %vm78, %v67, 0
  %v83 = vsel %vm78, %v68, 0
  %vm85 = vcmask 1043456
  %v87 = vsel %vm85, %v70, 0
  %89 = vmatprep.subr.mxu0 0.0
  %90 = vmatpush1.msra.mxu0 %v69
  %91 = vmatprep.subr.mxu0 0.0
  %92 = vmatpush1.msra.mxu0 %v87
  %93 = vmatprep.subr.mxu0 0.0
  %94 = vmatpush1.msra.mxu0 0.0
  %95 = vmatprep.subr.mxu0 0.0
  %96 = vmatpush1.msra.mxu0 0.0
  %97 = vmatprep.subr.mxu0 0.0
  %98 = vmatpush1.msra.mxu0 0.0
  %99 = vmatprep.subr.mxu0 0.0
  %100 = vmatpush1.msra.mxu0 0.0
  %101 = vmatprep.subr.mxu0 0.0
  %102 = vmatpush1.msra.mxu0 0.0
  %103 = vmatprep.subr.mxu0 0.0
  %104 = vmatpush1.msra.mxu0 0.0
  %105 = vmatprep.subr.mxu0 0.0
  %106 = vmatpush1.msra.mxu0 0.0
  %107 = vmatprep.subr.mxu0 0.0
  %108 = vmatpush1.msra.mxu0 0.0
  %109 = vmatprep.subr.mxu0 0.0
  %110 = vmatpush1.msra.mxu0 0.0
  %111 = vmatprep.subr.mxu0 0.0
  %112 = vmatpush1.msra.mxu0 0.0
  %113 = vmatprep.subr.mxu0 0.0
  %114 = vmatpush1.msra.mxu0 0.0
  %115 = vmatprep.subr.mxu0 0.0
  %116 = vmatpush1.msra.mxu0 0.0
  %117 = vmatprep.subr.mxu0 0.0
  %118 = vmatpush1.msra.mxu0 0.0
  %119 = vmatprep.subr.mxu0 0.0
  %120 = vmatpush1.msra.mxu0 0.0
  %121 = vmatprep.subr.mxu0 0.0
  %122 = vmatpush1.msra.mxu0 0.0
  %123 = vmatprep.subr.mxu0 0.0
  %124 = vmatpush1.msra.mxu0 0.0
  %125 = vmatprep.subr.mxu0 0.0
  %126 = vmatpush1.msra.mxu0 0.0
  %127 = vmatprep.subr.mxu0 0.0
  %128 = vmatpush1.msra.mxu0 0.0
  %129 = vmatprep.subr.mxu0 0.0
  %130 = vmatpush1.msra.mxu0 0.0
  %131 = vmatprep.subr.mxu0 0.0
  %132 = vmatpush1.msra.mxu0 0.0
  %133 = vmatprep.subr.mxu0 0.0
  %134 = vmatpush1.msra.mxu0 0.0
  %135 = vmatprep.subr.mxu0 0.0
  %136 = vmatpush1.msra.mxu0 0.0
  %137 = vmatprep.subr.mxu0 0.0
  %138 = vmatpush1.msra.mxu0 0.0
  %139 = vmatprep.subr.mxu0 0.0
  %140 = vmatpush1.msra.mxu0 0.0
  %141 = vmatprep.subr.mxu0 0.0
  %142 = vmatpush1.msra.mxu0 0.0
  %143 = vmatprep.subr.mxu0 0.0
  %144 = vmatpush1.msra.mxu0 0.0
  %145 = vmatprep.subr.mxu0 0.0
  %146 = vmatpush1.msra.mxu0 0.0
  %147 = vmatprep.subr.mxu0 0.0
  %148 = vmatpush1.msra.mxu0 0.0
  %149 = vmatprep.subr.mxu0 0.0
  %150 = vmatpush1.msra.mxu0 0.0
  %151 = vmatprep.subr.mxu0 0.0
  %152 = vmatpush1.msra.mxu0 0.0
  %153 = vmatprep.mubr.f32.mxu0 0.0
  %154 = vmatmul.mubr.f32.gmra.mrb[0].mxu0 %v80
  %v155 = vpop.f32.mrb[0].mxu0
  %v156 = vadd.f32 %v76, %v155
  %v157 = vpop.f32.mrb[0].mxu0
  %158 = vmatprep.mubr.f32.mxu0 0.0
  %159 = vmatmul.mubr.f32.gmra.mrb[0].mxu0 %v83
  %v160 = vpop.f32.mrb[0].mxu0
  %v161 = vadd.f32 %v76, %v160
  %v162 = vpop.f32.mrb[0].mxu0
  %163 = vdwg.mxu0
  %v164 = vmax.f32 %v156, 0.0
  %v165 = vmax.f32 %v161, 0.0
  %v166 = vld [vmem:[%s3] sm:$0xff]
  %v167 = vld [vmem:[%s3 + $0x8] sm:$0xff]
  %v168 = vld [vmem:[%s3 + $0x10] sm:$0xff]
  %v169 = vld [vmem:[%s3 + $0x18] sm:$0xff]
  %v170 = vld [vmem:[%s4] sm:$0x1]
  %v172 = vlaneseq
  %v173 = vshrl.u32 %v172, 7
  %v174 = vsub.s32 0, %v173
  %v175 = vrot.slane %v170, %v174
  %vm177 = vcmask 261120
  %v179 = vsel %vm177, %v164, 0
  %v182 = vsel %vm177, %v165, 0
  %184 = vmatprep.subr.mxu0 0.0
  %185 = vmatpush1.msra.mxu0 %v166
  %186 = vmatprep.subr.mxu0 0.0
  %187 = vmatpush1.msra.mxu0 %v167
  %188 = vmatprep.subr.mxu0 0.0
  %189 = vmatpush1.msra.mxu0 %v168
  %190 = vmatprep.subr.mxu0 0.0
  %191 = vmatpush1.msra.mxu0 %v169
  %192 = vmatprep.subr.mxu0 0.0
  %193 = vmatpush1.msra.mxu0 0.0
  %194 = vmatprep.subr.mxu0 0.0
  %195 = vmatpush1.msra.mxu0 0.0
  %196 = vmatprep.subr.mxu0 0.0
  %197 = vmatpush1.msra.mxu0 0.0
  %198 = vmatprep.subr.mxu0 0.0
  %199 = vmatpush1.msra.mxu0 0.0
  %200 = vmatprep.subr.mxu0 0.0
  %201 = vmatpush1.msra.mxu0 0.0
  %202 = vmatprep.subr.mxu0 0.0
  %203 = vmatpush1.msra.mxu0 0.0
  %204 = vmatprep.subr.mxu0 0.0
  %205 = vmatpush1.msra.mxu0 0.0
  %206 = vmatprep.subr.mxu0 0.0
  %207 = vmatpush1.msra.mxu0 0.0
  %208 = vmatprep.subr.mxu0 0.0
  %209 = vmatpush1.msra.mxu0 0.0
  %210 = vmatprep.subr.mxu0 0.0
  %211 = vmatpush1.msra.mxu0 0.0
  %212 = vmatprep.subr.mxu0 0.0
  %213 = vmatpush1.msra.mxu0 0.0
  %214 = vmatprep.subr.mxu0 0.0
  %215 = vmatpush1.msra.mxu0 0.0
  %216 = vmatprep.subr.mxu0 0.0
  %217 = vmatpush1.msra.mxu0 0.0
  %218 = vmatprep.subr.mxu0 0.0
  %219 = vmatpush1.msra.mxu0 0.0
  %220 = vmatprep.subr.mxu0 0.0
  %221 = vmatpush1.msra.mxu0 0.0
  %222 = vmatprep.subr.mxu0 0.0
  %223 = vmatpush1.msra.mxu0 0.0
  %224 = vmatprep.subr.mxu0 0.0
  %225 = vmatpush1.msra.mxu0 0.0
  %226 = vmatprep.subr.mxu0 0.0
  %227 = vmatpush1.msra.mxu0 0.0
  %228 = vmatprep.subr.mxu0 0.0
  %229 = vmatpush1.msra.mxu0 0.0
  %230 = vmatprep.subr.mxu0 0.0
  %231 = vmatpush1.msra.mxu0 0.0
  %232 = vmatprep.subr.mxu0 0.0
  %233 = vmatpush1.msra.mxu0 0.0
  %234 = vmatprep.subr.mxu0 0.0
  %235 = vmatpush1.msra.mxu0 0.0
  %236 = vmatprep.subr.mxu0 0.0
  %237 = vmatpush1.msra.mxu0 0.0
  %238 = vmatprep.subr.mxu0 0.0
  %239 = vmatpush1.msra.mxu0 0.0
  %240 = vmatprep.subr.mxu0 0.0
  %241 = vmatpush1.msra.mxu0 0.0
  %242 = vmatprep.subr.mxu0 0.0
  %243 = vmatpush1.msra.mxu0 0.0
  %244 = vmatprep.subr.mxu0 0.0
  %245 = vmatpush1.msra.mxu0 0.0
  %246 = vmatprep.subr.mxu0 0.0
  %247 = vmatpush1.msra.mxu0 0.0
  %248 = vmatprep.mubr.f32.mxu0 0.0
  %249 = vmatmul.mubr.f32.gmra.mrb[0].mxu0 %v179
  %v250 = vpop.f32.mrb[0].mxu0
  %v251 = vadd.f32 %v175, %v250
  %v252 = vpop.f32.mrb[0].mxu0
  %253 = vmatprep.mubr.f32.mxu0 0.0
  %254 = vmatmul.mubr.f32.gmra.mrb[0].mxu0 %v182
  %v255 = vpop.f32.mrb[0].mxu0
  %v256 = vadd.f32 %v175, %v255
  %v257 = vpop.f32.mrb[0].mxu0
  %258 = vdwg.mxu0
  %v259 = vld [vmem:[%s5] sm:$0xff]
  %v260 = vld [vmem:[%s5 + $0x8] sm:$0xff]
  %v261 = vld [vmem:[%s5 + $0x10] sm:$0xff]
  %v262 = vld [vmem:[%s5 + $0x18] sm:$0xff]
  %264 = vrot.lane.b32.xlu0 %v251, 96
  %v265 = vpop.permute.xlu0 %264
  %vm266 = vcmask 64512
  %v267 = vsel %vm266, %v251, 0
  %v269 = vsel %vm266, %v265, 0
  %271 = vmatprep.subr.mxu0 0.0
  %272 = vmatpush1.xpose.msra.mxu0 %v269
  %273 = vmatprep.subr.mxu0 0.0
  %274 = vmatpush1.xpose.msra.mxu0 0.0
  %275 = vmatprep.subr.mxu0 0.0
  %276 = vmatpush1.xpose.msra.mxu0 0.0
  %277 = vmatprep.subr.mxu0 0.0
  %278 = vmatpush1.xpose.msra.mxu0 0.0
  %279 = vmatprep.subr.mxu0 0.0
  %280 = vmatpush1.xpose.msra.mxu0 0.0
  %281 = vmatprep.subr.mxu0 0.0
  %282 = vmatpush1.xpose.msra.mxu0 0.0
  %283 = vmatprep.subr.mxu0 0.0
  %284 = vmatpush1.xpose.msra.mxu0 0.0
  %285 = vmatprep.subr.mxu0 0.0
  %286 = vmatpush1.xpose.msra.mxu0 0.0
  %287 = vmatprep.subr.mxu0 0.0
  %288 = vmatpush1.xpose.msra.mxu0 0.0
  %289 = vmatprep.subr.mxu0 0.0
  %290 = vmatpush1.xpose.msra.mxu0 0.0
  %291 = vmatprep.subr.mxu0 0.0
  %292 = vmatpush1.xpose.msra.mxu0 0.0
  %293 = vmatprep.subr.mxu0 0.0
  %294 = vmatpush1.xpose.msra.mxu0 0.0
  %295 = vmatprep.subr.mxu0 0.0
  %296 = vmatpush1.xpose.msra.mxu0 0.0
  %297 = vmatprep.subr.mxu0 0.0
  %298 = vmatpush1.xpose.msra.mxu0 0.0
  %299 = vmatprep.subr.mxu0 0.0
  %300 = vmatpush1.xpose.msra.mxu0 0.0
  %301 = vmatprep.subr.mxu0 0.0
  %302 = vmatpush1.xpose.msra.mxu0 0.0
  %303 = vmatprep.subr.mxu0 0.0
  %304 = vmatpush1.xpose.msra.mxu0 0.0
  %305 = vmatprep.subr.mxu0 0.0
  %306 = vmatpush1.xpose.msra.mxu0 0.0
  %307 = vmatprep.subr.mxu0 0.0
  %308 = vmatpush1.xpose.msra.mxu0 0.0
  %309 = vmatprep.subr.mxu0 0.0
  %310 = vmatpush1.xpose.msra.mxu0 0.0
  %311 = vmatprep.subr.mxu0 0.0
  %312 = vmatpush1.xpose.msra.mxu0 0.0
  %313 = vmatprep.subr.mxu0 0.0
  %314 = vmatpush1.xpose.msra.mxu0 0.0
  %315 = vmatprep.subr.mxu0 0.0
  %316 = vmatpush1.xpose.msra.mxu0 0.0
  %317 = vmatprep.subr.mxu0 0.0
  %318 = vmatpush1.xpose.msra.mxu0 0.0
  %319 = vmatprep.subr.mxu0 0.0
  %320 = vmatpush1.xpose.msra.mxu0 0.0
  %321 = vmatprep.subr.mxu0 0.0
  %322 = vmatpush1.xpose.msra.mxu0 0.0
  %323 = vmatprep.subr.mxu0 0.0
  %324 = vmatpush1.xpose.msra.mxu0 0.0
  %325 = vmatprep.subr.mxu0 0.0
  %326 = vmatpush1.xpose.msra.mxu0 0.0
  %327 = vmatprep.subr.mxu0 0.0
  %328 = vmatpush1.xpose.msra.mxu0 0.0
  %329 = vmatprep.subr.mxu0 0.0
  %330 = vmatpush1.xpose.msra.mxu0 0.0
  %331 = vmatprep.subr.mxu0 0.0
  %332 = vmatpush1.xpose.msra.mxu0 0.0
  %333 = vmatprep.subr.mxu0 0.0
  %334 = vmatpush1.xpose.msra.mxu0 0.0
  %335 = vmatprep.mubr.f32.mxu0 0.0
  %336 = vmatmul.mubr.f32.gmra.mrb[0].mxu0 %v267
  %v337 = vpop.f32.mrb[0].mxu0
  %v338 = vadd.f32 0.0, %v337
  %v339 = vpop.f32.mrb[0].mxu0
  %340 = vdwg.mxu0
  %v341 = vmul.f32 %v338, 0.35355338
  %v342 = vsel %vm266, %v341, -inf
  %343 = vmax.xlane.f32.xlu0 %v342
  %v344 = vpop.xlane.xlu0 %343
  %v345 = vsub.f32 %v341, %v344
  %v346 = vmul.f32 %v345, 1.442695
  %v347 = vpow.pop %v346
  %v348 = vsel %vm266, %v347, 0.0
  %349 = vadd.xlane.f32.xlu0 %v348
  %v350 = vpop.xlane.xlu0 %349
  %v351 = vrcp.pop %v350
  %v352 = vmul.f32 %v347, %v351
  %353 = vrot.lane.b32.xlu0 %v251, 64
  %v354 = vpop.permute.xlu0 %353
  %v357 = vsel %vm266, %v352, 0
  %359 = vmatprep.subr.mxu0 0.0
  %360 = vmatpush1.msra.mxu0 %v354
  %361 = vmatprep.subr.mxu0 0.0
  %362 = vmatpush1.msra.mxu0 0.0
  %363 = vmatprep.subr.mxu0 0.0
  %364 = vmatpush1.msra.mxu0 0.0
  %365 = vmatprep.subr.mxu0 0.0
  %366 = vmatpush1.msra.mxu0 0.0
  %367 = vmatprep.subr.mxu0 0.0
  %368 = vmatpush1.msra.mxu0 0.0
  %369 = vmatprep.subr.mxu0 0.0
  %370 = vmatpush1.msra.mxu0 0.0
  %371 = vmatprep.subr.mxu0 0.0
  %372 = vmatpush1.msra.mxu0 0.0
  %373 = vmatprep.subr.mxu0 0.0
  %374 = vmatpush1.msra.mxu0 0.0
  %375 = vmatprep.subr.mxu0 0.0
  %376 = vmatpush1.msra.mxu0 0.0
  %377 = vmatprep.subr.mxu0 0.0
  %378 = vmatpush1.msra.mxu0 0.0
  %379 = vmatprep.subr.mxu0 0.0
  %380 = vmatpush1.msra.mxu0 0.0
  %381 = vmatprep.subr.mxu0 0.0
  %382 = vmatpush1.msra.mxu0 0.0
  %383 = vmatprep.subr.mxu0 0.0
  %384 = vmatpush1.msra.mxu0 0.0
  %385 = vmatprep.subr.mxu0 0.0
  %386 = vmatpush1.msra.mxu0 0.0
  %387 = vmatprep.subr.mxu0 0.0
  %388 = vmatpush1.msra.mxu0 0.0
  %389 = vmatprep.subr.mxu0 0.0
  %390 = vmatpush1.msra.mxu0 0.0
  %391 = vmatprep.subr.mxu0 0.0
  %392 = vmatpush1.msra.mxu0 0.0
  %393 = vmatprep.subr.mxu0 0.0
  %394 = vmatpush1.msra.mxu0 0.0
  %395 = vmatprep.subr.mxu0 0.0
  %396 = vmatpush1.msra.mxu0 0.0
  %397 = vmatprep.subr.mxu0 0.0
  %398 = vmatpush1.msra.mxu0 0.0
  %399 = vmatprep.subr.mxu0 0.0
  %400 = vmatpush1.msra.mxu0 0.0
  %401 = vmatprep.subr.mxu0 0.0
  %402 = vmatpush1.msra.mxu0 0.0
  %403 = vmatprep.subr.mxu0 0.0
  %404 = vmatpush1.msra.mxu0 0.0
  %405 = vmatprep.subr.mxu0 0.0
  %406 = vmatpush1.msra.mxu0 0.0
  %407 = vmatprep.subr.mxu0 0.0
  %408 = vmatpush1.msra.mxu0 0.0
  %409 = vmatprep.subr.mxu0 0.0
  %410 = vmatpush1.msra.mxu0 0.0
  %411 = vmatprep.subr.mxu0 0.0
  %412 = vmatpush1.msra.mxu0 0.0
  %413 = vmatprep.subr.mxu0 0.0
  %414 = vmatpush1.msra.mxu0 0.0
  %415 = vmatprep.subr.mxu0 0.0
  %416 = vmatpush1.msra.mxu0 0.0
  %417 = vmatprep.subr.mxu0 0.0
  %418 = vmatpush1.msra.mxu0 0.0
  %419 = vmatprep.subr.mxu0 0.0
  %420 = vmatpush1.msra.mxu0 0.0
  %421 = vmatprep.subr.mxu0 0.0
  %422 = vmatpush1.msra.mxu0 0.0
  %423 = vmatprep.mubr.f32.mxu0 0.0
  %424 = vmatmul.mubr.f32.gmra.mrb[0].mxu0 %v357
  %v425 = vpop.f32.mrb[0].mxu0
  %v426 = vadd.f32 0.0, %v425
  %v427 = vpop.f32.mrb[0].mxu0
  %428 = vdwg.mxu0
  %429 = vrot.lane.b32.xlu0 %v251, 120
  %v430 = vpop.permute.xlu0 %429
  %431 = vrot.lane.b32.xlu0 %v251, 88
  %v432 = vpop.permute.xlu0 %431
  %v433 = vsel %vm266, %v430, 0
  %v435 = vsel %vm266, %v432, 0
  %437 = vmatprep.subr.mxu0 0.0
  %438 = vmatpush1.xpose.msra.mxu0 %v435
  %439 = vmatprep.subr.mxu0 0.0
  %440 = vmatpush1.xpose.msra.mxu0 0.0
  %441 = vmatprep.subr.mxu0 0.0
  %442 = vmatpush1.xpose.msra.mxu0 0.0
  %443 = vmatprep.subr.mxu0 0.0
  %444 = vmatpush1.xpose.msra.mxu0 0.0
  %445 = vmatprep.subr.mxu0 0.0
  %446 = vmatpush1.xpose.msra.mxu0 0.0
  %447 = vmatprep.subr.mxu0 0.0
  %448 = vmatpush1.xpose.msra.mxu0 0.0
  %449 = vmatprep.subr.mxu0 0.0
  %450 = vmatpush1.xpose.msra.mxu0 0.0
  %451 = vmatprep.subr.mxu0 0.0
  %452 = vmatpush1.xpose.msra.mxu0 0.0
  %453 = vmatprep.subr.mxu0 0.0
  %454 = vmatpush1.xpose.msra.mxu0 0.0
  %455 = vmatprep.subr.mxu0 0.0
  %456 = vmatpush1.xpose.msra.mxu0 0.0
  %457 = vmatprep.subr.mxu0 0.0
  %458 = vmatpush1.xpose.msra.mxu0 0.0
  %459 = vmatprep.subr.mxu0 0.0
  %460 = vmatpush1.xpose.msra.mxu0 0.0
  %461 = vmatprep.subr.mxu0 0.0
  %462 = vmatpush1.xpose.msra.mxu0 0.0
  %463 = vmatprep.subr.mxu0 0.0
  %464 = vmatpush1.xpose.msra.mxu0 0.0
  %465 = vmatprep.subr.mxu0 0.0
  %466 = vmatpush1.xpose.msra.mxu0 0.0
  %467 = vmatprep.subr.mxu0 0.0
  %468 = vmatpush1.xpose.msra.mxu0 0.0
  %469 = vmatprep.subr.mxu0 0.0
  %470 = vmatpush1.xpose.msra.mxu0 0.0
  %471 = vmatprep.subr.mxu0 0.0
  %472 = vmatpush1.xpose.msra.mxu0 0.0
  %473 = vmatprep.subr.mxu0 0.0
  %474 = vmatpush1.xpose.msra.mxu0 0.0
  %475 = vmatprep.subr.mxu0 0.0
  %476 = vmatpush1.xpose.msra.mxu0 0.0
  %477 = vmatprep.subr.mxu0 0.0
  %478 = vmatpush1.xpose.msra.mxu0 0.0
  %479 = vmatprep.subr.mxu0 0.0
  %480 = vmatpush1.xpose.msra.mxu0 0.0
  %481 = vmatprep.subr.mxu0 0.0
  %482 = vmatpush1.xpose.msra.mxu0 0.0
  %483 = vmatprep.subr.mxu0 0.0
  %484 = vmatpush1.xpose.msra.mxu0 0.0
  %485 = vmatprep.subr.mxu0 0.0
  %486 = vmatpush1.xpose.msra.mxu0 0.0
  %487 = vmatprep.subr.mxu0 0.0
  %488 = vmatpush1.xpose.msra.mxu0 0.0
  %489 = vmatprep.subr.mxu0 0.0
  %490 = vmatpush1.xpose.msra.mxu0 0.0
  %491 = vmatprep.subr.mxu0 0.0
  %492 = vmatpush1.xpose.msra.mxu0 0.0
  %493 = vmatprep.subr.mxu0 0.0
  %494 = vmatpush1.xpose.msra.mxu0 0.0
  %495 = vmatprep.subr.mxu0 0.0
  %496 = vmatpush1.xpose.msra.mxu0 0.0
  %497 = vmatprep.subr.mxu0 0.0
  %498 = vmatpush1.xpose.msra.mxu0 0.0
  %499 = vmatprep.subr.mxu0 0.0
  %500 = vmatpush1.xpose.msra.mxu0 0.0
  %501 = vmatprep.mubr.f32.mxu0 0.0
  %502 = vmatmul.mubr.f32.gmra.mrb[0].mxu0 %v433
  %v503 = vpop.f32.mrb[0].mxu0
  %v504 = vadd.f32 0.0, %v503
  %v505 = vpop.f32.mrb[0].mxu0
  %506 = vdwg.mxu0
  %v507 = vmul.f32 %v504, 0.35355338
  %v508 = vsel %vm266, %v507, -inf
  %509 = vmax.xlane.f32.xlu0 %v508
  %v510 = vpop.xlane.xlu0 %509
  %v511 = vsub.f32 %v507, %v510
  %v512 = vmul.f32 %v511, 1.442695
  %v513 = vpow.pop %v512
  %v514 = vsel %vm266, %v513, 0.0
  %515 = vadd.xlane.f32.xlu0 %v514
  %v516 = vpop.xlane.xlu0 %515
  %v517 = vrcp.pop %v516
  %v518 = vmul.f32 %v513, %v517
  %519 = vrot.lane.b32.xlu0 %v251, 56
  %v520 = vpop.permute.xlu0 %519
  %v523 = vsel %vm266, %v518, 0
  %525 = vmatprep.subr.mxu0 0.0
  %526 = vmatpush1.msra.mxu0 %v520
  %527 = vmatprep.subr.mxu0 0.0
  %528 = vmatpush1.msra.mxu0 0.0
  %529 = vmatprep.subr.mxu0 0.0
  %530 = vmatpush1.msra.mxu0 0.0
  %531 = vmatprep.subr.mxu0 0.0
  %532 = vmatpush1.msra.mxu0 0.0
  %533 = vmatprep.subr.mxu0 0.0
  %534 = vmatpush1.msra.mxu0 0.0
  %535 = vmatprep.subr.mxu0 0.0
  %536 = vmatpush1.msra.mxu0 0.0
  %537 = vmatprep.subr.mxu0 0.0
  %538 = vmatpush1.msra.mxu0 0.0
  %539 = vmatprep.subr.mxu0 0.0
  %540 = vmatpush1.msra.mxu0 0.0
  %541 = vmatprep.subr.mxu0 0.0
  %542 = vmatpush1.msra.mxu0 0.0
  %543 = vmatprep.subr.mxu0 0.0
  %544 = vmatpush1.msra.mxu0 0.0
  %545 = vmatprep.subr.mxu0 0.0
  %546 = vmatpush1.msra.mxu0 0.0
  %547 = vmatprep.subr.mxu0 0.0
  %548 = vmatpush1.msra.mxu0 0.0
  %549 = vmatprep.subr.mxu0 0.0
  %550 = vmatpush1.msra.mxu0 0.0
  %551 = vmatprep.subr.mxu0 0.0
  %552 = vmatpush1.msra.mxu0 0.0
  %553 = vmatprep.subr.mxu0 0.0
  %554 = vmatpush1.msra.mxu0 0.0
  %555 = vmatprep.subr.mxu0 0.0
  %556 = vmatpush1.msra.mxu0 0.0
  %557 = vmatprep.subr.mxu0 0.0
  %558 = vmatpush1.msra.mxu0 0.0
  %559 = vmatprep.subr.mxu0 0.0
  %560 = vmatpush1.msra.mxu0 0.0
  %561 = vmatprep.subr.mxu0 0.0
  %562 = vmatpush1.msra.mxu0 0.0
  %563 = vmatprep.subr.mxu0 0.0
  %564 = vmatpush1.msra.mxu0 0.0
  %565 = vmatprep.subr.mxu0 0.0
  %566 = vmatpush1.msra.mxu0 0.0
  %567 = vmatprep.subr.mxu0 0.0
  %568 = vmatpush1.msra.mxu0 0.0
  %569 = vmatprep.subr.mxu0 0.0
  %570 = vmatpush1.msra.mxu0 0.0
  %571 = vmatprep.subr.mxu0 0.0
  %572 = vmatpush1.msra.mxu0 0.0
  %573 = vmatprep.subr.mxu0 0.0
  %574 = vmatpush1.msra.mxu0 0.0
  %575 = vmatprep.subr.mxu0 0.0
  %576 = vmatpush1.msra.mxu0 0.0
  %577 = vmatprep.subr.mxu0 0.0
  %578 = vmatpush1.msra.mxu0 0.0
  %579 = vmatprep.subr.mxu0 0.0
  %580 = vmatpush1.msra.mxu0 0.0
  %581 = vmatprep.subr.mxu0 0.0
  %582 = vmatpush1.msra.mxu0 0.0
  %583 = vmatprep.subr.mxu0 0.0
  %584 = vmatpush1.msra.mxu0 0.0
  %585 = vmatprep.subr.mxu0 0.0
  %586 = vmatpush1.msra.mxu0 0.0
  %587 = vmatprep.subr.mxu0 0.0
  %588 = vmatpush1.msra.mxu0 0.0
  %589 = vmatprep.mubr.f32.mxu0 0.0
  %590 = vmatmul.mubr.f32.gmra.mrb[0].mxu0 %v523
  %v591 = vpop.f32.mrb[0].mxu0
  %v592 = vadd.f32 0.0, %v591
  %v593 = vpop.f32.mrb[0].mxu0
  %594 = vdwg.mxu0
  %v596 = vsel %vm266, %v592, 0
  %598 = vmatprep.subr.mxu0 0.0
  %599 = vmatpush1.msra.mxu0 %v260
  %600 = vmatprep.subr.mxu0 0.0
  %601 = vmatpush1.msra.mxu0 0.0
  %602 = vmatprep.subr.mxu0 0.0
  %603 = vmatpush1.msra.mxu0 0.0
  %604 = vmatprep.subr.mxu0 0.0
  %605 = vmatpush1.msra.mxu0 0.0
  %606 = vmatprep.subr.mxu0 0.0
  %607 = vmatpush1.msra.mxu0 0.0
  %608 = vmatprep.subr.mxu0 0.0
  %609 = vmatpush1.msra.mxu0 0.0
  %610 = vmatprep.subr.mxu0 0.0
  %611 = vmatpush1.msra.mxu0 0.0
  %612 = vmatprep.subr.mxu0 0.0
  %613 = vmatpush1.msra.mxu0 0.0
  %614 = vmatprep.subr.mxu0 0.0
  %615 = vmatpush1.msra.mxu0 0.0
  %616 = vmatprep.subr.mxu0 0.0
  %617 = vmatpush1.msra.mxu0 0.0
  %618 = vmatprep.subr.mxu0 0.0
  %619 = vmatpush1.msra.mxu0 0.0
  %620 = vmatprep.subr.mxu0 0.0
  %621 = vmatpush1.msra.mxu0 0.0
  %622 = vmatprep.subr.mxu0 0.0
  %623 = vmatpush1.msra.mxu0 0.0
  %624 = vmatprep.subr.mxu0 0.0
  %625 = vmatpush1.msra.mxu0 0.0
  %626 = vmatprep.subr.mxu0 0.0
  %627 = vmatpush1.msra.mxu0 0.0
  %628 = vmatprep.subr.mxu0 0.0
  %629 = vmatpush1.msra.mxu0 0.0
  %630 = vmatprep.subr.mxu0 0.0
  %631 = vmatpush1.msra.mxu0 0.0
  %632 = vmatprep.subr.mxu0 0.0
  %633 = vmatpush1.msra.mxu0 0.0
  %634 = vmatprep.subr.mxu0 0.0
  %635 = vmatpush1.msra.mxu0 0.0
  %636 = vmatprep.subr.mxu0 0.0
  %637 = vmatpush1.msra.mxu0 0.0
  %638 = vmatprep.subr.mxu0 0.0
  %639 = vmatpush1.msra.mxu0 0.0
  %640 = vmatprep.subr.mxu0 0.0
  %641 = vmatpush1.msra.mxu0 0.0
  %642 = vmatprep.subr.mxu0 0.0
  %643 = vmatpush1.msra.mxu0 0.0
  %644 = vmatprep.subr.mxu0 0.0
  %645 = vmatpush1.msra.mxu0 0.0
  %646 = vmatprep.subr.mxu0 0.0
  %647 = vmatpush1.msra.mxu0 0.0
  %648 = vmatprep.subr.mxu0 0.0
  %649 = vmatpush1.msra.mxu0 0.0
  %650 = vmatprep.subr.mxu0 0.0
  %651 = vmatpush1.msra.mxu0 0.0
  %652 = vmatprep.subr.mxu0 0.0
  %653 = vmatpush1.msra.mxu0 0.0
  %654 = vmatprep.subr.mxu0 0.0
  %655 = vmatpush1.msra.mxu0 0.0
  %656 = vmatprep.subr.mxu0 0.0
  %657 = vmatpush1.msra.mxu0 0.0
  %658 = vmatprep.subr.mxu0 0.0
  %659 = vmatpush1.msra.mxu0 0.0
  %660 = vmatprep.subr.mxu0 0.0
  %661 = vmatpush1.msra.mxu0 0.0
  %662 = vmatprep.mubr.f32.mxu0 0.0
  %663 = vmatmul.mubr.f32.gmra.mrb[0].mxu0 %v596
  %v664 = vpop.f32.mrb[0].mxu0
  %v665 = vadd.f32 0.0, %v664
  %v666 = vpop.f32.mrb[0].mxu0
  %667 = vdwg.mxu0
  %v669 = vsel %vm266, %v426, 0
  %671 = vmatprep.subr.mxu0 0.0
  %672 = vmatpush1.msra.mxu0 %v259
  %673 = vmatprep.subr.mxu0 0.0
  %674 = vmatpush1.msra.mxu0 0.0
  %675 = vmatprep.subr.mxu0 0.0
  %676 = vmatpush1.msra.mxu0 0.0
  %677 = vmatprep.subr.mxu0 0.0
  %678 = vmatpush1.msra.mxu0 0.0
  %679 = vmatprep.subr.mxu0 0.0
  %680 = vmatpush1.msra.mxu0 0.0
  %681 = vmatprep.subr.mxu0 0.0
  %682 = vmatpush1.msra.mxu0 0.0
  %683 = vmatprep.subr.mxu0 0.0
  %684 = vmatpush1.msra.mxu0 0.0
  %685 = vmatprep.subr.mxu0 0.0
  %686 = vmatpush1.msra.mxu0 0.0
  %687 = vmatprep.subr.mxu0 0.0
  %688 = vmatpush1.msra.mxu0 0.0
  %689 = vmatprep.subr.mxu0 0.0
  %690 = vmatpush1.msra.mxu0 0.0
  %691 = vmatprep.subr.mxu0 0.0
  %692 = vmatpush1.msra.mxu0 0.0
  %693 = vmatprep.subr.mxu0 0.0
  %694 = vmatpush1.msra.mxu0 0.0
  %695 = vmatprep.subr.mxu0 0.0
  %696 = vmatpush1.msra.mxu0 0.0
  %697 = vmatprep.subr.mxu0 0.0
  %698 = vmatpush1.msra.mxu0 0.0
  %699 = vmatprep.subr.mxu0 0.0
  %700 = vmatpush1.msra.mxu0 0.0
  %701 = vmatprep.subr.mxu0 0.0
  %702 = vmatpush1.msra.mxu0 0.0
  %703 = vmatprep.subr.mxu0 0.0
  %704 = vmatpush1.msra.mxu0 0.0
  %705 = vmatprep.subr.mxu0 0.0
  %706 = vmatpush1.msra.mxu0 0.0
  %707 = vmatprep.subr.mxu0 0.0
  %708 = vmatpush1.msra.mxu0 0.0
  %709 = vmatprep.subr.mxu0 0.0
  %710 = vmatpush1.msra.mxu0 0.0
  %711 = vmatprep.subr.mxu0 0.0
  %712 = vmatpush1.msra.mxu0 0.0
  %713 = vmatprep.subr.mxu0 0.0
  %714 = vmatpush1.msra.mxu0 0.0
  %715 = vmatprep.subr.mxu0 0.0
  %716 = vmatpush1.msra.mxu0 0.0
  %717 = vmatprep.subr.mxu0 0.0
  %718 = vmatpush1.msra.mxu0 0.0
  %719 = vmatprep.subr.mxu0 0.0
  %720 = vmatpush1.msra.mxu0 0.0
  %721 = vmatprep.subr.mxu0 0.0
  %722 = vmatpush1.msra.mxu0 0.0
  %723 = vmatprep.subr.mxu0 0.0
  %724 = vmatpush1.msra.mxu0 0.0
  %725 = vmatprep.subr.mxu0 0.0
  %726 = vmatpush1.msra.mxu0 0.0
  %727 = vmatprep.subr.mxu0 0.0
  %728 = vmatpush1.msra.mxu0 0.0
  %729 = vmatprep.subr.mxu0 0.0
  %730 = vmatpush1.msra.mxu0 0.0
  %731 = vmatprep.subr.mxu0 0.0
  %732 = vmatpush1.msra.mxu0 0.0
  %733 = vmatprep.subr.mxu0 0.0
  %734 = vmatpush1.msra.mxu0 0.0
  %735 = vmatprep.mubr.f32.mxu0 0.0
  %736 = vmatmul.mubr.f32.gmra.mrb[0].mxu0 %v669
  %v737 = vpop.f32.mrb[0].mxu0
  %v738 = vadd.f32 %v665, %v737
  %v739 = vpop.f32.mrb[0].mxu0
  %740 = vdwg.mxu0
  %741 = vrot.lane.b32.xlu0 %v251, 112
  %v742 = vpop.permute.xlu0 %741
  %743 = vrot.lane.b32.xlu0 %v251, 80
  %v744 = vpop.permute.xlu0 %743
  %v745 = vsel %vm266, %v742, 0
  %v747 = vsel %vm266, %v744, 0
  %749 = vmatprep.subr.mxu0 0.0
  %750 = vmatpush1.xpose.msra.mxu0 %v747
  %751 = vmatprep.subr.mxu0 0.0
  %752 = vmatpush1.xpose.msra.mxu0 0.0
  %753 = vmatprep.subr.mxu0 0.0
  %754 = vmatpush1.xpose.msra.mxu0 0.0
  %755 = vmatprep.subr.mxu0 0.0
  %756 = vmatpush1.xpose.msra.mxu0 0.0
  %757 = vmatprep.subr.mxu0 0.0
  %758 = vmatpush1.xpose.msra.mxu0 0.0
  %759 = vmatprep.subr.mxu0 0.0
  %760 = vmatpush1.xpose.msra.mxu0 0.0
  %761 = vmatprep.subr.mxu0 0.0
  %762 = vmatpush1.xpose.msra.mxu0 0.0
  %763 = vmatprep.subr.mxu0 0.0
  %764 = vmatpush1.xpose.msra.mxu0 0.0
  %765 = vmatprep.subr.mxu0 0.0
  %766 = vmatpush1.xpose.msra.mxu0 0.0
  %767 = vmatprep.subr.mxu0 0.0
  %768 = vmatpush1.xpose.msra.mxu0 0.0
  %769 = vmatprep.subr.mxu0 0.0
  %770 = vmatpush1.xpose.msra.mxu0 0.0
  %771 = vmatprep.subr.mxu0 0.0
  %772 = vmatpush1.xpose.msra.mxu0 0.0
  %773 = vmatprep.subr.mxu0 0.0
  %774 = vmatpush1.xpose.msra.mxu0 0.0
  %775 = vmatprep.subr.mxu0 0.0
  %776 = vmatpush1.xpose.msra.mxu0 0.0
  %777 = vmatprep.subr.mxu0 0.0
  %778 = vmatpush1.xpose.msra.mxu0 0.0
  %779 = vmatprep.subr.mxu0 0.0
  %780 = vmatpush1.xpose.msra.mxu0 0.0
  %781 = vmatprep.subr.mxu0 0.0
  %782 = vmatpush1.xpose.msra.mxu0 0.0
  %783 = vmatprep.subr.mxu0 0.0
  %784 = vmatpush1.xpose.msra.mxu0 0.0
  %785 = vmatprep.subr.mxu0 0.0
  %786 = vmatpush1.xpose.msra.mxu0 0.0
  %787 = vmatprep.subr.mxu0 0.0
  %788 = vmatpush1.xpose.msra.mxu0 0.0
  %789 = vmatprep.subr.mxu0 0.0
  %790 = vmatpush1.xpose.msra.mxu0 0.0
  %791 = vmatprep.subr.mxu0 0.0
  %792 = vmatpush1.xpose.msra.mxu0 0.0
  %793 = vmatprep.subr.mxu0 0.0
  %794 = vmatpush1.xpose.msra.mxu0 0.0
  %795 = vmatprep.subr.mxu0 0.0
  %796 = vmatpush1.xpose.msra.mxu0 0.0
  %797 = vmatprep.subr.mxu0 0.0
  %798 = vmatpush1.xpose.msra.mxu0 0.0
  %799 = vmatprep.subr.mxu0 0.0
  %800 = vmatpush1.xpose.msra.mxu0 0.0
  %801 = vmatprep.subr.mxu0 0.0
  %802 = vmatpush1.xpose.msra.mxu0 0.0
  %803 = vmatprep.subr.mxu0 0.0
  %804 = vmatpush1.xpose.msra.mxu0 0.0
  %805 = vmatprep.subr.mxu0 0.0
  %806 = vmatpush1.xpose.msra.mxu0 0.0
  %807 = vmatprep.subr.mxu0 0.0
  %808 = vmatpush1.xpose.msra.mxu0 0.0
  %809 = vmatprep.subr.mxu0 0.0
  %810 = vmatpush1.xpose.msra.mxu0 0.0
  %811 = vmatprep.subr.mxu0 0.0
  %812 = vmatpush1.xpose.msra.mxu0 0.0
  %813 = vmatprep.mubr.f32.mxu0 0.0
  %814 = vmatmul.mubr.f32.gmra.mrb[0].mxu0 %v745
  %v815 = vpop.f32.mrb[0].mxu0
  %v816 = vadd.f32 0.0, %v815
  %v817 = vpop.f32.mrb[0].mxu0
  %818 = vdwg.mxu0
  %v819 = vmul.f32 %v816, 0.35355338
  %v820 = vsel %vm266, %v819, -inf
  %821 = vmax.xlane.f32.xlu0 %v820
  %v822 = vpop.xlane.xlu0 %821
  %v823 = vsub.f32 %v819, %v822
  %v824 = vmul.f32 %v823, 1.442695
  %v825 = vpow.pop %v824
  %v826 = vsel %vm266, %v825, 0.0
  %827 = vadd.xlane.f32.xlu0 %v826
  %v828 = vpop.xlane.xlu0 %827
  %v829 = vrcp.pop %v828
  %v830 = vmul.f32 %v825, %v829
  %831 = vrot.lane.b32.xlu0 %v251, 48
  %v832 = vpop.permute.xlu0 %831
  %v835 = vsel %vm266, %v830, 0
  %837 = vmatprep.subr.mxu0 0.0
  %838 = vmatpush1.msra.mxu0 %v832
  %839 = vmatprep.subr.mxu0 0.0
  %840 = vmatpush1.msra.mxu0 0.0
  %841 = vmatprep.subr.mxu0 0.0
  %842 = vmatpush1.msra.mxu0 0.0
  %843 = vmatprep.subr.mxu0 0.0
  %844 = vmatpush1.msra.mxu0 0.0
  %845 = vmatprep.subr.mxu0 0.0
  %846 = vmatpush1.msra.mxu0 0.0
  %847 = vmatprep.subr.mxu0 0.0
  %848 = vmatpush1.msra.mxu0 0.0
  %849 = vmatprep.subr.mxu0 0.0
  %850 = vmatpush1.msra.mxu0 0.0
  %851 = vmatprep.subr.mxu0 0.0
  %852 = vmatpush1.msra.mxu0 0.0
  %853 = vmatprep.subr.mxu0 0.0
  %854 = vmatpush1.msra.mxu0 0.0
  %855 = vmatprep.subr.mxu0 0.0
  %856 = vmatpush1.msra.mxu0 0.0
  %857 = vmatprep.subr.mxu0 0.0
  %858 = vmatpush1.msra.mxu0 0.0
  %859 = vmatprep.subr.mxu0 0.0
  %860 = vmatpush1.msra.mxu0 0.0
  %861 = vmatprep.subr.mxu0 0.0
  %862 = vmatpush1.msra.mxu0 0.0
  %863 = vmatprep.subr.mxu0 0.0
  %864 = vmatpush1.msra.mxu0 0.0
  %865 = vmatprep.subr.mxu0 0.0
  %866 = vmatpush1.msra.mxu0 0.0
  %867 = vmatprep.subr.mxu0 0.0
  %868 = vmatpush1.msra.mxu0 0.0
  %869 = vmatprep.subr.mxu0 0.0
  %870 = vmatpush1.msra.mxu0 0.0
  %871 = vmatprep.subr.mxu0 0.0
  %872 = vmatpush1.msra.mxu0 0.0
  %873 = vmatprep.subr.mxu0 0.0
  %874 = vmatpush1.msra.mxu0 0.0
  %875 = vmatprep.subr.mxu0 0.0
  %876 = vmatpush1.msra.mxu0 0.0
  %877 = vmatprep.subr.mxu0 0.0
  %878 = vmatpush1.msra.mxu0 0.0
  %879 = vmatprep.subr.mxu0 0.0
  %880 = vmatpush1.msra.mxu0 0.0
  %881 = vmatprep.subr.mxu0 0.0
  %882 = vmatpush1.msra.mxu0 0.0
  %883 = vmatprep.subr.mxu0 0.0
  %884 = vmatpush1.msra.mxu0 0.0
  %885 = vmatprep.subr.mxu0 0.0
  %886 = vmatpush1.msra.mxu0 0.0
  %887 = vmatprep.subr.mxu0 0.0
  %888 = vmatpush1.msra.mxu0 0.0
  %889 = vmatprep.subr.mxu0 0.0
  %890 = vmatpush1.msra.mxu0 0.0
  %891 = vmatprep.subr.mxu0 0.0
  %892 = vmatpush1.msra.mxu0 0.0
  %893 = vmatprep.subr.mxu0 0.0
  %894 = vmatpush1.msra.mxu0 0.0
  %895 = vmatprep.subr.mxu0 0.0
  %896 = vmatpush1.msra.mxu0 0.0
  %897 = vmatprep.subr.mxu0 0.0
  %898 = vmatpush1.msra.mxu0 0.0
  %899 = vmatprep.subr.mxu0 0.0
  %900 = vmatpush1.msra.mxu0 0.0
  %901 = vmatprep.mubr.f32.mxu0 0.0
  %902 = vmatmul.mubr.f32.gmra.mrb[0].mxu0 %v835
  %v903 = vpop.f32.mrb[0].mxu0
  %v904 = vadd.f32 0.0, %v903
  %v905 = vpop.f32.mrb[0].mxu0
  %906 = vdwg.mxu0
  %v908 = vsel %vm266, %v904, 0
  %910 = vmatprep.subr.mxu0 0.0
  %911 = vmatpush1.msra.mxu0 %v261
  %912 = vmatprep.subr.mxu0 0.0
  %913 = vmatpush1.msra.mxu0 0.0
  %914 = vmatprep.subr.mxu0 0.0
  %915 = vmatpush1.msra.mxu0 0.0
  %916 = vmatprep.subr.mxu0 0.0
  %917 = vmatpush1.msra.mxu0 0.0
  %918 = vmatprep.subr.mxu0 0.0
  %919 = vmatpush1.msra.mxu0 0.0
  %920 = vmatprep.subr.mxu0 0.0
  %921 = vmatpush1.msra.mxu0 0.0
  %922 = vmatprep.subr.mxu0 0.0
  %923 = vmatpush1.msra.mxu0 0.0
  %924 = vmatprep.subr.mxu0 0.0
  %925 = vmatpush1.msra.mxu0 0.0
  %926 = vmatprep.subr.mxu0 0.0
  %927 = vmatpush1.msra.mxu0 0.0
  %928 = vmatprep.subr.mxu0 0.0
  %929 = vmatpush1.msra.mxu0 0.0
  %930 = vmatprep.subr.mxu0 0.0
  %931 = vmatpush1.msra.mxu0 0.0
  %932 = vmatprep.subr.mxu0 0.0
  %933 = vmatpush1.msra.mxu0 0.0
  %934 = vmatprep.subr.mxu0 0.0
  %935 = vmatpush1.msra.mxu0 0.0
  %936 = vmatprep.subr.mxu0 0.0
  %937 = vmatpush1.msra.mxu0 0.0
  %938 = vmatprep.subr.mxu0 0.0
  %939 = vmatpush1.msra.mxu0 0.0
  %940 = vmatprep.subr.mxu0 0.0
  %941 = vmatpush1.msra.mxu0 0.0
  %942 = vmatprep.subr.mxu0 0.0
  %943 = vmatpush1.msra.mxu0 0.0
  %944 = vmatprep.subr.mxu0 0.0
  %945 = vmatpush1.msra.mxu0 0.0
  %946 = vmatprep.subr.mxu0 0.0
  %947 = vmatpush1.msra.mxu0 0.0
  %948 = vmatprep.subr.mxu0 0.0
  %949 = vmatpush1.msra.mxu0 0.0
  %950 = vmatprep.subr.mxu0 0.0
  %951 = vmatpush1.msra.mxu0 0.0
  %952 = vmatprep.subr.mxu0 0.0
  %953 = vmatpush1.msra.mxu0 0.0
  %954 = vmatprep.subr.mxu0 0.0
  %955 = vmatpush1.msra.mxu0 0.0
  %956 = vmatprep.subr.mxu0 0.0
  %957 = vmatpush1.msra.mxu0 0.0
  %958 = vmatprep.subr.mxu0 0.0
  %959 = vmatpush1.msra.mxu0 0.0
  %960 = vmatprep.subr.mxu0 0.0
  %961 = vmatpush1.msra.mxu0 0.0
  %962 = vmatprep.subr.mxu0 0.0
  %963 = vmatpush1.msra.mxu0 0.0
  %964 = vmatprep.subr.mxu0 0.0
  %965 = vmatpush1.msra.mxu0 0.0
  %966 = vmatprep.subr.mxu0 0.0
  %967 = vmatpush1.msra.mxu0 0.0
  %968 = vmatprep.subr.mxu0 0.0
  %969 = vmatpush1.msra.mxu0 0.0
  %970 = vmatprep.subr.mxu0 0.0
  %971 = vmatpush1.msra.mxu0 0.0
  %972 = vmatprep.subr.mxu0 0.0
  %973 = vmatpush1.msra.mxu0 0.0
  %974 = vmatprep.mubr.f32.mxu0 0.0
  %975 = vmatmul.mubr.f32.gmra.mrb[0].mxu0 %v908
  %v976 = vpop.f32.mrb[0].mxu0
  %v977 = vadd.f32 0.0, %v976
  %v978 = vpop.f32.mrb[0].mxu0
  %979 = vdwg.mxu0
  %v980 = vadd.f32 %v738, %v977
  %981 = vrot.lane.b32.xlu0 %v251, 104
  %v982 = vpop.permute.xlu0 %981
  %983 = vrot.lane.b32.xlu0 %v251, 72
  %v984 = vpop.permute.xlu0 %983
  %v985 = vsel %vm266, %v982, 0
  %v987 = vsel %vm266, %v984, 0
  %989 = vmatprep.subr.mxu0 0.0
  %990 = vmatpush1.xpose.msra.mxu0 %v987
  %991 = vmatprep.subr.mxu0 0.0
  %992 = vmatpush1.xpose.msra.mxu0 0.0
  %993 = vmatprep.subr.mxu0 0.0
  %994 = vmatpush1.xpose.msra.mxu0 0.0
  %995 = vmatprep.subr.mxu0 0.0
  %996 = vmatpush1.xpose.msra.mxu0 0.0
  %997 = vmatprep.subr.mxu0 0.0
  %998 = vmatpush1.xpose.msra.mxu0 0.0
  %999 = vmatprep.subr.mxu0 0.0
  %1000 = vmatpush1.xpose.msra.mxu0 0.0
  %1001 = vmatprep.subr.mxu0 0.0
  %1002 = vmatpush1.xpose.msra.mxu0 0.0
  %1003 = vmatprep.subr.mxu0 0.0
  %1004 = vmatpush1.xpose.msra.mxu0 0.0
  %1005 = vmatprep.subr.mxu0 0.0
  %1006 = vmatpush1.xpose.msra.mxu0 0.0
  %1007 = vmatprep.subr.mxu0 0.0
  %1008 = vmatpush1.xpose.msra.mxu0 0.0
  %1009 = vmatprep.subr.mxu0 0.0
  %1010 = vmatpush1.xpose.msra.mxu0 0.0
  %1011 = vmatprep.subr.mxu0 0.0
  %1012 = vmatpush1.xpose.msra.mxu0 0.0
  %1013 = vmatprep.subr.mxu0 0.0
  %1014 = vmatpush1.xpose.msra.mxu0 0.0
  %1015 = vmatprep.subr.mxu0 0.0
  %1016 = vmatpush1.xpose.msra.mxu0 0.0
  %1017 = vmatprep.subr.mxu0 0.0
  %1018 = vmatpush1.xpose.msra.mxu0 0.0
  %1019 = vmatprep.subr.mxu0 0.0
  %1020 = vmatpush1.xpose.msra.mxu0 0.0
  %1021 = vmatprep.subr.mxu0 0.0
  %1022 = vmatpush1.xpose.msra.mxu0 0.0
  %1023 = vmatprep.subr.mxu0 0.0
  %1024 = vmatpush1.xpose.msra.mxu0 0.0
  %1025 = vmatprep.subr.mxu0 0.0
  %1026 = vmatpush1.xpose.msra.mxu0 0.0
  %1027 = vmatprep.subr.mxu0 0.0
  %1028 = vmatpush1.xpose.msra.mxu0 0.0
  %1029 = vmatprep.subr.mxu0 0.0
  %1030 = vmatpush1.xpose.msra.mxu0 0.0
  %1031 = vmatprep.subr.mxu0 0.0
  %1032 = vmatpush1.xpose.msra.mxu0 0.0
  %1033 = vmatprep.subr.mxu0 0.0
  %1034 = vmatpush1.xpose.msra.mxu0 0.0
  %1035 = vmatprep.subr.mxu0 0.0
  %1036 = vmatpush1.xpose.msra.mxu0 0.0
  %1037 = vmatprep.subr.mxu0 0.0
  %1038 = vmatpush1.xpose.msra.mxu0 0.0
  %1039 = vmatprep.subr.mxu0 0.0
  %1040 = vmatpush1.xpose.msra.mxu0 0.0
  %1041 = vmatprep.subr.mxu0 0.0
  %1042 = vmatpush1.xpose.msra.mxu0 0.0
  %1043 = vmatprep.subr.mxu0 0.0
  %1044 = vmatpush1.xpose.msra.mxu0 0.0
  %1045 = vmatprep.subr.mxu0 0.0
  %1046 = vmatpush1.xpose.msra.mxu0 0.0
  %1047 = vmatprep.subr.mxu0 0.0
  %1048 = vmatpush1.xpose.msra.mxu0 0.0
  %1049 = vmatprep.subr.mxu0 0.0
  %1050 = vmatpush1.xpose.msra.mxu0 0.0
  %1051 = vmatprep.subr.mxu0 0.0
  %1052 = vmatpush1.xpose.msra.mxu0 0.0
  %1053 = vmatprep.mubr.f32.mxu0 0.0
  %1054 = vmatmul.mubr.f32.gmra.mrb[0].mxu0 %v985
  %v1055 = vpop.f32.mrb[0].mxu0
  %v1056 = vadd.f32 0.0, %v1055
  %v1057 = vpop.f32.mrb[0].mxu0
  %1058 = vdwg.mxu0
  %v1059 = vmul.f32 %v1056, 0.35355338
  %v1060 = vsel %vm266, %v1059, -inf
  %1061 = vmax.xlane.f32.xlu0 %v1060
  %v1062 = vpop.xlane.xlu0 %1061
  %v1063 = vsub.f32 %v1059, %v1062
  %v1064 = vmul.f32 %v1063, 1.442695
  %v1065 = vpow.pop %v1064
  %v1066 = vsel %vm266, %v1065, 0.0
  %1067 = vadd.xlane.f32.xlu0 %v1066
  %v1068 = vpop.xlane.xlu0 %1067
  %v1069 = vrcp.pop %v1068
  %v1070 = vmul.f32 %v1065, %v1069
  %1071 = vrot.lane.b32.xlu0 %v251, 40
  %v1072 = vpop.permute.xlu0 %1071
  %v1075 = vsel %vm266, %v1070, 0
  %1077 = vmatprep.subr.mxu0 0.0
  %1078 = vmatpush1.msra.mxu0 %v1072
  %1079 = vmatprep.subr.mxu0 0.0
  %1080 = vmatpush1.msra.mxu0 0.0
  %1081 = vmatprep.subr.mxu0 0.0
  %1082 = vmatpush1.msra.mxu0 0.0
  %1083 = vmatprep.subr.mxu0 0.0
  %1084 = vmatpush1.msra.mxu0 0.0
  %1085 = vmatprep.subr.mxu0 0.0
  %1086 = vmatpush1.msra.mxu0 0.0
  %1087 = vmatprep.subr.mxu0 0.0
  %1088 = vmatpush1.msra.mxu0 0.0
  %1089 = vmatprep.subr.mxu0 0.0
  %1090 = vmatpush1.msra.mxu0 0.0
  %1091 = vmatprep.subr.mxu0 0.0
  %1092 = vmatpush1.msra.mxu0 0.0
  %1093 = vmatprep.subr.mxu0 0.0
  %1094 = vmatpush1.msra.mxu0 0.0
  %1095 = vmatprep.subr.mxu0 0.0
  %1096 = vmatpush1.msra.mxu0 0.0
  %1097 = vmatprep.subr.mxu0 0.0
  %1098 = vmatpush1.msra.mxu0 0.0
  %1099 = vmatprep.subr.mxu0 0.0
  %1100 = vmatpush1.msra.mxu0 0.0
  %1101 = vmatprep.subr.mxu0 0.0
  %1102 = vmatpush1.msra.mxu0 0.0
  %1103 = vmatprep.subr.mxu0 0.0
  %1104 = vmatpush1.msra.mxu0 0.0
  %1105 = vmatprep.subr.mxu0 0.0
  %1106 = vmatpush1.msra.mxu0 0.0
  %1107 = vmatprep.subr.mxu0 0.0
  %1108 = vmatpush1.msra.mxu0 0.0
  %1109 = vmatprep.subr.mxu0 0.0
  %1110 = vmatpush1.msra.mxu0 0.0
  %1111 = vmatprep.subr.mxu0 0.0
  %1112 = vmatpush1.msra.mxu0 0.0
  %1113 = vmatprep.subr.mxu0 0.0
  %1114 = vmatpush1.msra.mxu0 0.0
  %1115 = vmatprep.subr.mxu0 0.0
  %1116 = vmatpush1.msra.mxu0 0.0
  %1117 = vmatprep.subr.mxu0 0.0
  %1118 = vmatpush1.msra.mxu0 0.0
  %1119 = vmatprep.subr.mxu0 0.0
  %1120 = vmatpush1.msra.mxu0 0.0
  %1121 = vmatprep.subr.mxu0 0.0
  %1122 = vmatpush1.msra.mxu0 0.0
  %1123 = vmatprep.subr.mxu0 0.0
  %1124 = vmatpush1.msra.mxu0 0.0
  %1125 = vmatprep.subr.mxu0 0.0
  %1126 = vmatpush1.msra.mxu0 0.0
  %1127 = vmatprep.subr.mxu0 0.0
  %1128 = vmatpush1.msra.mxu0 0.0
  %1129 = vmatprep.subr.mxu0 0.0
  %1130 = vmatpush1.msra.mxu0 0.0
  %1131 = vmatprep.subr.mxu0 0.0
  %1132 = vmatpush1.msra.mxu0 0.0
  %1133 = vmatprep.subr.mxu0 0.0
  %1134 = vmatpush1.msra.mxu0 0.0
  %1135 = vmatprep.subr.mxu0 0.0
  %1136 = vmatpush1.msra.mxu0 0.0
  %1137 = vmatprep.subr.mxu0 0.0
  %1138 = vmatpush1.msra.mxu0 0.0
  %1139 = vmatprep.subr.mxu0 0.0
  %1140 = vmatpush1.msra.mxu0 0.0
  %1141 = vmatprep.mubr.f32.mxu0 0.0
  %1142 = vmatmul.mubr.f32.gmra.mrb[0].mxu0 %v1075
  %v1143 = vpop.f32.mrb[0].mxu0
  %v1144 = vadd.f32 0.0, %v1143
  %v1145 = vpop.f32.mrb[0].mxu0
  %1146 = vdwg.mxu0
  %v1148 = vsel %vm266, %v1144, 0
  %1150 = vmatprep.subr.mxu0 0.0
  %1151 = vmatpush1.msra.mxu0 %v262
  %1152 = vmatprep.subr.mxu0 0.0
  %1153 = vmatpush1.msra.mxu0 0.0
  %1154 = vmatprep.subr.mxu0 0.0
  %1155 = vmatpush1.msra.mxu0 0.0
  %1156 = vmatprep.subr.mxu0 0.0
  %1157 = vmatpush1.msra.mxu0 0.0
  %1158 = vmatprep.subr.mxu0 0.0
  %1159 = vmatpush1.msra.mxu0 0.0
  %1160 = vmatprep.subr.mxu0 0.0
  %1161 = vmatpush1.msra.mxu0 0.0
  %1162 = vmatprep.subr.mxu0 0.0
  %1163 = vmatpush1.msra.mxu0 0.0
  %1164 = vmatprep.subr.mxu0 0.0
  %1165 = vmatpush1.msra.mxu0 0.0
  %1166 = vmatprep.subr.mxu0 0.0
  %1167 = vmatpush1.msra.mxu0 0.0
  %1168 = vmatprep.subr.mxu0 0.0
  %1169 = vmatpush1.msra.mxu0 0.0
  %1170 = vmatprep.subr.mxu0 0.0
  %1171 = vmatpush1.msra.mxu0 0.0
  %1172 = vmatprep.subr.mxu0 0.0
  %1173 = vmatpush1.msra.mxu0 0.0
  %1174 = vmatprep.subr.mxu0 0.0
  %1175 = vmatpush1.msra.mxu0 0.0
  %1176 = vmatprep.subr.mxu0 0.0
  %1177 = vmatpush1.msra.mxu0 0.0
  %1178 = vmatprep.subr.mxu0 0.0
  %1179 = vmatpush1.msra.mxu0 0.0
  %1180 = vmatprep.subr.mxu0 0.0
  %1181 = vmatpush1.msra.mxu0 0.0
  %1182 = vmatprep.subr.mxu0 0.0
  %1183 = vmatpush1.msra.mxu0 0.0
  %1184 = vmatprep.subr.mxu0 0.0
  %1185 = vmatpush1.msra.mxu0 0.0
  %1186 = vmatprep.subr.mxu0 0.0
  %1187 = vmatpush1.msra.mxu0 0.0
  %1188 = vmatprep.subr.mxu0 0.0
  %1189 = vmatpush1.msra.mxu0 0.0
  %1190 = vmatprep.subr.mxu0 0.0
  %1191 = vmatpush1.msra.mxu0 0.0
  %1192 = vmatprep.subr.mxu0 0.0
  %1193 = vmatpush1.msra.mxu0 0.0
  %1194 = vmatprep.subr.mxu0 0.0
  %1195 = vmatpush1.msra.mxu0 0.0
  %1196 = vmatprep.subr.mxu0 0.0
  %1197 = vmatpush1.msra.mxu0 0.0
  %1198 = vmatprep.subr.mxu0 0.0
  %1199 = vmatpush1.msra.mxu0 0.0
  %1200 = vmatprep.subr.mxu0 0.0
  %1201 = vmatpush1.msra.mxu0 0.0
  %1202 = vmatprep.subr.mxu0 0.0
  %1203 = vmatpush1.msra.mxu0 0.0
  %1204 = vmatprep.subr.mxu0 0.0
  %1205 = vmatpush1.msra.mxu0 0.0
  %1206 = vmatprep.subr.mxu0 0.0
  %1207 = vmatpush1.msra.mxu0 0.0
  %1208 = vmatprep.subr.mxu0 0.0
  %1209 = vmatpush1.msra.mxu0 0.0
  %1210 = vmatprep.subr.mxu0 0.0
  %1211 = vmatpush1.msra.mxu0 0.0
  %1212 = vmatprep.subr.mxu0 0.0
  %1213 = vmatpush1.msra.mxu0 0.0
  %1214 = vmatprep.mubr.f32.mxu0 0.0
  %1215 = vmatmul.mubr.f32.gmra.mrb[0].mxu0 %v1148
  %v1216 = vpop.f32.mrb[0].mxu0
  %v1217 = vadd.f32 0.0, %v1216
  %v1218 = vpop.f32.mrb[0].mxu0
  %1219 = vdwg.mxu0
  %v1220 = vadd.f32 %v980, %v1217
  %1222 = vrot.lane.b32.xlu0 %v256, 96
  %v1223 = vpop.permute.xlu0 %1222
  %v1224 = vsel %vm266, %v256, 0
  %v1226 = vsel %vm266, %v1223, 0
  %1228 = vmatprep.subr.mxu0 0.0
  %1229 = vmatpush1.xpose.msra.mxu0 %v1226
  %1230 = vmatprep.subr.mxu0 0.0
  %1231 = vmatpush1.xpose.msra.mxu0 0.0
  %1232 = vmatprep.subr.mxu0 0.0
  %1233 = vmatpush1.xpose.msra.mxu0 0.0
  %1234 = vmatprep.subr.mxu0 0.0
  %1235 = vmatpush1.xpose.msra.mxu0 0.0
  %1236 = vmatprep.subr.mxu0 0.0
  %1237 = vmatpush1.xpose.msra.mxu0 0.0
  %1238 = vmatprep.subr.mxu0 0.0
  %1239 = vmatpush1.xpose.msra.mxu0 0.0
  %1240 = vmatprep.subr.mxu0 0.0
  %1241 = vmatpush1.xpose.msra.mxu0 0.0
  %1242 = vmatprep.subr.mxu0 0.0
  %1243 = vmatpush1.xpose.msra.mxu0 0.0
  %1244 = vmatprep.subr.mxu0 0.0
  %1245 = vmatpush1.xpose.msra.mxu0 0.0
  %1246 = vmatprep.subr.mxu0 0.0
  %1247 = vmatpush1.xpose.msra.mxu0 0.0
  %1248 = vmatprep.subr.mxu0 0.0
  %1249 = vmatpush1.xpose.msra.mxu0 0.0
  %1250 = vmatprep.subr.mxu0 0.0
  %1251 = vmatpush1.xpose.msra.mxu0 0.0
  %1252 = vmatprep.subr.mxu0 0.0
  %1253 = vmatpush1.xpose.msra.mxu0 0.0
  %1254 = vmatprep.subr.mxu0 0.0
  %1255 = vmatpush1.xpose.msra.mxu0 0.0
  %1256 = vmatprep.subr.mxu0 0.0
  %1257 = vmatpush1.xpose.msra.mxu0 0.0
  %1258 = vmatprep.subr.mxu0 0.0
  %1259 = vmatpush1.xpose.msra.mxu0 0.0
  %1260 = vmatprep.subr.mxu0 0.0
  %1261 = vmatpush1.xpose.msra.mxu0 0.0
  %1262 = vmatprep.subr.mxu0 0.0
  %1263 = vmatpush1.xpose.msra.mxu0 0.0
  %1264 = vmatprep.subr.mxu0 0.0
  %1265 = vmatpush1.xpose.msra.mxu0 0.0
  %1266 = vmatprep.subr.mxu0 0.0
  %1267 = vmatpush1.xpose.msra.mxu0 0.0
  %1268 = vmatprep.subr.mxu0 0.0
  %1269 = vmatpush1.xpose.msra.mxu0 0.0
  %1270 = vmatprep.subr.mxu0 0.0
  %1271 = vmatpush1.xpose.msra.mxu0 0.0
  %1272 = vmatprep.subr.mxu0 0.0
  %1273 = vmatpush1.xpose.msra.mxu0 0.0
  %1274 = vmatprep.subr.mxu0 0.0
  %1275 = vmatpush1.xpose.msra.mxu0 0.0
  %1276 = vmatprep.subr.mxu0 0.0
  %1277 = vmatpush1.xpose.msra.mxu0 0.0
  %1278 = vmatprep.subr.mxu0 0.0
  %1279 = vmatpush1.xpose.msra.mxu0 0.0
  %1280 = vmatprep.subr.mxu0 0.0
  %1281 = vmatpush1.xpose.msra.mxu0 0.0
  %1282 = vmatprep.subr.mxu0 0.0
  %1283 = vmatpush1.xpose.msra.mxu0 0.0
  %1284 = vmatprep.subr.mxu0 0.0
  %1285 = vmatpush1.xpose.msra.mxu0 0.0
  %1286 = vmatprep.subr.mxu0 0.0
  %1287 = vmatpush1.xpose.msra.mxu0 0.0
  %1288 = vmatprep.subr.mxu0 0.0
  %1289 = vmatpush1.xpose.msra.mxu0 0.0
  %1290 = vmatprep.subr.mxu0 0.0
  %1291 = vmatpush1.xpose.msra.mxu0 0.0
  %1292 = vmatprep.mubr.f32.mxu0 0.0
  %1293 = vmatmul.mubr.f32.gmra.mrb[0].mxu0 %v1224
  %v1294 = vpop.f32.mrb[0].mxu0
  %v1295 = vadd.f32 0.0, %v1294
  %v1296 = vpop.f32.mrb[0].mxu0
  %1297 = vdwg.mxu0
  %v1298 = vmul.f32 %v1295, 0.35355338
  %v1299 = vsel %vm266, %v1298, -inf
  %1300 = vmax.xlane.f32.xlu0 %v1299
  %v1301 = vpop.xlane.xlu0 %1300
  %v1302 = vsub.f32 %v1298, %v1301
  %v1303 = vmul.f32 %v1302, 1.442695
  %v1304 = vpow.pop %v1303
  %v1305 = vsel %vm266, %v1304, 0.0
  %1306 = vadd.xlane.f32.xlu0 %v1305
  %v1307 = vpop.xlane.xlu0 %1306
  %v1308 = vrcp.pop %v1307
  %v1309 = vmul.f32 %v1304, %v1308
  %1310 = vrot.lane.b32.xlu0 %v256, 64
  %v1311 = vpop.permute.xlu0 %1310
  %v1314 = vsel %vm266, %v1309, 0
  %1316 = vmatprep.subr.mxu0 0.0
  %1317 = vmatpush1.msra.mxu0 %v1311
  %1318 = vmatprep.subr.mxu0 0.0
  %1319 = vmatpush1.msra.mxu0 0.0
  %1320 = vmatprep.subr.mxu0 0.0
  %1321 = vmatpush1.msra.mxu0 0.0
  %1322 = vmatprep.subr.mxu0 0.0
  %1323 = vmatpush1.msra.mxu0 0.0
  %1324 = vmatprep.subr.mxu0 0.0
  %1325 = vmatpush1.msra.mxu0 0.0
  %1326 = vmatprep.subr.mxu0 0.0
  %1327 = vmatpush1.msra.mxu0 0.0
  %1328 = vmatprep.subr.mxu0 0.0
  %1329 = vmatpush1.msra.mxu0 0.0
  %1330 = vmatprep.subr.mxu0 0.0
  %1331 = vmatpush1.msra.mxu0 0.0
  %1332 = vmatprep.subr.mxu0 0.0
  %1333 = vmatpush1.msra.mxu0 0.0
  %1334 = vmatprep.subr.mxu0 0.0
  %1335 = vmatpush1.msra.mxu0 0.0
  %1336 = vmatprep.subr.mxu0 0.0
  %1337 = vmatpush1.msra.mxu0 0.0
  %1338 = vmatprep.subr.mxu0 0.0
  %1339 = vmatpush1.msra.mxu0 0.0
  %1340 = vmatprep.subr.mxu0 0.0
  %1341 = vmatpush1.msra.mxu0 0.0
  %1342 = vmatprep.subr.mxu0 0.0
  %1343 = vmatpush1.msra.mxu0 0.0
  %1344 = vmatprep.subr.mxu0 0.0
  %1345 = vmatpush1.msra.mxu0 0.0
  %1346 = vmatprep.subr.mxu0 0.0
  %1347 = vmatpush1.msra.mxu0 0.0
  %1348 = vmatprep.subr.mxu0 0.0
  %1349 = vmatpush1.msra.mxu0 0.0
  %1350 = vmatprep.subr.mxu0 0.0
  %1351 = vmatpush1.msra.mxu0 0.0
  %1352 = vmatprep.subr.mxu0 0.0
  %1353 = vmatpush1.msra.mxu0 0.0
  %1354 = vmatprep.subr.mxu0 0.0
  %1355 = vmatpush1.msra.mxu0 0.0
  %1356 = vmatprep.subr.mxu0 0.0
  %1357 = vmatpush1.msra.mxu0 0.0
  %1358 = vmatprep.subr.mxu0 0.0
  %1359 = vmatpush1.msra.mxu0 0.0
  %1360 = vmatprep.subr.mxu0 0.0
  %1361 = vmatpush1.msra.mxu0 0.0
  %1362 = vmatprep.subr.mxu0 0.0
  %1363 = vmatpush1.msra.mxu0 0.0
  %1364 = vmatprep.subr.mxu0 0.0
  %1365 = vmatpush1.msra.mxu0 0.0
  %1366 = vmatprep.subr.mxu0 0.0
  %1367 = vmatpush1.msra.mxu0 0.0
  %1368 = vmatprep.subr.mxu0 0.0
  %1369 = vmatpush1.msra.mxu0 0.0
  %1370 = vmatprep.subr.mxu0 0.0
  %1371 = vmatpush1.msra.mxu0 0.0
  %1372 = vmatprep.subr.mxu0 0.0
  %1373 = vmatpush1.msra.mxu0 0.0
  %1374 = vmatprep.subr.mxu0 0.0
  %1375 = vmatpush1.msra.mxu0 0.0
  %1376 = vmatprep.subr.mxu0 0.0
  %1377 = vmatpush1.msra.mxu0 0.0
  %1378 = vmatprep.subr.mxu0 0.0
  %1379 = vmatpush1.msra.mxu0 0.0
  %1380 = vmatprep.mubr.f32.mxu0 0.0
  %1381 = vmatmul.mubr.f32.gmra.mrb[0].mxu0 %v1314
  %v1382 = vpop.f32.mrb[0].mxu0
  %v1383 = vadd.f32 0.0, %v1382
  %v1384 = vpop.f32.mrb[0].mxu0
  %1385 = vdwg.mxu0
  %1386 = vrot.lane.b32.xlu0 %v256, 120
  %v1387 = vpop.permute.xlu0 %1386
  %1388 = vrot.lane.b32.xlu0 %v256, 88
  %v1389 = vpop.permute.xlu0 %1388
  %v1390 = vsel %vm266, %v1387, 0
  %v1392 = vsel %vm266, %v1389, 0
  %1394 = vmatprep.subr.mxu0 0.0
  %1395 = vmatpush1.xpose.msra.mxu0 %v1392
  %1396 = vmatprep.subr.mxu0 0.0
  %1397 = vmatpush1.xpose.msra.mxu0 0.0
  %1398 = vmatprep.subr.mxu0 0.0
  %1399 = vmatpush1.xpose.msra.mxu0 0.0
  %1400 = vmatprep.subr.mxu0 0.0
  %1401 = vmatpush1.xpose.msra.mxu0 0.0
  %1402 = vmatprep.subr.mxu0 0.0
  %1403 = vmatpush1.xpose.msra.mxu0 0.0
  %1404 = vmatprep.subr.mxu0 0.0
  %1405 = vmatpush1.xpose.msra.mxu0 0.0
  %1406 = vmatprep.subr.mxu0 0.0
  %1407 = vmatpush1.xpose.msra.mxu0 0.0
  %1408 = vmatprep.subr.mxu0 0.0
  %1409 = vmatpush1.xpose.msra.mxu0 0.0
  %1410 = vmatprep.subr.mxu0 0.0
  %1411 = vmatpush1.xpose.msra.mxu0 0.0
  %1412 = vmatprep.subr.mxu0 0.0
  %1413 = vmatpush1.xpose.msra.mxu0 0.0
  %1414 = vmatprep.subr.mxu0 0.0
  %1415 = vmatpush1.xpose.msra.mxu0 0.0
  %1416 = vmatprep.subr.mxu0 0.0
  %1417 = vmatpush1.xpose.msra.mxu0 0.0
  %1418 = vmatprep.subr.mxu0 0.0
  %1419 = vmatpush1.xpose.msra.mxu0 0.0
  %1420 = vmatprep.subr.mxu0 0.0
  %1421 = vmatpush1.xpose.msra.mxu0 0.0
  %1422 = vmatprep.subr.mxu0 0.0
  %1423 = vmatpush1.xpose.msra.mxu0 0.0
  %1424 = vmatprep.subr.mxu0 0.0
  %1425 = vmatpush1.xpose.msra.mxu0 0.0
  %1426 = vmatprep.subr.mxu0 0.0
  %1427 = vmatpush1.xpose.msra.mxu0 0.0
  %1428 = vmatprep.subr.mxu0 0.0
  %1429 = vmatpush1.xpose.msra.mxu0 0.0
  %1430 = vmatprep.subr.mxu0 0.0
  %1431 = vmatpush1.xpose.msra.mxu0 0.0
  %1432 = vmatprep.subr.mxu0 0.0
  %1433 = vmatpush1.xpose.msra.mxu0 0.0
  %1434 = vmatprep.subr.mxu0 0.0
  %1435 = vmatpush1.xpose.msra.mxu0 0.0
  %1436 = vmatprep.subr.mxu0 0.0
  %1437 = vmatpush1.xpose.msra.mxu0 0.0
  %1438 = vmatprep.subr.mxu0 0.0
  %1439 = vmatpush1.xpose.msra.mxu0 0.0
  %1440 = vmatprep.subr.mxu0 0.0
  %1441 = vmatpush1.xpose.msra.mxu0 0.0
  %1442 = vmatprep.subr.mxu0 0.0
  %1443 = vmatpush1.xpose.msra.mxu0 0.0
  %1444 = vmatprep.subr.mxu0 0.0
  %1445 = vmatpush1.xpose.msra.mxu0 0.0
  %1446 = vmatprep.subr.mxu0 0.0
  %1447 = vmatpush1.xpose.msra.mxu0 0.0
  %1448 = vmatprep.subr.mxu0 0.0
  %1449 = vmatpush1.xpose.msra.mxu0 0.0
  %1450 = vmatprep.subr.mxu0 0.0
  %1451 = vmatpush1.xpose.msra.mxu0 0.0
  %1452 = vmatprep.subr.mxu0 0.0
  %1453 = vmatpush1.xpose.msra.mxu0 0.0
  %1454 = vmatprep.subr.mxu0 0.0
  %1455 = vmatpush1.xpose.msra.mxu0 0.0
  %1456 = vmatprep.subr.mxu0 0.0
  %1457 = vmatpush1.xpose.msra.mxu0 0.0
  %1458 = vmatprep.mubr.f32.mxu0 0.0
  %1459 = vmatmul.mubr.f32.gmra.mrb[0].mxu0 %v1390
  %v1460 = vpop.f32.mrb[0].mxu0
  %v1461 = vadd.f32 0.0, %v1460
  %v1462 = vpop.f32.mrb[0].mxu0
  %1463 = vdwg.mxu0
  %v1464 = vmul.f32 %v1461, 0.35355338
  %v1465 = vsel %vm266, %v1464, -inf
  %1466 = vmax.xlane.f32.xlu0 %v1465
  %v1467 = vpop.xlane.xlu0 %1466
  %v1468 = vsub.f32 %v1464, %v1467
  %v1469 = vmul.f32 %v1468, 1.442695
  %v1470 = vpow.pop %v1469
  %v1471 = vsel %vm266, %v1470, 0.0
  %1472 = vadd.xlane.f32.xlu0 %v1471
  %v1473 = vpop.xlane.xlu0 %1472
  %v1474 = vrcp.pop %v1473
  %v1475 = vmul.f32 %v1470, %v1474
  %1476 = vrot.lane.b32.xlu0 %v256, 56
  %v1477 = vpop.permute.xlu0 %1476
  %v1480 = vsel %vm266, %v1475, 0
  %1482 = vmatprep.subr.mxu0 0.0
  %1483 = vmatpush1.msra.mxu0 %v1477
  %1484 = vmatprep.subr.mxu0 0.0
  %1485 = vmatpush1.msra.mxu0 0.0
  %1486 = vmatprep.subr.mxu0 0.0
  %1487 = vmatpush1.msra.mxu0 0.0
  %1488 = vmatprep.subr.mxu0 0.0
  %1489 = vmatpush1.msra.mxu0 0.0
  %1490 = vmatprep.subr.mxu0 0.0
  %1491 = vmatpush1.msra.mxu0 0.0
  %1492 = vmatprep.subr.mxu0 0.0
  %1493 = vmatpush1.msra.mxu0 0.0
  %1494 = vmatprep.subr.mxu0 0.0
  %1495 = vmatpush1.msra.mxu0 0.0
  %1496 = vmatprep.subr.mxu0 0.0
  %1497 = vmatpush1.msra.mxu0 0.0
  %1498 = vmatprep.subr.mxu0 0.0
  %1499 = vmatpush1.msra.mxu0 0.0
  %1500 = vmatprep.subr.mxu0 0.0
  %1501 = vmatpush1.msra.mxu0 0.0
  %1502 = vmatprep.subr.mxu0 0.0
  %1503 = vmatpush1.msra.mxu0 0.0
  %1504 = vmatprep.subr.mxu0 0.0
  %1505 = vmatpush1.msra.mxu0 0.0
  %1506 = vmatprep.subr.mxu0 0.0
  %1507 = vmatpush1.msra.mxu0 0.0
  %1508 = vmatprep.subr.mxu0 0.0
  %1509 = vmatpush1.msra.mxu0 0.0
  %1510 = vmatprep.subr.mxu0 0.0
  %1511 = vmatpush1.msra.mxu0 0.0
  %1512 = vmatprep.subr.mxu0 0.0
  %1513 = vmatpush1.msra.mxu0 0.0
  %1514 = vmatprep.subr.mxu0 0.0
  %1515 = vmatpush1.msra.mxu0 0.0
  %1516 = vmatprep.subr.mxu0 0.0
  %1517 = vmatpush1.msra.mxu0 0.0
  %1518 = vmatprep.subr.mxu0 0.0
  %1519 = vmatpush1.msra.mxu0 0.0
  %1520 = vmatprep.subr.mxu0 0.0
  %1521 = vmatpush1.msra.mxu0 0.0
  %1522 = vmatprep.subr.mxu0 0.0
  %1523 = vmatpush1.msra.mxu0 0.0
  %1524 = vmatprep.subr.mxu0 0.0
  %1525 = vmatpush1.msra.mxu0 0.0
  %1526 = vmatprep.subr.mxu0 0.0
  %1527 = vmatpush1.msra.mxu0 0.0
  %1528 = vmatprep.subr.mxu0 0.0
  %1529 = vmatpush1.msra.mxu0 0.0
  %1530 = vmatprep.subr.mxu0 0.0
  %1531 = vmatpush1.msra.mxu0 0.0
  %1532 = vmatprep.subr.mxu0 0.0
  %1533 = vmatpush1.msra.mxu0 0.0
  %1534 = vmatprep.subr.mxu0 0.0
  %1535 = vmatpush1.msra.mxu0 0.0
  %1536 = vmatprep.subr.mxu0 0.0
  %1537 = vmatpush1.msra.mxu0 0.0
  %1538 = vmatprep.subr.mxu0 0.0
  %1539 = vmatpush1.msra.mxu0 0.0
  %1540 = vmatprep.subr.mxu0 0.0
  %1541 = vmatpush1.msra.mxu0 0.0
  %1542 = vmatprep.subr.mxu0 0.0
  %1543 = vmatpush1.msra.mxu0 0.0
  %1544 = vmatprep.subr.mxu0 0.0
  %1545 = vmatpush1.msra.mxu0 0.0
  %1546 = vmatprep.mubr.f32.mxu0 0.0
  %1547 = vmatmul.mubr.f32.gmra.mrb[0].mxu0 %v1480
  %v1548 = vpop.f32.mrb[0].mxu0
  %v1549 = vadd.f32 0.0, %v1548
  %v1550 = vpop.f32.mrb[0].mxu0
  %1551 = vdwg.mxu0
  %v1553 = vsel %vm266, %v1549, 0
  %1555 = vmatprep.subr.mxu0 0.0
  %1556 = vmatpush1.msra.mxu0 %v260
  %1557 = vmatprep.subr.mxu0 0.0
  %1558 = vmatpush1.msra.mxu0 0.0
  %1559 = vmatprep.subr.mxu0 0.0
  %1560 = vmatpush1.msra.mxu0 0.0
  %1561 = vmatprep.subr.mxu0 0.0
  %1562 = vmatpush1.msra.mxu0 0.0
  %1563 = vmatprep.subr.mxu0 0.0
  %1564 = vmatpush1.msra.mxu0 0.0
  %1565 = vmatprep.subr.mxu0 0.0
  %1566 = vmatpush1.msra.mxu0 0.0
  %1567 = vmatprep.subr.mxu0 0.0
  %1568 = vmatpush1.msra.mxu0 0.0
  %1569 = vmatprep.subr.mxu0 0.0
  %1570 = vmatpush1.msra.mxu0 0.0
  %1571 = vmatprep.subr.mxu0 0.0
  %1572 = vmatpush1.msra.mxu0 0.0
  %1573 = vmatprep.subr.mxu0 0.0
  %1574 = vmatpush1.msra.mxu0 0.0
  %1575 = vmatprep.subr.mxu0 0.0
  %1576 = vmatpush1.msra.mxu0 0.0
  %1577 = vmatprep.subr.mxu0 0.0
  %1578 = vmatpush1.msra.mxu0 0.0
  %1579 = vmatprep.subr.mxu0 0.0
  %1580 = vmatpush1.msra.mxu0 0.0
  %1581 = vmatprep.subr.mxu0 0.0
  %1582 = vmatpush1.msra.mxu0 0.0
  %1583 = vmatprep.subr.mxu0 0.0
  %1584 = vmatpush1.msra.mxu0 0.0
  %1585 = vmatprep.subr.mxu0 0.0
  %1586 = vmatpush1.msra.mxu0 0.0
  %1587 = vmatprep.subr.mxu0 0.0
  %1588 = vmatpush1.msra.mxu0 0.0
  %1589 = vmatprep.subr.mxu0 0.0
  %1590 = vmatpush1.msra.mxu0 0.0
  %1591 = vmatprep.subr.mxu0 0.0
  %1592 = vmatpush1.msra.mxu0 0.0
  %1593 = vmatprep.subr.mxu0 0.0
  %1594 = vmatpush1.msra.mxu0 0.0
  %1595 = vmatprep.subr.mxu0 0.0
  %1596 = vmatpush1.msra.mxu0 0.0
  %1597 = vmatprep.subr.mxu0 0.0
  %1598 = vmatpush1.msra.mxu0 0.0
  %1599 = vmatprep.subr.mxu0 0.0
  %1600 = vmatpush1.msra.mxu0 0.0
  %1601 = vmatprep.subr.mxu0 0.0
  %1602 = vmatpush1.msra.mxu0 0.0
  %1603 = vmatprep.subr.mxu0 0.0
  %1604 = vmatpush1.msra.mxu0 0.0
  %1605 = vmatprep.subr.mxu0 0.0
  %1606 = vmatpush1.msra.mxu0 0.0
  %1607 = vmatprep.subr.mxu0 0.0
  %1608 = vmatpush1.msra.mxu0 0.0
  %1609 = vmatprep.subr.mxu0 0.0
  %1610 = vmatpush1.msra.mxu0 0.0
  %1611 = vmatprep.subr.mxu0 0.0
  %1612 = vmatpush1.msra.mxu0 0.0
  %1613 = vmatprep.subr.mxu0 0.0
  %1614 = vmatpush1.msra.mxu0 0.0
  %1615 = vmatprep.subr.mxu0 0.0
  %1616 = vmatpush1.msra.mxu0 0.0
  %1617 = vmatprep.subr.mxu0 0.0
  %1618 = vmatpush1.msra.mxu0 0.0
  %1619 = vmatprep.mubr.f32.mxu0 0.0
  %1620 = vmatmul.mubr.f32.gmra.mrb[0].mxu0 %v1553
  %v1621 = vpop.f32.mrb[0].mxu0
  %v1622 = vadd.f32 0.0, %v1621
  %v1623 = vpop.f32.mrb[0].mxu0
  %1624 = vdwg.mxu0
  %v1626 = vsel %vm266, %v1383, 0
  %1628 = vmatprep.subr.mxu0 0.0
  %1629 = vmatpush1.msra.mxu0 %v259
  %1630 = vmatprep.subr.mxu0 0.0
  %1631 = vmatpush1.msra.mxu0 0.0
  %1632 = vmatprep.subr.mxu0 0.0
  %1633 = vmatpush1.msra.mxu0 0.0
  %1634 = vmatprep.subr.mxu0 0.0
  %1635 = vmatpush1.msra.mxu0 0.0
  %1636 = vmatprep.subr.mxu0 0.0
  %1637 = vmatpush1.msra.mxu0 0.0
  %1638 = vmatprep.subr.mxu0 0.0
  %1639 = vmatpush1.msra.mxu0 0.0
  %1640 = vmatprep.subr.mxu0 0.0
  %1641 = vmatpush1.msra.mxu0 0.0
  %1642 = vmatprep.subr.mxu0 0.0
  %1643 = vmatpush1.msra.mxu0 0.0
  %1644 = vmatprep.subr.mxu0 0.0
  %1645 = vmatpush1.msra.mxu0 0.0
  %1646 = vmatprep.subr.mxu0 0.0
  %1647 = vmatpush1.msra.mxu0 0.0
  %1648 = vmatprep.subr.mxu0 0.0
  %1649 = vmatpush1.msra.mxu0 0.0
  %1650 = vmatprep.subr.mxu0 0.0
  %1651 = vmatpush1.msra.mxu0 0.0
  %1652 = vmatprep.subr.mxu0 0.0
  %1653 = vmatpush1.msra.mxu0 0.0
  %1654 = vmatprep.subr.mxu0 0.0
  %1655 = vmatpush1.msra.mxu0 0.0
  %1656 = vmatprep.subr.mxu0 0.0
  %1657 = vmatpush1.msra.mxu0 0.0
  %1658 = vmatprep.subr.mxu0 0.0
  %1659 = vmatpush1.msra.mxu0 0.0
  %1660 = vmatprep.subr.mxu0 0.0
  %1661 = vmatpush1.msra.mxu0 0.0
  %1662 = vmatprep.subr.mxu0 0.0
  %1663 = vmatpush1.msra.mxu0 0.0
  %1664 = vmatprep.subr.mxu0 0.0
  %1665 = vmatpush1.msra.mxu0 0.0
  %1666 = vmatprep.subr.mxu0 0.0
  %1667 = vmatpush1.msra.mxu0 0.0
  %1668 = vmatprep.subr.mxu0 0.0
  %1669 = vmatpush1.msra.mxu0 0.0
  %1670 = vmatprep.subr.mxu0 0.0
  %1671 = vmatpush1.msra.mxu0 0.0
  %1672 = vmatprep.subr.mxu0 0.0
  %1673 = vmatpush1.msra.mxu0 0.0
  %1674 = vmatprep.subr.mxu0 0.0
  %1675 = vmatpush1.msra.mxu0 0.0
  %1676 = vmatprep.subr.mxu0 0.0
  %1677 = vmatpush1.msra.mxu0 0.0
  %1678 = vmatprep.subr.mxu0 0.0
  %1679 = vmatpush1.msra.mxu0 0.0
  %1680 = vmatprep.subr.mxu0 0.0
  %1681 = vmatpush1.msra.mxu0 0.0
  %1682 = vmatprep.subr.mxu0 0.0
  %1683 = vmatpush1.msra.mxu0 0.0
  %1684 = vmatprep.subr.mxu0 0.0
  %1685 = vmatpush1.msra.mxu0 0.0
  %1686 = vmatprep.subr.mxu0 0.0
  %1687 = vmatpush1.msra.mxu0 0.0
  %1688 = vmatprep.subr.mxu0 0.0
  %1689 = vmatpush1.msra.mxu0 0.0
  %1690 = vmatprep.subr.mxu0 0.0
  %1691 = vmatpush1.msra.mxu0 0.0
  %1692 = vmatprep.mubr.f32.mxu0 0.0
  %1693 = vmatmul.mubr.f32.gmra.mrb[0].mxu0 %v1626
  %v1694 = vpop.f32.mrb[0].mxu0
  %v1695 = vadd.f32 %v1622, %v1694
  %v1696 = vpop.f32.mrb[0].mxu0
  %1697 = vdwg.mxu0
  %1698 = vrot.lane.b32.xlu0 %v256, 112
  %v1699 = vpop.permute.xlu0 %1698
  %1700 = vrot.lane.b32.xlu0 %v256, 80
  %v1701 = vpop.permute.xlu0 %1700
  %v1702 = vsel %vm266, %v1699, 0
  %v1704 = vsel %vm266, %v1701, 0
  %1706 = vmatprep.subr.mxu0 0.0
  %1707 = vmatpush1.xpose.msra.mxu0 %v1704
  %1708 = vmatprep.subr.mxu0 0.0
  %1709 = vmatpush1.xpose.msra.mxu0 0.0
  %1710 = vmatprep.subr.mxu0 0.0
  %1711 = vmatpush1.xpose.msra.mxu0 0.0
  %1712 = vmatprep.subr.mxu0 0.0
  %1713 = vmatpush1.xpose.msra.mxu0 0.0
  %1714 = vmatprep.subr.mxu0 0.0
  %1715 = vmatpush1.xpose.msra.mxu0 0.0
  %1716 = vmatprep.subr.mxu0 0.0
  %1717 = vmatpush1.xpose.msra.mxu0 0.0
  %1718 = vmatprep.subr.mxu0 0.0
  %1719 = vmatpush1.xpose.msra.mxu0 0.0
  %1720 = vmatprep.subr.mxu0 0.0
  %1721 = vmatpush1.xpose.msra.mxu0 0.0
  %1722 = vmatprep.subr.mxu0 0.0
  %1723 = vmatpush1.xpose.msra.mxu0 0.0
  %1724 = vmatprep.subr.mxu0 0.0
  %1725 = vmatpush1.xpose.msra.mxu0 0.0
  %1726 = vmatprep.subr.mxu0 0.0
  %1727 = vmatpush1.xpose.msra.mxu0 0.0
  %1728 = vmatprep.subr.mxu0 0.0
  %1729 = vmatpush1.xpose.msra.mxu0 0.0
  %1730 = vmatprep.subr.mxu0 0.0
  %1731 = vmatpush1.xpose.msra.mxu0 0.0
  %1732 = vmatprep.subr.mxu0 0.0
  %1733 = vmatpush1.xpose.msra.mxu0 0.0
  %1734 = vmatprep.subr.mxu0 0.0
  %1735 = vmatpush1.xpose.msra.mxu0 0.0
  %1736 = vmatprep.subr.mxu0 0.0
  %1737 = vmatpush1.xpose.msra.mxu0 0.0
  %1738 = vmatprep.subr.mxu0 0.0
  %1739 = vmatpush1.xpose.msra.mxu0 0.0
  %1740 = vmatprep.subr.mxu0 0.0
  %1741 = vmatpush1.xpose.msra.mxu0 0.0
  %1742 = vmatprep.subr.mxu0 0.0
  %1743 = vmatpush1.xpose.msra.mxu0 0.0
  %1744 = vmatprep.subr.mxu0 0.0
  %1745 = vmatpush1.xpose.msra.mxu0 0.0
  %1746 = vmatprep.subr.mxu0 0.0
  %1747 = vmatpush1.xpose.msra.mxu0 0.0
  %1748 = vmatprep.subr.mxu0 0.0
  %1749 = vmatpush1.xpose.msra.mxu0 0.0
  %1750 = vmatprep.subr.mxu0 0.0
  %1751 = vmatpush1.xpose.msra.mxu0 0.0
  %1752 = vmatprep.subr.mxu0 0.0
  %1753 = vmatpush1.xpose.msra.mxu0 0.0
  %1754 = vmatprep.subr.mxu0 0.0
  %1755 = vmatpush1.xpose.msra.mxu0 0.0
  %1756 = vmatprep.subr.mxu0 0.0
  %1757 = vmatpush1.xpose.msra.mxu0 0.0
  %1758 = vmatprep.subr.mxu0 0.0
  %1759 = vmatpush1.xpose.msra.mxu0 0.0
  %1760 = vmatprep.subr.mxu0 0.0
  %1761 = vmatpush1.xpose.msra.mxu0 0.0
  %1762 = vmatprep.subr.mxu0 0.0
  %1763 = vmatpush1.xpose.msra.mxu0 0.0
  %1764 = vmatprep.subr.mxu0 0.0
  %1765 = vmatpush1.xpose.msra.mxu0 0.0
  %1766 = vmatprep.subr.mxu0 0.0
  %1767 = vmatpush1.xpose.msra.mxu0 0.0
  %1768 = vmatprep.subr.mxu0 0.0
  %1769 = vmatpush1.xpose.msra.mxu0 0.0
  %1770 = vmatprep.mubr.f32.mxu0 0.0
  %1771 = vmatmul.mubr.f32.gmra.mrb[0].mxu0 %v1702
  %v1772 = vpop.f32.mrb[0].mxu0
  %v1773 = vadd.f32 0.0, %v1772
  %v1774 = vpop.f32.mrb[0].mxu0
  %1775 = vdwg.mxu0
  %v1776 = vmul.f32 %v1773, 0.35355338
  %v1777 = vsel %vm266, %v1776, -inf
  %1778 = vmax.xlane.f32.xlu0 %v1777
  %v1779 = vpop.xlane.xlu0 %1778
  %v1780 = vsub.f32 %v1776, %v1779
  %v1781 = vmul.f32 %v1780, 1.442695
  %v1782 = vpow.pop %v1781
  %v1783 = vsel %vm266, %v1782, 0.0
  %1784 = vadd.xlane.f32.xlu0 %v1783
  %v1785 = vpop.xlane.xlu0 %1784
  %v1786 = vrcp.pop %v1785
  %v1787 = vmul.f32 %v1782, %v1786
  %1788 = vrot.lane.b32.xlu0 %v256, 48
  %v1789 = vpop.permute.xlu0 %1788
  %v1792 = vsel %vm266, %v1787, 0
  %1794 = vmatprep.subr.mxu0 0.0
  %1795 = vmatpush1.msra.mxu0 %v1789
  %1796 = vmatprep.subr.mxu0 0.0
  %1797 = vmatpush1.msra.mxu0 0.0
  %1798 = vmatprep.subr.mxu0 0.0
  %1799 = vmatpush1.msra.mxu0 0.0
  %1800 = vmatprep.subr.mxu0 0.0
  %1801 = vmatpush1.msra.mxu0 0.0
  %1802 = vmatprep.subr.mxu0 0.0
  %1803 = vmatpush1.msra.mxu0 0.0
  %1804 = vmatprep.subr.mxu0 0.0
  %1805 = vmatpush1.msra.mxu0 0.0
  %1806 = vmatprep.subr.mxu0 0.0
  %1807 = vmatpush1.msra.mxu0 0.0
  %1808 = vmatprep.subr.mxu0 0.0
  %1809 = vmatpush1.msra.mxu0 0.0
  %1810 = vmatprep.subr.mxu0 0.0
  %1811 = vmatpush1.msra.mxu0 0.0
  %1812 = vmatprep.subr.mxu0 0.0
  %1813 = vmatpush1.msra.mxu0 0.0
  %1814 = vmatprep.subr.mxu0 0.0
  %1815 = vmatpush1.msra.mxu0 0.0
  %1816 = vmatprep.subr.mxu0 0.0
  %1817 = vmatpush1.msra.mxu0 0.0
  %1818 = vmatprep.subr.mxu0 0.0
  %1819 = vmatpush1.msra.mxu0 0.0
  %1820 = vmatprep.subr.mxu0 0.0
  %1821 = vmatpush1.msra.mxu0 0.0
  %1822 = vmatprep.subr.mxu0 0.0
  %1823 = vmatpush1.msra.mxu0 0.0
  %1824 = vmatprep.subr.mxu0 0.0
  %1825 = vmatpush1.msra.mxu0 0.0
  %1826 = vmatprep.subr.mxu0 0.0
  %1827 = vmatpush1.msra.mxu0 0.0
  %1828 = vmatprep.subr.mxu0 0.0
  %1829 = vmatpush1.msra.mxu0 0.0
  %1830 = vmatprep.subr.mxu0 0.0
  %1831 = vmatpush1.msra.mxu0 0.0
  %1832 = vmatprep.subr.mxu0 0.0
  %1833 = vmatpush1.msra.mxu0 0.0
  %1834 = vmatprep.subr.mxu0 0.0
  %1835 = vmatpush1.msra.mxu0 0.0
  %1836 = vmatprep.subr.mxu0 0.0
  %1837 = vmatpush1.msra.mxu0 0.0
  %1838 = vmatprep.subr.mxu0 0.0
  %1839 = vmatpush1.msra.mxu0 0.0
  %1840 = vmatprep.subr.mxu0 0.0
  %1841 = vmatpush1.msra.mxu0 0.0
  %1842 = vmatprep.subr.mxu0 0.0
  %1843 = vmatpush1.msra.mxu0 0.0
  %1844 = vmatprep.subr.mxu0 0.0
  %1845 = vmatpush1.msra.mxu0 0.0
  %1846 = vmatprep.subr.mxu0 0.0
  %1847 = vmatpush1.msra.mxu0 0.0
  %1848 = vmatprep.subr.mxu0 0.0
  %1849 = vmatpush1.msra.mxu0 0.0
  %1850 = vmatprep.subr.mxu0 0.0
  %1851 = vmatpush1.msra.mxu0 0.0
  %1852 = vmatprep.subr.mxu0 0.0
  %1853 = vmatpush1.msra.mxu0 0.0
  %1854 = vmatprep.subr.mxu0 0.0
  %1855 = vmatpush1.msra.mxu0 0.0
  %1856 = vmatprep.subr.mxu0 0.0
  %1857 = vmatpush1.msra.mxu0 0.0
  %1858 = vmatprep.mubr.f32.mxu0 0.0
  %1859 = vmatmul.mubr.f32.gmra.mrb[0].mxu0 %v1792
  %v1860 = vpop.f32.mrb[0].mxu0
  %v1861 = vadd.f32 0.0, %v1860
  %v1862 = vpop.f32.mrb[0].mxu0
  %1863 = vdwg.mxu0
  %v1865 = vsel %vm266, %v1861, 0
  %1867 = vmatprep.subr.mxu0 0.0
  %1868 = vmatpush1.msra.mxu0 %v261
  %1869 = vmatprep.subr.mxu0 0.0
  %1870 = vmatpush1.msra.mxu0 0.0
  %1871 = vmatprep.subr.mxu0 0.0
  %1872 = vmatpush1.msra.mxu0 0.0
  %1873 = vmatprep.subr.mxu0 0.0
  %1874 = vmatpush1.msra.mxu0 0.0
  %1875 = vmatprep.subr.mxu0 0.0
  %1876 = vmatpush1.msra.mxu0 0.0
  %1877 = vmatprep.subr.mxu0 0.0
  %1878 = vmatpush1.msra.mxu0 0.0
  %1879 = vmatprep.subr.mxu0 0.0
  %1880 = vmatpush1.msra.mxu0 0.0
  %1881 = vmatprep.subr.mxu0 0.0
  %1882 = vmatpush1.msra.mxu0 0.0
  %1883 = vmatprep.subr.mxu0 0.0
  %1884 = vmatpush1.msra.mxu0 0.0
  %1885 = vmatprep.subr.mxu0 0.0
  %1886 = vmatpush1.msra.mxu0 0.0
  %1887 = vmatprep.subr.mxu0 0.0
  %1888 = vmatpush1.msra.mxu0 0.0
  %1889 = vmatprep.subr.mxu0 0.0
  %1890 = vmatpush1.msra.mxu0 0.0
  %1891 = vmatprep.subr.mxu0 0.0
  %1892 = vmatpush1.msra.mxu0 0.0
  %1893 = vmatprep.subr.mxu0 0.0
  %1894 = vmatpush1.msra.mxu0 0.0
  %1895 = vmatprep.subr.mxu0 0.0
  %1896 = vmatpush1.msra.mxu0 0.0
  %1897 = vmatprep.subr.mxu0 0.0
  %1898 = vmatpush1.msra.mxu0 0.0
  %1899 = vmatprep.subr.mxu0 0.0
  %1900 = vmatpush1.msra.mxu0 0.0
  %1901 = vmatprep.subr.mxu0 0.0
  %1902 = vmatpush1.msra.mxu0 0.0
  %1903 = vmatprep.subr.mxu0 0.0
  %1904 = vmatpush1.msra.mxu0 0.0
  %1905 = vmatprep.subr.mxu0 0.0
  %1906 = vmatpush1.msra.mxu0 0.0
  %1907 = vmatprep.subr.mxu0 0.0
  %1908 = vmatpush1.msra.mxu0 0.0
  %1909 = vmatprep.subr.mxu0 0.0
  %1910 = vmatpush1.msra.mxu0 0.0
  %1911 = vmatprep.subr.mxu0 0.0
  %1912 = vmatpush1.msra.mxu0 0.0
  %1913 = vmatprep.subr.mxu0 0.0
  %1914 = vmatpush1.msra.mxu0 0.0
  %1915 = vmatprep.subr.mxu0 0.0
  %1916 = vmatpush1.msra.mxu0 0.0
  %1917 = vmatprep.subr.mxu0 0.0
  %1918 = vmatpush1.msra.mxu0 0.0
  %1919 = vmatprep.subr.mxu0 0.0
  %1920 = vmatpush1.msra.mxu0 0.0
  %1921 = vmatprep.subr.mxu0 0.0
  %1922 = vmatpush1.msra.mxu0 0.0
  %1923 = vmatprep.subr.mxu0 0.0
  %1924 = vmatpush1.msra.mxu0 0.0
  %1925 = vmatprep.subr.mxu0 0.0
  %1926 = vmatpush1.msra.mxu0 0.0
  %1927 = vmatprep.subr.mxu0 0.0
  %1928 = vmatpush1.msra.mxu0 0.0
  %1929 = vmatprep.subr.mxu0 0.0
  %1930 = vmatpush1.msra.mxu0 0.0
  %1931 = vmatprep.mubr.f32.mxu0 0.0
  %1932 = vmatmul.mubr.f32.gmra.mrb[0].mxu0 %v1865
  %v1933 = vpop.f32.mrb[0].mxu0
  %v1934 = vadd.f32 0.0, %v1933
  %v1935 = vpop.f32.mrb[0].mxu0
  %1936 = vdwg.mxu0
  %v1937 = vadd.f32 %v1695, %v1934
  %1938 = vrot.lane.b32.xlu0 %v256, 104
  %v1939 = vpop.permute.xlu0 %1938
  %1940 = vrot.lane.b32.xlu0 %v256, 72
  %v1941 = vpop.permute.xlu0 %1940
  %v1942 = vsel %vm266, %v1939, 0
  %v1944 = vsel %vm266, %v1941, 0
  %1946 = vmatprep.subr.mxu0 0.0
  %1947 = vmatpush1.xpose.msra.mxu0 %v1944
  %1948 = vmatprep.subr.mxu0 0.0
  %1949 = vmatpush1.xpose.msra.mxu0 0.0
  %1950 = vmatprep.subr.mxu0 0.0
  %1951 = vmatpush1.xpose.msra.mxu0 0.0
  %1952 = vmatprep.subr.mxu0 0.0
  %1953 = vmatpush1.xpose.msra.mxu0 0.0
  %1954 = vmatprep.subr.mxu0 0.0
  %1955 = vmatpush1.xpose.msra.mxu0 0.0
  %1956 = vmatprep.subr.mxu0 0.0
  %1957 = vmatpush1.xpose.msra.mxu0 0.0
  %1958 = vmatprep.subr.mxu0 0.0
  %1959 = vmatpush1.xpose.msra.mxu0 0.0
  %1960 = vmatprep.subr.mxu0 0.0
  %1961 = vmatpush1.xpose.msra.mxu0 0.0
  %1962 = vmatprep.subr.mxu0 0.0
  %1963 = vmatpush1.xpose.msra.mxu0 0.0
  %1964 = vmatprep.subr.mxu0 0.0
  %1965 = vmatpush1.xpose.msra.mxu0 0.0
  %1966 = vmatprep.subr.mxu0 0.0
  %1967 = vmatpush1.xpose.msra.mxu0 0.0
  %1968 = vmatprep.subr.mxu0 0.0
  %1969 = vmatpush1.xpose.msra.mxu0 0.0
  %1970 = vmatprep.subr.mxu0 0.0
  %1971 = vmatpush1.xpose.msra.mxu0 0.0
  %1972 = vmatprep.subr.mxu0 0.0
  %1973 = vmatpush1.xpose.msra.mxu0 0.0
  %1974 = vmatprep.subr.mxu0 0.0
  %1975 = vmatpush1.xpose.msra.mxu0 0.0
  %1976 = vmatprep.subr.mxu0 0.0
  %1977 = vmatpush1.xpose.msra.mxu0 0.0
  %1978 = vmatprep.subr.mxu0 0.0
  %1979 = vmatpush1.xpose.msra.mxu0 0.0
  %1980 = vmatprep.subr.mxu0 0.0
  %1981 = vmatpush1.xpose.msra.mxu0 0.0
  %1982 = vmatprep.subr.mxu0 0.0
  %1983 = vmatpush1.xpose.msra.mxu0 0.0
  %1984 = vmatprep.subr.mxu0 0.0
  %1985 = vmatpush1.xpose.msra.mxu0 0.0
  %1986 = vmatprep.subr.mxu0 0.0
  %1987 = vmatpush1.xpose.msra.mxu0 0.0
  %1988 = vmatprep.subr.mxu0 0.0
  %1989 = vmatpush1.xpose.msra.mxu0 0.0
  %1990 = vmatprep.subr.mxu0 0.0
  %1991 = vmatpush1.xpose.msra.mxu0 0.0
  %1992 = vmatprep.subr.mxu0 0.0
  %1993 = vmatpush1.xpose.msra.mxu0 0.0
  %1994 = vmatprep.subr.mxu0 0.0
  %1995 = vmatpush1.xpose.msra.mxu0 0.0
  %1996 = vmatprep.subr.mxu0 0.0
  %1997 = vmatpush1.xpose.msra.mxu0 0.0
  %1998 = vmatprep.subr.mxu0 0.0
  %1999 = vmatpush1.xpose.msra.mxu0 0.0
  %2000 = vmatprep.subr.mxu0 0.0
  %2001 = vmatpush1.xpose.msra.mxu0 0.0
  %2002 = vmatprep.subr.mxu0 0.0
  %2003 = vmatpush1.xpose.msra.mxu0 0.0
  %2004 = vmatprep.subr.mxu0 0.0
  %2005 = vmatpush1.xpose.msra.mxu0 0.0
  %2006 = vmatprep.subr.mxu0 0.0
  %2007 = vmatpush1.xpose.msra.mxu0 0.0
  %2008 = vmatprep.subr.mxu0 0.0
  %2009 = vmatpush1.xpose.msra.mxu0 0.0
  %2010 = vmatprep.mubr.f32.mxu0 0.0
  %2011 = vmatmul.mubr.f32.gmra.mrb[0].mxu0 %v1942
  %v2012 = vpop.f32.mrb[0].mxu0
  %v2013 = vadd.f32 0.0, %v2012
  %v2014 = vpop.f32.mrb[0].mxu0
  %2015 = vdwg.mxu0
  %v2016 = vmul.f32 %v2013, 0.35355338
  %v2017 = vsel %vm266, %v2016, -inf
  %2018 = vmax.xlane.f32.xlu0 %v2017
  %v2019 = vpop.xlane.xlu0 %2018
  %v2020 = vsub.f32 %v2016, %v2019
  %v2021 = vmul.f32 %v2020, 1.442695
  %v2022 = vpow.pop %v2021
  %v2023 = vsel %vm266, %v2022, 0.0
  %2024 = vadd.xlane.f32.xlu0 %v2023
  %v2025 = vpop.xlane.xlu0 %2024
  %v2026 = vrcp.pop %v2025
  %v2027 = vmul.f32 %v2022, %v2026
  %2028 = vrot.lane.b32.xlu0 %v256, 40
  %v2029 = vpop.permute.xlu0 %2028
  %v2032 = vsel %vm266, %v2027, 0
  %2034 = vmatprep.subr.mxu0 0.0
  %2035 = vmatpush1.msra.mxu0 %v2029
  %2036 = vmatprep.subr.mxu0 0.0
  %2037 = vmatpush1.msra.mxu0 0.0
  %2038 = vmatprep.subr.mxu0 0.0
  %2039 = vmatpush1.msra.mxu0 0.0
  %2040 = vmatprep.subr.mxu0 0.0
  %2041 = vmatpush1.msra.mxu0 0.0
  %2042 = vmatprep.subr.mxu0 0.0
  %2043 = vmatpush1.msra.mxu0 0.0
  %2044 = vmatprep.subr.mxu0 0.0
  %2045 = vmatpush1.msra.mxu0 0.0
  %2046 = vmatprep.subr.mxu0 0.0
  %2047 = vmatpush1.msra.mxu0 0.0
  %2048 = vmatprep.subr.mxu0 0.0
  %2049 = vmatpush1.msra.mxu0 0.0
  %2050 = vmatprep.subr.mxu0 0.0
  %2051 = vmatpush1.msra.mxu0 0.0
  %2052 = vmatprep.subr.mxu0 0.0
  %2053 = vmatpush1.msra.mxu0 0.0
  %2054 = vmatprep.subr.mxu0 0.0
  %2055 = vmatpush1.msra.mxu0 0.0
  %2056 = vmatprep.subr.mxu0 0.0
  %2057 = vmatpush1.msra.mxu0 0.0
  %2058 = vmatprep.subr.mxu0 0.0
  %2059 = vmatpush1.msra.mxu0 0.0
  %2060 = vmatprep.subr.mxu0 0.0
  %2061 = vmatpush1.msra.mxu0 0.0
  %2062 = vmatprep.subr.mxu0 0.0
  %2063 = vmatpush1.msra.mxu0 0.0
  %2064 = vmatprep.subr.mxu0 0.0
  %2065 = vmatpush1.msra.mxu0 0.0
  %2066 = vmatprep.subr.mxu0 0.0
  %2067 = vmatpush1.msra.mxu0 0.0
  %2068 = vmatprep.subr.mxu0 0.0
  %2069 = vmatpush1.msra.mxu0 0.0
  %2070 = vmatprep.subr.mxu0 0.0
  %2071 = vmatpush1.msra.mxu0 0.0
  %2072 = vmatprep.subr.mxu0 0.0
  %2073 = vmatpush1.msra.mxu0 0.0
  %2074 = vmatprep.subr.mxu0 0.0
  %2075 = vmatpush1.msra.mxu0 0.0
  %2076 = vmatprep.subr.mxu0 0.0
  %2077 = vmatpush1.msra.mxu0 0.0
  %2078 = vmatprep.subr.mxu0 0.0
  %2079 = vmatpush1.msra.mxu0 0.0
  %2080 = vmatprep.subr.mxu0 0.0
  %2081 = vmatpush1.msra.mxu0 0.0
  %2082 = vmatprep.subr.mxu0 0.0
  %2083 = vmatpush1.msra.mxu0 0.0
  %2084 = vmatprep.subr.mxu0 0.0
  %2085 = vmatpush1.msra.mxu0 0.0
  %2086 = vmatprep.subr.mxu0 0.0
  %2087 = vmatpush1.msra.mxu0 0.0
  %2088 = vmatprep.subr.mxu0 0.0
  %2089 = vmatpush1.msra.mxu0 0.0
  %2090 = vmatprep.subr.mxu0 0.0
  %2091 = vmatpush1.msra.mxu0 0.0
  %2092 = vmatprep.subr.mxu0 0.0
  %2093 = vmatpush1.msra.mxu0 0.0
  %2094 = vmatprep.subr.mxu0 0.0
  %2095 = vmatpush1.msra.mxu0 0.0
  %2096 = vmatprep.subr.mxu0 0.0
  %2097 = vmatpush1.msra.mxu0 0.0
  %2098 = vmatprep.mubr.f32.mxu0 0.0
  %2099 = vmatmul.mubr.f32.gmra.mrb[0].mxu0 %v2032
  %v2100 = vpop.f32.mrb[0].mxu0
  %v2101 = vadd.f32 0.0, %v2100
  %v2102 = vpop.f32.mrb[0].mxu0
  %2103 = vdwg.mxu0
  %v2105 = vsel %vm266, %v2101, 0
  %2107 = vmatprep.subr.mxu0 0.0
  %2108 = vmatpush1.msra.mxu0 %v262
  %2109 = vmatprep.subr.mxu0 0.0
  %2110 = vmatpush1.msra.mxu0 0.0
  %2111 = vmatprep.subr.mxu0 0.0
  %2112 = vmatpush1.msra.mxu0 0.0
  %2113 = vmatprep.subr.mxu0 0.0
  %2114 = vmatpush1.msra.mxu0 0.0
  %2115 = vmatprep.subr.mxu0 0.0
  %2116 = vmatpush1.msra.mxu0 0.0
  %2117 = vmatprep.subr.mxu0 0.0
  %2118 = vmatpush1.msra.mxu0 0.0
  %2119 = vmatprep.subr.mxu0 0.0
  %2120 = vmatpush1.msra.mxu0 0.0
  %2121 = vmatprep.subr.mxu0 0.0
  %2122 = vmatpush1.msra.mxu0 0.0
  %2123 = vmatprep.subr.mxu0 0.0
  %2124 = vmatpush1.msra.mxu0 0.0
  %2125 = vmatprep.subr.mxu0 0.0
  %2126 = vmatpush1.msra.mxu0 0.0
  %2127 = vmatprep.subr.mxu0 0.0
  %2128 = vmatpush1.msra.mxu0 0.0
  %2129 = vmatprep.subr.mxu0 0.0
  %2130 = vmatpush1.msra.mxu0 0.0
  %2131 = vmatprep.subr.mxu0 0.0
  %2132 = vmatpush1.msra.mxu0 0.0
  %2133 = vmatprep.subr.mxu0 0.0
  %2134 = vmatpush1.msra.mxu0 0.0
  %2135 = vmatprep.subr.mxu0 0.0
  %2136 = vmatpush1.msra.mxu0 0.0
  %2137 = vmatprep.subr.mxu0 0.0
  %2138 = vmatpush1.msra.mxu0 0.0
  %2139 = vmatprep.subr.mxu0 0.0
  %2140 = vmatpush1.msra.mxu0 0.0
  %2141 = vmatprep.subr.mxu0 0.0
  %2142 = vmatpush1.msra.mxu0 0.0
  %2143 = vmatprep.subr.mxu0 0.0
  %2144 = vmatpush1.msra.mxu0 0.0
  %2145 = vmatprep.subr.mxu0 0.0
  %2146 = vmatpush1.msra.mxu0 0.0
  %2147 = vmatprep.subr.mxu0 0.0
  %2148 = vmatpush1.msra.mxu0 0.0
  %2149 = vmatprep.subr.mxu0 0.0
  %2150 = vmatpush1.msra.mxu0 0.0
  %2151 = vmatprep.subr.mxu0 0.0
  %2152 = vmatpush1.msra.mxu0 0.0
  %2153 = vmatprep.subr.mxu0 0.0
  %2154 = vmatpush1.msra.mxu0 0.0
  %2155 = vmatprep.subr.mxu0 0.0
  %2156 = vmatpush1.msra.mxu0 0.0
  %2157 = vmatprep.subr.mxu0 0.0
  %2158 = vmatpush1.msra.mxu0 0.0
  %2159 = vmatprep.subr.mxu0 0.0
  %2160 = vmatpush1.msra.mxu0 0.0
  %2161 = vmatprep.subr.mxu0 0.0
  %2162 = vmatpush1.msra.mxu0 0.0
  %2163 = vmatprep.subr.mxu0 0.0
  %2164 = vmatpush1.msra.mxu0 0.0
  %2165 = vmatprep.subr.mxu0 0.0
  %2166 = vmatpush1.msra.mxu0 0.0
  %2167 = vmatprep.subr.mxu0 0.0
  %2168 = vmatpush1.msra.mxu0 0.0
  %2169 = vmatprep.subr.mxu0 0.0
  %2170 = vmatpush1.msra.mxu0 0.0
  %2171 = vmatprep.mubr.f32.mxu0 0.0
  %2172 = vmatmul.mubr.f32.gmra.mrb[0].mxu0 %v2105
  %v2173 = vpop.f32.mrb[0].mxu0
  %v2174 = vadd.f32 0.0, %v2173
  %v2175 = vpop.f32.mrb[0].mxu0
  %2176 = vdwg.mxu0
  %v2177 = vadd.f32 %v1937, %v2174
  %v2178 = vld [vmem:[%s6] sm:$0x1]
  %v2180 = vlaneseq
  %v2181 = vshrl.u32 %v2180, 7
  %v2182 = vsub.s32 0, %v2181
  %v2183 = vrot.slane %v2178, %v2182
  %v2185 = vadd.f32 %v1220, %v2183
  %v2186 = vadd.f32 %v2177, %v2183
  %v2187 = vadd.f32 %v164, %v2185
  %v2188 = vadd.f32 %v165, %v2186
  %v2189 = vld [vmem:[%s7] sm:$0x1]
  %v2190 = vld [vmem:[%s8] sm:$0x1]
  %v2191 = vsel %vm177, %v2187, 0.0
  %2192 = vadd.xlane.f32.xlu0 %v2191
  %v2193 = vpop.xlane.xlu0 %2192
  %v2194 = vsel %vm177, %v2188, 0.0
  %2195 = vadd.xlane.f32.xlu0 %v2194
  %v2196 = vpop.xlane.xlu0 %2195
  %v2197 = vrcp.pop 32.0
  %v2198 = vmul.f32 %v2193, %v2197
  %v2199 = vmul.f32 %v2196, %v2197
  %v2200 = vsub.f32 %v2187, %v2198
  %v2201 = vsub.f32 %v2188, %v2199
  %v2202 = vmul.f32 %v2200, %v2200
  %v2203 = vmul.f32 %v2201, %v2201
  %v2204 = vsel %vm177, %v2202, 0.0
  %2205 = vadd.xlane.f32.xlu0 %v2204
  %v2206 = vpop.xlane.xlu0 %2205
  %v2207 = vsel %vm177, %v2203, 0.0
  %2208 = vadd.xlane.f32.xlu0 %v2207
  %v2209 = vpop.xlane.xlu0 %2208
  %v2210 = vmul.f32 %v2206, %v2197
  %v2211 = vmul.f32 %v2209, %v2197
  %v2212 = vadd.f32 %v2210, 1e-05
  %v2213 = vadd.f32 %v2211, 1e-05
  %v2214 = vrsqrt.pop %v2212
  %v2215 = vrsqrt.pop %v2213
  %v2216 = vmul.f32 %v2200, %v2214
  %v2217 = vmul.f32 %v2201, %v2215
  %v2219 = vlaneseq
  %v2220 = vshrl.u32 %v2219, 7
  %v2221 = vsub.s32 0, %v2220
  %v2222 = vrot.slane %v2189, %v2221
  %v2224 = vmul.f32 %v2216, %v2222
  %v2225 = vmul.f32 %v2217, %v2222
  %v2227 = vlaneseq
  %v2228 = vshrl.u32 %v2227, 7
  %v2229 = vsub.s32 0, %v2228
  %v2230 = vrot.slane %v2190, %v2229
  %v2232 = vadd.f32 %v2224, %v2230
  %v2233 = vadd.f32 %v2225, %v2230
  %v2234 = vld [vmem:[%s9] sm:$0xff]
  %v2235 = vld [vmem:[%s9 + $0x8] sm:$0xff]
  %v2236 = vld [vmem:[%s9 + $0x10] sm:$0xff]
  %v2237 = vld [vmem:[%s9 + $0x18] sm:$0xff]
  %v2238 = vld [vmem:[%s10] sm:$0x1]
  %v2240 = vlaneseq
  %v2241 = vshrl.u32 %v2240, 7
  %v2242 = vsub.s32 0, %v2241
  %v2243 = vrot.slane %v2238, %v2242
  %v2246 = vsel %vm177, %v2232, 0
  %v2249 = vsel %vm177, %v2233, 0
  %2251 = vmatprep.subr.mxu0 0.0
  %2252 = vmatpush1.msra.mxu0 %v2234
  %2253 = vmatprep.subr.mxu0 0.0
  %2254 = vmatpush1.msra.mxu0 %v2235
  %2255 = vmatprep.subr.mxu0 0.0
  %2256 = vmatpush1.msra.mxu0 %v2236
  %2257 = vmatprep.subr.mxu0 0.0
  %2258 = vmatpush1.msra.mxu0 %v2237
  %2259 = vmatprep.subr.mxu0 0.0
  %2260 = vmatpush1.msra.mxu0 0.0
  %2261 = vmatprep.subr.mxu0 0.0
  %2262 = vmatpush1.msra.mxu0 0.0
  %2263 = vmatprep.subr.mxu0 0.0
  %2264 = vmatpush1.msra.mxu0 0.0
  %2265 = vmatprep.subr.mxu0 0.0
  %2266 = vmatpush1.msra.mxu0 0.0
  %2267 = vmatprep.subr.mxu0 0.0
  %2268 = vmatpush1.msra.mxu0 0.0
  %2269 = vmatprep.subr.mxu0 0.0
  %2270 = vmatpush1.msra.mxu0 0.0
  %2271 = vmatprep.subr.mxu0 0.0
  %2272 = vmatpush1.msra.mxu0 0.0
  %2273 = vmatprep.subr.mxu0 0.0
  %2274 = vmatpush1.msra.mxu0 0.0
  %2275 = vmatprep.subr.mxu0 0.0
  %2276 = vmatpush1.msra.mxu0 0.0
  %2277 = vmatprep.subr.mxu0 0.0
  %2278 = vmatpush1.msra.mxu0 0.0
  %2279 = vmatprep.subr.mxu0 0.0
  %2280 = vmatpush1.msra.mxu0 0.0
  %2281 = vmatprep.subr.mxu0 0.0
  %2282 = vmatpush1.msra.mxu0 0.0
  %2283 = vmatprep.subr.mxu0 0.0
  %2284 = vmatpush1.msra.mxu0 0.0
  %2285 = vmatprep.subr.mxu0 0.0
  %2286 = vmatpush1.msra.mxu0 0.0
  %2287 = vmatprep.subr.mxu0 0.0
  %2288 = vmatpush1.msra.mxu0 0.0
  %2289 = vmatprep.subr.mxu0 0.0
  %2290 = vmatpush1.msra.mxu0 0.0
  %2291 = vmatprep.subr.mxu0 0.0
  %2292 = vmatpush1.msra.mxu0 0.0
  %2293 = vmatprep.subr.mxu0 0.0
  %2294 = vmatpush1.msra.mxu0 0.0
  %2295 = vmatprep.subr.mxu0 0.0
  %2296 = vmatpush1.msra.mxu0 0.0
  %2297 = vmatprep.subr.mxu0 0.0
  %2298 = vmatpush1.msra.mxu0 0.0
  %2299 = vmatprep.subr.mxu0 0.0
  %2300 = vmatpush1.msra.mxu0 0.0
  %2301 = vmatprep.subr.mxu0 0.0
  %2302 = vmatpush1.msra.mxu0 0.0
  %2303 = vmatprep.subr.mxu0 0.0
  %2304 = vmatpush1.msra.mxu0 0.0
  %2305 = vmatprep.subr.mxu0 0.0
  %2306 = vmatpush1.msra.mxu0 0.0
  %2307 = vmatprep.subr.mxu0 0.0
  %2308 = vmatpush1.msra.mxu0 0.0
  %2309 = vmatprep.subr.mxu0 0.0
  %2310 = vmatpush1.msra.mxu0 0.0
  %2311 = vmatprep.subr.mxu0 0.0
  %2312 = vmatpush1.msra.mxu0 0.0
  %2313 = vmatprep.subr.mxu0 0.0
  %2314 = vmatpush1.msra.mxu0 0.0
  %2315 = vmatprep.mubr.f32.mxu0 0.0
  %2316 = vmatmul.mubr.f32.gmra.mrb[0].mxu0 %v2246
  %v2317 = vpop.f32.mrb[0].mxu0
  %v2318 = vadd.f32 %v2243, %v2317
  %v2319 = vpop.f32.mrb[0].mxu0
  %2320 = vmatprep.mubr.f32.mxu0 0.0
  %2321 = vmatmul.mubr.f32.gmra.mrb[0].mxu0 %v2249
  %v2322 = vpop.f32.mrb[0].mxu0
  %v2323 = vadd.f32 %v2243, %v2322
  %v2324 = vpop.f32.mrb[0].mxu0
  %2325 = vdwg.mxu0
  %v2326 = vmax.f32 %v2318, 0.0
  %v2327 = vmax.f32 %v2323, 0.0
  %v2328 = vld [vmem:[%s11] sm:$0xff]
  %v2329 = vld [vmem:[%s11 + $0x8] sm:$0xff]
  %v2330 = vld [vmem:[%s11 + $0x10] sm:$0xff]
  %v2331 = vld [vmem:[%s11 + $0x18] sm:$0xff]
  %v2332 = vld [vmem:[%s11 + $0x20] sm:$0xff]
  %v2333 = vld [vmem:[%s11 + $0x28] sm:$0xff]
  %v2334 = vld [vmem:[%s11 + $0x30] sm:$0xff]
  %v2335 = vld [vmem:[%s11 + $0x38] sm:$0xff]
  %v2336 = vld [vmem:[%s11 + $0x40] sm:$0xff]
  %v2337 = vld [vmem:[%s11 + $0x48] sm:$0xff]
  %v2338 = vld [vmem:[%s11 + $0x50] sm:$0xff]
  %v2339 = vld [vmem:[%s11 + $0x58] sm:$0xff]
  %v2340 = vld [vmem:[%s11 + $0x60] sm:$0xff]
  %v2341 = vld [vmem:[%s11 + $0x68] sm:$0xff]
  %v2342 = vld [vmem:[%s11 + $0x70] sm:$0xff]
  %v2343 = vld [vmem:[%s11 + $0x78] sm:$0xff]
  %v2344 = vld [vmem:[%s12] sm:$0x1]
  %v2346 = vlaneseq
  %v2347 = vshrl.u32 %v2346, 7
  %v2348 = vsub.s32 0, %v2347
  %v2349 = vrot.slane %v2344, %v2348
  %2351 = vmatprep.subr.mxu0 0.0
  %2352 = vmatpush1.msra.mxu0 %v2328
  %2353 = vmatprep.subr.mxu0 0.0
  %2354 = vmatpush1.msra.mxu0 %v2329
  %2355 = vmatprep.subr.mxu0 0.0
  %2356 = vmatpush1.msra.mxu0 %v2330
  %2357 = vmatprep.subr.mxu0 0.0
  %2358 = vmatpush1.msra.mxu0 %v2331
  %2359 = vmatprep.subr.mxu0 0.0
  %2360 = vmatpush1.msra.mxu0 %v2332
  %2361 = vmatprep.subr.mxu0 0.0
  %2362 = vmatpush1.msra.mxu0 %v2333
  %2363 = vmatprep.subr.mxu0 0.0
  %2364 = vmatpush1.msra.mxu0 %v2334
  %2365 = vmatprep.subr.mxu0 0.0
  %2366 = vmatpush1.msra.mxu0 %v2335
  %2367 = vmatprep.subr.mxu0 0.0
  %2368 = vmatpush1.msra.mxu0 %v2336
  %2369 = vmatprep.subr.mxu0 0.0
  %2370 = vmatpush1.msra.mxu0 %v2337
  %2371 = vmatprep.subr.mxu0 0.0
  %2372 = vmatpush1.msra.mxu0 %v2338
  %2373 = vmatprep.subr.mxu0 0.0
  %2374 = vmatpush1.msra.mxu0 %v2339
  %2375 = vmatprep.subr.mxu0 0.0
  %2376 = vmatpush1.msra.mxu0 %v2340
  %2377 = vmatprep.subr.mxu0 0.0
  %2378 = vmatpush1.msra.mxu0 %v2341
  %2379 = vmatprep.subr.mxu0 0.0
  %2380 = vmatpush1.msra.mxu0 %v2342
  %2381 = vmatprep.subr.mxu0 0.0
  %2382 = vmatpush1.msra.mxu0 %v2343
  %2383 = vmatprep.subr.mxu0 0.0
  %2384 = vmatpush1.msra.mxu0 0.0
  %2385 = vmatprep.subr.mxu0 0.0
  %2386 = vmatpush1.msra.mxu0 0.0
  %2387 = vmatprep.subr.mxu0 0.0
  %2388 = vmatpush1.msra.mxu0 0.0
  %2389 = vmatprep.subr.mxu0 0.0
  %2390 = vmatpush1.msra.mxu0 0.0
  %2391 = vmatprep.subr.mxu0 0.0
  %2392 = vmatpush1.msra.mxu0 0.0
  %2393 = vmatprep.subr.mxu0 0.0
  %2394 = vmatpush1.msra.mxu0 0.0
  %2395 = vmatprep.subr.mxu0 0.0
  %2396 = vmatpush1.msra.mxu0 0.0
  %2397 = vmatprep.subr.mxu0 0.0
  %2398 = vmatpush1.msra.mxu0 0.0
  %2399 = vmatprep.subr.mxu0 0.0
  %2400 = vmatpush1.msra.mxu0 0.0
  %2401 = vmatprep.subr.mxu0 0.0
  %2402 = vmatpush1.msra.mxu0 0.0
  %2403 = vmatprep.subr.mxu0 0.0
  %2404 = vmatpush1.msra.mxu0 0.0
  %2405 = vmatprep.subr.mxu0 0.0
  %2406 = vmatpush1.msra.mxu0 0.0
  %2407 = vmatprep.subr.mxu0 0.0
  %2408 = vmatpush1.msra.mxu0 0.0
  %2409 = vmatprep.subr.mxu0 0.0
  %2410 = vmatpush1.msra.mxu0 0.0
  %2411 = vmatprep.subr.mxu0 0.0
  %2412 = vmatpush1.msra.mxu0 0.0
  %2413 = vmatprep.subr.mxu0 0.0
  %2414 = vmatpush1.msra.mxu0 0.0
  %2415 = vmatprep.mubr.f32.mxu0 0.0
  %2416 = vmatmul.mubr.f32.gmra.mrb[0].mxu0 %v2326
  %v2417 = vpop.f32.mrb[0].mxu0
  %v2418 = vadd.f32 %v2349, %v2417
  %v2419 = vpop.f32.mrb[0].mxu0
  %2420 = vmatprep.mubr.f32.mxu0 0.0
  %2421 = vmatmul.mubr.f32.gmra.mrb[0].mxu0 %v2327
  %v2422 = vpop.f32.mrb[0].mxu0
  %v2423 = vadd.f32 %v2349, %v2422
  %v2424 = vpop.f32.mrb[0].mxu0
  %2425 = vdwg.mxu0
  %v2426 = vadd.f32 %v2232, %v2418
  %v2427 = vadd.f32 %v2233, %v2423
  %v2428 = vld [vmem:[%s13] sm:$0x1]
  %v2429 = vld [vmem:[%s14] sm:$0x1]
  %v2430 = vsel %vm177, %v2426, 0.0
  %2431 = vadd.xlane.f32.xlu0 %v2430
  %v2432 = vpop.xlane.xlu0 %2431
  %v2433 = vsel %vm177, %v2427, 0.0
  %2434 = vadd.xlane.f32.xlu0 %v2433
  %v2435 = vpop.xlane.xlu0 %2434
  %v2436 = vmul.f32 %v2432, %v2197
  %v2437 = vmul.f32 %v2435, %v2197
  %v2438 = vsub.f32 %v2426, %v2436
  %v2439 = vsub.f32 %v2427, %v2437
  %v2440 = vmul.f32 %v2438, %v2438
  %v2441 = vmul.f32 %v2439, %v2439
  %v2442 = vsel %vm177, %v2440, 0.0
  %2443 = vadd.xlane.f32.xlu0 %v2442
  %v2444 = vpop.xlane.xlu0 %2443
  %v2445 = vsel %vm177, %v2441, 0.0
  %2446 = vadd.xlane.f32.xlu0 %v2445
  %v2447 = vpop.xlane.xlu0 %2446
  %v2448 = vmul.f32 %v2444, %v2197
  %v2449 = vmul.f32 %v2447, %v2197
  %v2450 = vadd.f32 %v2448, 1e-05
  %v2451 = vadd.f32 %v2449, 1e-05
  %v2452 = vrsqrt.pop %v2450
  %v2453 = vrsqrt.pop %v2451
  %v2454 = vmul.f32 %v2438, %v2452
  %v2455 = vmul.f32 %v2439, %v2453
  %v2457 = vlaneseq
  %v2458 = vshrl.u32 %v2457, 7
  %v2459 = vsub.s32 0, %v2458
  %v2460 = vrot.slane %v2428, %v2459
  %v2462 = vmul.f32 %v2454, %v2460
  %v2463 = vmul.f32 %v2455, %v2460
  %v2465 = vlaneseq
  %v2466 = vshrl.u32 %v2465, 7
  %v2467 = vsub.s32 0, %v2466
  %v2468 = vrot.slane %v2429, %v2467
  %v2470 = vadd.f32 %v2462, %v2468
  %v2471 = vadd.f32 %v2463, %v2468
  %s2472 = scalar_lea.vmem %s3, 32
  %v2473 = vld [vmem:[%s2472] sm:$0xff]
  %v2474 = vld [vmem:[%s2472 + $0x8] sm:$0xff]
  %v2475 = vld [vmem:[%s2472 + $0x10] sm:$0xff]
  %v2476 = vld [vmem:[%s2472 + $0x18] sm:$0xff]
  %s2477 = scalar_lea.vmem %s4, 1
  %v2478 = vld [vmem:[%s2477] sm:$0x1]
  %v2480 = vlaneseq
  %v2481 = vshrl.u32 %v2480, 7
  %v2482 = vsub.s32 0, %v2481
  %v2483 = vrot.slane %v2478, %v2482
  %v2486 = vsel %vm177, %v2470, 0
  %v2489 = vsel %vm177, %v2471, 0
  %2491 = vmatprep.subr.mxu0 0.0
  %2492 = vmatpush1.msra.mxu0 %v2473
  %2493 = vmatprep.subr.mxu0 0.0
  %2494 = vmatpush1.msra.mxu0 %v2474
  %2495 = vmatprep.subr.mxu0 0.0
  %2496 = vmatpush1.msra.mxu0 %v2475
  %2497 = vmatprep.subr.mxu0 0.0
  %2498 = vmatpush1.msra.mxu0 %v2476
  %2499 = vmatprep.subr.mxu0 0.0
  %2500 = vmatpush1.msra.mxu0 0.0
  %2501 = vmatprep.subr.mxu0 0.0
  %2502 = vmatpush1.msra.mxu0 0.0
  %2503 = vmatprep.subr.mxu0 0.0
  %2504 = vmatpush1.msra.mxu0 0.0
  %2505 = vmatprep.subr.mxu0 0.0
  %2506 = vmatpush1.msra.mxu0 0.0
  %2507 = vmatprep.subr.mxu0 0.0
  %2508 = vmatpush1.msra.mxu0 0.0
  %2509 = vmatprep.subr.mxu0 0.0
  %2510 = vmatpush1.msra.mxu0 0.0
  %2511 = vmatprep.subr.mxu0 0.0
  %2512 = vmatpush1.msra.mxu0 0.0
  %2513 = vmatprep.subr.mxu0 0.0
  %2514 = vmatpush1.msra.mxu0 0.0
  %2515 = vmatprep.subr.mxu0 0.0
  %2516 = vmatpush1.msra.mxu0 0.0
  %2517 = vmatprep.subr.mxu0 0.0
  %2518 = vmatpush1.msra.mxu0 0.0
  %2519 = vmatprep.subr.mxu0 0.0
  %2520 = vmatpush1.msra.mxu0 0.0
  %2521 = vmatprep.subr.mxu0 0.0
  %2522 = vmatpush1.msra.mxu0 0.0
  %2523 = vmatprep.subr.mxu0 0.0
  %2524 = vmatpush1.msra.mxu0 0.0
  %2525 = vmatprep.subr.mxu0 0.0
  %2526 = vmatpush1.msra.mxu0 0.0
  %2527 = vmatprep.subr.mxu0 0.0
  %2528 = vmatpush1.msra.mxu0 0.0
  %2529 = vmatprep.subr.mxu0 0.0
  %2530 = vmatpush1.msra.mxu0 0.0
  %2531 = vmatprep.subr.mxu0 0.0
  %2532 = vmatpush1.msra.mxu0 0.0
  %2533 = vmatprep.subr.mxu0 0.0
  %2534 = vmatpush1.msra.mxu0 0.0
  %2535 = vmatprep.subr.mxu0 0.0
  %2536 = vmatpush1.msra.mxu0 0.0
  %2537 = vmatprep.subr.mxu0 0.0
  %2538 = vmatpush1.msra.mxu0 0.0
  %2539 = vmatprep.subr.mxu0 0.0
  %2540 = vmatpush1.msra.mxu0 0.0
  %2541 = vmatprep.subr.mxu0 0.0
  %2542 = vmatpush1.msra.mxu0 0.0
  %2543 = vmatprep.subr.mxu0 0.0
  %2544 = vmatpush1.msra.mxu0 0.0
  %2545 = vmatprep.subr.mxu0 0.0
  %2546 = vmatpush1.msra.mxu0 0.0
  %2547 = vmatprep.subr.mxu0 0.0
  %2548 = vmatpush1.msra.mxu0 0.0
  %2549 = vmatprep.subr.mxu0 0.0
  %2550 = vmatpush1.msra.mxu0 0.0
  %2551 = vmatprep.subr.mxu0 0.0
  %2552 = vmatpush1.msra.mxu0 0.0
  %2553 = vmatprep.subr.mxu0 0.0
  %2554 = vmatpush1.msra.mxu0 0.0
  %2555 = vmatprep.mubr.f32.mxu0 0.0
  %2556 = vmatmul.mubr.f32.gmra.mrb[0].mxu0 %v2486
  %v2557 = vpop.f32.mrb[0].mxu0
  %v2558 = vadd.f32 %v2483, %v2557
  %v2559 = vpop.f32.mrb[0].mxu0
  %2560 = vmatprep.mubr.f32.mxu0 0.0
  %2561 = vmatmul.mubr.f32.gmra.mrb[0].mxu0 %v2489
  %v2562 = vpop.f32.mrb[0].mxu0
  %v2563 = vadd.f32 %v2483, %v2562
  %v2564 = vpop.f32.mrb[0].mxu0
  %2565 = vdwg.mxu0
  %s2566 = scalar_lea.vmem %s5, 32
  %v2567 = vld [vmem:[%s2566] sm:$0xff]
  %v2568 = vld [vmem:[%s2566 + $0x8] sm:$0xff]
  %v2569 = vld [vmem:[%s2566 + $0x10] sm:$0xff]
  %v2570 = vld [vmem:[%s2566 + $0x18] sm:$0xff]
  %2572 = vrot.lane.b32.xlu0 %v2558, 96
  %v2573 = vpop.permute.xlu0 %2572
  %v2574 = vsel %vm266, %v2558, 0
  %v2576 = vsel %vm266, %v2573, 0
  %2578 = vmatprep.subr.mxu0 0.0
  %2579 = vmatpush1.xpose.msra.mxu0 %v2576
  %2580 = vmatprep.subr.mxu0 0.0
  %2581 = vmatpush1.xpose.msra.mxu0 0.0
  %2582 = vmatprep.subr.mxu0 0.0
  %2583 = vmatpush1.xpose.msra.mxu0 0.0
  %2584 = vmatprep.subr.mxu0 0.0
  %2585 = vmatpush1.xpose.msra.mxu0 0.0
  %2586 = vmatprep.subr.mxu0 0.0
  %2587 = vmatpush1.xpose.msra.mxu0 0.0
  %2588 = vmatprep.subr.mxu0 0.0
  %2589 = vmatpush1.xpose.msra.mxu0 0.0
  %2590 = vmatprep.subr.mxu0 0.0
  %2591 = vmatpush1.xpose.msra.mxu0 0.0
  %2592 = vmatprep.subr.mxu0 0.0
  %2593 = vmatpush1.xpose.msra.mxu0 0.0
  %2594 = vmatprep.subr.mxu0 0.0
  %2595 = vmatpush1.xpose.msra.mxu0 0.0
  %2596 = vmatprep.subr.mxu0 0.0
  %2597 = vmatpush1.xpose.msra.mxu0 0.0
  %2598 = vmatprep.subr.mxu0 0.0
  %2599 = vmatpush1.xpose.msra.mxu0 0.0
  %2600 = vmatprep.subr.mxu0 0.0
  %2601 = vmatpush1.xpose.msra.mxu0 0.0
  %2602 = vmatprep.subr.mxu0 0.0
  %2603 = vmatpush1.xpose.msra.mxu0 0.0
  %2604 = vmatprep.subr.mxu0 0.0
  %2605 = vmatpush1.xpose.msra.mxu0 0.0
  %2606 = vmatprep.subr.mxu0 0.0
  %2607 = vmatpush1.xpose.msra.mxu0 0.0
  %2608 = vmatprep.subr.mxu0 0.0
  %2609 = vmatpush1.xpose.msra.mxu0 0.0
  %2610 = vmatprep.subr.mxu0 0.0
  %2611 = vmatpush1.xpose.msra.mxu0 0.0
  %2612 = vmatprep.subr.mxu0 0.0
  %2613 = vmatpush1.xpose.msra.mxu0 0.0
  %2614 = vmatprep.subr.mxu0 0.0
  %2615 = vmatpush1.xpose.msra.mxu0 0.0
  %2616 = vmatprep.subr.mxu0 0.0
  %2617 = vmatpush1.xpose.msra.mxu0 0.0
  %2618 = vmatprep.subr.mxu0 0.0
  %2619 = vmatpush1.xpose.msra.mxu0 0.0
  %2620 = vmatprep.subr.mxu0 0.0
  %2621 = vmatpush1.xpose.msra.mxu0 0.0
  %2622 = vmatprep.subr.mxu0 0.0
  %2623 = vmatpush1.xpose.msra.mxu0 0.0
  %2624 = vmatprep.subr.mxu0 0.0
  %2625 = vmatpush1.xpose.msra.mxu0 0.0
  %2626 = vmatprep.subr.mxu0 0.0
  %2627 = vmatpush1.xpose.msra.mxu0 0.0
  %2628 = vmatprep.subr.mxu0 0.0
  %2629 = vmatpush1.xpose.msra.mxu0 0.0
  %2630 = vmatprep.subr.mxu0 0.0
  %2631 = vmatpush1.xpose.msra.mxu0 0.0
  %2632 = vmatprep.subr.mxu0 0.0
  %2633 = vmatpush1.xpose.msra.mxu0 0.0
  %2634 = vmatprep.subr.mxu0 0.0
  %2635 = vmatpush1.xpose.msra.mxu0 0.0
  %2636 = vmatprep.subr.mxu0 0.0
  %2637 = vmatpush1.xpose.msra.mxu0 0.0
  %2638 = vmatprep.subr.mxu0 0.0
  %2639 = vmatpush1.xpose.msra.mxu0 0.0
  %2640 = vmatprep.subr.mxu0 0.0
  %2641 = vmatpush1.xpose.msra.mxu0 0.0
  %2642 = vmatprep.mubr.f32.mxu0 0.0
  %2643 = vmatmul.mubr.f32.gmra.mrb[0].mxu0 %v2574
  %v2644 = vpop.f32.mrb[0].mxu0
  %v2645 = vadd.f32 0.0, %v2644
  %v2646 = vpop.f32.mrb[0].mxu0
  %2647 = vdwg.mxu0
  %v2648 = vmul.f32 %v2645, 0.35355338
  %v2649 = vsel %vm266, %v2648, -inf
  %2650 = vmax.xlane.f32.xlu0 %v2649
  %v2651 = vpop.xlane.xlu0 %2650
  %v2652 = vsub.f32 %v2648, %v2651
  %v2653 = vmul.f32 %v2652, 1.442695
  %v2654 = vpow.pop %v2653
  %v2655 = vsel %vm266, %v2654, 0.0
  %2656 = vadd.xlane.f32.xlu0 %v2655
  %v2657 = vpop.xlane.xlu0 %2656
  %v2658 = vrcp.pop %v2657
  %v2659 = vmul.f32 %v2654, %v2658
  %2660 = vrot.lane.b32.xlu0 %v2558, 64
  %v2661 = vpop.permute.xlu0 %2660
  %v2664 = vsel %vm266, %v2659, 0
  %2666 = vmatprep.subr.mxu0 0.0
  %2667 = vmatpush1.msra.mxu0 %v2661
  %2668 = vmatprep.subr.mxu0 0.0
  %2669 = vmatpush1.msra.mxu0 0.0
  %2670 = vmatprep.subr.mxu0 0.0
  %2671 = vmatpush1.msra.mxu0 0.0
  %2672 = vmatprep.subr.mxu0 0.0
  %2673 = vmatpush1.msra.mxu0 0.0
  %2674 = vmatprep.subr.mxu0 0.0
  %2675 = vmatpush1.msra.mxu0 0.0
  %2676 = vmatprep.subr.mxu0 0.0
  %2677 = vmatpush1.msra.mxu0 0.0
  %2678 = vmatprep.subr.mxu0 0.0
  %2679 = vmatpush1.msra.mxu0 0.0
  %2680 = vmatprep.subr.mxu0 0.0
  %2681 = vmatpush1.msra.mxu0 0.0
  %2682 = vmatprep.subr.mxu0 0.0
  %2683 = vmatpush1.msra.mxu0 0.0
  %2684 = vmatprep.subr.mxu0 0.0
  %2685 = vmatpush1.msra.mxu0 0.0
  %2686 = vmatprep.subr.mxu0 0.0
  %2687 = vmatpush1.msra.mxu0 0.0
  %2688 = vmatprep.subr.mxu0 0.0
  %2689 = vmatpush1.msra.mxu0 0.0
  %2690 = vmatprep.subr.mxu0 0.0
  %2691 = vmatpush1.msra.mxu0 0.0
  %2692 = vmatprep.subr.mxu0 0.0
  %2693 = vmatpush1.msra.mxu0 0.0
  %2694 = vmatprep.subr.mxu0 0.0
  %2695 = vmatpush1.msra.mxu0 0.0
  %2696 = vmatprep.subr.mxu0 0.0
  %2697 = vmatpush1.msra.mxu0 0.0
  %2698 = vmatprep.subr.mxu0 0.0
  %2699 = vmatpush1.msra.mxu0 0.0
  %2700 = vmatprep.subr.mxu0 0.0
  %2701 = vmatpush1.msra.mxu0 0.0
  %2702 = vmatprep.subr.mxu0 0.0
  %2703 = vmatpush1.msra.mxu0 0.0
  %2704 = vmatprep.subr.mxu0 0.0
  %2705 = vmatpush1.msra.mxu0 0.0
  %2706 = vmatprep.subr.mxu0 0.0
  %2707 = vmatpush1.msra.mxu0 0.0
  %2708 = vmatprep.subr.mxu0 0.0
  %2709 = vmatpush1.msra.mxu0 0.0
  %2710 = vmatprep.subr.mxu0 0.0
  %2711 = vmatpush1.msra.mxu0 0.0
  %2712 = vmatprep.subr.mxu0 0.0
  %2713 = vmatpush1.msra.mxu0 0.0
  %2714 = vmatprep.subr.mxu0 0.0
  %2715 = vmatpush1.msra.mxu0 0.0
  %2716 = vmatprep.subr.mxu0 0.0
  %2717 = vmatpush1.msra.mxu0 0.0
  %2718 = vmatprep.subr.mxu0 0.0
  %2719 = vmatpush1.msra.mxu0 0.0
  %2720 = vmatprep.subr.mxu0 0.0
  %2721 = vmatpush1.msra.mxu0 0.0
  %2722 = vmatprep.subr.mxu0 0.0
  %2723 = vmatpush1.msra.mxu0 0.0
  %2724 = vmatprep.subr.mxu0 0.0
  %2725 = vmatpush1.msra.mxu0 0.0
  %2726 = vmatprep.subr.mxu0 0.0
  %2727 = vmatpush1.msra.mxu0 0.0
  %2728 = vmatprep.subr.mxu0 0.0
  %2729 = vmatpush1.msra.mxu0 0.0
  %2730 = vmatprep.mubr.f32.mxu0 0.0
  %2731 = vmatmul.mubr.f32.gmra.mrb[0].mxu0 %v2664
  %v2732 = vpop.f32.mrb[0].mxu0
  %v2733 = vadd.f32 0.0, %v2732
  %v2734 = vpop.f32.mrb[0].mxu0
  %2735 = vdwg.mxu0
  %2736 = vrot.lane.b32.xlu0 %v2558, 120
  %v2737 = vpop.permute.xlu0 %2736
  %2738 = vrot.lane.b32.xlu0 %v2558, 88
  %v2739 = vpop.permute.xlu0 %2738
  %v2740 = vsel %vm266, %v2737, 0
  %v2742 = vsel %vm266, %v2739, 0
  %2744 = vmatprep.subr.mxu0 0.0
  %2745 = vmatpush1.xpose.msra.mxu0 %v2742
  %2746 = vmatprep.subr.mxu0 0.0
  %2747 = vmatpush1.xpose.msra.mxu0 0.0
  %2748 = vmatprep.subr.mxu0 0.0
  %2749 = vmatpush1.xpose.msra.mxu0 0.0
  %2750 = vmatprep.subr.mxu0 0.0
  %2751 = vmatpush1.xpose.msra.mxu0 0.0
  %2752 = vmatprep.subr.mxu0 0.0
  %2753 = vmatpush1.xpose.msra.mxu0 0.0
  %2754 = vmatprep.subr.mxu0 0.0
  %2755 = vmatpush1.xpose.msra.mxu0 0.0
  %2756 = vmatprep.subr.mxu0 0.0
  %2757 = vmatpush1.xpose.msra.mxu0 0.0
  %2758 = vmatprep.subr.mxu0 0.0
  %2759 = vmatpush1.xpose.msra.mxu0 0.0
  %2760 = vmatprep.subr.mxu0 0.0
  %2761 = vmatpush1.xpose.msra.mxu0 0.0
  %2762 = vmatprep.subr.mxu0 0.0
  %2763 = vmatpush1.xpose.msra.mxu0 0.0
  %2764 = vmatprep.subr.mxu0 0.0
  %2765 = vmatpush1.xpose.msra.mxu0 0.0
  %2766 = vmatprep.subr.mxu0 0.0
  %2767 = vmatpush1.xpose.msra.mxu0 0.0
  %2768 = vmatprep.subr.mxu0 0.0
  %2769 = vmatpush1.xpose.msra.mxu0 0.0
  %2770 = vmatprep.subr.mxu0 0.0
  %2771 = vmatpush1.xpose.msra.mxu0 0.0
  %2772 = vmatprep.subr.mxu0 0.0
  %2773 = vmatpush1.xpose.msra.mxu0 0.0
  %2774 = vmatprep.subr.mxu0 0.0
  %2775 = vmatpush1.xpose.msra.mxu0 0.0
  %2776 = vmatprep.subr.mxu0 0.0
  %2777 = vmatpush1.xpose.msra.mxu0 0.0
  %2778 = vmatprep.subr.mxu0 0.0
  %2779 = vmatpush1.xpose.msra.mxu0 0.0
  %2780 = vmatprep.subr.mxu0 0.0
  %2781 = vmatpush1.xpose.msra.mxu0 0.0
  %2782 = vmatprep.subr.mxu0 0.0
  %2783 = vmatpush1.xpose.msra.mxu0 0.0
  %2784 = vmatprep.subr.mxu0 0.0
  %2785 = vmatpush1.xpose.msra.mxu0 0.0
  %2786 = vmatprep.subr.mxu0 0.0
  %2787 = vmatpush1.xpose.msra.mxu0 0.0
  %2788 = vmatprep.subr.mxu0 0.0
  %2789 = vmatpush1.xpose.msra.mxu0 0.0
  %2790 = vmatprep.subr.mxu0 0.0
  %2791 = vmatpush1.xpose.msra.mxu0 0.0
  %2792 = vmatprep.subr.mxu0 0.0
  %2793 = vmatpush1.xpose.msra.mxu0 0.0
  %2794 = vmatprep.subr.mxu0 0.0
  %2795 = vmatpush1.xpose.msra.mxu0 0.0
  %2796 = vmatprep.subr.mxu0 0.0
  %2797 = vmatpush1.xpose.msra.mxu0 0.0
  %2798 = vmatprep.subr.mxu0 0.0
  %2799 = vmatpush1.xpose.msra.mxu0 0.0
  %2800 = vmatprep.subr.mxu0 0.0
  %2801 = vmatpush1.xpose.msra.mxu0 0.0
  %2802 = vmatprep.subr.mxu0 0.0
  %2803 = vmatpush1.xpose.msra.mxu0 0.0
  %2804 = vmatprep.subr.mxu0 0.0
  %2805 = vmatpush1.xpose.msra.mxu0 0.0
  %2806 = vmatprep.subr.mxu0 0.0
  %2807 = vmatpush1.xpose.msra.mxu0 0.0
  %2808 = vmatprep.mubr.f32.mxu0 0.0
  %2809 = vmatmul.mubr.f32.gmra.mrb[0].mxu0 %v2740
  %v2810 = vpop.f32.mrb[0].mxu0
  %v2811 = vadd.f32 0.0, %v2810
  %v2812 = vpop.f32.mrb[0].mxu0
  %2813 = vdwg.mxu0
  %v2814 = vmul.f32 %v2811, 0.35355338
  %v2815 = vsel %vm266, %v2814, -inf
  %2816 = vmax.xlane.f32.xlu0 %v2815
  %v2817 = vpop.xlane.xlu0 %2816
  %v2818 = vsub.f32 %v2814, %v2817
  %v2819 = vmul.f32 %v2818, 1.442695
  %v2820 = vpow.pop %v2819
  %v2821 = vsel %vm266, %v2820, 0.0
  %2822 = vadd.xlane.f32.xlu0 %v2821
  %v2823 = vpop.xlane.xlu0 %2822
  %v2824 = vrcp.pop %v2823
  %v2825 = vmul.f32 %v2820, %v2824
  %2826 = vrot.lane.b32.xlu0 %v2558, 56
  %v2827 = vpop.permute.xlu0 %2826
  %v2830 = vsel %vm266, %v2825, 0
  %2832 = vmatprep.subr.mxu0 0.0
  %2833 = vmatpush1.msra.mxu0 %v2827
  %2834 = vmatprep.subr.mxu0 0.0
  %2835 = vmatpush1.msra.mxu0 0.0
  %2836 = vmatprep.subr.mxu0 0.0
  %2837 = vmatpush1.msra.mxu0 0.0
  %2838 = vmatprep.subr.mxu0 0.0
  %2839 = vmatpush1.msra.mxu0 0.0
  %2840 = vmatprep.subr.mxu0 0.0
  %2841 = vmatpush1.msra.mxu0 0.0
  %2842 = vmatprep.subr.mxu0 0.0
  %2843 = vmatpush1.msra.mxu0 0.0
  %2844 = vmatprep.subr.mxu0 0.0
  %2845 = vmatpush1.msra.mxu0 0.0
  %2846 = vmatprep.subr.mxu0 0.0
  %2847 = vmatpush1.msra.mxu0 0.0
  %2848 = vmatprep.subr.mxu0 0.0
  %2849 = vmatpush1.msra.mxu0 0.0
  %2850 = vmatprep.subr.mxu0 0.0
  %2851 = vmatpush1.msra.mxu0 0.0
  %2852 = vmatprep.subr.mxu0 0.0
  %2853 = vmatpush1.msra.mxu0 0.0
  %2854 = vmatprep.subr.mxu0 0.0
  %2855 = vmatpush1.msra.mxu0 0.0
  %2856 = vmatprep.subr.mxu0 0.0
  %2857 = vmatpush1.msra.mxu0 0.0
  %2858 = vmatprep.subr.mxu0 0.0
  %2859 = vmatpush1.msra.mxu0 0.0
  %2860 = vmatprep.subr.mxu0 0.0
  %2861 = vmatpush1.msra.mxu0 0.0
  %2862 = vmatprep.subr.mxu0 0.0
  %2863 = vmatpush1.msra.mxu0 0.0
  %2864 = vmatprep.subr.mxu0 0.0
  %2865 = vmatpush1.msra.mxu0 0.0
  %2866 = vmatprep.subr.mxu0 0.0
  %2867 = vmatpush1.msra.mxu0 0.0
  %2868 = vmatprep.subr.mxu0 0.0
  %2869 = vmatpush1.msra.mxu0 0.0
  %2870 = vmatprep.subr.mxu0 0.0
  %2871 = vmatpush1.msra.mxu0 0.0
  %2872 = vmatprep.subr.mxu0 0.0
  %2873 = vmatpush1.msra.mxu0 0.0
  %2874 = vmatprep.subr.mxu0 0.0
  %2875 = vmatpush1.msra.mxu0 0.0
  %2876 = vmatprep.subr.mxu0 0.0
  %2877 = vmatpush1.msra.mxu0 0.0
  %2878 = vmatprep.subr.mxu0 0.0
  %2879 = vmatpush1.msra.mxu0 0.0
  %2880 = vmatprep.subr.mxu0 0.0
  %2881 = vmatpush1.msra.mxu0 0.0
  %2882 = vmatprep.subr.mxu0 0.0
  %2883 = vmatpush1.msra.mxu0 0.0
  %2884 = vmatprep.subr.mxu0 0.0
  %2885 = vmatpush1.msra.mxu0 0.0
  %2886 = vmatprep.subr.mxu0 0.0
  %2887 = vmatpush1.msra.mxu0 0.0
  %2888 = vmatprep.subr.mxu0 0.0
  %2889 = vmatpush1.msra.mxu0 0.0
  %2890 = vmatprep.subr.mxu0 0.0
  %2891 = vmatpush1.msra.mxu0 0.0
  %2892 = vmatprep.subr.mxu0 0.0
  %2893 = vmatpush1.msra.mxu0 0.0
  %2894 = vmatprep.subr.mxu0 0.0
  %2895 = vmatpush1.msra.mxu0 0.0
  %2896 = vmatprep.mubr.f32.mxu0 0.0
  %2897 = vmatmul.mubr.f32.gmra.mrb[0].mxu0 %v2830
  %v2898 = vpop.f32.mrb[0].mxu0
  %v2899 = vadd.f32 0.0, %v2898
  %v2900 = vpop.f32.mrb[0].mxu0
  %2901 = vdwg.mxu0
  %v2903 = vsel %vm266, %v2899, 0
  %2905 = vmatprep.subr.mxu0 0.0
  %2906 = vmatpush1.msra.mxu0 %v2568
  %2907 = vmatprep.subr.mxu0 0.0
  %2908 = vmatpush1.msra.mxu0 0.0
  %2909 = vmatprep.subr.mxu0 0.0
  %2910 = vmatpush1.msra.mxu0 0.0
  %2911 = vmatprep.subr.mxu0 0.0
  %2912 = vmatpush1.msra.mxu0 0.0
  %2913 = vmatprep.subr.mxu0 0.0
  %2914 = vmatpush1.msra.mxu0 0.0
  %2915 = vmatprep.subr.mxu0 0.0
  %2916 = vmatpush1.msra.mxu0 0.0
  %2917 = vmatprep.subr.mxu0 0.0
  %2918 = vmatpush1.msra.mxu0 0.0
  %2919 = vmatprep.subr.mxu0 0.0
  %2920 = vmatpush1.msra.mxu0 0.0
  %2921 = vmatprep.subr.mxu0 0.0
  %2922 = vmatpush1.msra.mxu0 0.0
  %2923 = vmatprep.subr.mxu0 0.0
  %2924 = vmatpush1.msra.mxu0 0.0
  %2925 = vmatprep.subr.mxu0 0.0
  %2926 = vmatpush1.msra.mxu0 0.0
  %2927 = vmatprep.subr.mxu0 0.0
  %2928 = vmatpush1.msra.mxu0 0.0
  %2929 = vmatprep.subr.mxu0 0.0
  %2930 = vmatpush1.msra.mxu0 0.0
  %2931 = vmatprep.subr.mxu0 0.0
  %2932 = vmatpush1.msra.mxu0 0.0
  %2933 = vmatprep.subr.mxu0 0.0
  %2934 = vmatpush1.msra.mxu0 0.0
  %2935 = vmatprep.subr.mxu0 0.0
  %2936 = vmatpush1.msra.mxu0 0.0
  %2937 = vmatprep.subr.mxu0 0.0
  %2938 = vmatpush1.msra.mxu0 0.0
  %2939 = vmatprep.subr.mxu0 0.0
  %2940 = vmatpush1.msra.mxu0 0.0
  %2941 = vmatprep.subr.mxu0 0.0
  %2942 = vmatpush1.msra.mxu0 0.0
  %2943 = vmatprep.subr.mxu0 0.0
  %2944 = vmatpush1.msra.mxu0 0.0
  %2945 = vmatprep.subr.mxu0 0.0
  %2946 = vmatpush1.msra.mxu0 0.0
  %2947 = vmatprep.subr.mxu0 0.0
  %2948 = vmatpush1.msra.mxu0 0.0
  %2949 = vmatprep.subr.mxu0 0.0
  %2950 = vmatpush1.msra.mxu0 0.0
  %2951 = vmatprep.subr.mxu0 0.0
  %2952 = vmatpush1.msra.mxu0 0.0
  %2953 = vmatprep.subr.mxu0 0.0
  %2954 = vmatpush1.msra.mxu0 0.0
  %2955 = vmatprep.subr.mxu0 0.0
  %2956 = vmatpush1.msra.mxu0 0.0
  %2957 = vmatprep.subr.mxu0 0.0
  %2958 = vmatpush1.msra.mxu0 0.0
  %2959 = vmatprep.subr.mxu0 0.0
  %2960 = vmatpush1.msra.mxu0 0.0
  %2961 = vmatprep.subr.mxu0 0.0
  %2962 = vmatpush1.msra.mxu0 0.0
  %2963 = vmatprep.subr.mxu0 0.0
  %2964 = vmatpush1.msra.mxu0 0.0
  %2965 = vmatprep.subr.mxu0 0.0
  %2966 = vmatpush1.msra.mxu0 0.0
  %2967 = vmatprep.subr.mxu0 0.0
  %2968 = vmatpush1.msra.mxu0 0.0
  %2969 = vmatprep.mubr.f32.mxu0 0.0
  %2970 = vmatmul.mubr.f32.gmra.mrb[0].mxu0 %v2903
  %v2971 = vpop.f32.mrb[0].mxu0
  %v2972 = vadd.f32 0.0, %v2971
  %v2973 = vpop.f32.mrb[0].mxu0
  %2974 = vdwg.mxu0
  %v2976 = vsel %vm266, %v2733, 0
  %2978 = vmatprep.subr.mxu0 0.0
  %2979 = vmatpush1.msra.mxu0 %v2567
  %2980 = vmatprep.subr.mxu0 0.0
  %2981 = vmatpush1.msra.mxu0 0.0
  %2982 = vmatprep.subr.mxu0 0.0
  %2983 = vmatpush1.msra.mxu0 0.0
  %2984 = vmatprep.subr.mxu0 0.0
  %2985 = vmatpush1.msra.mxu0 0.0
  %2986 = vmatprep.subr.mxu0 0.0
  %2987 = vmatpush1.msra.mxu0 0.0
  %2988 = vmatprep.subr.mxu0 0.0
  %2989 = vmatpush1.msra.mxu0 0.0
  %2990 = vmatprep.subr.mxu0 0.0
  %2991 = vmatpush1.msra.mxu0 0.0
  %2992 = vmatprep.subr.mxu0 0.0
  %2993 = vmatpush1.msra.mxu0 0.0
  %2994 = vmatprep.subr.mxu0 0.0
  %2995 = vmatpush1.msra.mxu0 0.0
  %2996 = vmatprep.subr.mxu0 0.0
  %2997 = vmatpush1.msra.mxu0 0.0
  %2998 = vmatprep.subr.mxu0 0.0
  %2999 = vmatpush1.msra.mxu0 0.0
  %3000 = vmatprep.subr.mxu0 0.0
  %3001 = vmatpush1.msra.mxu0 0.0
  %3002 = vmatprep.subr.mxu0 0.0
  %3003 = vmatpush1.msra.mxu0 0.0
  %3004 = vmatprep.subr.mxu0 0.0
  %3005 = vmatpush1.msra.mxu0 0.0
  %3006 = vmatprep.subr.mxu0 0.0
  %3007 = vmatpush1.msra.mxu0 0.0
  %3008 = vmatprep.subr.mxu0 0.0
  %3009 = vmatpush1.msra.mxu0 0.0
  %3010 = vmatprep.subr.mxu0 0.0
  %3011 = vmatpush1.msra.mxu0 0.0
  %3012 = vmatprep.subr.mxu0 0.0
  %3013 = vmatpush1.msra.mxu0 0.0
  %3014 = vmatprep.subr.mxu0 0.0
  %3015 = vmatpush1.msra.mxu0 0.0
  %3016 = vmatprep.subr.mxu0 0.0
  %3017 = vmatpush1.msra.mxu0 0.0
  %3018 = vmatprep.subr.mxu0 0.0
  %3019 = vmatpush1.msra.mxu0 0.0
  %3020 = vmatprep.subr.mxu0 0.0
  %3021 = vmatpush1.msra.mxu0 0.0
  %3022 = vmatprep.subr.mxu0 0.0
  %3023 = vmatpush1.msra.mxu0 0.0
  %3024 = vmatprep.subr.mxu0 0.0
  %3025 = vmatpush1.msra.mxu0 0.0
  %3026 = vmatprep.subr.mxu0 0.0
  %3027 = vmatpush1.msra.mxu0 0.0
  %3028 = vmatprep.subr.mxu0 0.0
  %3029 = vmatpush1.msra.mxu0 0.0
  %3030 = vmatprep.subr.mxu0 0.0
  %3031 = vmatpush1.msra.mxu0 0.0
  %3032 = vmatprep.subr.mxu0 0.0
  %3033 = vmatpush1.msra.mxu0 0.0
  %3034 = vmatprep.subr.mxu0 0.0
  %3035 = vmatpush1.msra.mxu0 0.0
  %3036 = vmatprep.subr.mxu0 0.0
  %3037 = vmatpush1.msra.mxu0 0.0
  %3038 = vmatprep.subr.mxu0 0.0
  %3039 = vmatpush1.msra.mxu0 0.0
  %3040 = vmatprep.subr.mxu0 0.0
  %3041 = vmatpush1.msra.mxu0 0.0
  %3042 = vmatprep.mubr.f32.mxu0 0.0
  %3043 = vmatmul.mubr.f32.gmra.mrb[0].mxu0 %v2976
  %v3044 = vpop.f32.mrb[0].mxu0
  %v3045 = vadd.f32 %v2972, %v3044
  %v3046 = vpop.f32.mrb[0].mxu0
  %3047 = vdwg.mxu0
  %3048 = vrot.lane.b32.xlu0 %v2558, 112
  %v3049 = vpop.permute.xlu0 %3048
  %3050 = vrot.lane.b32.xlu0 %v2558, 80
  %v3051 = vpop.permute.xlu0 %3050
  %v3052 = vsel %vm266, %v3049, 0
  %v3054 = vsel %vm266, %v3051, 0
  %3056 = vmatprep.subr.mxu0 0.0
  %3057 = vmatpush1.xpose.msra.mxu0 %v3054
  %3058 = vmatprep.subr.mxu0 0.0
  %3059 = vmatpush1.xpose.msra.mxu0 0.0
  %3060 = vmatprep.subr.mxu0 0.0
  %3061 = vmatpush1.xpose.msra.mxu0 0.0
  %3062 = vmatprep.subr.mxu0 0.0
  %3063 = vmatpush1.xpose.msra.mxu0 0.0
  %3064 = vmatprep.subr.mxu0 0.0
  %3065 = vmatpush1.xpose.msra.mxu0 0.0
  %3066 = vmatprep.subr.mxu0 0.0
  %3067 = vmatpush1.xpose.msra.mxu0 0.0
  %3068 = vmatprep.subr.mxu0 0.0
  %3069 = vmatpush1.xpose.msra.mxu0 0.0
  %3070 = vmatprep.subr.mxu0 0.0
  %3071 = vmatpush1.xpose.msra.mxu0 0.0
  %3072 = vmatprep.subr.mxu0 0.0
  %3073 = vmatpush1.xpose.msra.mxu0 0.0
  %3074 = vmatprep.subr.mxu0 0.0
  %3075 = vmatpush1.xpose.msra.mxu0 0.0
  %3076 = vmatprep.subr.mxu0 0.0
  %3077 = vmatpush1.xpose.msra.mxu0 0.0
  %3078 = vmatprep.subr.mxu0 0.0
  %3079 = vmatpush1.xpose.msra.mxu0 0.0
  %3080 = vmatprep.subr.mxu0 0.0
  %3081 = vmatpush1.xpose.msra.mxu0 0.0
  %3082 = vmatprep.subr.mxu0 0.0
  %3083 = vmatpush1.xpose.msra.mxu0 0.0
  %3084 = vmatprep.subr.mxu0 0.0
  %3085 = vmatpush1.xpose.msra.mxu0 0.0
  %3086 = vmatprep.subr.mxu0 0.0
  %3087 = vmatpush1.xpose.msra.mxu0 0.0
  %3088 = vmatprep.subr.mxu0 0.0
  %3089 = vmatpush1.xpose.msra.mxu0 0.0
  %3090 = vmatprep.subr.mxu0 0.0
  %3091 = vmatpush1.xpose.msra.mxu0 0.0
  %3092 = vmatprep.subr.mxu0 0.0
  %3093 = vmatpush1.xpose.msra.mxu0 0.0
  %3094 = vmatprep.subr.mxu0 0.0
  %3095 = vmatpush1.xpose.msra.mxu0 0.0
  %3096 = vmatprep.subr.mxu0 0.0
  %3097 = vmatpush1.xpose.msra.mxu0 0.0
  %3098 = vmatprep.subr.mxu0 0.0
  %3099 = vmatpush1.xpose.msra.mxu0 0.0
  %3100 = vmatprep.subr.mxu0 0.0
  %3101 = vmatpush1.xpose.msra.mxu0 0.0
  %3102 = vmatprep.subr.mxu0 0.0
  %3103 = vmatpush1.xpose.msra.mxu0 0.0
  %3104 = vmatprep.subr.mxu0 0.0
  %3105 = vmatpush1.xpose.msra.mxu0 0.0
  %3106 = vmatprep.subr.mxu0 0.0
  %3107 = vmatpush1.xpose.msra.mxu0 0.0
  %3108 = vmatprep.subr.mxu0 0.0
  %3109 = vmatpush1.xpose.msra.mxu0 0.0
  %3110 = vmatprep.subr.mxu0 0.0
  %3111 = vmatpush1.xpose.msra.mxu0 0.0
  %3112 = vmatprep.subr.mxu0 0.0
  %3113 = vmatpush1.xpose.msra.mxu0 0.0
  %3114 = vmatprep.subr.mxu0 0.0
  %3115 = vmatpush1.xpose.msra.mxu0 0.0
  %3116 = vmatprep.subr.mxu0 0.0
  %3117 = vmatpush1.xpose.msra.mxu0 0.0
  %3118 = vmatprep.subr.mxu0 0.0
  %3119 = vmatpush1.xpose.msra.mxu0 0.0
  %3120 = vmatprep.mubr.f32.mxu0 0.0
  %3121 = vmatmul.mubr.f32.gmra.mrb[0].mxu0 %v3052
  %v3122 = vpop.f32.mrb[0].mxu0
  %v3123 = vadd.f32 0.0, %v3122
  %v3124 = vpop.f32.mrb[0].mxu0
  %3125 = vdwg.mxu0
  %v3126 = vmul.f32 %v3123, 0.35355338
  %v3127 = vsel %vm266, %v3126, -inf
  %3128 = vmax.xlane.f32.xlu0 %v3127
  %v3129 = vpop.xlane.xlu0 %3128
  %v3130 = vsub.f32 %v3126, %v3129
  %v3131 = vmul.f32 %v3130, 1.442695
  %v3132 = vpow.pop %v3131
  %v3133 = vsel %vm266, %v3132, 0.0
  %3134 = vadd.xlane.f32.xlu0 %v3133
  %v3135 = vpop.xlane.xlu0 %3134
  %v3136 = vrcp.pop %v3135
  %v3137 = vmul.f32 %v3132, %v3136
  %3138 = vrot.lane.b32.xlu0 %v2558, 48
  %v3139 = vpop.permute.xlu0 %3138
  %v3142 = vsel %vm266, %v3137, 0
  %3144 = vmatprep.subr.mxu0 0.0
  %3145 = vmatpush1.msra.mxu0 %v3139
  %3146 = vmatprep.subr.mxu0 0.0
  %3147 = vmatpush1.msra.mxu0 0.0
  %3148 = vmatprep.subr.mxu0 0.0
  %3149 = vmatpush1.msra.mxu0 0.0
  %3150 = vmatprep.subr.mxu0 0.0
  %3151 = vmatpush1.msra.mxu0 0.0
  %3152 = vmatprep.subr.mxu0 0.0
  %3153 = vmatpush1.msra.mxu0 0.0
  %3154 = vmatprep.subr.mxu0 0.0
  %3155 = vmatpush1.msra.mxu0 0.0
  %3156 = vmatprep.subr.mxu0 0.0
  %3157 = vmatpush1.msra.mxu0 0.0
  %3158 = vmatprep.subr.mxu0 0.0
  %3159 = vmatpush1.msra.mxu0 0.0
  %3160 = vmatprep.subr.mxu0 0.0
  %3161 = vmatpush1.msra.mxu0 0.0
  %3162 = vmatprep.subr.mxu0 0.0
  %3163 = vmatpush1.msra.mxu0 0.0
  %3164 = vmatprep.subr.mxu0 0.0
  %3165 = vmatpush1.msra.mxu0 0.0
  %3166 = vmatprep.subr.mxu0 0.0
  %3167 = vmatpush1.msra.mxu0 0.0
  %3168 = vmatprep.subr.mxu0 0.0
  %3169 = vmatpush1.msra.mxu0 0.0
  %3170 = vmatprep.subr.mxu0 0.0
  %3171 = vmatpush1.msra.mxu0 0.0
  %3172 = vmatprep.subr.mxu0 0.0
  %3173 = vmatpush1.msra.mxu0 0.0
  %3174 = vmatprep.subr.mxu0 0.0
  %3175 = vmatpush1.msra.mxu0 0.0
  %3176 = vmatprep.subr.mxu0 0.0
  %3177 = vmatpush1.msra.mxu0 0.0
  %3178 = vmatprep.subr.mxu0 0.0
  %3179 = vmatpush1.msra.mxu0 0.0
  %3180 = vmatprep.subr.mxu0 0.0
  %3181 = vmatpush1.msra.mxu0 0.0
  %3182 = vmatprep.subr.mxu0 0.0
  %3183 = vmatpush1.msra.mxu0 0.0
  %3184 = vmatprep.subr.mxu0 0.0
  %3185 = vmatpush1.msra.mxu0 0.0
  %3186 = vmatprep.subr.mxu0 0.0
  %3187 = vmatpush1.msra.mxu0 0.0
  %3188 = vmatprep.subr.mxu0 0.0
  %3189 = vmatpush1.msra.mxu0 0.0
  %3190 = vmatprep.subr.mxu0 0.0
  %3191 = vmatpush1.msra.mxu0 0.0
  %3192 = vmatprep.subr.mxu0 0.0
  %3193 = vmatpush1.msra.mxu0 0.0
  %3194 = vmatprep.subr.mxu0 0.0
  %3195 = vmatpush1.msra.mxu0 0.0
  %3196 = vmatprep.subr.mxu0 0.0
  %3197 = vmatpush1.msra.mxu0 0.0
  %3198 = vmatprep.subr.mxu0 0.0
  %3199 = vmatpush1.msra.mxu0 0.0
  %3200 = vmatprep.subr.mxu0 0.0
  %3201 = vmatpush1.msra.mxu0 0.0
  %3202 = vmatprep.subr.mxu0 0.0
  %3203 = vmatpush1.msra.mxu0 0.0
  %3204 = vmatprep.subr.mxu0 0.0
  %3205 = vmatpush1.msra.mxu0 0.0
  %3206 = vmatprep.subr.mxu0 0.0
  %3207 = vmatpush1.msra.mxu0 0.0
  %3208 = vmatprep.mubr.f32.mxu0 0.0
  %3209 = vmatmul.mubr.f32.gmra.mrb[0].mxu0 %v3142
  %v3210 = vpop.f32.mrb[0].mxu0
  %v3211 = vadd.f32 0.0, %v3210
  %v3212 = vpop.f32.mrb[0].mxu0
  %3213 = vdwg.mxu0
  %v3215 = vsel %vm266, %v3211, 0
  %3217 = vmatprep.subr.mxu0 0.0
  %3218 = vmatpush1.msra.mxu0 %v2569
  %3219 = vmatprep.subr.mxu0 0.0
  %3220 = vmatpush1.msra.mxu0 0.0
  %3221 = vmatprep.subr.mxu0 0.0
  %3222 = vmatpush1.msra.mxu0 0.0
  %3223 = vmatprep.subr.mxu0 0.0
  %3224 = vmatpush1.msra.mxu0 0.0
  %3225 = vmatprep.subr.mxu0 0.0
  %3226 = vmatpush1.msra.mxu0 0.0
  %3227 = vmatprep.subr.mxu0 0.0
  %3228 = vmatpush1.msra.mxu0 0.0
  %3229 = vmatprep.subr.mxu0 0.0
  %3230 = vmatpush1.msra.mxu0 0.0
  %3231 = vmatprep.subr.mxu0 0.0
  %3232 = vmatpush1.msra.mxu0 0.0
  %3233 = vmatprep.subr.mxu0 0.0
  %3234 = vmatpush1.msra.mxu0 0.0
  %3235 = vmatprep.subr.mxu0 0.0
  %3236 = vmatpush1.msra.mxu0 0.0
  %3237 = vmatprep.subr.mxu0 0.0
  %3238 = vmatpush1.msra.mxu0 0.0
  %3239 = vmatprep.subr.mxu0 0.0
  %3240 = vmatpush1.msra.mxu0 0.0
  %3241 = vmatprep.subr.mxu0 0.0
  %3242 = vmatpush1.msra.mxu0 0.0
  %3243 = vmatprep.subr.mxu0 0.0
  %3244 = vmatpush1.msra.mxu0 0.0
  %3245 = vmatprep.subr.mxu0 0.0
  %3246 = vmatpush1.msra.mxu0 0.0
  %3247 = vmatprep.subr.mxu0 0.0
  %3248 = vmatpush1.msra.mxu0 0.0
  %3249 = vmatprep.subr.mxu0 0.0
  %3250 = vmatpush1.msra.mxu0 0.0
  %3251 = vmatprep.subr.mxu0 0.0
  %3252 = vmatpush1.msra.mxu0 0.0
  %3253 = vmatprep.subr.mxu0 0.0
  %3254 = vmatpush1.msra.mxu0 0.0
  %3255 = vmatprep.subr.mxu0 0.0
  %3256 = vmatpush1.msra.mxu0 0.0
  %3257 = vmatprep.subr.mxu0 0.0
  %3258 = vmatpush1.msra.mxu0 0.0
  %3259 = vmatprep.subr.mxu0 0.0
  %3260 = vmatpush1.msra.mxu0 0.0
  %3261 = vmatprep.subr.mxu0 0.0
  %3262 = vmatpush1.msra.mxu0 0.0
  %3263 = vmatprep.subr.mxu0 0.0
  %3264 = vmatpush1.msra.mxu0 0.0
  %3265 = vmatprep.subr.mxu0 0.0
  %3266 = vmatpush1.msra.mxu0 0.0
  %3267 = vmatprep.subr.mxu0 0.0
  %3268 = vmatpush1.msra.mxu0 0.0
  %3269 = vmatprep.subr.mxu0 0.0
  %3270 = vmatpush1.msra.mxu0 0.0
  %3271 = vmatprep.subr.mxu0 0.0
  %3272 = vmatpush1.msra.mxu0 0.0
  %3273 = vmatprep.subr.mxu0 0.0
  %3274 = vmatpush1.msra.mxu0 0.0
  %3275 = vmatprep.subr.mxu0 0.0
  %3276 = vmatpush1.msra.mxu0 0.0
  %3277 = vmatprep.subr.mxu0 0.0
  %3278 = vmatpush1.msra.mxu0 0.0
  %3279 = vmatprep.subr.mxu0 0.0
  %3280 = vmatpush1.msra.mxu0 0.0
  %3281 = vmatprep.mubr.f32.mxu0 0.0
  %3282 = vmatmul.mubr.f32.gmra.mrb[0].mxu0 %v3215
  %v3283 = vpop.f32.mrb[0].mxu0
  %v3284 = vadd.f32 0.0, %v3283
  %v3285 = vpop.f32.mrb[0].mxu0
  %3286 = vdwg.mxu0
  %v3287 = vadd.f32 %v3045, %v3284
  %3288 = vrot.lane.b32.xlu0 %v2558, 104
  %v3289 = vpop.permute.xlu0 %3288
  %3290 = vrot.lane.b32.xlu0 %v2558, 72
  %v3291 = vpop.permute.xlu0 %3290
  %v3292 = vsel %vm266, %v3289, 0
  %v3294 = vsel %vm266, %v3291, 0
  %3296 = vmatprep.subr.mxu0 0.0
  %3297 = vmatpush1.xpose.msra.mxu0 %v3294
  %3298 = vmatprep.subr.mxu0 0.0
  %3299 = vmatpush1.xpose.msra.mxu0 0.0
  %3300 = vmatprep.subr.mxu0 0.0
  %3301 = vmatpush1.xpose.msra.mxu0 0.0
  %3302 = vmatprep.subr.mxu0 0.0
  %3303 = vmatpush1.xpose.msra.mxu0 0.0
  %3304 = vmatprep.subr.mxu0 0.0
  %3305 = vmatpush1.xpose.msra.mxu0 0.0
  %3306 = vmatprep.subr.mxu0 0.0
  %3307 = vmatpush1.xpose.msra.mxu0 0.0
  %3308 = vmatprep.subr.mxu0 0.0
  %3309 = vmatpush1.xpose.msra.mxu0 0.0
  %3310 = vmatprep.subr.mxu0 0.0
  %3311 = vmatpush1.xpose.msra.mxu0 0.0
  %3312 = vmatprep.subr.mxu0 0.0
  %3313 = vmatpush1.xpose.msra.mxu0 0.0
  %3314 = vmatprep.subr.mxu0 0.0
  %3315 = vmatpush1.xpose.msra.mxu0 0.0
  %3316 = vmatprep.subr.mxu0 0.0
  %3317 = vmatpush1.xpose.msra.mxu0 0.0
  %3318 = vmatprep.subr.mxu0 0.0
  %3319 = vmatpush1.xpose.msra.mxu0 0.0
  %3320 = vmatprep.subr.mxu0 0.0
  %3321 = vmatpush1.xpose.msra.mxu0 0.0
  %3322 = vmatprep.subr.mxu0 0.0
  %3323 = vmatpush1.xpose.msra.mxu0 0.0
  %3324 = vmatprep.subr.mxu0 0.0
  %3325 = vmatpush1.xpose.msra.mxu0 0.0
  %3326 = vmatprep.subr.mxu0 0.0
  %3327 = vmatpush1.xpose.msra.mxu0 0.0
  %3328 = vmatprep.subr.mxu0 0.0
  %3329 = vmatpush1.xpose.msra.mxu0 0.0
  %3330 = vmatprep.subr.mxu0 0.0
  %3331 = vmatpush1.xpose.msra.mxu0 0.0
  %3332 = vmatprep.subr.mxu0 0.0
  %3333 = vmatpush1.xpose.msra.mxu0 0.0
  %3334 = vmatprep.subr.mxu0 0.0
  %3335 = vmatpush1.xpose.msra.mxu0 0.0
  %3336 = vmatprep.subr.mxu0 0.0
  %3337 = vmatpush1.xpose.msra.mxu0 0.0
  %3338 = vmatprep.subr.mxu0 0.0
  %3339 = vmatpush1.xpose.msra.mxu0 0.0
  %3340 = vmatprep.subr.mxu0 0.0
  %3341 = vmatpush1.xpose.msra.mxu0 0.0
  %3342 = vmatprep.subr.mxu0 0.0
  %3343 = vmatpush1.xpose.msra.mxu0 0.0
  %3344 = vmatprep.subr.mxu0 0.0
  %3345 = vmatpush1.xpose.msra.mxu0 0.0
  %3346 = vmatprep.subr.mxu0 0.0
  %3347 = vmatpush1.xpose.msra.mxu0 0.0
  %3348 = vmatprep.subr.mxu0 0.0
  %3349 = vmatpush1.xpose.msra.mxu0 0.0
  %3350 = vmatprep.subr.mxu0 0.0
  %3351 = vmatpush1.xpose.msra.mxu0 0.0
  %3352 = vmatprep.subr.mxu0 0.0
  %3353 = vmatpush1.xpose.msra.mxu0 0.0
  %3354 = vmatprep.subr.mxu0 0.0
  %3355 = vmatpush1.xpose.msra.mxu0 0.0
  %3356 = vmatprep.subr.mxu0 0.0
  %3357 = vmatpush1.xpose.msra.mxu0 0.0
  %3358 = vmatprep.subr.mxu0 0.0
  %3359 = vmatpush1.xpose.msra.mxu0 0.0
  %3360 = vmatprep.mubr.f32.mxu0 0.0
  %3361 = vmatmul.mubr.f32.gmra.mrb[0].mxu0 %v3292
  %v3362 = vpop.f32.mrb[0].mxu0
  %v3363 = vadd.f32 0.0, %v3362
  %v3364 = vpop.f32.mrb[0].mxu0
  %3365 = vdwg.mxu0
  %v3366 = vmul.f32 %v3363, 0.35355338
  %v3367 = vsel %vm266, %v3366, -inf
  %3368 = vmax.xlane.f32.xlu0 %v3367
  %v3369 = vpop.xlane.xlu0 %3368
  %v3370 = vsub.f32 %v3366, %v3369
  %v3371 = vmul.f32 %v3370, 1.442695
  %v3372 = vpow.pop %v3371
  %v3373 = vsel %vm266, %v3372, 0.0
  %3374 = vadd.xlane.f32.xlu0 %v3373
  %v3375 = vpop.xlane.xlu0 %3374
  %v3376 = vrcp.pop %v3375
  %v3377 = vmul.f32 %v3372, %v3376
  %3378 = vrot.lane.b32.xlu0 %v2558, 40
  %v3379 = vpop.permute.xlu0 %3378
  %v3382 = vsel %vm266, %v3377, 0
  %3384 = vmatprep.subr.mxu0 0.0
  %3385 = vmatpush1.msra.mxu0 %v3379
  %3386 = vmatprep.subr.mxu0 0.0
  %3387 = vmatpush1.msra.mxu0 0.0
  %3388 = vmatprep.subr.mxu0 0.0
  %3389 = vmatpush1.msra.mxu0 0.0
  %3390 = vmatprep.subr.mxu0 0.0
  %3391 = vmatpush1.msra.mxu0 0.0
  %3392 = vmatprep.subr.mxu0 0.0
  %3393 = vmatpush1.msra.mxu0 0.0
  %3394 = vmatprep.subr.mxu0 0.0
  %3395 = vmatpush1.msra.mxu0 0.0
  %3396 = vmatprep.subr.mxu0 0.0
  %3397 = vmatpush1.msra.mxu0 0.0
  %3398 = vmatprep.subr.mxu0 0.0
  %3399 = vmatpush1.msra.mxu0 0.0
  %3400 = vmatprep.subr.mxu0 0.0
  %3401 = vmatpush1.msra.mxu0 0.0
  %3402 = vmatprep.subr.mxu0 0.0
  %3403 = vmatpush1.msra.mxu0 0.0
  %3404 = vmatprep.subr.mxu0 0.0
  %3405 = vmatpush1.msra.mxu0 0.0
  %3406 = vmatprep.subr.mxu0 0.0
  %3407 = vmatpush1.msra.mxu0 0.0
  %3408 = vmatprep.subr.mxu0 0.0
  %3409 = vmatpush1.msra.mxu0 0.0
  %3410 = vmatprep.subr.mxu0 0.0
  %3411 = vmatpush1.msra.mxu0 0.0
  %3412 = vmatprep.subr.mxu0 0.0
  %3413 = vmatpush1.msra.mxu0 0.0
  %3414 = vmatprep.subr.mxu0 0.0
  %3415 = vmatpush1.msra.mxu0 0.0
  %3416 = vmatprep.subr.mxu0 0.0
  %3417 = vmatpush1.msra.mxu0 0.0
  %3418 = vmatprep.subr.mxu0 0.0
  %3419 = vmatpush1.msra.mxu0 0.0
  %3420 = vmatprep.subr.mxu0 0.0
  %3421 = vmatpush1.msra.mxu0 0.0
  %3422 = vmatprep.subr.mxu0 0.0
  %3423 = vmatpush1.msra.mxu0 0.0
  %3424 = vmatprep.subr.mxu0 0.0
  %3425 = vmatpush1.msra.mxu0 0.0
  %3426 = vmatprep.subr.mxu0 0.0
  %3427 = vmatpush1.msra.mxu0 0.0
  %3428 = vmatprep.subr.mxu0 0.0
  %3429 = vmatpush1.msra.mxu0 0.0
  %3430 = vmatprep.subr.mxu0 0.0
  %3431 = vmatpush1.msra.mxu0 0.0
  %3432 = vmatprep.subr.mxu0 0.0
  %3433 = vmatpush1.msra.mxu0 0.0
  %3434 = vmatprep.subr.mxu0 0.0
  %3435 = vmatpush1.msra.mxu0 0.0
  %3436 = vmatprep.subr.mxu0 0.0
  %3437 = vmatpush1.msra.mxu0 0.0
  %3438 = vmatprep.subr.mxu0 0.0
  %3439 = vmatpush1.msra.mxu0 0.0
  %3440 = vmatprep.subr.mxu0 0.0
  %3441 = vmatpush1.msra.mxu0 0.0
  %3442 = vmatprep.subr.mxu0 0.0
  %3443 = vmatpush1.msra.mxu0 0.0
  %3444 = vmatprep.subr.mxu0 0.0
  %3445 = vmatpush1.msra.mxu0 0.0
  %3446 = vmatprep.subr.mxu0 0.0
  %3447 = vmatpush1.msra.mxu0 0.0
  %3448 = vmatprep.mubr.f32.mxu0 0.0
  %3449 = vmatmul.mubr.f32.gmra.mrb[0].mxu0 %v3382
  %v3450 = vpop.f32.mrb[0].mxu0
  %v3451 = vadd.f32 0.0, %v3450
  %v3452 = vpop.f32.mrb[0].mxu0
  %3453 = vdwg.mxu0
  %v3455 = vsel %vm266, %v3451, 0
  %3457 = vmatprep.subr.mxu0 0.0
  %3458 = vmatpush1.msra.mxu0 %v2570
  %3459 = vmatprep.subr.mxu0 0.0
  %3460 = vmatpush1.msra.mxu0 0.0
  %3461 = vmatprep.subr.mxu0 0.0
  %3462 = vmatpush1.msra.mxu0 0.0
  %3463 = vmatprep.subr.mxu0 0.0
  %3464 = vmatpush1.msra.mxu0 0.0
  %3465 = vmatprep.subr.mxu0 0.0
  %3466 = vmatpush1.msra.mxu0 0.0
  %3467 = vmatprep.subr.mxu0 0.0
  %3468 = vmatpush1.msra.mxu0 0.0
  %3469 = vmatprep.subr.mxu0 0.0
  %3470 = vmatpush1.msra.mxu0 0.0
  %3471 = vmatprep.subr.mxu0 0.0
  %3472 = vmatpush1.msra.mxu0 0.0
  %3473 = vmatprep.subr.mxu0 0.0
  %3474 = vmatpush1.msra.mxu0 0.0
  %3475 = vmatprep.subr.mxu0 0.0
  %3476 = vmatpush1.msra.mxu0 0.0
  %3477 = vmatprep.subr.mxu0 0.0
  %3478 = vmatpush1.msra.mxu0 0.0
  %3479 = vmatprep.subr.mxu0 0.0
  %3480 = vmatpush1.msra.mxu0 0.0
  %3481 = vmatprep.subr.mxu0 0.0
  %3482 = vmatpush1.msra.mxu0 0.0
  %3483 = vmatprep.subr.mxu0 0.0
  %3484 = vmatpush1.msra.mxu0 0.0
  %3485 = vmatprep.subr.mxu0 0.0
  %3486 = vmatpush1.msra.mxu0 0.0
  %3487 = vmatprep.subr.mxu0 0.0
  %3488 = vmatpush1.msra.mxu0 0.0
  %3489 = vmatprep.subr.mxu0 0.0
  %3490 = vmatpush1.msra.mxu0 0.0
  %3491 = vmatprep.subr.mxu0 0.0
  %3492 = vmatpush1.msra.mxu0 0.0
  %3493 = vmatprep.subr.mxu0 0.0
  %3494 = vmatpush1.msra.mxu0 0.0
  %3495 = vmatprep.subr.mxu0 0.0
  %3496 = vmatpush1.msra.mxu0 0.0
  %3497 = vmatprep.subr.mxu0 0.0
  %3498 = vmatpush1.msra.mxu0 0.0
  %3499 = vmatprep.subr.mxu0 0.0
  %3500 = vmatpush1.msra.mxu0 0.0
  %3501 = vmatprep.subr.mxu0 0.0
  %3502 = vmatpush1.msra.mxu0 0.0
  %3503 = vmatprep.subr.mxu0 0.0
  %3504 = vmatpush1.msra.mxu0 0.0
  %3505 = vmatprep.subr.mxu0 0.0
  %3506 = vmatpush1.msra.mxu0 0.0
  %3507 = vmatprep.subr.mxu0 0.0
  %3508 = vmatpush1.msra.mxu0 0.0
  %3509 = vmatprep.subr.mxu0 0.0
  %3510 = vmatpush1.msra.mxu0 0.0
  %3511 = vmatprep.subr.mxu0 0.0
  %3512 = vmatpush1.msra.mxu0 0.0
  %3513 = vmatprep.subr.mxu0 0.0
  %3514 = vmatpush1.msra.mxu0 0.0
  %3515 = vmatprep.subr.mxu0 0.0
  %3516 = vmatpush1.msra.mxu0 0.0
  %3517 = vmatprep.subr.mxu0 0.0
  %3518 = vmatpush1.msra.mxu0 0.0
  %3519 = vmatprep.subr.mxu0 0.0
  %3520 = vmatpush1.msra.mxu0 0.0
  %3521 = vmatprep.mubr.f32.mxu0 0.0
  %3522 = vmatmul.mubr.f32.gmra.mrb[0].mxu0 %v3455
  %v3523 = vpop.f32.mrb[0].mxu0
  %v3524 = vadd.f32 0.0, %v3523
  %v3525 = vpop.f32.mrb[0].mxu0
  %3526 = vdwg.mxu0
  %v3527 = vadd.f32 %v3287, %v3524
  %3529 = vrot.lane.b32.xlu0 %v2563, 96
  %v3530 = vpop.permute.xlu0 %3529
  %v3531 = vsel %vm266, %v2563, 0
  %v3533 = vsel %vm266, %v3530, 0
  %3535 = vmatprep.subr.mxu0 0.0
  %3536 = vmatpush1.xpose.msra.mxu0 %v3533
  %3537 = vmatprep.subr.mxu0 0.0
  %3538 = vmatpush1.xpose.msra.mxu0 0.0
  %3539 = vmatprep.subr.mxu0 0.0
  %3540 = vmatpush1.xpose.msra.mxu0 0.0
  %3541 = vmatprep.subr.mxu0 0.0
  %3542 = vmatpush1.xpose.msra.mxu0 0.0
  %3543 = vmatprep.subr.mxu0 0.0
  %3544 = vmatpush1.xpose.msra.mxu0 0.0
  %3545 = vmatprep.subr.mxu0 0.0
  %3546 = vmatpush1.xpose.msra.mxu0 0.0
  %3547 = vmatprep.subr.mxu0 0.0
  %3548 = vmatpush1.xpose.msra.mxu0 0.0
  %3549 = vmatprep.subr.mxu0 0.0
  %3550 = vmatpush1.xpose.msra.mxu0 0.0
  %3551 = vmatprep.subr.mxu0 0.0
  %3552 = vmatpush1.xpose.msra.mxu0 0.0
  %3553 = vmatprep.subr.mxu0 0.0
  %3554 = vmatpush1.xpose.msra.mxu0 0.0
  %3555 = vmatprep.subr.mxu0 0.0
  %3556 = vmatpush1.xpose.msra.mxu0 0.0
  %3557 = vmatprep.subr.mxu0 0.0
  %3558 = vmatpush1.xpose.msra.mxu0 0.0
  %3559 = vmatprep.subr.mxu0 0.0
  %3560 = vmatpush1.xpose.msra.mxu0 0.0
  %3561 = vmatprep.subr.mxu0 0.0
  %3562 = vmatpush1.xpose.msra.mxu0 0.0
  %3563 = vmatprep.subr.mxu0 0.0
  %3564 = vmatpush1.xpose.msra.mxu0 0.0
  %3565 = vmatprep.subr.mxu0 0.0
  %3566 = vmatpush1.xpose.msra.mxu0 0.0
  %3567 = vmatprep.subr.mxu0 0.0
  %3568 = vmatpush1.xpose.msra.mxu0 0.0
  %3569 = vmatprep.subr.mxu0 0.0
  %3570 = vmatpush1.xpose.msra.mxu0 0.0
  %3571 = vmatprep.subr.mxu0 0.0
  %3572 = vmatpush1.xpose.msra.mxu0 0.0
  %3573 = vmatprep.subr.mxu0 0.0
  %3574 = vmatpush1.xpose.msra.mxu0 0.0
  %3575 = vmatprep.subr.mxu0 0.0
  %3576 = vmatpush1.xpose.msra.mxu0 0.0
  %3577 = vmatprep.subr.mxu0 0.0
  %3578 = vmatpush1.xpose.msra.mxu0 0.0
  %3579 = vmatprep.subr.mxu0 0.0
  %3580 = vmatpush1.xpose.msra.mxu0 0.0
  %3581 = vmatprep.subr.mxu0 0.0
  %3582 = vmatpush1.xpose.msra.mxu0 0.0
  %3583 = vmatprep.subr.mxu0 0.0
  %3584 = vmatpush1.xpose.msra.mxu0 0.0
  %3585 = vmatprep.subr.mxu0 0.0
  %3586 = vmatpush1.xpose.msra.mxu0 0.0
  %3587 = vmatprep.subr.mxu0 0.0
  %3588 = vmatpush1.xpose.msra.mxu0 0.0
  %3589 = vmatprep.subr.mxu0 0.0
  %3590 = vmatpush1.xpose.msra.mxu0 0.0
  %3591 = vmatprep.subr.mxu0 0.0
  %3592 = vmatpush1.xpose.msra.mxu0 0.0
  %3593 = vmatprep.subr.mxu0 0.0
  %3594 = vmatpush1.xpose.msra.mxu0 0.0
  %3595 = vmatprep.subr.mxu0 0.0
  %3596 = vmatpush1.xpose.msra.mxu0 0.0
  %3597 = vmatprep.subr.mxu0 0.0
  %3598 = vmatpush1.xpose.msra.mxu0 0.0
  %3599 = vmatprep.mubr.f32.mxu0 0.0
  %3600 = vmatmul.mubr.f32.gmra.mrb[0].mxu0 %v3531
  %v3601 = vpop.f32.mrb[0].mxu0
  %v3602 = vadd.f32 0.0, %v3601
  %v3603 = vpop.f32.mrb[0].mxu0
  %3604 = vdwg.mxu0
  %v3605 = vmul.f32 %v3602, 0.35355338
  %v3606 = vsel %vm266, %v3605, -inf
  %3607 = vmax.xlane.f32.xlu0 %v3606
  %v3608 = vpop.xlane.xlu0 %3607
  %v3609 = vsub.f32 %v3605, %v3608
  %v3610 = vmul.f32 %v3609, 1.442695
  %v3611 = vpow.pop %v3610
  %v3612 = vsel %vm266, %v3611, 0.0
  %3613 = vadd.xlane.f32.xlu0 %v3612
  %v3614 = vpop.xlane.xlu0 %3613
  %v3615 = vrcp.pop %v3614
  %v3616 = vmul.f32 %v3611, %v3615
  %3617 = vrot.lane.b32.xlu0 %v2563, 64
  %v3618 = vpop.permute.xlu0 %3617
  %v3621 = vsel %vm266, %v3616, 0
  %3623 = vmatprep.subr.mxu0 0.0
  %3624 = vmatpush1.msra.mxu0 %v3618
  %3625 = vmatprep.subr.mxu0 0.0
  %3626 = vmatpush1.msra.mxu0 0.0
  %3627 = vmatprep.subr.mxu0 0.0
  %3628 = vmatpush1.msra.mxu0 0.0
  %3629 = vmatprep.subr.mxu0 0.0
  %3630 = vmatpush1.msra.mxu0 0.0
  %3631 = vmatprep.subr.mxu0 0.0
  %3632 = vmatpush1.msra.mxu0 0.0
  %3633 = vmatprep.subr.mxu0 0.0
  %3634 = vmatpush1.msra.mxu0 0.0
  %3635 = vmatprep.subr.mxu0 0.0
  %3636 = vmatpush1.msra.mxu0 0.0
  %3637 = vmatprep.subr.mxu0 0.0
  %3638 = vmatpush1.msra.mxu0 0.0
  %3639 = vmatprep.subr.mxu0 0.0
  %3640 = vmatpush1.msra.mxu0 0.0
  %3641 = vmatprep.subr.mxu0 0.0
  %3642 = vmatpush1.msra.mxu0 0.0
  %3643 = vmatprep.subr.mxu0 0.0
  %3644 = vmatpush1.msra.mxu0 0.0
  %3645 = vmatprep.subr.mxu0 0.0
  %3646 = vmatpush1.msra.mxu0 0.0
  %3647 = vmatprep.subr.mxu0 0.0
  %3648 = vmatpush1.msra.mxu0 0.0
  %3649 = vmatprep.subr.mxu0 0.0
  %3650 = vmatpush1.msra.mxu0 0.0
  %3651 = vmatprep.subr.mxu0 0.0
  %3652 = vmatpush1.msra.mxu0 0.0
  %3653 = vmatprep.subr.mxu0 0.0
  %3654 = vmatpush1.msra.mxu0 0.0
  %3655 = vmatprep.subr.mxu0 0.0
  %3656 = vmatpush1.msra.mxu0 0.0
  %3657 = vmatprep.subr.mxu0 0.0
  %3658 = vmatpush1.msra.mxu0 0.0
  %3659 = vmatprep.subr.mxu0 0.0
  %3660 = vmatpush1.msra.mxu0 0.0
  %3661 = vmatprep.subr.mxu0 0.0
  %3662 = vmatpush1.msra.mxu0 0.0
  %3663 = vmatprep.subr.mxu0 0.0
  %3664 = vmatpush1.msra.mxu0 0.0
  %3665 = vmatprep.subr.mxu0 0.0
  %3666 = vmatpush1.msra.mxu0 0.0
  %3667 = vmatprep.subr.mxu0 0.0
  %3668 = vmatpush1.msra.mxu0 0.0
  %3669 = vmatprep.subr.mxu0 0.0
  %3670 = vmatpush1.msra.mxu0 0.0
  %3671 = vmatprep.subr.mxu0 0.0
  %3672 = vmatpush1.msra.mxu0 0.0
  %3673 = vmatprep.subr.mxu0 0.0
  %3674 = vmatpush1.msra.mxu0 0.0
  %3675 = vmatprep.subr.mxu0 0.0
  %3676 = vmatpush1.msra.mxu0 0.0
  %3677 = vmatprep.subr.mxu0 0.0
  %3678 = vmatpush1.msra.mxu0 0.0
  %3679 = vmatprep.subr.mxu0 0.0
  %3680 = vmatpush1.msra.mxu0 0.0
  %3681 = vmatprep.subr.mxu0 0.0
  %3682 = vmatpush1.msra.mxu0 0.0
  %3683 = vmatprep.subr.mxu0 0.0
  %3684 = vmatpush1.msra.mxu0 0.0
  %3685 = vmatprep.subr.mxu0 0.0
  %3686 = vmatpush1.msra.mxu0 0.0
  %3687 = vmatprep.mubr.f32.mxu0 0.0
  %3688 = vmatmul.mubr.f32.gmra.mrb[0].mxu0 %v3621
  %v3689 = vpop.f32.mrb[0].mxu0
  %v3690 = vadd.f32 0.0, %v3689
  %v3691 = vpop.f32.mrb[0].mxu0
  %3692 = vdwg.mxu0
  %3693 = vrot.lane.b32.xlu0 %v2563, 120
  %v3694 = vpop.permute.xlu0 %3693
  %3695 = vrot.lane.b32.xlu0 %v2563, 88
  %v3696 = vpop.permute.xlu0 %3695
  %v3697 = vsel %vm266, %v3694, 0
  %v3699 = vsel %vm266, %v3696, 0
  %3701 = vmatprep.subr.mxu0 0.0
  %3702 = vmatpush1.xpose.msra.mxu0 %v3699
  %3703 = vmatprep.subr.mxu0 0.0
  %3704 = vmatpush1.xpose.msra.mxu0 0.0
  %3705 = vmatprep.subr.mxu0 0.0
  %3706 = vmatpush1.xpose.msra.mxu0 0.0
  %3707 = vmatprep.subr.mxu0 0.0
  %3708 = vmatpush1.xpose.msra.mxu0 0.0
  %3709 = vmatprep.subr.mxu0 0.0
  %3710 = vmatpush1.xpose.msra.mxu0 0.0
  %3711 = vmatprep.subr.mxu0 0.0
  %3712 = vmatpush1.xpose.msra.mxu0 0.0
  %3713 = vmatprep.subr.mxu0 0.0
  %3714 = vmatpush1.xpose.msra.mxu0 0.0
  %3715 = vmatprep.subr.mxu0 0.0
  %3716 = vmatpush1.xpose.msra.mxu0 0.0
  %3717 = vmatprep.subr.mxu0 0.0
  %3718 = vmatpush1.xpose.msra.mxu0 0.0
  %3719 = vmatprep.subr.mxu0 0.0
  %3720 = vmatpush1.xpose.msra.mxu0 0.0
  %3721 = vmatprep.subr.mxu0 0.0
  %3722 = vmatpush1.xpose.msra.mxu0 0.0
  %3723 = vmatprep.subr.mxu0 0.0
  %3724 = vmatpush1.xpose.msra.mxu0 0.0
  %3725 = vmatprep.subr.mxu0 0.0
  %3726 = vmatpush1.xpose.msra.mxu0 0.0
  %3727 = vmatprep.subr.mxu0 0.0
  %3728 = vmatpush1.xpose.msra.mxu0 0.0
  %3729 = vmatprep.subr.mxu0 0.0
  %3730 = vmatpush1.xpose.msra.mxu0 0.0
  %3731 = vmatprep.subr.mxu0 0.0
  %3732 = vmatpush1.xpose.msra.mxu0 0.0
  %3733 = vmatprep.subr.mxu0 0.0
  %3734 = vmatpush1.xpose.msra.mxu0 0.0
  %3735 = vmatprep.subr.mxu0 0.0
  %3736 = vmatpush1.xpose.msra.mxu0 0.0
  %3737 = vmatprep.subr.mxu0 0.0
  %3738 = vmatpush1.xpose.msra.mxu0 0.0
  %3739 = vmatprep.subr.mxu0 0.0
  %3740 = vmatpush1.xpose.msra.mxu0 0.0
  %3741 = vmatprep.subr.mxu0 0.0
  %3742 = vmatpush1.xpose.msra.mxu0 0.0
  %3743 = vmatprep.subr.mxu0 0.0
  %3744 = vmatpush1.xpose.msra.mxu0 0.0
  %3745 = vmatprep.subr.mxu0 0.0
  %3746 = vmatpush1.xpose.msra.mxu0 0.0
  %3747 = vmatprep.subr.mxu0 0.0
  %3748 = vmatpush1.xpose.msra.mxu0 0.0
  %3749 = vmatprep.subr.mxu0 0.0
  %3750 = vmatpush1.xpose.msra.mxu0 0.0
  %3751 = vmatprep.subr.mxu0 0.0
  %3752 = vmatpush1.xpose.msra.mxu0 0.0
  %3753 = vmatprep.subr.mxu0 0.0
  %3754 = vmatpush1.xpose.msra.mxu0 0.0
  %3755 = vmatprep.subr.mxu0 0.0
  %3756 = vmatpush1.xpose.msra.mxu0 0.0
  %3757 = vmatprep.subr.mxu0 0.0
  %3758 = vmatpush1.xpose.msra.mxu0 0.0
  %3759 = vmatprep.subr.mxu0 0.0
  %3760 = vmatpush1.xpose.msra.mxu0 0.0
  %3761 = vmatprep.subr.mxu0 0.0
  %3762 = vmatpush1.xpose.msra.mxu0 0.0
  %3763 = vmatprep.subr.mxu0 0.0
  %3764 = vmatpush1.xpose.msra.mxu0 0.0
  %3765 = vmatprep.mubr.f32.mxu0 0.0
  %3766 = vmatmul.mubr.f32.gmra.mrb[0].mxu0 %v3697
  %v3767 = vpop.f32.mrb[0].mxu0
  %v3768 = vadd.f32 0.0, %v3767
  %v3769 = vpop.f32.mrb[0].mxu0
  %3770 = vdwg.mxu0
  %v3771 = vmul.f32 %v3768, 0.35355338
  %v3772 = vsel %vm266, %v3771, -inf
  %3773 = vmax.xlane.f32.xlu0 %v3772
  %v3774 = vpop.xlane.xlu0 %3773
  %v3775 = vsub.f32 %v3771, %v3774
  %v3776 = vmul.f32 %v3775, 1.442695
  %v3777 = vpow.pop %v3776
  %v3778 = vsel %vm266, %v3777, 0.0
  %3779 = vadd.xlane.f32.xlu0 %v3778
  %v3780 = vpop.xlane.xlu0 %3779
  %v3781 = vrcp.pop %v3780
  %v3782 = vmul.f32 %v3777, %v3781
  %3783 = vrot.lane.b32.xlu0 %v2563, 56
  %v3784 = vpop.permute.xlu0 %3783
  %v3787 = vsel %vm266, %v3782, 0
  %3789 = vmatprep.subr.mxu0 0.0
  %3790 = vmatpush1.msra.mxu0 %v3784
  %3791 = vmatprep.subr.mxu0 0.0
  %3792 = vmatpush1.msra.mxu0 0.0
  %3793 = vmatprep.subr.mxu0 0.0
  %3794 = vmatpush1.msra.mxu0 0.0
  %3795 = vmatprep.subr.mxu0 0.0
  %3796 = vmatpush1.msra.mxu0 0.0
  %3797 = vmatprep.subr.mxu0 0.0
  %3798 = vmatpush1.msra.mxu0 0.0
  %3799 = vmatprep.subr.mxu0 0.0
  %3800 = vmatpush1.msra.mxu0 0.0
  %3801 = vmatprep.subr.mxu0 0.0
  %3802 = vmatpush1.msra.mxu0 0.0
  %3803 = vmatprep.subr.mxu0 0.0
  %3804 = vmatpush1.msra.mxu0 0.0
  %3805 = vmatprep.subr.mxu0 0.0
  %3806 = vmatpush1.msra.mxu0 0.0
  %3807 = vmatprep.subr.mxu0 0.0
  %3808 = vmatpush1.msra.mxu0 0.0
  %3809 = vmatprep.subr.mxu0 0.0
  %3810 = vmatpush1.msra.mxu0 0.0
  %3811 = vmatprep.subr.mxu0 0.0
  %3812 = vmatpush1.msra.mxu0 0.0
  %3813 = vmatprep.subr.mxu0 0.0
  %3814 = vmatpush1.msra.mxu0 0.0
  %3815 = vmatprep.subr.mxu0 0.0
  %3816 = vmatpush1.msra.mxu0 0.0
  %3817 = vmatprep.subr.mxu0 0.0
  %3818 = vmatpush1.msra.mxu0 0.0
  %3819 = vmatprep.subr.mxu0 0.0
  %3820 = vmatpush1.msra.mxu0 0.0
  %3821 = vmatprep.subr.mxu0 0.0
  %3822 = vmatpush1.msra.mxu0 0.0
  %3823 = vmatprep.subr.mxu0 0.0
  %3824 = vmatpush1.msra.mxu0 0.0
  %3825 = vmatprep.subr.mxu0 0.0
  %3826 = vmatpush1.msra.mxu0 0.0
  %3827 = vmatprep.subr.mxu0 0.0
  %3828 = vmatpush1.msra.mxu0 0.0
  %3829 = vmatprep.subr.mxu0 0.0
  %3830 = vmatpush1.msra.mxu0 0.0
  %3831 = vmatprep.subr.mxu0 0.0
  %3832 = vmatpush1.msra.mxu0 0.0
  %3833 = vmatprep.subr.mxu0 0.0
  %3834 = vmatpush1.msra.mxu0 0.0
  %3835 = vmatprep.subr.mxu0 0.0
  %3836 = vmatpush1.msra.mxu0 0.0
  %3837 = vmatprep.subr.mxu0 0.0
  %3838 = vmatpush1.msra.mxu0 0.0
  %3839 = vmatprep.subr.mxu0 0.0
  %3840 = vmatpush1.msra.mxu0 0.0
  %3841 = vmatprep.subr.mxu0 0.0
  %3842 = vmatpush1.msra.mxu0 0.0
  %3843 = vmatprep.subr.mxu0 0.0
  %3844 = vmatpush1.msra.mxu0 0.0
  %3845 = vmatprep.subr.mxu0 0.0
  %3846 = vmatpush1.msra.mxu0 0.0
  %3847 = vmatprep.subr.mxu0 0.0
  %3848 = vmatpush1.msra.mxu0 0.0
  %3849 = vmatprep.subr.mxu0 0.0
  %3850 = vmatpush1.msra.mxu0 0.0
  %3851 = vmatprep.subr.mxu0 0.0
  %3852 = vmatpush1.msra.mxu0 0.0
  %3853 = vmatprep.mubr.f32.mxu0 0.0
  %3854 = vmatmul.mubr.f32.gmra.mrb[0].mxu0 %v3787
  %v3855 = vpop.f32.mrb[0].mxu0
  %v3856 = vadd.f32 0.0, %v3855
  %v3857 = vpop.f32.mrb[0].mxu0
  %3858 = vdwg.mxu0
  %v3860 = vsel %vm266, %v3856, 0
  %3862 = vmatprep.subr.mxu0 0.0
  %3863 = vmatpush1.msra.mxu0 %v2568
  %3864 = vmatprep.subr.mxu0 0.0
  %3865 = vmatpush1.msra.mxu0 0.0
  %3866 = vmatprep.subr.mxu0 0.0
  %3867 = vmatpush1.msra.mxu0 0.0
  %3868 = vmatprep.subr.mxu0 0.0
  %3869 = vmatpush1.msra.mxu0 0.0
  %3870 = vmatprep.subr.mxu0 0.0
  %3871 = vmatpush1.msra.mxu0 0.0
  %3872 = vmatprep.subr.mxu0 0.0
  %3873 = vmatpush1.msra.mxu0 0.0
  %3874 = vmatprep.subr.mxu0 0.0
  %3875 = vmatpush1.msra.mxu0 0.0
  %3876 = vmatprep.subr.mxu0 0.0
  %3877 = vmatpush1.msra.mxu0 0.0
  %3878 = vmatprep.subr.mxu0 0.0
  %3879 = vmatpush1.msra.mxu0 0.0
  %3880 = vmatprep.subr.mxu0 0.0
  %3881 = vmatpush1.msra.mxu0 0.0
  %3882 = vmatprep.subr.mxu0 0.0
  %3883 = vmatpush1.msra.mxu0 0.0
  %3884 = vmatprep.subr.mxu0 0.0
  %3885 = vmatpush1.msra.mxu0 0.0
  %3886 = vmatprep.subr.mxu0 0.0
  %3887 = vmatpush1.msra.mxu0 0.0
  %3888 = vmatprep.subr.mxu0 0.0
  %3889 = vmatpush1.msra.mxu0 0.0
  %3890 = vmatprep.subr.mxu0 0.0
  %3891 = vmatpush1.msra.mxu0 0.0
  %3892 = vmatprep.subr.mxu0 0.0
  %3893 = vmatpush1.msra.mxu0 0.0
  %3894 = vmatprep.subr.mxu0 0.0
  %3895 = vmatpush1.msra.mxu0 0.0
  %3896 = vmatprep.subr.mxu0 0.0
  %3897 = vmatpush1.msra.mxu0 0.0
  %3898 = vmatprep.subr.mxu0 0.0
  %3899 = vmatpush1.msra.mxu0 0.0
  %3900 = vmatprep.subr.mxu0 0.0
  %3901 = vmatpush1.msra.mxu0 0.0
  %3902 = vmatprep.subr.mxu0 0.0
  %3903 = vmatpush1.msra.mxu0 0.0
  %3904 = vmatprep.subr.mxu0 0.0
  %3905 = vmatpush1.msra.mxu0 0.0
  %3906 = vmatprep.subr.mxu0 0.0
  %3907 = vmatpush1.msra.mxu0 0.0
  %3908 = vmatprep.subr.mxu0 0.0
  %3909 = vmatpush1.msra.mxu0 0.0
  %3910 = vmatprep.subr.mxu0 0.0
  %3911 = vmatpush1.msra.mxu0 0.0
  %3912 = vmatprep.subr.mxu0 0.0
  %3913 = vmatpush1.msra.mxu0 0.0
  %3914 = vmatprep.subr.mxu0 0.0
  %3915 = vmatpush1.msra.mxu0 0.0
  %3916 = vmatprep.subr.mxu0 0.0
  %3917 = vmatpush1.msra.mxu0 0.0
  %3918 = vmatprep.subr.mxu0 0.0
  %3919 = vmatpush1.msra.mxu0 0.0
  %3920 = vmatprep.subr.mxu0 0.0
  %3921 = vmatpush1.msra.mxu0 0.0
  %3922 = vmatprep.subr.mxu0 0.0
  %3923 = vmatpush1.msra.mxu0 0.0
  %3924 = vmatprep.subr.mxu0 0.0
  %3925 = vmatpush1.msra.mxu0 0.0
  %3926 = vmatprep.mubr.f32.mxu0 0.0
  %3927 = vmatmul.mubr.f32.gmra.mrb[0].mxu0 %v3860
  %v3928 = vpop.f32.mrb[0].mxu0
  %v3929 = vadd.f32 0.0, %v3928
  %v3930 = vpop.f32.mrb[0].mxu0
  %3931 = vdwg.mxu0
  %v3933 = vsel %vm266, %v3690, 0
  %3935 = vmatprep.subr.mxu0 0.0
  %3936 = vmatpush1.msra.mxu0 %v2567
  %3937 = vmatprep.subr.mxu0 0.0
  %3938 = vmatpush1.msra.mxu0 0.0
  %3939 = vmatprep.subr.mxu0 0.0
  %3940 = vmatpush1.msra.mxu0 0.0
  %3941 = vmatprep.subr.mxu0 0.0
  %3942 = vmatpush1.msra.mxu0 0.0
  %3943 = vmatprep.subr.mxu0 0.0
  %3944 = vmatpush1.msra.mxu0 0.0
  %3945 = vmatprep.subr.mxu0 0.0
  %3946 = vmatpush1.msra.mxu0 0.0
  %3947 = vmatprep.subr.mxu0 0.0
  %3948 = vmatpush1.msra.mxu0 0.0
  %3949 = vmatprep.subr.mxu0 0.0
  %3950 = vmatpush1.msra.mxu0 0.0
  %3951 = vmatprep.subr.mxu0 0.0
  %3952 = vmatpush1.msra.mxu0 0.0
  %3953 = vmatprep.subr.mxu0 0.0
  %3954 = vmatpush1.msra.mxu0 0.0
  %3955 = vmatprep.subr.mxu0 0.0
  %3956 = vmatpush1.msra.mxu0 0.0
  %3957 = vmatprep.subr.mxu0 0.0
  %3958 = vmatpush1.msra.mxu0 0.0
  %3959 = vmatprep.subr.mxu0 0.0
  %3960 = vmatpush1.msra.mxu0 0.0
  %3961 = vmatprep.subr.mxu0 0.0
  %3962 = vmatpush1.msra.mxu0 0.0
  %3963 = vmatprep.subr.mxu0 0.0
  %3964 = vmatpush1.msra.mxu0 0.0
  %3965 = vmatprep.subr.mxu0 0.0
  %3966 = vmatpush1.msra.mxu0 0.0
  %3967 = vmatprep.subr.mxu0 0.0
  %3968 = vmatpush1.msra.mxu0 0.0
  %3969 = vmatprep.subr.mxu0 0.0
  %3970 = vmatpush1.msra.mxu0 0.0
  %3971 = vmatprep.subr.mxu0 0.0
  %3972 = vmatpush1.msra.mxu0 0.0
  %3973 = vmatprep.subr.mxu0 0.0
  %3974 = vmatpush1.msra.mxu0 0.0
  %3975 = vmatprep.subr.mxu0 0.0
  %3976 = vmatpush1.msra.mxu0 0.0
  %3977 = vmatprep.subr.mxu0 0.0
  %3978 = vmatpush1.msra.mxu0 0.0
  %3979 = vmatprep.subr.mxu0 0.0
  %3980 = vmatpush1.msra.mxu0 0.0
  %3981 = vmatprep.subr.mxu0 0.0
  %3982 = vmatpush1.msra.mxu0 0.0
  %3983 = vmatprep.subr.mxu0 0.0
  %3984 = vmatpush1.msra.mxu0 0.0
  %3985 = vmatprep.subr.mxu0 0.0
  %3986 = vmatpush1.msra.mxu0 0.0
  %3987 = vmatprep.subr.mxu0 0.0
  %3988 = vmatpush1.msra.mxu0 0.0
  %3989 = vmatprep.subr.mxu0 0.0
  %3990 = vmatpush1.msra.mxu0 0.0
  %3991 = vmatprep.subr.mxu0 0.0
  %3992 = vmatpush1.msra.mxu0 0.0
  %3993 = vmatprep.subr.mxu0 0.0
  %3994 = vmatpush1.msra.mxu0 0.0
  %3995 = vmatprep.subr.mxu0 0.0
  %3996 = vmatpush1.msra.mxu0 0.0
  %3997 = vmatprep.subr.mxu0 0.0
  %3998 = vmatpush1.msra.mxu0 0.0
  %3999 = vmatprep.mubr.f32.mxu0 0.0
  %4000 = vmatmul.mubr.f32.gmra.mrb[0].mxu0 %v3933
  %v4001 = vpop.f32.mrb[0].mxu0
  %v4002 = vadd.f32 %v3929, %v4001
  %v4003 = vpop.f32.mrb[0].mxu0
  %4004 = vdwg.mxu0
  %4005 = vrot.lane.b32.xlu0 %v2563, 112
  %v4006 = vpop.permute.xlu0 %4005
  %4007 = vrot.lane.b32.xlu0 %v2563, 80
  %v4008 = vpop.permute.xlu0 %4007
  %v4009 = vsel %vm266, %v4006, 0
  %v4011 = vsel %vm266, %v4008, 0
  %4013 = vmatprep.subr.mxu0 0.0
  %4014 = vmatpush1.xpose.msra.mxu0 %v4011
  %4015 = vmatprep.subr.mxu0 0.0
  %4016 = vmatpush1.xpose.msra.mxu0 0.0
  %4017 = vmatprep.subr.mxu0 0.0
  %4018 = vmatpush1.xpose.msra.mxu0 0.0
  %4019 = vmatprep.subr.mxu0 0.0
  %4020 = vmatpush1.xpose.msra.mxu0 0.0
  %4021 = vmatprep.subr.mxu0 0.0
  %4022 = vmatpush1.xpose.msra.mxu0 0.0
  %4023 = vmatprep.subr.mxu0 0.0
  %4024 = vmatpush1.xpose.msra.mxu0 0.0
  %4025 = vmatprep.subr.mxu0 0.0
  %4026 = vmatpush1.xpose.msra.mxu0 0.0
  %4027 = vmatprep.subr.mxu0 0.0
  %4028 = vmatpush1.xpose.msra.mxu0 0.0
  %4029 = vmatprep.subr.mxu0 0.0
  %4030 = vmatpush1.xpose.msra.mxu0 0.0
  %4031 = vmatprep.subr.mxu0 0.0
  %4032 = vmatpush1.xpose.msra.mxu0 0.0
  %4033 = vmatprep.subr.mxu0 0.0
  %4034 = vmatpush1.xpose.msra.mxu0 0.0
  %4035 = vmatprep.subr.mxu0 0.0
  %4036 = vmatpush1.xpose.msra.mxu0 0.0
  %4037 = vmatprep.subr.mxu0 0.0
  %4038 = vmatpush1.xpose.msra.mxu0 0.0
  %4039 = vmatprep.subr.mxu0 0.0
  %4040 = vmatpush1.xpose.msra.mxu0 0.0
  %4041 = vmatprep.subr.mxu0 0.0
  %4042 = vmatpush1.xpose.msra.mxu0 0.0
  %4043 = vmatprep.subr.mxu0 0.0
  %4044 = vmatpush1.xpose.msra.mxu0 0.0
  %4045 = vmatprep.subr.mxu0 0.0
  %4046 = vmatpush1.xpose.msra.mxu0 0.0
  %4047 = vmatprep.subr.mxu0 0.0
  %4048 = vmatpush1.xpose.msra.mxu0 0.0
  %4049 = vmatprep.subr.mxu0 0.0
  %4050 = vmatpush1.xpose.msra.mxu0 0.0
  %4051 = vmatprep.subr.mxu0 0.0
  %4052 = vmatpush1.xpose.msra.mxu0 0.0
  %4053 = vmatprep.subr.mxu0 0.0
  %4054 = vmatpush1.xpose.msra.mxu0 0.0
  %4055 = vmatprep.subr.mxu0 0.0
  %4056 = vmatpush1.xpose.msra.mxu0 0.0
  %4057 = vmatprep.subr.mxu0 0.0
  %4058 = vmatpush1.xpose.msra.mxu0 0.0
  %4059 = vmatprep.subr.mxu0 0.0
  %4060 = vmatpush1.xpose.msra.mxu0 0.0
  %4061 = vmatprep.subr.mxu0 0.0
  %4062 = vmatpush1.xpose.msra.mxu0 0.0
  %4063 = vmatprep.subr.mxu0 0.0
  %4064 = vmatpush1.xpose.msra.mxu0 0.0
  %4065 = vmatprep.subr.mxu0 0.0
  %4066 = vmatpush1.xpose.msra.mxu0 0.0
  %4067 = vmatprep.subr.mxu0 0.0
  %4068 = vmatpush1.xpose.msra.mxu0 0.0
  %4069 = vmatprep.subr.mxu0 0.0
  %4070 = vmatpush1.xpose.msra.mxu0 0.0
  %4071 = vmatprep.subr.mxu0 0.0
  %4072 = vmatpush1.xpose.msra.mxu0 0.0
  %4073 = vmatprep.subr.mxu0 0.0
  %4074 = vmatpush1.xpose.msra.mxu0 0.0
  %4075 = vmatprep.subr.mxu0 0.0
  %4076 = vmatpush1.xpose.msra.mxu0 0.0
  %4077 = vmatprep.mubr.f32.mxu0 0.0
  %4078 = vmatmul.mubr.f32.gmra.mrb[0].mxu0 %v4009
  %v4079 = vpop.f32.mrb[0].mxu0
  %v4080 = vadd.f32 0.0, %v4079
  %v4081 = vpop.f32.mrb[0].mxu0
  %4082 = vdwg.mxu0
  %v4083 = vmul.f32 %v4080, 0.35355338
  %v4084 = vsel %vm266, %v4083, -inf
  %4085 = vmax.xlane.f32.xlu0 %v4084
  %v4086 = vpop.xlane.xlu0 %4085
  %v4087 = vsub.f32 %v4083, %v4086
  %v4088 = vmul.f32 %v4087, 1.442695
  %v4089 = vpow.pop %v4088
  %v4090 = vsel %vm266, %v4089, 0.0
  %4091 = vadd.xlane.f32.xlu0 %v4090
  %v4092 = vpop.xlane.xlu0 %4091
  %v4093 = vrcp.pop %v4092
  %v4094 = vmul.f32 %v4089, %v4093
  %4095 = vrot.lane.b32.xlu0 %v2563, 48
  %v4096 = vpop.permute.xlu0 %4095
  %v4099 = vsel %vm266, %v4094, 0
  %4101 = vmatprep.subr.mxu0 0.0
  %4102 = vmatpush1.msra.mxu0 %v4096
  %4103 = vmatprep.subr.mxu0 0.0
  %4104 = vmatpush1.msra.mxu0 0.0
  %4105 = vmatprep.subr.mxu0 0.0
  %4106 = vmatpush1.msra.mxu0 0.0
  %4107 = vmatprep.subr.mxu0 0.0
  %4108 = vmatpush1.msra.mxu0 0.0
  %4109 = vmatprep.subr.mxu0 0.0
  %4110 = vmatpush1.msra.mxu0 0.0
  %4111 = vmatprep.subr.mxu0 0.0
  %4112 = vmatpush1.msra.mxu0 0.0
  %4113 = vmatprep.subr.mxu0 0.0
  %4114 = vmatpush1.msra.mxu0 0.0
  %4115 = vmatprep.subr.mxu0 0.0
  %4116 = vmatpush1.msra.mxu0 0.0
  %4117 = vmatprep.subr.mxu0 0.0
  %4118 = vmatpush1.msra.mxu0 0.0
  %4119 = vmatprep.subr.mxu0 0.0
  %4120 = vmatpush1.msra.mxu0 0.0
  %4121 = vmatprep.subr.mxu0 0.0
  %4122 = vmatpush1.msra.mxu0 0.0
  %4123 = vmatprep.subr.mxu0 0.0
  %4124 = vmatpush1.msra.mxu0 0.0
  %4125 = vmatprep.subr.mxu0 0.0
  %4126 = vmatpush1.msra.mxu0 0.0
  %4127 = vmatprep.subr.mxu0 0.0
  %4128 = vmatpush1.msra.mxu0 0.0
  %4129 = vmatprep.subr.mxu0 0.0
  %4130 = vmatpush1.msra.mxu0 0.0
  %4131 = vmatprep.subr.mxu0 0.0
  %4132 = vmatpush1.msra.mxu0 0.0
  %4133 = vmatprep.subr.mxu0 0.0
  %4134 = vmatpush1.msra.mxu0 0.0
  %4135 = vmatprep.subr.mxu0 0.0
  %4136 = vmatpush1.msra.mxu0 0.0
  %4137 = vmatprep.subr.mxu0 0.0
  %4138 = vmatpush1.msra.mxu0 0.0
  %4139 = vmatprep.subr.mxu0 0.0
  %4140 = vmatpush1.msra.mxu0 0.0
  %4141 = vmatprep.subr.mxu0 0.0
  %4142 = vmatpush1.msra.mxu0 0.0
  %4143 = vmatprep.subr.mxu0 0.0
  %4144 = vmatpush1.msra.mxu0 0.0
  %4145 = vmatprep.subr.mxu0 0.0
  %4146 = vmatpush1.msra.mxu0 0.0
  %4147 = vmatprep.subr.mxu0 0.0
  %4148 = vmatpush1.msra.mxu0 0.0
  %4149 = vmatprep.subr.mxu0 0.0
  %4150 = vmatpush1.msra.mxu0 0.0
  %4151 = vmatprep.subr.mxu0 0.0
  %4152 = vmatpush1.msra.mxu0 0.0
  %4153 = vmatprep.subr.mxu0 0.0
  %4154 = vmatpush1.msra.mxu0 0.0
  %4155 = vmatprep.subr.mxu0 0.0
  %4156 = vmatpush1.msra.mxu0 0.0
  %4157 = vmatprep.subr.mxu0 0.0
  %4158 = vmatpush1.msra.mxu0 0.0
  %4159 = vmatprep.subr.mxu0 0.0
  %4160 = vmatpush1.msra.mxu0 0.0
  %4161 = vmatprep.subr.mxu0 0.0
  %4162 = vmatpush1.msra.mxu0 0.0
  %4163 = vmatprep.subr.mxu0 0.0
  %4164 = vmatpush1.msra.mxu0 0.0
  %4165 = vmatprep.mubr.f32.mxu0 0.0
  %4166 = vmatmul.mubr.f32.gmra.mrb[0].mxu0 %v4099
  %v4167 = vpop.f32.mrb[0].mxu0
  %v4168 = vadd.f32 0.0, %v4167
  %v4169 = vpop.f32.mrb[0].mxu0
  %4170 = vdwg.mxu0
  %v4172 = vsel %vm266, %v4168, 0
  %4174 = vmatprep.subr.mxu0 0.0
  %4175 = vmatpush1.msra.mxu0 %v2569
  %4176 = vmatprep.subr.mxu0 0.0
  %4177 = vmatpush1.msra.mxu0 0.0
  %4178 = vmatprep.subr.mxu0 0.0
  %4179 = vmatpush1.msra.mxu0 0.0
  %4180 = vmatprep.subr.mxu0 0.0
  %4181 = vmatpush1.msra.mxu0 0.0
  %4182 = vmatprep.subr.mxu0 0.0
  %4183 = vmatpush1.msra.mxu0 0.0
  %4184 = vmatprep.subr.mxu0 0.0
  %4185 = vmatpush1.msra.mxu0 0.0
  %4186 = vmatprep.subr.mxu0 0.0
  %4187 = vmatpush1.msra.mxu0 0.0
  %4188 = vmatprep.subr.mxu0 0.0
  %4189 = vmatpush1.msra.mxu0 0.0
  %4190 = vmatprep.subr.mxu0 0.0
  %4191 = vmatpush1.msra.mxu0 0.0
  %4192 = vmatprep.subr.mxu0 0.0
  %4193 = vmatpush1.msra.mxu0 0.0
  %4194 = vmatprep.subr.mxu0 0.0
  %4195 = vmatpush1.msra.mxu0 0.0
  %4196 = vmatprep.subr.mxu0 0.0
  %4197 = vmatpush1.msra.mxu0 0.0
  %4198 = vmatprep.subr.mxu0 0.0
  %4199 = vmatpush1.msra.mxu0 0.0
  %4200 = vmatprep.subr.mxu0 0.0
  %4201 = vmatpush1.msra.mxu0 0.0
  %4202 = vmatprep.subr.mxu0 0.0
  %4203 = vmatpush1.msra.mxu0 0.0
  %4204 = vmatprep.subr.mxu0 0.0
  %4205 = vmatpush1.msra.mxu0 0.0
  %4206 = vmatprep.subr.mxu0 0.0
  %4207 = vmatpush1.msra.mxu0 0.0
  %4208 = vmatprep.subr.mxu0 0.0
  %4209 = vmatpush1.msra.mxu0 0.0
  %4210 = vmatprep.subr.mxu0 0.0
  %4211 = vmatpush1.msra.mxu0 0.0
  %4212 = vmatprep.subr.mxu0 0.0
  %4213 = vmatpush1.msra.mxu0 0.0
  %4214 = vmatprep.subr.mxu0 0.0
  %4215 = vmatpush1.msra.mxu0 0.0
  %4216 = vmatprep.subr.mxu0 0.0
  %4217 = vmatpush1.msra.mxu0 0.0
  %4218 = vmatprep.subr.mxu0 0.0
  %4219 = vmatpush1.msra.mxu0 0.0
  %4220 = vmatprep.subr.mxu0 0.0
  %4221 = vmatpush1.msra.mxu0 0.0
  %4222 = vmatprep.subr.mxu0 0.0
  %4223 = vmatpush1.msra.mxu0 0.0
  %4224 = vmatprep.subr.mxu0 0.0
  %4225 = vmatpush1.msra.mxu0 0.0
  %4226 = vmatprep.subr.mxu0 0.0
  %4227 = vmatpush1.msra.mxu0 0.0
  %4228 = vmatprep.subr.mxu0 0.0
  %4229 = vmatpush1.msra.mxu0 0.0
  %4230 = vmatprep.subr.mxu0 0.0
  %4231 = vmatpush1.msra.mxu0 0.0
  %4232 = vmatprep.subr.mxu0 0.0
  %4233 = vmatpush1.msra.mxu0 0.0
  %4234 = vmatprep.subr.mxu0 0.0
  %4235 = vmatpush1.msra.mxu0 0.0
  %4236 = vmatprep.subr.mxu0 0.0
  %4237 = vmatpush1.msra.mxu0 0.0
  %4238 = vmatprep.mubr.f32.mxu0 0.0
  %4239 = vmatmul.mubr.f32.gmra.mrb[0].mxu0 %v4172
  %v4240 = vpop.f32.mrb[0].mxu0
  %v4241 = vadd.f32 0.0, %v4240
  %v4242 = vpop.f32.mrb[0].mxu0
  %4243 = vdwg.mxu0
  %v4244 = vadd.f32 %v4002, %v4241
  %4245 = vrot.lane.b32.xlu0 %v2563, 104
  %v4246 = vpop.permute.xlu0 %4245
  %4247 = vrot.lane.b32.xlu0 %v2563, 72
  %v4248 = vpop.permute.xlu0 %4247
  %v4249 = vsel %vm266, %v4246, 0
  %v4251 = vsel %vm266, %v4248, 0
  %4253 = vmatprep.subr.mxu0 0.0
  %4254 = vmatpush1.xpose.msra.mxu0 %v4251
  %4255 = vmatprep.subr.mxu0 0.0
  %4256 = vmatpush1.xpose.msra.mxu0 0.0
  %4257 = vmatprep.subr.mxu0 0.0
  %4258 = vmatpush1.xpose.msra.mxu0 0.0
  %4259 = vmatprep.subr.mxu0 0.0
  %4260 = vmatpush1.xpose.msra.mxu0 0.0
  %4261 = vmatprep.subr.mxu0 0.0
  %4262 = vmatpush1.xpose.msra.mxu0 0.0
  %4263 = vmatprep.subr.mxu0 0.0
  %4264 = vmatpush1.xpose.msra.mxu0 0.0
  %4265 = vmatprep.subr.mxu0 0.0
  %4266 = vmatpush1.xpose.msra.mxu0 0.0
  %4267 = vmatprep.subr.mxu0 0.0
  %4268 = vmatpush1.xpose.msra.mxu0 0.0
  %4269 = vmatprep.subr.mxu0 0.0
  %4270 = vmatpush1.xpose.msra.mxu0 0.0
  %4271 = vmatprep.subr.mxu0 0.0
  %4272 = vmatpush1.xpose.msra.mxu0 0.0
  %4273 = vmatprep.subr.mxu0 0.0
  %4274 = vmatpush1.xpose.msra.mxu0 0.0
  %4275 = vmatprep.subr.mxu0 0.0
  %4276 = vmatpush1.xpose.msra.mxu0 0.0
  %4277 = vmatprep.subr.mxu0 0.0
  %4278 = vmatpush1.xpose.msra.mxu0 0.0
  %4279 = vmatprep.subr.mxu0 0.0
  %4280 = vmatpush1.xpose.msra.mxu0 0.0
  %4281 = vmatprep.subr.mxu0 0.0
  %4282 = vmatpush1.xpose.msra.mxu0 0.0
  %4283 = vmatprep.subr.mxu0 0.0
  %4284 = vmatpush1.xpose.msra.mxu0 0.0
  %4285 = vmatprep.subr.mxu0 0.0
  %4286 = vmatpush1.xpose.msra.mxu0 0.0
  %4287 = vmatprep.subr.mxu0 0.0
  %4288 = vmatpush1.xpose.msra.mxu0 0.0
  %4289 = vmatprep.subr.mxu0 0.0
  %4290 = vmatpush1.xpose.msra.mxu0 0.0
  %4291 = vmatprep.subr.mxu0 0.0
  %4292 = vmatpush1.xpose.msra.mxu0 0.0
  %4293 = vmatprep.subr.mxu0 0.0
  %4294 = vmatpush1.xpose.msra.mxu0 0.0
  %4295 = vmatprep.subr.mxu0 0.0
  %4296 = vmatpush1.xpose.msra.mxu0 0.0
  %4297 = vmatprep.subr.mxu0 0.0
  %4298 = vmatpush1.xpose.msra.mxu0 0.0
  %4299 = vmatprep.subr.mxu0 0.0
  %4300 = vmatpush1.xpose.msra.mxu0 0.0
  %4301 = vmatprep.subr.mxu0 0.0
  %4302 = vmatpush1.xpose.msra.mxu0 0.0
  %4303 = vmatprep.subr.mxu0 0.0
  %4304 = vmatpush1.xpose.msra.mxu0 0.0
  %4305 = vmatprep.subr.mxu0 0.0
  %4306 = vmatpush1.xpose.msra.mxu0 0.0
  %4307 = vmatprep.subr.mxu0 0.0
  %4308 = vmatpush1.xpose.msra.mxu0 0.0
  %4309 = vmatprep.subr.mxu0 0.0
  %4310 = vmatpush1.xpose.msra.mxu0 0.0
  %4311 = vmatprep.subr.mxu0 0.0
  %4312 = vmatpush1.xpose.msra.mxu0 0.0
  %4313 = vmatprep.subr.mxu0 0.0
  %4314 = vmatpush1.xpose.msra.mxu0 0.0
  %4315 = vmatprep.subr.mxu0 0.0
  %4316 = vmatpush1.xpose.msra.mxu0 0.0
  %4317 = vmatprep.mubr.f32.mxu0 0.0
  %4318 = vmatmul.mubr.f32.gmra.mrb[0].mxu0 %v4249
  %v4319 = vpop.f32.mrb[0].mxu0
  %v4320 = vadd.f32 0.0, %v4319
  %v4321 = vpop.f32.mrb[0].mxu0
  %4322 = vdwg.mxu0
  %v4323 = vmul.f32 %v4320, 0.35355338
  %v4324 = vsel %vm266, %v4323, -inf
  %4325 = vmax.xlane.f32.xlu0 %v4324
  %v4326 = vpop.xlane.xlu0 %4325
  %v4327 = vsub.f32 %v4323, %v4326
  %v4328 = vmul.f32 %v4327, 1.442695
  %v4329 = vpow.pop %v4328
  %v4330 = vsel %vm266, %v4329, 0.0
  %4331 = vadd.xlane.f32.xlu0 %v4330
  %v4332 = vpop.xlane.xlu0 %4331
  %v4333 = vrcp.pop %v4332
  %v4334 = vmul.f32 %v4329, %v4333
  %4335 = vrot.lane.b32.xlu0 %v2563, 40
  %v4336 = vpop.permute.xlu0 %4335
  %v4339 = vsel %vm266, %v4334, 0
  %4341 = vmatprep.subr.mxu0 0.0
  %4342 = vmatpush1.msra.mxu0 %v4336
  %4343 = vmatprep.subr.mxu0 0.0
  %4344 = vmatpush1.msra.mxu0 0.0
  %4345 = vmatprep.subr.mxu0 0.0
  %4346 = vmatpush1.msra.mxu0 0.0
  %4347 = vmatprep.subr.mxu0 0.0
  %4348 = vmatpush1.msra.mxu0 0.0
  %4349 = vmatprep.subr.mxu0 0.0
  %4350 = vmatpush1.msra.mxu0 0.0
  %4351 = vmatprep.subr.mxu0 0.0
  %4352 = vmatpush1.msra.mxu0 0.0
  %4353 = vmatprep.subr.mxu0 0.0
  %4354 = vmatpush1.msra.mxu0 0.0
  %4355 = vmatprep.subr.mxu0 0.0
  %4356 = vmatpush1.msra.mxu0 0.0
  %4357 = vmatprep.subr.mxu0 0.0
  %4358 = vmatpush1.msra.mxu0 0.0
  %4359 = vmatprep.subr.mxu0 0.0
  %4360 = vmatpush1.msra.mxu0 0.0
  %4361 = vmatprep.subr.mxu0 0.0
  %4362 = vmatpush1.msra.mxu0 0.0
  %4363 = vmatprep.subr.mxu0 0.0
  %4364 = vmatpush1.msra.mxu0 0.0
  %4365 = vmatprep.subr.mxu0 0.0
  %4366 = vmatpush1.msra.mxu0 0.0
  %4367 = vmatprep.subr.mxu0 0.0
  %4368 = vmatpush1.msra.mxu0 0.0
  %4369 = vmatprep.subr.mxu0 0.0
  %4370 = vmatpush1.msra.mxu0 0.0
  %4371 = vmatprep.subr.mxu0 0.0
  %4372 = vmatpush1.msra.mxu0 0.0
  %4373 = vmatprep.subr.mxu0 0.0
  %4374 = vmatpush1.msra.mxu0 0.0
  %4375 = vmatprep.subr.mxu0 0.0
  %4376 = vmatpush1.msra.mxu0 0.0
  %4377 = vmatprep.subr.mxu0 0.0
  %4378 = vmatpush1.msra.mxu0 0.0
  %4379 = vmatprep.subr.mxu0 0.0
  %4380 = vmatpush1.msra.mxu0 0.0
  %4381 = vmatprep.subr.mxu0 0.0
  %4382 = vmatpush1.msra.mxu0 0.0
  %4383 = vmatprep.subr.mxu0 0.0
  %4384 = vmatpush1.msra.mxu0 0.0
  %4385 = vmatprep.subr.mxu0 0.0
  %4386 = vmatpush1.msra.mxu0 0.0
  %4387 = vmatprep.subr.mxu0 0.0
  %4388 = vmatpush1.msra.mxu0 0.0
  %4389 = vmatprep.subr.mxu0 0.0
  %4390 = vmatpush1.msra.mxu0 0.0
  %4391 = vmatprep.subr.mxu0 0.0
  %4392 = vmatpush1.msra.mxu0 0.0
  %4393 = vmatprep.subr.mxu0 0.0
  %4394 = vmatpush1.msra.mxu0 0.0
  %4395 = vmatprep.subr.mxu0 0.0
  %4396 = vmatpush1.msra.mxu0 0.0
  %4397 = vmatprep.subr.mxu0 0.0
  %4398 = vmatpush1.msra.mxu0 0.0
  %4399 = vmatprep.subr.mxu0 0.0
  %4400 = vmatpush1.msra.mxu0 0.0
  %4401 = vmatprep.subr.mxu0 0.0
  %4402 = vmatpush1.msra.mxu0 0.0
  %4403 = vmatprep.subr.mxu0 0.0
  %4404 = vmatpush1.msra.mxu0 0.0
  %4405 = vmatprep.mubr.f32.mxu0 0.0
  %4406 = vmatmul.mubr.f32.gmra.mrb[0].mxu0 %v4339
  %v4407 = vpop.f32.mrb[0].mxu0
  %v4408 = vadd.f32 0.0, %v4407
  %v4409 = vpop.f32.mrb[0].mxu0
  %4410 = vdwg.mxu0
  %v4412 = vsel %vm266, %v4408, 0
  %4414 = vmatprep.subr.mxu0 0.0
  %4415 = vmatpush1.msra.mxu0 %v2570
  %4416 = vmatprep.subr.mxu0 0.0
  %4417 = vmatpush1.msra.mxu0 0.0
  %4418 = vmatprep.subr.mxu0 0.0
  %4419 = vmatpush1.msra.mxu0 0.0
  %4420 = vmatprep.subr.mxu0 0.0
  %4421 = vmatpush1.msra.mxu0 0.0
  %4422 = vmatprep.subr.mxu0 0.0
  %4423 = vmatpush1.msra.mxu0 0.0
  %4424 = vmatprep.subr.mxu0 0.0
  %4425 = vmatpush1.msra.mxu0 0.0
  %4426 = vmatprep.subr.mxu0 0.0
  %4427 = vmatpush1.msra.mxu0 0.0
  %4428 = vmatprep.subr.mxu0 0.0
  %4429 = vmatpush1.msra.mxu0 0.0
  %4430 = vmatprep.subr.mxu0 0.0
  %4431 = vmatpush1.msra.mxu0 0.0
  %4432 = vmatprep.subr.mxu0 0.0
  %4433 = vmatpush1.msra.mxu0 0.0
  %4434 = vmatprep.subr.mxu0 0.0
  %4435 = vmatpush1.msra.mxu0 0.0
  %4436 = vmatprep.subr.mxu0 0.0
  %4437 = vmatpush1.msra.mxu0 0.0
  %4438 = vmatprep.subr.mxu0 0.0
  %4439 = vmatpush1.msra.mxu0 0.0
  %4440 = vmatprep.subr.mxu0 0.0
  %4441 = vmatpush1.msra.mxu0 0.0
  %4442 = vmatprep.subr.mxu0 0.0
  %4443 = vmatpush1.msra.mxu0 0.0
  %4444 = vmatprep.subr.mxu0 0.0
  %4445 = vmatpush1.msra.mxu0 0.0
  %4446 = vmatprep.subr.mxu0 0.0
  %4447 = vmatpush1.msra.mxu0 0.0
  %4448 = vmatprep.subr.mxu0 0.0
  %4449 = vmatpush1.msra.mxu0 0.0
  %4450 = vmatprep.subr.mxu0 0.0
  %4451 = vmatpush1.msra.mxu0 0.0
  %4452 = vmatprep.subr.mxu0 0.0
  %4453 = vmatpush1.msra.mxu0 0.0
  %4454 = vmatprep.subr.mxu0 0.0
  %4455 = vmatpush1.msra.mxu0 0.0
  %4456 = vmatprep.subr.mxu0 0.0
  %4457 = vmatpush1.msra.mxu0 0.0
  %4458 = vmatprep.subr.mxu0 0.0
  %4459 = vmatpush1.msra.mxu0 0.0
  %4460 = vmatprep.subr.mxu0 0.0
  %4461 = vmatpush1.msra.mxu0 0.0
  %4462 = vmatprep.subr.mxu0 0.0
  %4463 = vmatpush1.msra.mxu0 0.0
  %4464 = vmatprep.subr.mxu0 0.0
  %4465 = vmatpush1.msra.mxu0 0.0
  %4466 = vmatprep.subr.mxu0 0.0
  %4467 = vmatpush1.msra.mxu0 0.0
  %4468 = vmatprep.subr.mxu0 0.0
  %4469 = vmatpush1.msra.mxu0 0.0
  %4470 = vmatprep.subr.mxu0 0.0
  %4471 = vmatpush1.msra.mxu0 0.0
  %4472 = vmatprep.subr.mxu0 0.0
  %4473 = vmatpush1.msra.mxu0 0.0
  %4474 = vmatprep.subr.mxu0 0.0
  %4475 = vmatpush1.msra.mxu0 0.0
  %4476 = vmatprep.subr.mxu0 0.0
  %4477 = vmatpush1.msra.mxu0 0.0
  %4478 = vmatprep.mubr.f32.mxu0 0.0
  %4479 = vmatmul.mubr.f32.gmra.mrb[0].mxu0 %v4412
  %v4480 = vpop.f32.mrb[0].mxu0
  %v4481 = vadd.f32 0.0, %v4480
  %v4482 = vpop.f32.mrb[0].mxu0
  %4483 = vdwg.mxu0
  %v4484 = vadd.f32 %v4244, %v4481
  %s4485 = scalar_lea.vmem %s6, 1
  %v4486 = vld [vmem:[%s4485] sm:$0x1]
  %v4488 = vlaneseq
  %v4489 = vshrl.u32 %v4488, 7
  %v4490 = vsub.s32 0, %v4489
  %v4491 = vrot.slane %v4486, %v4490
  %v4493 = vadd.f32 %v3527, %v4491
  %v4494 = vadd.f32 %v4484, %v4491
  %v4495 = vadd.f32 %v2470, %v4493
  %v4496 = vadd.f32 %v2471, %v4494
  %s4497 = scalar_lea.vmem %s7, 1
  %v4498 = vld [vmem:[%s4497] sm:$0x1]
  %s4499 = scalar_lea.vmem %s8, 1
  %v4500 = vld [vmem:[%s4499] sm:$0x1]
  %v4501 = vsel %vm177, %v4495, 0.0
  %4502 = vadd.xlane.f32.xlu0 %v4501
  %v4503 = vpop.xlane.xlu0 %4502
  %v4504 = vsel %vm177, %v4496, 0.0
  %4505 = vadd.xlane.f32.xlu0 %v4504
  %v4506 = vpop.xlane.xlu0 %4505
  %v4507 = vmul.f32 %v4503, %v2197
  %v4508 = vmul.f32 %v4506, %v2197
  %v4509 = vsub.f32 %v4495, %v4507
  %v4510 = vsub.f32 %v4496, %v4508
  %v4511 = vmul.f32 %v4509, %v4509
  %v4512 = vmul.f32 %v4510, %v4510
  %v4513 = vsel %vm177, %v4511, 0.0
  %4514 = vadd.xlane.f32.xlu0 %v4513
  %v4515 = vpop.xlane.xlu0 %4514
  %v4516 = vsel %vm177, %v4512, 0.0
  %4517 = vadd.xlane.f32.xlu0 %v4516
  %v4518 = vpop.xlane.xlu0 %4517
  %v4519 = vmul.f32 %v4515, %v2197
  %v4520 = vmul.f32 %v4518, %v2197
  %v4521 = vadd.f32 %v4519, 1e-05
  %v4522 = vadd.f32 %v4520, 1e-05
  %v4523 = vrsqrt.pop %v4521
  %v4524 = vrsqrt.pop %v4522
  %v4525 = vmul.f32 %v4509, %v4523
  %v4526 = vmul.f32 %v4510, %v4524
  %v4528 = vlaneseq
  %v4529 = vshrl.u32 %v4528, 7
  %v4530 = vsub.s32 0, %v4529
  %v4531 = vrot.slane %v4498, %v4530
  %v4533 = vmul.f32 %v4525, %v4531
  %v4534 = vmul.f32 %v4526, %v4531
  %v4536 = vlaneseq
  %v4537 = vshrl.u32 %v4536, 7
  %v4538 = vsub.s32 0, %v4537
  %v4539 = vrot.slane %v4500, %v4538
  %v4541 = vadd.f32 %v4533, %v4539
  %v4542 = vadd.f32 %v4534, %v4539
  %s4543 = scalar_lea.vmem %s9, 32
  %v4544 = vld [vmem:[%s4543] sm:$0xff]
  %v4545 = vld [vmem:[%s4543 + $0x8] sm:$0xff]
  %v4546 = vld [vmem:[%s4543 + $0x10] sm:$0xff]
  %v4547 = vld [vmem:[%s4543 + $0x18] sm:$0xff]
  %s4548 = scalar_lea.vmem %s10, 1
  %v4549 = vld [vmem:[%s4548] sm:$0x1]
  %v4551 = vlaneseq
  %v4552 = vshrl.u32 %v4551, 7
  %v4553 = vsub.s32 0, %v4552
  %v4554 = vrot.slane %v4549, %v4553
  %v4557 = vsel %vm177, %v4541, 0
  %v4560 = vsel %vm177, %v4542, 0
  %4562 = vmatprep.subr.mxu0 0.0
  %4563 = vmatpush1.msra.mxu0 %v4544
  %4564 = vmatprep.subr.mxu0 0.0
  %4565 = vmatpush1.msra.mxu0 %v4545
  %4566 = vmatprep.subr.mxu0 0.0
  %4567 = vmatpush1.msra.mxu0 %v4546
  %4568 = vmatprep.subr.mxu0 0.0
  %4569 = vmatpush1.msra.mxu0 %v4547
  %4570 = vmatprep.subr.mxu0 0.0
  %4571 = vmatpush1.msra.mxu0 0.0
  %4572 = vmatprep.subr.mxu0 0.0
  %4573 = vmatpush1.msra.mxu0 0.0
  %4574 = vmatprep.subr.mxu0 0.0
  %4575 = vmatpush1.msra.mxu0 0.0
  %4576 = vmatprep.subr.mxu0 0.0
  %4577 = vmatpush1.msra.mxu0 0.0
  %4578 = vmatprep.subr.mxu0 0.0
  %4579 = vmatpush1.msra.mxu0 0.0
  %4580 = vmatprep.subr.mxu0 0.0
  %4581 = vmatpush1.msra.mxu0 0.0
  %4582 = vmatprep.subr.mxu0 0.0
  %4583 = vmatpush1.msra.mxu0 0.0
  %4584 = vmatprep.subr.mxu0 0.0
  %4585 = vmatpush1.msra.mxu0 0.0
  %4586 = vmatprep.subr.mxu0 0.0
  %4587 = vmatpush1.msra.mxu0 0.0
  %4588 = vmatprep.subr.mxu0 0.0
  %4589 = vmatpush1.msra.mxu0 0.0
  %4590 = vmatprep.subr.mxu0 0.0
  %4591 = vmatpush1.msra.mxu0 0.0
  %4592 = vmatprep.subr.mxu0 0.0
  %4593 = vmatpush1.msra.mxu0 0.0
  %4594 = vmatprep.subr.mxu0 0.0
  %4595 = vmatpush1.msra.mxu0 0.0
  %4596 = vmatprep.subr.mxu0 0.0
  %4597 = vmatpush1.msra.mxu0 0.0
  %4598 = vmatprep.subr.mxu0 0.0
  %4599 = vmatpush1.msra.mxu0 0.0
  %4600 = vmatprep.subr.mxu0 0.0
  %4601 = vmatpush1.msra.mxu0 0.0
  %4602 = vmatprep.subr.mxu0 0.0
  %4603 = vmatpush1.msra.mxu0 0.0
  %4604 = vmatprep.subr.mxu0 0.0
  %4605 = vmatpush1.msra.mxu0 0.0
  %4606 = vmatprep.subr.mxu0 0.0
  %4607 = vmatpush1.msra.mxu0 0.0
  %4608 = vmatprep.subr.mxu0 0.0
  %4609 = vmatpush1.msra.mxu0 0.0
  %4610 = vmatprep.subr.mxu0 0.0
  %4611 = vmatpush1.msra.mxu0 0.0
  %4612 = vmatprep.subr.mxu0 0.0
  %4613 = vmatpush1.msra.mxu0 0.0
  %4614 = vmatprep.subr.mxu0 0.0
  %4615 = vmatpush1.msra.mxu0 0.0
  %4616 = vmatprep.subr.mxu0 0.0
  %4617 = vmatpush1.msra.mxu0 0.0
  %4618 = vmatprep.subr.mxu0 0.0
  %4619 = vmatpush1.msra.mxu0 0.0
  %4620 = vmatprep.subr.mxu0 0.0
  %4621 = vmatpush1.msra.mxu0 0.0
  %4622 = vmatprep.subr.mxu0 0.0
  %4623 = vmatpush1.msra.mxu0 0.0
  %4624 = vmatprep.subr.mxu0 0.0
  %4625 = vmatpush1.msra.mxu0 0.0
  %4626 = vmatprep.mubr.f32.mxu0 0.0
  %4627 = vmatmul.mubr.f32.gmra.mrb[0].mxu0 %v4557
  %v4628 = vpop.f32.mrb[0].mxu0
  %v4629 = vadd.f32 %v4554, %v4628
  %v4630 = vpop.f32.mrb[0].mxu0
  %4631 = vmatprep.mubr.f32.mxu0 0.0
  %4632 = vmatmul.mubr.f32.gmra.mrb[0].mxu0 %v4560
  %v4633 = vpop.f32.mrb[0].mxu0
  %v4634 = vadd.f32 %v4554, %v4633
  %v4635 = vpop.f32.mrb[0].mxu0
  %4636 = vdwg.mxu0
  %v4637 = vmax.f32 %v4629, 0.0
  %v4638 = vmax.f32 %v4634, 0.0
  %s4639 = scalar_lea.vmem %s11, 128
  %v4640 = vld [vmem:[%s4639] sm:$0xff]
  %v4641 = vld [vmem:[%s4639 + $0x8] sm:$0xff]
  %v4642 = vld [vmem:[%s4639 + $0x10] sm:$0xff]
  %v4643 = vld [vmem:[%s4639 + $0x18] sm:$0xff]
  %v4644 = vld [vmem:[%s4639 + $0x20] sm:$0xff]
  %v4645 = vld [vmem:[%s4639 + $0x28] sm:$0xff]
  %v4646 = vld [vmem:[%s4639 + $0x30] sm:$0xff]
  %v4647 = vld [vmem:[%s4639 + $0x38] sm:$0xff]
  %v4648 = vld [vmem:[%s4639 + $0x40] sm:$0xff]
  %v4649 = vld [vmem:[%s4639 + $0x48] sm:$0xff]
  %v4650 = vld [vmem:[%s4639 + $0x50] sm:$0xff]
  %v4651 = vld [vmem:[%s4639 + $0x58] sm:$0xff]
  %v4652 = vld [vmem:[%s4639 + $0x60] sm:$0xff]
  %v4653 = vld [vmem:[%s4639 + $0x68] sm:$0xff]
  %v4654 = vld [vmem:[%s4639 + $0x70] sm:$0xff]
  %v4655 = vld [vmem:[%s4639 + $0x78] sm:$0xff]
  %s4656 = scalar_lea.vmem %s12, 1
  %v4657 = vld [vmem:[%s4656] sm:$0x1]
  %v4659 = vlaneseq
  %v4660 = vshrl.u32 %v4659, 7
  %v4661 = vsub.s32 0, %v4660
  %v4662 = vrot.slane %v4657, %v4661
  %4664 = vmatprep.subr.mxu0 0.0
  %4665 = vmatpush1.msra.mxu0 %v4640
  %4666 = vmatprep.subr.mxu0 0.0
  %4667 = vmatpush1.msra.mxu0 %v4641
  %4668 = vmatprep.subr.mxu0 0.0
  %4669 = vmatpush1.msra.mxu0 %v4642
  %4670 = vmatprep.subr.mxu0 0.0
  %4671 = vmatpush1.msra.mxu0 %v4643
  %4672 = vmatprep.subr.mxu0 0.0
  %4673 = vmatpush1.msra.mxu0 %v4644
  %4674 = vmatprep.subr.mxu0 0.0
  %4675 = vmatpush1.msra.mxu0 %v4645
  %4676 = vmatprep.subr.mxu0 0.0
  %4677 = vmatpush1.msra.mxu0 %v4646
  %4678 = vmatprep.subr.mxu0 0.0
  %4679 = vmatpush1.msra.mxu0 %v4647
  %4680 = vmatprep.subr.mxu0 0.0
  %4681 = vmatpush1.msra.mxu0 %v4648
  %4682 = vmatprep.subr.mxu0 0.0
  %4683 = vmatpush1.msra.mxu0 %v4649
  %4684 = vmatprep.subr.mxu0 0.0
  %4685 = vmatpush1.msra.mxu0 %v4650
  %4686 = vmatprep.subr.mxu0 0.0
  %4687 = vmatpush1.msra.mxu0 %v4651
  %4688 = vmatprep.subr.mxu0 0.0
  %4689 = vmatpush1.msra.mxu0 %v4652
  %4690 = vmatprep.subr.mxu0 0.0
  %4691 = vmatpush1.msra.mxu0 %v4653
  %4692 = vmatprep.subr.mxu0 0.0
  %4693 = vmatpush1.msra.mxu0 %v4654
  %4694 = vmatprep.subr.mxu0 0.0
  %4695 = vmatpush1.msra.mxu0 %v4655
  %4696 = vmatprep.subr.mxu0 0.0
  %4697 = vmatpush1.msra.mxu0 0.0
  %4698 = vmatprep.subr.mxu0 0.0
  %4699 = vmatpush1.msra.mxu0 0.0
  %4700 = vmatprep.subr.mxu0 0.0
  %4701 = vmatpush1.msra.mxu0 0.0
  %4702 = vmatprep.subr.mxu0 0.0
  %4703 = vmatpush1.msra.mxu0 0.0
  %4704 = vmatprep.subr.mxu0 0.0
  %4705 = vmatpush1.msra.mxu0 0.0
  %4706 = vmatprep.subr.mxu0 0.0
  %4707 = vmatpush1.msra.mxu0 0.0
  %4708 = vmatprep.subr.mxu0 0.0
  %4709 = vmatpush1.msra.mxu0 0.0
  %4710 = vmatprep.subr.mxu0 0.0
  %4711 = vmatpush1.msra.mxu0 0.0
  %4712 = vmatprep.subr.mxu0 0.0
  %4713 = vmatpush1.msra.mxu0 0.0
  %4714 = vmatprep.subr.mxu0 0.0
  %4715 = vmatpush1.msra.mxu0 0.0
  %4716 = vmatprep.subr.mxu0 0.0
  %4717 = vmatpush1.msra.mxu0 0.0
  %4718 = vmatprep.subr.mxu0 0.0
  %4719 = vmatpush1.msra.mxu0 0.0
  %4720 = vmatprep.subr.mxu0 0.0
  %4721 = vmatpush1.msra.mxu0 0.0
  %4722 = vmatprep.subr.mxu0 0.0
  %4723 = vmatpush1.msra.mxu0 0.0
  %4724 = vmatprep.subr.mxu0 0.0
  %4725 = vmatpush1.msra.mxu0 0.0
  %4726 = vmatprep.subr.mxu0 0.0
  %4727 = vmatpush1.msra.mxu0 0.0
  %4728 = vmatprep.mubr.f32.mxu0 0.0
  %4729 = vmatmul.mubr.f32.gmra.mrb[0].mxu0 %v4637
  %v4730 = vpop.f32.mrb[0].mxu0
  %v4731 = vadd.f32 %v4662, %v4730
  %v4732 = vpop.f32.mrb[0].mxu0
  %4733 = vmatprep.mubr.f32.mxu0 0.0
  %4734 = vmatmul.mubr.f32.gmra.mrb[0].mxu0 %v4638
  %v4735 = vpop.f32.mrb[0].mxu0
  %v4736 = vadd.f32 %v4662, %v4735
  %v4737 = vpop.f32.mrb[0].mxu0
  %4738 = vdwg.mxu0
  %v4739 = vadd.f32 %v4541, %v4731
  %v4740 = vadd.f32 %v4542, %v4736
  %s4741 = scalar_lea.vmem %s13, 1
  %v4742 = vld [vmem:[%s4741] sm:$0x1]
  %s4743 = scalar_lea.vmem %s14, 1
  %v4744 = vld [vmem:[%s4743] sm:$0x1]
  %v4745 = vsel %vm177, %v4739, 0.0
  %4746 = vadd.xlane.f32.xlu0 %v4745
  %v4747 = vpop.xlane.xlu0 %4746
  %v4748 = vsel %vm177, %v4740, 0.0
  %4749 = vadd.xlane.f32.xlu0 %v4748
  %v4750 = vpop.xlane.xlu0 %4749
  %v4751 = vmul.f32 %v4747, %v2197
  %v4752 = vmul.f32 %v4750, %v2197
  %v4753 = vsub.f32 %v4739, %v4751
  %v4754 = vsub.f32 %v4740, %v4752
  %v4755 = vmul.f32 %v4753, %v4753
  %v4756 = vmul.f32 %v4754, %v4754
  %v4757 = vsel %vm177, %v4755, 0.0
  %4758 = vadd.xlane.f32.xlu0 %v4757
  %v4759 = vpop.xlane.xlu0 %4758
  %v4760 = vsel %vm177, %v4756, 0.0
  %4761 = vadd.xlane.f32.xlu0 %v4760
  %v4762 = vpop.xlane.xlu0 %4761
  %v4763 = vmul.f32 %v4759, %v2197
  %v4764 = vmul.f32 %v4762, %v2197
  %v4765 = vadd.f32 %v4763, 1e-05
  %v4766 = vadd.f32 %v4764, 1e-05
  %v4767 = vrsqrt.pop %v4765
  %v4768 = vrsqrt.pop %v4766
  %v4769 = vmul.f32 %v4753, %v4767
  %v4770 = vmul.f32 %v4754, %v4768
  %v4772 = vlaneseq
  %v4773 = vshrl.u32 %v4772, 7
  %v4774 = vsub.s32 0, %v4773
  %v4775 = vrot.slane %v4742, %v4774
  %v4777 = vmul.f32 %v4769, %v4775
  %v4778 = vmul.f32 %v4770, %v4775
  %v4780 = vlaneseq
  %v4781 = vshrl.u32 %v4780, 7
  %v4782 = vsub.s32 0, %v4781
  %v4783 = vrot.slane %v4744, %v4782
  %v4785 = vadd.f32 %v4777, %v4783
  %v4786 = vadd.f32 %v4778, %v4783
  %v4787 = vld [vmem:[%s15] sm:$0xff]
  %v4788 = vld [vmem:[%s15 + $0x8] sm:$0xff]
  %v4789 = vld [vmem:[%s15 + $0x10] sm:$0xff]
  %v4790 = vld [vmem:[%s15 + $0x18] sm:$0xff]
  %v4791 = vld [vmem:[%s17] sm:$0x1]
  %v4793 = vlaneseq
  %v4794 = vshrl.u32 %v4793, 7
  %v4795 = vsub.s32 0, %v4794
  %v4796 = vrot.slane %v4791, %v4795
  %v4799 = vsel %vm177, %v4785, 0
  %v4802 = vsel %vm177, %v4786, 0
  %4804 = vmatprep.subr.mxu0 0.0
  %4805 = vmatpush1.msra.mxu0 %v4787
  %4806 = vmatprep.subr.mxu0 0.0
  %4807 = vmatpush1.msra.mxu0 %v4788
  %4808 = vmatprep.subr.mxu0 0.0
  %4809 = vmatpush1.msra.mxu0 %v4789
  %4810 = vmatprep.subr.mxu0 0.0
  %4811 = vmatpush1.msra.mxu0 %v4790
  %4812 = vmatprep.subr.mxu0 0.0
  %4813 = vmatpush1.msra.mxu0 0.0
  %4814 = vmatprep.subr.mxu0 0.0
  %4815 = vmatpush1.msra.mxu0 0.0
  %4816 = vmatprep.subr.mxu0 0.0
  %4817 = vmatpush1.msra.mxu0 0.0
  %4818 = vmatprep.subr.mxu0 0.0
  %4819 = vmatpush1.msra.mxu0 0.0
  %4820 = vmatprep.subr.mxu0 0.0
  %4821 = vmatpush1.msra.mxu0 0.0
  %4822 = vmatprep.subr.mxu0 0.0
  %4823 = vmatpush1.msra.mxu0 0.0
  %4824 = vmatprep.subr.mxu0 0.0
  %4825 = vmatpush1.msra.mxu0 0.0
  %4826 = vmatprep.subr.mxu0 0.0
  %4827 = vmatpush1.msra.mxu0 0.0
  %4828 = vmatprep.subr.mxu0 0.0
  %4829 = vmatpush1.msra.mxu0 0.0
  %4830 = vmatprep.subr.mxu0 0.0
  %4831 = vmatpush1.msra.mxu0 0.0
  %4832 = vmatprep.subr.mxu0 0.0
  %4833 = vmatpush1.msra.mxu0 0.0
  %4834 = vmatprep.subr.mxu0 0.0
  %4835 = vmatpush1.msra.mxu0 0.0
  %4836 = vmatprep.subr.mxu0 0.0
  %4837 = vmatpush1.msra.mxu0 0.0
  %4838 = vmatprep.subr.mxu0 0.0
  %4839 = vmatpush1.msra.mxu0 0.0
  %4840 = vmatprep.subr.mxu0 0.0
  %4841 = vmatpush1.msra.mxu0 0.0
  %4842 = vmatprep.subr.mxu0 0.0
  %4843 = vmatpush1.msra.mxu0 0.0
  %4844 = vmatprep.subr.mxu0 0.0
  %4845 = vmatpush1.msra.mxu0 0.0
  %4846 = vmatprep.subr.mxu0 0.0
  %4847 = vmatpush1.msra.mxu0 0.0
  %4848 = vmatprep.subr.mxu0 0.0
  %4849 = vmatpush1.msra.mxu0 0.0
  %4850 = vmatprep.subr.mxu0 0.0
  %4851 = vmatpush1.msra.mxu0 0.0
  %4852 = vmatprep.subr.mxu0 0.0
  %4853 = vmatpush1.msra.mxu0 0.0
  %4854 = vmatprep.subr.mxu0 0.0
  %4855 = vmatpush1.msra.mxu0 0.0
  %4856 = vmatprep.subr.mxu0 0.0
  %4857 = vmatpush1.msra.mxu0 0.0
  %4858 = vmatprep.subr.mxu0 0.0
  %4859 = vmatpush1.msra.mxu0 0.0
  %4860 = vmatprep.subr.mxu0 0.0
  %4861 = vmatpush1.msra.mxu0 0.0
  %4862 = vmatprep.subr.mxu0 0.0
  %4863 = vmatpush1.msra.mxu0 0.0
  %4864 = vmatprep.subr.mxu0 0.0
  %4865 = vmatpush1.msra.mxu0 0.0
  %4866 = vmatprep.subr.mxu0 0.0
  %4867 = vmatpush1.msra.mxu0 0.0
  %4868 = vmatprep.mubr.f32.mxu0 0.0
  %4869 = vmatmul.mubr.f32.gmra.mrb[0].mxu0 %v4799
  %v4870 = vpop.f32.mrb[0].mxu0
  %v4871 = vadd.f32 %v4796, %v4870
  %v4872 = vpop.f32.mrb[0].mxu0
  %4873 = vmatprep.mubr.f32.mxu0 0.0
  %4874 = vmatmul.mubr.f32.gmra.mrb[0].mxu0 %v4802
  %v4875 = vpop.f32.mrb[0].mxu0
  %v4876 = vadd.f32 %v4796, %v4875
  %v4877 = vpop.f32.mrb[0].mxu0
  %4878 = vdwg.mxu0
  %v4879 = vld [vmem:[%s16] sm:$0xff]
  %v4880 = vld [vmem:[%s16 + $0x8] sm:$0xff]
  %v4881 = vld [vmem:[%s16 + $0x10] sm:$0xff]
  %v4882 = vld [vmem:[%s16 + $0x18] sm:$0xff]
  %v4884 = vrot.slane %v4876, 7
  %vm4886 = vcmask 1040384
  %v4887 = vsel %vm4886, %v4871, %v4884
  %v4889 = vsel %vm177, 0.0, 0
  %4891 = vmatprep.subr.mxu0 0.0
  %4892 = vmatpush1.msra.mxu0 %v4879
  %4893 = vmatprep.subr.mxu0 0.0
  %4894 = vmatpush1.msra.mxu0 %v4880
  %4895 = vmatprep.subr.mxu0 0.0
  %4896 = vmatpush1.msra.mxu0 %v4881
  %4897 = vmatprep.subr.mxu0 0.0
  %4898 = vmatpush1.msra.mxu0 %v4882
  %4899 = vmatprep.subr.mxu0 0.0
  %4900 = vmatpush1.msra.mxu0 0.0
  %4901 = vmatprep.subr.mxu0 0.0
  %4902 = vmatpush1.msra.mxu0 0.0
  %4903 = vmatprep.subr.mxu0 0.0
  %4904 = vmatpush1.msra.mxu0 0.0
  %4905 = vmatprep.subr.mxu0 0.0
  %4906 = vmatpush1.msra.mxu0 0.0
  %4907 = vmatprep.subr.mxu0 0.0
  %4908 = vmatpush1.msra.mxu0 0.0
  %4909 = vmatprep.subr.mxu0 0.0
  %4910 = vmatpush1.msra.mxu0 0.0
  %4911 = vmatprep.subr.mxu0 0.0
  %4912 = vmatpush1.msra.mxu0 0.0
  %4913 = vmatprep.subr.mxu0 0.0
  %4914 = vmatpush1.msra.mxu0 0.0
  %4915 = vmatprep.subr.mxu0 0.0
  %4916 = vmatpush1.msra.mxu0 0.0
  %4917 = vmatprep.subr.mxu0 0.0
  %4918 = vmatpush1.msra.mxu0 0.0
  %4919 = vmatprep.subr.mxu0 0.0
  %4920 = vmatpush1.msra.mxu0 0.0
  %4921 = vmatprep.subr.mxu0 0.0
  %4922 = vmatpush1.msra.mxu0 0.0
  %4923 = vmatprep.subr.mxu0 0.0
  %4924 = vmatpush1.msra.mxu0 0.0
  %4925 = vmatprep.subr.mxu0 0.0
  %4926 = vmatpush1.msra.mxu0 0.0
  %4927 = vmatprep.subr.mxu0 0.0
  %4928 = vmatpush1.msra.mxu0 0.0
  %4929 = vmatprep.subr.mxu0 0.0
  %4930 = vmatpush1.msra.mxu0 0.0
  %4931 = vmatprep.subr.mxu0 0.0
  %4932 = vmatpush1.msra.mxu0 0.0
  %4933 = vmatprep.subr.mxu0 0.0
  %4934 = vmatpush1.msra.mxu0 0.0
  %4935 = vmatprep.subr.mxu0 0.0
  %4936 = vmatpush1.msra.mxu0 0.0
  %4937 = vmatprep.subr.mxu0 0.0
  %4938 = vmatpush1.msra.mxu0 0.0
  %4939 = vmatprep.subr.mxu0 0.0
  %4940 = vmatpush1.msra.mxu0 0.0
  %4941 = vmatprep.subr.mxu0 0.0
  %4942 = vmatpush1.msra.mxu0 0.0
  %4943 = vmatprep.subr.mxu0 0.0
  %4944 = vmatpush1.msra.mxu0 0.0
  %4945 = vmatprep.subr.mxu0 0.0
  %4946 = vmatpush1.msra.mxu0 0.0
  %4947 = vmatprep.subr.mxu0 0.0
  %4948 = vmatpush1.msra.mxu0 0.0
  %4949 = vmatprep.subr.mxu0 0.0
  %4950 = vmatpush1.msra.mxu0 0.0
  %4951 = vmatprep.subr.mxu0 0.0
  %4952 = vmatpush1.msra.mxu0 0.0
  %4953 = vmatprep.subr.mxu0 0.0
  %4954 = vmatpush1.msra.mxu0 0.0
  %4955 = vmatprep.mubr.f32.mxu0 0.0
  %4956 = vmatmul.mubr.f32.gmra.mrb[0].mxu0 %v4889
  %v4957 = vpop.f32.mrb[0].mxu0
  %v4958 = vadd.f32 0.0, %v4957
  %v4959 = vpop.f32.mrb[0].mxu0
  %4960 = vdwg.mxu0
  %v4961 = vadd.f32 %v4887, %v4958
  %v4962 = vsub.f32 0.0, %v4961
  %v4963 = vmul.f32 %v4962, 1.442695
  %v4964 = vpow.pop %v4963
  %v4965 = vadd.f32 %v4964, 1.0
  %v4966 = vrcp.pop %v4965
  %v4967 = vtanh.pop %v4961
  %v4968 = vmul.f32 %v4966, 0.0
  %4970 = vrot.lane.b32.xlu0 %v4967, 64
  %v4971 = vpop.permute.xlu0 %4970
  %v4973 = vmul.f32 %v4966, %v4971
  %4975 = vrot.lane.b32.xlu0 %v4973, 32
  %v4976 = vpop.permute.xlu0 %4975
  %v4978 = vadd.f32 %v4968, %v4976
  %v4979 = vtanh.pop %v4978
  %4981 = vrot.lane.b32.xlu0 %v4979, 64
  %v4982 = vpop.permute.xlu0 %4981
  %v4984 = vmul.f32 %v4966, %v4982
  %v4986 = vrot.slane %v4871, 1
  %v4988 = vsel %vm4886, %v4986, %v4876
  %4990 = vrot.lane.b32.xlu0 %v4984, 32
  %v4991 = vpop.permute.xlu0 %4990
  %v4992 = vsel %vm177, %v4991, 0
  %4994 = vmatprep.subr.mxu0 0.0
  %4995 = vmatpush1.msra.mxu0 %v4879
  %4996 = vmatprep.subr.mxu0 0.0
  %4997 = vmatpush1.msra.mxu0 %v4880
  %4998 = vmatprep.subr.mxu0 0.0
  %4999 = vmatpush1.msra.mxu0 %v4881
  %5000 = vmatprep.subr.mxu0 0.0
  %5001 = vmatpush1.msra.mxu0 %v4882
  %5002 = vmatprep.subr.mxu0 0.0
  %5003 = vmatpush1.msra.mxu0 0.0
  %5004 = vmatprep.subr.mxu0 0.0
  %5005 = vmatpush1.msra.mxu0 0.0
  %5006 = vmatprep.subr.mxu0 0.0
  %5007 = vmatpush1.msra.mxu0 0.0
  %5008 = vmatprep.subr.mxu0 0.0
  %5009 = vmatpush1.msra.mxu0 0.0
  %5010 = vmatprep.subr.mxu0 0.0
  %5011 = vmatpush1.msra.mxu0 0.0
  %5012 = vmatprep.subr.mxu0 0.0
  %5013 = vmatpush1.msra.mxu0 0.0
  %5014 = vmatprep.subr.mxu0 0.0
  %5015 = vmatpush1.msra.mxu0 0.0
  %5016 = vmatprep.subr.mxu0 0.0
  %5017 = vmatpush1.msra.mxu0 0.0
  %5018 = vmatprep.subr.mxu0 0.0
  %5019 = vmatpush1.msra.mxu0 0.0
  %5020 = vmatprep.subr.mxu0 0.0
  %5021 = vmatpush1.msra.mxu0 0.0
  %5022 = vmatprep.subr.mxu0 0.0
  %5023 = vmatpush1.msra.mxu0 0.0
  %5024 = vmatprep.subr.mxu0 0.0
  %5025 = vmatpush1.msra.mxu0 0.0
  %5026 = vmatprep.subr.mxu0 0.0
  %5027 = vmatpush1.msra.mxu0 0.0
  %5028 = vmatprep.subr.mxu0 0.0
  %5029 = vmatpush1.msra.mxu0 0.0
  %5030 = vmatprep.subr.mxu0 0.0
  %5031 = vmatpush1.msra.mxu0 0.0
  %5032 = vmatprep.subr.mxu0 0.0
  %5033 = vmatpush1.msra.mxu0 0.0
  %5034 = vmatprep.subr.mxu0 0.0
  %5035 = vmatpush1.msra.mxu0 0.0
  %5036 = vmatprep.subr.mxu0 0.0
  %5037 = vmatpush1.msra.mxu0 0.0
  %5038 = vmatprep.subr.mxu0 0.0
  %5039 = vmatpush1.msra.mxu0 0.0
  %5040 = vmatprep.subr.mxu0 0.0
  %5041 = vmatpush1.msra.mxu0 0.0
  %5042 = vmatprep.subr.mxu0 0.0
  %5043 = vmatpush1.msra.mxu0 0.0
  %5044 = vmatprep.subr.mxu0 0.0
  %5045 = vmatpush1.msra.mxu0 0.0
  %5046 = vmatprep.subr.mxu0 0.0
  %5047 = vmatpush1.msra.mxu0 0.0
  %5048 = vmatprep.subr.mxu0 0.0
  %5049 = vmatpush1.msra.mxu0 0.0
  %5050 = vmatprep.subr.mxu0 0.0
  %5051 = vmatpush1.msra.mxu0 0.0
  %5052 = vmatprep.subr.mxu0 0.0
  %5053 = vmatpush1.msra.mxu0 0.0
  %5054 = vmatprep.subr.mxu0 0.0
  %5055 = vmatpush1.msra.mxu0 0.0
  %5056 = vmatprep.subr.mxu0 0.0
  %5057 = vmatpush1.msra.mxu0 0.0
  %5058 = vmatprep.mubr.f32.mxu0 0.0
  %5059 = vmatmul.mubr.f32.gmra.mrb[0].mxu0 %v4992
  %v5060 = vpop.f32.mrb[0].mxu0
  %v5061 = vadd.f32 0.0, %v5060
  %v5062 = vpop.f32.mrb[0].mxu0
  %5063 = vdwg.mxu0
  %v5064 = vadd.f32 %v4988, %v5061
  %v5065 = vsub.f32 0.0, %v5064
  %v5066 = vmul.f32 %v5065, 1.442695
  %v5067 = vpow.pop %v5066
  %v5068 = vadd.f32 %v5067, 1.0
  %v5069 = vrcp.pop %v5068
  %v5070 = vtanh.pop %v5064
  %v5071 = vmul.f32 %v5069, %v4978
  %5073 = vrot.lane.b32.xlu0 %v5070, 64
  %v5074 = vpop.permute.xlu0 %5073
  %v5076 = vmul.f32 %v5069, %v5074
  %5078 = vrot.lane.b32.xlu0 %v5076, 32
  %v5079 = vpop.permute.xlu0 %5078
  %v5081 = vadd.f32 %v5071, %v5079
  %v5082 = vtanh.pop %v5081
  %5084 = vrot.lane.b32.xlu0 %v5082, 64
  %v5085 = vpop.permute.xlu0 %5084
  %v5087 = vmul.f32 %v5069, %v5085
  %v5088 = vrot.slane %v4871, 2
  %v5090 = vrot.slane %v4876, 1
  %v5092 = vsel %vm4886, %v5088, %v5090
  %5094 = vrot.lane.b32.xlu0 %v5087, 32
  %v5095 = vpop.permute.xlu0 %5094
  %v5096 = vsel %vm177, %v5095, 0
  %5098 = vmatprep.subr.mxu0 0.0
  %5099 = vmatpush1.msra.mxu0 %v4879
  %5100 = vmatprep.subr.mxu0 0.0
  %5101 = vmatpush1.msra.mxu0 %v4880
  %5102 = vmatprep.subr.mxu0 0.0
  %5103 = vmatpush1.msra.mxu0 %v4881
  %5104 = vmatprep.subr.mxu0 0.0
  %5105 = vmatpush1.msra.mxu0 %v4882
  %5106 = vmatprep.subr.mxu0 0.0
  %5107 = vmatpush1.msra.mxu0 0.0
  %5108 = vmatprep.subr.mxu0 0.0
  %5109 = vmatpush1.msra.mxu0 0.0
  %5110 = vmatprep.subr.mxu0 0.0
  %5111 = vmatpush1.msra.mxu0 0.0
  %5112 = vmatprep.subr.mxu0 0.0
  %5113 = vmatpush1.msra.mxu0 0.0
  %5114 = vmatprep.subr.mxu0 0.0
  %5115 = vmatpush1.msra.mxu0 0.0
  %5116 = vmatprep.subr.mxu0 0.0
  %5117 = vmatpush1.msra.mxu0 0.0
  %5118 = vmatprep.subr.mxu0 0.0
  %5119 = vmatpush1.msra.mxu0 0.0
  %5120 = vmatprep.subr.mxu0 0.0
  %5121 = vmatpush1.msra.mxu0 0.0
  %5122 = vmatprep.subr.mxu0 0.0
  %5123 = vmatpush1.msra.mxu0 0.0
  %5124 = vmatprep.subr.mxu0 0.0
  %5125 = vmatpush1.msra.mxu0 0.0
  %5126 = vmatprep.subr.mxu0 0.0
  %5127 = vmatpush1.msra.mxu0 0.0
  %5128 = vmatprep.subr.mxu0 0.0
  %5129 = vmatpush1.msra.mxu0 0.0
  %5130 = vmatprep.subr.mxu0 0.0
  %5131 = vmatpush1.msra.mxu0 0.0
  %5132 = vmatprep.subr.mxu0 0.0
  %5133 = vmatpush1.msra.mxu0 0.0
  %5134 = vmatprep.subr.mxu0 0.0
  %5135 = vmatpush1.msra.mxu0 0.0
  %5136 = vmatprep.subr.mxu0 0.0
  %5137 = vmatpush1.msra.mxu0 0.0
  %5138 = vmatprep.subr.mxu0 0.0
  %5139 = vmatpush1.msra.mxu0 0.0
  %5140 = vmatprep.subr.mxu0 0.0
  %5141 = vmatpush1.msra.mxu0 0.0
  %5142 = vmatprep.subr.mxu0 0.0
  %5143 = vmatpush1.msra.mxu0 0.0
  %5144 = vmatprep.subr.mxu0 0.0
  %5145 = vmatpush1.msra.mxu0 0.0
  %5146 = vmatprep.subr.mxu0 0.0
  %5147 = vmatpush1.msra.mxu0 0.0
  %5148 = vmatprep.subr.mxu0 0.0
  %5149 = vmatpush1.msra.mxu0 0.0
  %5150 = vmatprep.subr.mxu0 0.0
  %5151 = vmatpush1.msra.mxu0 0.0
  %5152 = vmatprep.subr.mxu0 0.0
  %5153 = vmatpush1.msra.mxu0 0.0
  %5154 = vmatprep.subr.mxu0 0.0
  %5155 = vmatpush1.msra.mxu0 0.0
  %5156 = vmatprep.subr.mxu0 0.0
  %5157 = vmatpush1.msra.mxu0 0.0
  %5158 = vmatprep.subr.mxu0 0.0
  %5159 = vmatpush1.msra.mxu0 0.0
  %5160 = vmatprep.subr.mxu0 0.0
  %5161 = vmatpush1.msra.mxu0 0.0
  %5162 = vmatprep.mubr.f32.mxu0 0.0
  %5163 = vmatmul.mubr.f32.gmra.mrb[0].mxu0 %v5096
  %v5164 = vpop.f32.mrb[0].mxu0
  %v5165 = vadd.f32 0.0, %v5164
  %v5166 = vpop.f32.mrb[0].mxu0
  %5167 = vdwg.mxu0
  %v5168 = vadd.f32 %v5092, %v5165
  %v5169 = vsub.f32 0.0, %v5168
  %v5170 = vmul.f32 %v5169, 1.442695
  %v5171 = vpow.pop %v5170
  %v5172 = vadd.f32 %v5171, 1.0
  %v5173 = vrcp.pop %v5172
  %v5174 = vtanh.pop %v5168
  %v5175 = vmul.f32 %v5173, %v5081
  %5177 = vrot.lane.b32.xlu0 %v5174, 64
  %v5178 = vpop.permute.xlu0 %5177
  %v5180 = vmul.f32 %v5173, %v5178
  %5182 = vrot.lane.b32.xlu0 %v5180, 32
  %v5183 = vpop.permute.xlu0 %5182
  %v5185 = vadd.f32 %v5175, %v5183
  %v5186 = vtanh.pop %v5185
  %5188 = vrot.lane.b32.xlu0 %v5186, 64
  %v5189 = vpop.permute.xlu0 %5188
  %v5191 = vmul.f32 %v5173, %v5189
  %v5192 = vrot.slane %v4871, 3
  %v5194 = vrot.slane %v4876, 2
  %v5196 = vsel %vm4886, %v5192, %v5194
  %5198 = vrot.lane.b32.xlu0 %v5191, 32
  %v5199 = vpop.permute.xlu0 %5198
  %v5200 = vsel %vm177, %v5199, 0
  %5202 = vmatprep.subr.mxu0 0.0
  %5203 = vmatpush1.msra.mxu0 %v4879
  %5204 = vmatprep.subr.mxu0 0.0
  %5205 = vmatpush1.msra.mxu0 %v4880
  %5206 = vmatprep.subr.mxu0 0.0
  %5207 = vmatpush1.msra.mxu0 %v4881
  %5208 = vmatprep.subr.mxu0 0.0
  %5209 = vmatpush1.msra.mxu0 %v4882
  %5210 = vmatprep.subr.mxu0 0.0
  %5211 = vmatpush1.msra.mxu0 0.0
  %5212 = vmatprep.subr.mxu0 0.0
  %5213 = vmatpush1.msra.mxu0 0.0
  %5214 = vmatprep.subr.mxu0 0.0
  %5215 = vmatpush1.msra.mxu0 0.0
  %5216 = vmatprep.subr.mxu0 0.0
  %5217 = vmatpush1.msra.mxu0 0.0
  %5218 = vmatprep.subr.mxu0 0.0
  %5219 = vmatpush1.msra.mxu0 0.0
  %5220 = vmatprep.subr.mxu0 0.0
  %5221 = vmatpush1.msra.mxu0 0.0
  %5222 = vmatprep.subr.mxu0 0.0
  %5223 = vmatpush1.msra.mxu0 0.0
  %5224 = vmatprep.subr.mxu0 0.0
  %5225 = vmatpush1.msra.mxu0 0.0
  %5226 = vmatprep.subr.mxu0 0.0
  %5227 = vmatpush1.msra.mxu0 0.0
  %5228 = vmatprep.subr.mxu0 0.0
  %5229 = vmatpush1.msra.mxu0 0.0
  %5230 = vmatprep.subr.mxu0 0.0
  %5231 = vmatpush1.msra.mxu0 0.0
  %5232 = vmatprep.subr.mxu0 0.0
  %5233 = vmatpush1.msra.mxu0 0.0
  %5234 = vmatprep.subr.mxu0 0.0
  %5235 = vmatpush1.msra.mxu0 0.0
  %5236 = vmatprep.subr.mxu0 0.0
  %5237 = vmatpush1.msra.mxu0 0.0
  %5238 = vmatprep.subr.mxu0 0.0
  %5239 = vmatpush1.msra.mxu0 0.0
  %5240 = vmatprep.subr.mxu0 0.0
  %5241 = vmatpush1.msra.mxu0 0.0
  %5242 = vmatprep.subr.mxu0 0.0
  %5243 = vmatpush1.msra.mxu0 0.0
  %5244 = vmatprep.subr.mxu0 0.0
  %5245 = vmatpush1.msra.mxu0 0.0
  %5246 = vmatprep.subr.mxu0 0.0
  %5247 = vmatpush1.msra.mxu0 0.0
  %5248 = vmatprep.subr.mxu0 0.0
  %5249 = vmatpush1.msra.mxu0 0.0
  %5250 = vmatprep.subr.mxu0 0.0
  %5251 = vmatpush1.msra.mxu0 0.0
  %5252 = vmatprep.subr.mxu0 0.0
  %5253 = vmatpush1.msra.mxu0 0.0
  %5254 = vmatprep.subr.mxu0 0.0
  %5255 = vmatpush1.msra.mxu0 0.0
  %5256 = vmatprep.subr.mxu0 0.0
  %5257 = vmatpush1.msra.mxu0 0.0
  %5258 = vmatprep.subr.mxu0 0.0
  %5259 = vmatpush1.msra.mxu0 0.0
  %5260 = vmatprep.subr.mxu0 0.0
  %5261 = vmatpush1.msra.mxu0 0.0
  %5262 = vmatprep.subr.mxu0 0.0
  %5263 = vmatpush1.msra.mxu0 0.0
  %5264 = vmatprep.subr.mxu0 0.0
  %5265 = vmatpush1.msra.mxu0 0.0
  %5266 = vmatprep.mubr.f32.mxu0 0.0
  %5267 = vmatmul.mubr.f32.gmra.mrb[0].mxu0 %v5200
  %v5268 = vpop.f32.mrb[0].mxu0
  %v5269 = vadd.f32 0.0, %v5268
  %v5270 = vpop.f32.mrb[0].mxu0
  %5271 = vdwg.mxu0
  %v5272 = vadd.f32 %v5196, %v5269
  %v5273 = vsub.f32 0.0, %v5272
  %v5274 = vmul.f32 %v5273, 1.442695
  %v5275 = vpow.pop %v5274
  %v5276 = vadd.f32 %v5275, 1.0
  %v5277 = vrcp.pop %v5276
  %v5278 = vtanh.pop %v5272
  %v5279 = vmul.f32 %v5277, %v5185
  %5281 = vrot.lane.b32.xlu0 %v5278, 64
  %v5282 = vpop.permute.xlu0 %5281
  %v5284 = vmul.f32 %v5277, %v5282
  %5286 = vrot.lane.b32.xlu0 %v5284, 32
  %v5287 = vpop.permute.xlu0 %5286
  %v5289 = vadd.f32 %v5279, %v5287
  %v5290 = vtanh.pop %v5289
  %5292 = vrot.lane.b32.xlu0 %v5290, 64
  %v5293 = vpop.permute.xlu0 %5292
  %v5295 = vmul.f32 %v5277, %v5293
  %v5296 = vrot.slane %v4871, 4
  %v5298 = vrot.slane %v4876, 3
  %v5300 = vsel %vm4886, %v5296, %v5298
  %5302 = vrot.lane.b32.xlu0 %v5295, 32
  %v5303 = vpop.permute.xlu0 %5302
  %v5304 = vsel %vm177, %v5303, 0
  %5306 = vmatprep.subr.mxu0 0.0
  %5307 = vmatpush1.msra.mxu0 %v4879
  %5308 = vmatprep.subr.mxu0 0.0
  %5309 = vmatpush1.msra.mxu0 %v4880
  %5310 = vmatprep.subr.mxu0 0.0
  %5311 = vmatpush1.msra.mxu0 %v4881
  %5312 = vmatprep.subr.mxu0 0.0
  %5313 = vmatpush1.msra.mxu0 %v4882
  %5314 = vmatprep.subr.mxu0 0.0
  %5315 = vmatpush1.msra.mxu0 0.0
  %5316 = vmatprep.subr.mxu0 0.0
  %5317 = vmatpush1.msra.mxu0 0.0
  %5318 = vmatprep.subr.mxu0 0.0
  %5319 = vmatpush1.msra.mxu0 0.0
  %5320 = vmatprep.subr.mxu0 0.0
  %5321 = vmatpush1.msra.mxu0 0.0
  %5322 = vmatprep.subr.mxu0 0.0
  %5323 = vmatpush1.msra.mxu0 0.0
  %5324 = vmatprep.subr.mxu0 0.0
  %5325 = vmatpush1.msra.mxu0 0.0
  %5326 = vmatprep.subr.mxu0 0.0
  %5327 = vmatpush1.msra.mxu0 0.0
  %5328 = vmatprep.subr.mxu0 0.0
  %5329 = vmatpush1.msra.mxu0 0.0
  %5330 = vmatprep.subr.mxu0 0.0
  %5331 = vmatpush1.msra.mxu0 0.0
  %5332 = vmatprep.subr.mxu0 0.0
  %5333 = vmatpush1.msra.mxu0 0.0
  %5334 = vmatprep.subr.mxu0 0.0
  %5335 = vmatpush1.msra.mxu0 0.0
  %5336 = vmatprep.subr.mxu0 0.0
  %5337 = vmatpush1.msra.mxu0 0.0
  %5338 = vmatprep.subr.mxu0 0.0
  %5339 = vmatpush1.msra.mxu0 0.0
  %5340 = vmatprep.subr.mxu0 0.0
  %5341 = vmatpush1.msra.mxu0 0.0
  %5342 = vmatprep.subr.mxu0 0.0
  %5343 = vmatpush1.msra.mxu0 0.0
  %5344 = vmatprep.subr.mxu0 0.0
  %5345 = vmatpush1.msra.mxu0 0.0
  %5346 = vmatprep.subr.mxu0 0.0
  %5347 = vmatpush1.msra.mxu0 0.0
  %5348 = vmatprep.subr.mxu0 0.0
  %5349 = vmatpush1.msra.mxu0 0.0
  %5350 = vmatprep.subr.mxu0 0.0
  %5351 = vmatpush1.msra.mxu0 0.0
  %5352 = vmatprep.subr.mxu0 0.0
  %5353 = vmatpush1.msra.mxu0 0.0
  %5354 = vmatprep.subr.mxu0 0.0
  %5355 = vmatpush1.msra.mxu0 0.0
  %5356 = vmatprep.subr.mxu0 0.0
  %5357 = vmatpush1.msra.mxu0 0.0
  %5358 = vmatprep.subr.mxu0 0.0
  %5359 = vmatpush1.msra.mxu0 0.0
  %5360 = vmatprep.subr.mxu0 0.0
  %5361 = vmatpush1.msra.mxu0 0.0
  %5362 = vmatprep.subr.mxu0 0.0
  %5363 = vmatpush1.msra.mxu0 0.0
  %5364 = vmatprep.subr.mxu0 0.0
  %5365 = vmatpush1.msra.mxu0 0.0
  %5366 = vmatprep.subr.mxu0 0.0
  %5367 = vmatpush1.msra.mxu0 0.0
  %5368 = vmatprep.subr.mxu0 0.0
  %5369 = vmatpush1.msra.mxu0 0.0
  %5370 = vmatprep.mubr.f32.mxu0 0.0
  %5371 = vmatmul.mubr.f32.gmra.mrb[0].mxu0 %v5304
  %v5372 = vpop.f32.mrb[0].mxu0
  %v5373 = vadd.f32 0.0, %v5372
  %v5374 = vpop.f32.mrb[0].mxu0
  %5375 = vdwg.mxu0
  %v5376 = vadd.f32 %v5300, %v5373
  %v5377 = vsub.f32 0.0, %v5376
  %v5378 = vmul.f32 %v5377, 1.442695
  %v5379 = vpow.pop %v5378
  %v5380 = vadd.f32 %v5379, 1.0
  %v5381 = vrcp.pop %v5380
  %v5382 = vtanh.pop %v5376
  %v5383 = vmul.f32 %v5381, %v5289
  %5385 = vrot.lane.b32.xlu0 %v5382, 64
  %v5386 = vpop.permute.xlu0 %5385
  %v5388 = vmul.f32 %v5381, %v5386
  %5390 = vrot.lane.b32.xlu0 %v5388, 32
  %v5391 = vpop.permute.xlu0 %5390
  %v5393 = vadd.f32 %v5383, %v5391
  %v5394 = vtanh.pop %v5393
  %5396 = vrot.lane.b32.xlu0 %v5394, 64
  %v5397 = vpop.permute.xlu0 %5396
  %v5399 = vmul.f32 %v5381, %v5397
  %v5400 = vrot.slane %v4871, 5
  %v5402 = vrot.slane %v4876, 4
  %v5404 = vsel %vm4886, %v5400, %v5402
  %5406 = vrot.lane.b32.xlu0 %v5399, 32
  %v5407 = vpop.permute.xlu0 %5406
  %v5408 = vsel %vm177, %v5407, 0
  %5410 = vmatprep.subr.mxu0 0.0
  %5411 = vmatpush1.msra.mxu0 %v4879
  %5412 = vmatprep.subr.mxu0 0.0
  %5413 = vmatpush1.msra.mxu0 %v4880
  %5414 = vmatprep.subr.mxu0 0.0
  %5415 = vmatpush1.msra.mxu0 %v4881
  %5416 = vmatprep.subr.mxu0 0.0
  %5417 = vmatpush1.msra.mxu0 %v4882
  %5418 = vmatprep.subr.mxu0 0.0
  %5419 = vmatpush1.msra.mxu0 0.0
  %5420 = vmatprep.subr.mxu0 0.0
  %5421 = vmatpush1.msra.mxu0 0.0
  %5422 = vmatprep.subr.mxu0 0.0
  %5423 = vmatpush1.msra.mxu0 0.0
  %5424 = vmatprep.subr.mxu0 0.0
  %5425 = vmatpush1.msra.mxu0 0.0
  %5426 = vmatprep.subr.mxu0 0.0
  %5427 = vmatpush1.msra.mxu0 0.0
  %5428 = vmatprep.subr.mxu0 0.0
  %5429 = vmatpush1.msra.mxu0 0.0
  %5430 = vmatprep.subr.mxu0 0.0
  %5431 = vmatpush1.msra.mxu0 0.0
  %5432 = vmatprep.subr.mxu0 0.0
  %5433 = vmatpush1.msra.mxu0 0.0
  %5434 = vmatprep.subr.mxu0 0.0
  %5435 = vmatpush1.msra.mxu0 0.0
  %5436 = vmatprep.subr.mxu0 0.0
  %5437 = vmatpush1.msra.mxu0 0.0
  %5438 = vmatprep.subr.mxu0 0.0
  %5439 = vmatpush1.msra.mxu0 0.0
  %5440 = vmatprep.subr.mxu0 0.0
  %5441 = vmatpush1.msra.mxu0 0.0
  %5442 = vmatprep.subr.mxu0 0.0
  %5443 = vmatpush1.msra.mxu0 0.0
  %5444 = vmatprep.subr.mxu0 0.0
  %5445 = vmatpush1.msra.mxu0 0.0
  %5446 = vmatprep.subr.mxu0 0.0
  %5447 = vmatpush1.msra.mxu0 0.0
  %5448 = vmatprep.subr.mxu0 0.0
  %5449 = vmatpush1.msra.mxu0 0.0
  %5450 = vmatprep.subr.mxu0 0.0
  %5451 = vmatpush1.msra.mxu0 0.0
  %5452 = vmatprep.subr.mxu0 0.0
  %5453 = vmatpush1.msra.mxu0 0.0
  %5454 = vmatprep.subr.mxu0 0.0
  %5455 = vmatpush1.msra.mxu0 0.0
  %5456 = vmatprep.subr.mxu0 0.0
  %5457 = vmatpush1.msra.mxu0 0.0
  %5458 = vmatprep.subr.mxu0 0.0
  %5459 = vmatpush1.msra.mxu0 0.0
  %5460 = vmatprep.subr.mxu0 0.0
  %5461 = vmatpush1.msra.mxu0 0.0
  %5462 = vmatprep.subr.mxu0 0.0
  %5463 = vmatpush1.msra.mxu0 0.0
  %5464 = vmatprep.subr.mxu0 0.0
  %5465 = vmatpush1.msra.mxu0 0.0
  %5466 = vmatprep.subr.mxu0 0.0
  %5467 = vmatpush1.msra.mxu0 0.0
  %5468 = vmatprep.subr.mxu0 0.0
  %5469 = vmatpush1.msra.mxu0 0.0
  %5470 = vmatprep.subr.mxu0 0.0
  %5471 = vmatpush1.msra.mxu0 0.0
  %5472 = vmatprep.subr.mxu0 0.0
  %5473 = vmatpush1.msra.mxu0 0.0
  %5474 = vmatprep.mubr.f32.mxu0 0.0
  %5475 = vmatmul.mubr.f32.gmra.mrb[0].mxu0 %v5408
  %v5476 = vpop.f32.mrb[0].mxu0
  %v5477 = vadd.f32 0.0, %v5476
  %v5478 = vpop.f32.mrb[0].mxu0
  %5479 = vdwg.mxu0
  %v5480 = vadd.f32 %v5404, %v5477
  %v5481 = vsub.f32 0.0, %v5480
  %v5482 = vmul.f32 %v5481, 1.442695
  %v5483 = vpow.pop %v5482
  %v5484 = vadd.f32 %v5483, 1.0
  %v5485 = vrcp.pop %v5484
  %v5486 = vtanh.pop %v5480
  %v5487 = vmul.f32 %v5485, %v5393
  %5489 = vrot.lane.b32.xlu0 %v5486, 64
  %v5490 = vpop.permute.xlu0 %5489
  %v5492 = vmul.f32 %v5485, %v5490
  %5494 = vrot.lane.b32.xlu0 %v5492, 32
  %v5495 = vpop.permute.xlu0 %5494
  %v5497 = vadd.f32 %v5487, %v5495
  %v5498 = vtanh.pop %v5497
  %5500 = vrot.lane.b32.xlu0 %v5498, 64
  %v5501 = vpop.permute.xlu0 %5500
  %v5503 = vmul.f32 %v5485, %v5501
  %v5504 = vrot.slane %v4871, 6
  %v5506 = vrot.slane %v4876, 5
  %v5508 = vsel %vm4886, %v5504, %v5506
  %5510 = vrot.lane.b32.xlu0 %v5503, 32
  %v5511 = vpop.permute.xlu0 %5510
  %v5512 = vsel %vm177, %v5511, 0
  %5514 = vmatprep.subr.mxu0 0.0
  %5515 = vmatpush1.msra.mxu0 %v4879
  %5516 = vmatprep.subr.mxu0 0.0
  %5517 = vmatpush1.msra.mxu0 %v4880
  %5518 = vmatprep.subr.mxu0 0.0
  %5519 = vmatpush1.msra.mxu0 %v4881
  %5520 = vmatprep.subr.mxu0 0.0
  %5521 = vmatpush1.msra.mxu0 %v4882
  %5522 = vmatprep.subr.mxu0 0.0
  %5523 = vmatpush1.msra.mxu0 0.0
  %5524 = vmatprep.subr.mxu0 0.0
  %5525 = vmatpush1.msra.mxu0 0.0
  %5526 = vmatprep.subr.mxu0 0.0
  %5527 = vmatpush1.msra.mxu0 0.0
  %5528 = vmatprep.subr.mxu0 0.0
  %5529 = vmatpush1.msra.mxu0 0.0
  %5530 = vmatprep.subr.mxu0 0.0
  %5531 = vmatpush1.msra.mxu0 0.0
  %5532 = vmatprep.subr.mxu0 0.0
  %5533 = vmatpush1.msra.mxu0 0.0
  %5534 = vmatprep.subr.mxu0 0.0
  %5535 = vmatpush1.msra.mxu0 0.0
  %5536 = vmatprep.subr.mxu0 0.0
  %5537 = vmatpush1.msra.mxu0 0.0
  %5538 = vmatprep.subr.mxu0 0.0
  %5539 = vmatpush1.msra.mxu0 0.0
  %5540 = vmatprep.subr.mxu0 0.0
  %5541 = vmatpush1.msra.mxu0 0.0
  %5542 = vmatprep.subr.mxu0 0.0
  %5543 = vmatpush1.msra.mxu0 0.0
  %5544 = vmatprep.subr.mxu0 0.0
  %5545 = vmatpush1.msra.mxu0 0.0
  %5546 = vmatprep.subr.mxu0 0.0
  %5547 = vmatpush1.msra.mxu0 0.0
  %5548 = vmatprep.subr.mxu0 0.0
  %5549 = vmatpush1.msra.mxu0 0.0
  %5550 = vmatprep.subr.mxu0 0.0
  %5551 = vmatpush1.msra.mxu0 0.0
  %5552 = vmatprep.subr.mxu0 0.0
  %5553 = vmatpush1.msra.mxu0 0.0
  %5554 = vmatprep.subr.mxu0 0.0
  %5555 = vmatpush1.msra.mxu0 0.0
  %5556 = vmatprep.subr.mxu0 0.0
  %5557 = vmatpush1.msra.mxu0 0.0
  %5558 = vmatprep.subr.mxu0 0.0
  %5559 = vmatpush1.msra.mxu0 0.0
  %5560 = vmatprep.subr.mxu0 0.0
  %5561 = vmatpush1.msra.mxu0 0.0
  %5562 = vmatprep.subr.mxu0 0.0
  %5563 = vmatpush1.msra.mxu0 0.0
  %5564 = vmatprep.subr.mxu0 0.0
  %5565 = vmatpush1.msra.mxu0 0.0
  %5566 = vmatprep.subr.mxu0 0.0
  %5567 = vmatpush1.msra.mxu0 0.0
  %5568 = vmatprep.subr.mxu0 0.0
  %5569 = vmatpush1.msra.mxu0 0.0
  %5570 = vmatprep.subr.mxu0 0.0
  %5571 = vmatpush1.msra.mxu0 0.0
  %5572 = vmatprep.subr.mxu0 0.0
  %5573 = vmatpush1.msra.mxu0 0.0
  %5574 = vmatprep.subr.mxu0 0.0
  %5575 = vmatpush1.msra.mxu0 0.0
  %5576 = vmatprep.subr.mxu0 0.0
  %5577 = vmatpush1.msra.mxu0 0.0
  %5578 = vmatprep.mubr.f32.mxu0 0.0
  %5579 = vmatmul.mubr.f32.gmra.mrb[0].mxu0 %v5512
  %v5580 = vpop.f32.mrb[0].mxu0
  %v5581 = vadd.f32 0.0, %v5580
  %v5582 = vpop.f32.mrb[0].mxu0
  %5583 = vdwg.mxu0
  %v5584 = vadd.f32 %v5508, %v5581
  %v5585 = vsub.f32 0.0, %v5584
  %v5586 = vmul.f32 %v5585, 1.442695
  %v5587 = vpow.pop %v5586
  %v5588 = vadd.f32 %v5587, 1.0
  %v5589 = vrcp.pop %v5588
  %v5590 = vtanh.pop %v5584
  %v5591 = vmul.f32 %v5589, %v5497
  %5593 = vrot.lane.b32.xlu0 %v5590, 64
  %v5594 = vpop.permute.xlu0 %5593
  %v5596 = vmul.f32 %v5589, %v5594
  %5598 = vrot.lane.b32.xlu0 %v5596, 32
  %v5599 = vpop.permute.xlu0 %5598
  %v5601 = vadd.f32 %v5591, %v5599
  %v5602 = vtanh.pop %v5601
  %5604 = vrot.lane.b32.xlu0 %v5602, 64
  %v5605 = vpop.permute.xlu0 %5604
  %v5607 = vmul.f32 %v5589, %v5605
  %v5608 = vrot.slane %v4871, 7
  %v5610 = vrot.slane %v4876, 6
  %v5612 = vsel %vm4886, %v5608, %v5610
  %5614 = vrot.lane.b32.xlu0 %v5607, 32
  %v5615 = vpop.permute.xlu0 %5614
  %v5616 = vsel %vm177, %v5615, 0
  %5618 = vmatprep.subr.mxu0 0.0
  %5619 = vmatpush1.msra.mxu0 %v4879
  %5620 = vmatprep.subr.mxu0 0.0
  %5621 = vmatpush1.msra.mxu0 %v4880
  %5622 = vmatprep.subr.mxu0 0.0
  %5623 = vmatpush1.msra.mxu0 %v4881
  %5624 = vmatprep.subr.mxu0 0.0
  %5625 = vmatpush1.msra.mxu0 %v4882
  %5626 = vmatprep.subr.mxu0 0.0
  %5627 = vmatpush1.msra.mxu0 0.0
  %5628 = vmatprep.subr.mxu0 0.0
  %5629 = vmatpush1.msra.mxu0 0.0
  %5630 = vmatprep.subr.mxu0 0.0
  %5631 = vmatpush1.msra.mxu0 0.0
  %5632 = vmatprep.subr.mxu0 0.0
  %5633 = vmatpush1.msra.mxu0 0.0
  %5634 = vmatprep.subr.mxu0 0.0
  %5635 = vmatpush1.msra.mxu0 0.0
  %5636 = vmatprep.subr.mxu0 0.0
  %5637 = vmatpush1.msra.mxu0 0.0
  %5638 = vmatprep.subr.mxu0 0.0
  %5639 = vmatpush1.msra.mxu0 0.0
  %5640 = vmatprep.subr.mxu0 0.0
  %5641 = vmatpush1.msra.mxu0 0.0
  %5642 = vmatprep.subr.mxu0 0.0
  %5643 = vmatpush1.msra.mxu0 0.0
  %5644 = vmatprep.subr.mxu0 0.0
  %5645 = vmatpush1.msra.mxu0 0.0
  %5646 = vmatprep.subr.mxu0 0.0
  %5647 = vmatpush1.msra.mxu0 0.0
  %5648 = vmatprep.subr.mxu0 0.0
  %5649 = vmatpush1.msra.mxu0 0.0
  %5650 = vmatprep.subr.mxu0 0.0
  %5651 = vmatpush1.msra.mxu0 0.0
  %5652 = vmatprep.subr.mxu0 0.0
  %5653 = vmatpush1.msra.mxu0 0.0
  %5654 = vmatprep.subr.mxu0 0.0
  %5655 = vmatpush1.msra.mxu0 0.0
  %5656 = vmatprep.subr.mxu0 0.0
  %5657 = vmatpush1.msra.mxu0 0.0
  %5658 = vmatprep.subr.mxu0 0.0
  %5659 = vmatpush1.msra.mxu0 0.0
  %5660 = vmatprep.subr.mxu0 0.0
  %5661 = vmatpush1.msra.mxu0 0.0
  %5662 = vmatprep.subr.mxu0 0.0
  %5663 = vmatpush1.msra.mxu0 0.0
  %5664 = vmatprep.subr.mxu0 0.0
  %5665 = vmatpush1.msra.mxu0 0.0
  %5666 = vmatprep.subr.mxu0 0.0
  %5667 = vmatpush1.msra.mxu0 0.0
  %5668 = vmatprep.subr.mxu0 0.0
  %5669 = vmatpush1.msra.mxu0 0.0
  %5670 = vmatprep.subr.mxu0 0.0
  %5671 = vmatpush1.msra.mxu0 0.0
  %5672 = vmatprep.subr.mxu0 0.0
  %5673 = vmatpush1.msra.mxu0 0.0
  %5674 = vmatprep.subr.mxu0 0.0
  %5675 = vmatpush1.msra.mxu0 0.0
  %5676 = vmatprep.subr.mxu0 0.0
  %5677 = vmatpush1.msra.mxu0 0.0
  %5678 = vmatprep.subr.mxu0 0.0
  %5679 = vmatpush1.msra.mxu0 0.0
  %5680 = vmatprep.subr.mxu0 0.0
  %5681 = vmatpush1.msra.mxu0 0.0
  %5682 = vmatprep.mubr.f32.mxu0 0.0
  %5683 = vmatmul.mubr.f32.gmra.mrb[0].mxu0 %v5616
  %v5684 = vpop.f32.mrb[0].mxu0
  %v5685 = vadd.f32 0.0, %v5684
  %v5686 = vpop.f32.mrb[0].mxu0
  %5687 = vdwg.mxu0
  %v5688 = vadd.f32 %v5612, %v5685
  %v5689 = vsub.f32 0.0, %v5688
  %v5690 = vmul.f32 %v5689, 1.442695
  %v5691 = vpow.pop %v5690
  %v5692 = vadd.f32 %v5691, 1.0
  %v5693 = vrcp.pop %v5692
  %v5694 = vtanh.pop %v5688
  %v5695 = vmul.f32 %v5693, %v5601
  %5697 = vrot.lane.b32.xlu0 %v5694, 64
  %v5698 = vpop.permute.xlu0 %5697
  %v5700 = vmul.f32 %v5693, %v5698
  %5702 = vrot.lane.b32.xlu0 %v5700, 32
  %v5703 = vpop.permute.xlu0 %5702
  %v5705 = vadd.f32 %v5695, %v5703
  %v5706 = vtanh.pop %v5705
  %5708 = vrot.lane.b32.xlu0 %v5706, 64
  %v5709 = vpop.permute.xlu0 %5708
  %v5711 = vmul.f32 %v5693, %v5709
  %v5712 = vld [vmem:[%s18] sm:$0x1]
  %v5714 = vlaneseq
  %v5715 = vshrl.u32 %v5714, 7
  %v5716 = vsub.s32 0, %v5715
  %v5717 = vrot.slane %v5712, %v5716
  %5718 = vrot.lane.b32.xlu0 %v5717, 96
  %v5719 = vpop.permute.xlu0 %5718
  %v5721 = vmul.f32 %v5711, %v5719
  %5723 = vrot.lane.b32.xlu0 %v5721, 32
  %v5724 = vpop.permute.xlu0 %5723
  %vm5726 = vcmask 254976
  %v5727 = vsel %vm5726, %v5724, 0.0
  %5728 = vadd.xlane.f32.xlu0 %v5727
  %v5729 = vpop.xlane.xlu0 %5728
  %v5730 = vld [vmem:[#allocation2] sm:$0x1]
  %v5732 = vlaneseq
  %v5733 = vshrl.u32 %v5732, 7
  %v5734 = vsub.s32 0, %v5733
  %v5735 = vrot.slane %v5730, %v5734
  %v5737 = vadd.f32 %v5729, %v5735
  %vm5738 = vcmask 1024
  %5739 = vst.msk [vmem:[%s20] sm:$0x3] %vm5738, %v5737
  // Predicated region
  $region82: #{hybrid_forward.1} parent=0 // pred_check
    _
  $region83: #{hybrid_forward.1} parent=0 // pred_check_branch
    %5741 = sbr.rel (0) target = $region85
  $region84: #{hybrid_forward.1} parent=0 // pred_region
    _
  $region85: #{hybrid_forward.1} parent=0 // pred_fallthru
    _
  // Predicated region
  $region86: #{hybrid_forward.1} parent=0 // pred_check
    _
  $region87: #{hybrid_forward.1} parent=0 // pred_check_branch
    %5743 = sbr.rel (0) target = $region89
  $region88: #{hybrid_forward.1} parent=0 // pred_region
    _
  $region89: #{hybrid_forward.1} parent=0 // pred_fallthru
    _

</llo_original>
